<compile_context>
chip_gen: v6e
topology: v6e:2x2x1
jax: 0.10.0
libtpu: 0.0.40
codegen_flags: <defaults>
</compile_context>

<pallas_src>
import functools

import jax
import jax.numpy as jnp
from jax.experimental import pallas as pl
from jax.experimental.pallas import tpu as pltpu

H, W = 10, 9                                  # xiangqi board
HP, WP = H + 2, W + 2                         # zero-padded board (for 3x3, pad=1)
PFLAT = HP * WP                               # 132 flattened padded positions / board
GUARD = 16                                    # guard rows (>= WP + 1) around flat buffer
EMBED_DIM = 80
CHANNELS = 128
NUM_RESIDUAL_BLOCKS = 7
NUM_STEPS = 1 + NUM_RESIDUAL_BLOCKS           # 8 tower grid steps (input conv + 7 blocks)
ACTION_SIZE = 2086                            # TODO(synk): MoveTransform.action_size() placeholder
ACTION_PAD = ((ACTION_SIZE + 127) // 128) * 128   # 2176 = 17*128 (lane-dense)
HEADC = 8                                     # padded head-conv channels: [p0, p1, v, 0*5]
BN_EPS = 1e-5
BATCH_TILE = 32                               # boards per tower grid step (sweepable)


# ---------------------------------------------------------------------------
# Kernel 1: fused conv tower (input conv + 7 residual blocks) + 1x1 head convs
# ---------------------------------------------------------------------------
def _tower_kernel(x_ref, mask_ref, w_ref, b_ref, wh_ref, hb_ref,
                  out_ref, act, *, nrows):
  """One grid step = input conv (step 0) or one full residual block (steps>0).

  act: (GUARD + nrows + GUARD, C) bf16 flat padded activation (VMEM-resident
       across the whole step axis).
  """
  step = pl.program_id(1)
  last = pl.num_programs(1) - 1

  # Step 0: zero the whole buffer (padding ring + guards) and load the board.
  @pl.when(step == 0)
  def _():
    act[...] = jnp.zeros_like(act)
    act[GUARD:GUARD + nrows, :] = x_ref[...]

  mask = mask_ref[...]                                       # (nrows, C) bf16 {0,1}

  def conv3x3(slot, center):
    """3x3 conv as 9 value-space-accumulated MXU matmuls (BN scale pre-folded)."""
    acc = None
    for t in range(9):
      if t == 4:
        win = center                                         # reuse the center tap
      else:
        kh, kw = divmod(t, 3)
        off = GUARD + (kh - 1) * WP + (kw - 1)
        win = act[off:off + nrows, :]                        # (nrows, C) bf16
      part = jnp.dot(win, w_ref[0, slot * 9 + t],
                     preferred_element_type=jnp.float32)
      acc = part if acc is None else acc + part
    return acc                                               # (nrows, C) f32

  # --- conv A: input conv (step 0) or first conv of the residual block ------
  x_in = act[GUARD:GUARD + nrows, :]                         # block input (bf16)
  acc_a = conv3x3(0, x_in)
  y_a = jnp.maximum(acc_a + b_ref[0, 0], 0.0).astype(jnp.bfloat16) * mask
  act[GUARD:GUARD + nrows, :] = y_a

  # --- conv B: second conv of the residual block (+ residual, ReLU) ---------
  @pl.when(step > 0)
  def _():
    acc_b = conv3x3(1, y_a)
    y_b = jnp.maximum(acc_b + b_ref[0, 1] + x_in.astype(jnp.float32),
                      0.0).astype(jnp.bfloat16) * mask
    act[GUARD:GUARD + nrows, :] = y_b

    # Last step: fused 1x1 policy/value head convs (+ folded BN + ReLU) on the
    # in-register block output; only this small (nrows, 8) result goes to HBM.
    @pl.when(step == last)
    def _():
      h = jnp.dot(y_b, wh_ref[...], preferred_element_type=jnp.float32)
      out_ref[...] = jnp.maximum(h + hb_ref[...], 0.0)


def _board_mask():
  """(PFLAT, 1) f32: 1 at interior board positions of the flattened padded layout."""
  m = jnp.zeros((HP, WP), jnp.float32).at[1:1 + H, 1:1 + W].set(1.0)
  return m.reshape(PFLAT, 1)


def _run_tower(x_flat, prep, tb, bp):
  """x_flat: (bp*PFLAT, C) bf16 flat padded activations. Returns (bp*PFLAT, HEADC) f32."""
  nrows = tb * PFLAT
  ntiles = bp // tb
  mask = jnp.tile(_board_mask(), (tb, CHANNELS)).astype(jnp.bfloat16)   # (nrows, C)

  kernel = functools.partial(_tower_kernel, nrows=nrows)
  return pl.pallas_call(
      kernel,
      out_shape=jax.ShapeDtypeStruct((bp * PFLAT, HEADC), jnp.float32),
      grid_spec=pltpu.PrefetchScalarGridSpec(
          num_scalar_prefetch=0,
          grid=(ntiles, NUM_STEPS),
          in_specs=[
              pl.BlockSpec((nrows, CHANNELS), lambda bt, s: (bt, 0)),       # activations
              pl.BlockSpec((nrows, CHANNELS), lambda bt, s: (0, 0)),        # interior mask
              pl.BlockSpec((1, 2 * 9, CHANNELS, CHANNELS),
                           lambda bt, s: (s, 0, 0, 0)),                     # per-step weights
              pl.BlockSpec((1, 2, 1, CHANNELS), lambda bt, s: (s, 0, 0, 0)),# per-step biases
              pl.BlockSpec((CHANNELS, HEADC), lambda bt, s: (0, 0)),        # fused head conv w
              pl.BlockSpec((1, HEADC), lambda bt, s: (0, 0)),               # head bias
          ],
          out_specs=pl.BlockSpec((nrows, HEADC), lambda bt, s: (bt, 0)),
          scratch_shapes=[
              pltpu.VMEM((nrows + 2 * GUARD, CHANNELS), jnp.bfloat16),      # resident act
          ]),
      compiler_params=pltpu.CompilerParams(
          dimension_semantics=("parallel", "arbitrary"),
          vmem_limit_bytes=64 * 1024 * 1024),
  )(x_flat, mask, prep['w_stack'], prep['b_stack'], prep['wh'], prep['hb'])


# ---------------------------------------------------------------------------
# Kernel 2: fused policy + value projections
# ---------------------------------------------------------------------------
def _heads_kernel(p_ref, v_ref, wpp_ref, bpp_ref, w1_ref, b1_ref, w2_ref, b2_ref,
                  logp_ref, val_ref):
  # Policy: Linear(180 -> ACTION_PAD) + LogSoftmax (padded actions biased to -1e30).
  logits = jnp.dot(p_ref[...], wpp_ref[...], preferred_element_type=jnp.float32)
  logits = logits + bpp_ref[...]
  m = jnp.max(logits, axis=-1, keepdims=True)
  lse = jnp.log(jnp.sum(jnp.exp(logits - m), axis=-1, keepdims=True)) + m
  logp_ref[...] = logits - lse

  # Value: Linear(90 -> 256) + ReLU + Linear(256 -> 1) + Tanh.
  h = jnp.dot(v_ref[...], w1_ref[...], preferred_element_type=jnp.float32)
  h = jnp.maximum(h + b1_ref[...], 0.0)
  v = jnp.sum(h * w2_ref[...], axis=-1, keepdims=True) + b2_ref[...]
  val_ref[...] = jnp.tanh(v)


def _run_heads(p_in, v_in, prep):
  b = p_in.shape[0]
  if b <= 128:
    tm, bp = b, b
  else:
    tm = 128
    bp = ((b + tm - 1) // tm) * tm
    p_in = jnp.pad(p_in, ((0, bp - b), (0, 0)))
    v_in = jnp.pad(v_in, ((0, bp - b), (0, 0)))

  logp, val = pl.pallas_call(
      _heads_kernel,
      out_shape=(jax.ShapeDtypeStruct((bp, ACTION_PAD), jnp.float32),
                 jax.ShapeDtypeStruct((bp, 1), jnp.float32)),
      grid_spec=pltpu.PrefetchScalarGridSpec(
          num_scalar_prefetch=0,
          grid=(bp // tm,),
          in_specs=[
              pl.BlockSpec((tm, 2 * H * W), lambda i: (i, 0)),
              pl.BlockSpec((tm, H * W), lambda i: (i, 0)),
              pl.BlockSpec((2 * H * W, ACTION_PAD), lambda i: (0, 0)),
              pl.BlockSpec((1, ACTION_PAD), lambda i: (0, 0)),
              pl.BlockSpec((H * W, 256), lambda i: (0, 0)),
              pl.BlockSpec((1, 256), lambda i: (0, 0)),
              pl.BlockSpec((1, 256), lambda i: (0, 0)),
              pl.BlockSpec((1, 1), lambda i: (0, 0)),
          ],
          out_specs=(pl.BlockSpec((tm, ACTION_PAD), lambda i: (i, 0)),
                     pl.BlockSpec((tm, 1), lambda i: (i, 0)))),
      compiler_params=pltpu.CompilerParams(dimension_semantics=("parallel",)),
  )(p_in, v_in, prep['pp_w'], prep['pp_b'], prep['vp_w1'], prep['vp_b1'],
    prep['vp_w2'], prep['vp_b2'])
  return logp, val


# ---------------------------------------------------------------------------
# Parameters (deterministic, synthetic) and preparation (BN folding, packing)
# ---------------------------------------------------------------------------
def make_params(key, num_blocks=NUM_RESIDUAL_BLOCKS, emb_dim=EMBED_DIM,
                action_size=ACTION_SIZE):
  counter = [0]

  def nrm(shape, s=0.05):
    counter[0] += 1
    return (s * jax.random.normal(jax.random.fold_in(key, counter[0]),
                                  shape)).astype(jnp.float32)

  def bn(c):
    return dict(gamma=1.0 + nrm((c,), 0.02), beta=nrm((c,), 0.02),
                mean=nrm((c,), 0.02), var=jnp.abs(1.0 + nrm((c,), 0.02)))

  p = {}
  emb = nrm((15, emb_dim), 0.5)
  p['emb'] = emb.at[0].set(0.0)                       # padding_idx=0 -> zero row

  p['in_w'] = nrm((3, 3, emb_dim, CHANNELS))          # HWIO
  p['in_cb'] = nrm((CHANNELS,))
  p['in_bn'] = bn(CHANNELS)

  p['blocks'] = []
  for _ in range(num_blocks):
    p['blocks'].append(dict(
        w1=nrm((3, 3, CHANNELS, CHANNELS)), cb1=nrm((CHANNELS,)), bn1=bn(CHANNELS),
        w2=nrm((3, 3, CHANNELS, CHANNELS)), cb2=nrm((CHANNELS,)), bn2=bn(CHANNELS)))

  p['ph_w'] = nrm((CHANNELS, 2)); p['ph_cb'] = nrm((2,)); p['ph_bn'] = bn(2)
  p['pp_w'] = nrm((2 * H * W, action_size)); p['pp_b'] = nrm((action_size,))
  p['vh_w'] = nrm((CHANNELS, 1)); p['vh_cb'] = nrm((1,)); p['vh_bn'] = bn(1)
  p['vp_w1'] = nrm((H * W, 256)); p['vp_b1'] = nrm((256,))
  p['vp_w2'] = nrm((256, 1)); p['vp_b2'] = nrm((1,))
  return p


def _fold_bn(bnp, conv_bias):
  scale = bnp['gamma'] / jnp.sqrt(bnp['var'] + BN_EPS)
  bias = bnp['beta'] + scale * (conv_bias - bnp['mean'])
  return scale, bias


def prepare_params(p):
  prep = {'emb': p['emb']}

  def fold_conv(w_hwio, cb, bnp, cin_pad=0):
    """Fold BN scale into the conv weight; return ((9,Cin,Cout) weight, (Cout,) bias)."""
    s, b = _fold_bn(bnp, cb)
    w = w_hwio
    if cin_pad:
      w = jnp.pad(w, ((0, 0), (0, 0), (0, cin_pad), (0, 0)))
    w = w.reshape(9, CHANNELS, CHANNELS) * s[None, None, :]
    return w, b

  zeros_w = jnp.zeros((9, CHANNELS, CHANNELS), jnp.float32)
  zeros_b = jnp.zeros((CHANNELS,), jnp.float32)

  # Step 0: input conv in slot 0 (Cin zero-padded 80->128), slot 1 unused (zeros).
  w0, b0 = fold_conv(p['in_w'], p['in_cb'], p['in_bn'],
                     cin_pad=CHANNELS - EMBED_DIM)
  w_steps = [jnp.concatenate([w0, zeros_w], axis=0)]          # (18,128,128)
  b_steps = [jnp.stack([b0, zeros_b])]                        # (2,128)
  # Steps 1..7: residual block conv1 / conv2.
  for blk in p['blocks']:
    w1, bb1 = fold_conv(blk['w1'], blk['cb1'], blk['bn1'])
    w2, bb2 = fold_conv(blk['w2'], blk['cb2'], blk['bn2'])
    w_steps.append(jnp.concatenate([w1, w2], axis=0))
    b_steps.append(jnp.stack([bb1, bb2]))
  prep['w_stack'] = jnp.stack(w_steps).astype(jnp.bfloat16)                 # (8,18,128,128)
  prep['b_stack'] = jnp.stack(b_steps)[:, :, None, :].astype(jnp.float32)   # (8,2,1,128)

  # Fused 1x1 head convs (BN scale folded into weights): cols [p0, p1, v, 0*5].
  ph_s, ph_b = _fold_bn(p['ph_bn'], p['ph_cb'])
  vh_s, vh_b = _fold_bn(p['vh_bn'], p['vh_cb'])
  wh = jnp.zeros((CHANNELS, HEADC), jnp.float32)
  wh = wh.at[:, 0:2].set(p['ph_w'] * ph_s[None, :])
  wh = wh.at[:, 2:3].set(p['vh_w'] * vh_s[None, :])
  hb = jnp.zeros((HEADC,), jnp.float32).at[0:2].set(ph_b).at[2].set(vh_b[0])
  prep['wh'] = wh.astype(jnp.bfloat16)
  prep['hb'] = hb.reshape(1, HEADC)

  # Policy projection, action dim padded to 2176; padded columns biased to -1e30.
  pp_w = jnp.zeros((2 * H * W, ACTION_PAD), jnp.float32).at[:, :ACTION_SIZE].set(p['pp_w'])
  pp_b = jnp.full((ACTION_PAD,), -1e30, jnp.float32).at[:ACTION_SIZE].set(p['pp_b'])
  prep['pp_w'] = pp_w.astype(jnp.bfloat16)
  prep['pp_b'] = pp_b.reshape(1, ACTION_PAD)

  prep['vp_w1'] = p['vp_w1'].astype(jnp.bfloat16)
  prep['vp_b1'] = p['vp_b1'].reshape(1, 256)
  prep['vp_w2'] = p['vp_w2'].reshape(1, 256)          # used elementwise, keep f32
  prep['vp_b2'] = p['vp_b2'].reshape(1, 1)
  return prep


# ---------------------------------------------------------------------------
# Forward pass
# ---------------------------------------------------------------------------
def forward(prep, board):
  """board: (B, 10, 9) int32 piece indices in [0, 15). Returns (log_policy, value)."""
  b = board.shape[0]

  # XLA glue: embedding, channel pad 80->128, spatial zero-pad, flatten.
  x = jnp.take(prep['emb'], board, axis=0)                        # (B,10,9,80)
  x = jnp.pad(x, ((0, 0), (0, 0), (0, 0), (0, CHANNELS - EMBED_DIM)))
  xp = jnp.pad(x, ((0, 0), (1, 1), (1, 1), (0, 0)))               # (B,12,11,128)

  # Batch tiling: big tiles amortize per-step overhead + weight streaming; for
  # b > BATCH_TILE this yields >=2 tiles so the 'parallel' axis can use both
  # TensorCores on v7x.
  if b <= BATCH_TILE:
    tb, bp = b, b
  else:
    tb = BATCH_TILE
    bp = ((b + tb - 1) // tb) * tb
    xp = jnp.pad(xp, ((0, bp - b), (0, 0), (0, 0), (0, 0)))
  x_flat = xp.reshape(bp * PFLAT, CHANNELS).astype(jnp.bfloat16)

  # Fused tower + 1x1 head convs (single pallas_call).
  head_flat = _run_tower(x_flat, prep, tb, bp)                    # (bp*132, 8) f32

  # Extract board-interior positions; build the heads' flattened inputs.
  hv = head_flat.reshape(bp, HP, WP, HEADC)[:b, 1:1 + H, 1:1 + W, :]   # (B,10,9,8)
  ph = hv[..., 0:2]                                               # (B,10,9,2)
  p_in = jnp.transpose(ph, (0, 3, 1, 2)).reshape(b, 2 * H * W)    # NCHW-order flatten
  v_in = hv[..., 2].reshape(b, H * W)

  logp, val = _run_heads(p_in.astype(jnp.bfloat16), v_in.astype(jnp.bfloat16), prep)
  return logp[:b, :ACTION_SIZE], val[:b, 0]


if __name__ == "__main__":
  key = jax.random.PRNGKey(0)
  pkey, bkey = jax.random.split(key)
  params = make_params(pkey)
  prep = prepare_params(params)

  batch = 2
  board = jax.random.randint(bkey, (batch, H, W), 0, 15, dtype=jnp.int32)

  p, v = jax.jit(forward)(prep, board)
  jax.block_until_ready((p, v))

  assert p.shape == (batch, ACTION_SIZE) and p.dtype == jnp.float32
  assert v.shape == (batch,) and v.dtype == jnp.float32
  # log-softmax rows must sum to ~1 in prob space; value in [-1, 1].
  assert jnp.allclose(jnp.sum(jnp.exp(p), axis=-1), 1.0, atol=1e-3)
  assert bool(jnp.all(jnp.abs(v) <= 1.0))
  print("KERNEL_OK")
</pallas_src>

<mosaic_0001>
module attributes {stable_mosaic.version = 11 : i64} {
  func.func @_tower_kernel(%arg0: i32, %arg1: i32, %arg2: memref<264x128xbf16, #tpu.memory_space<vmem>>, %arg3: memref<264x128xbf16, #tpu.memory_space<vmem>>, %arg4: memref<1x18x128x128xbf16, #tpu.memory_space<vmem>>, %arg5: memref<1x2x1x128xf32, #tpu.memory_space<vmem>>, %arg6: memref<128x8xbf16, #tpu.memory_space<vmem>>, %arg7: memref<1x8xf32, #tpu.memory_space<vmem>>, %arg8: memref<264x8xf32, #tpu.memory_space<vmem>>, %arg9: memref<296x128xbf16, #tpu.memory_space<vmem>>) attributes {dimension_semantics = [#tpu.dimension_semantics<parallel>, #tpu.dimension_semantics<arbitrary>], iteration_bounds = array<i64: 1, 8>, scalar_prefetch = 0 : i64, scratch_operands = 1 : i64, tpu.core_type = #tpu.core_type<tc>, window_params = [{transform_indices = @transform_0, window_bounds = array<i64: 264, 128>}, {pipeline_mode = #tpu.pipeline_mode<synchronous>, transform_indices = @transform_1, window_bounds = array<i64: 264, 128>}, {transform_indices = @transform_2, window_bounds = array<i64: 1, 18, 128, 128>}, {transform_indices = @transform_3, window_bounds = array<i64: 1, 2, 1, 128>}, {pipeline_mode = #tpu.pipeline_mode<synchronous>, transform_indices = @transform_4, window_bounds = array<i64: 128, 8>}, {pipeline_mode = #tpu.pipeline_mode<synchronous>, transform_indices = @transform_5, window_bounds = array<i64: 1, 8>}, {transform_indices = @transform_6, window_bounds = array<i64: 264, 8>}]} {
    %c0_i32 = arith.constant 0 : i32
    %0 = arith.cmpi eq, %arg1, %c0_i32 : i32
    %1 = arith.extui %0 : i1 to i32
    %c0_i32_0 = arith.constant 0 : i32
    %2 = arith.cmpi ne, %1, %c0_i32_0 : i32
    scf.if %2 {
      %cst_59 = arith.constant 0.000000e+00 : bf16
      %60 = vector.broadcast %cst_59 : bf16 to vector<296x128xbf16>
      %c0_60 = arith.constant 0 : index
      %c0_61 = arith.constant 0 : index
      %61 = vector.load %arg9[%c0_60, %c0_61] : memref<296x128xbf16, #tpu.memory_space<vmem>>, vector<296x128xbf16>
      tpu.vector_store %arg9[%c0_60, %c0_61], %60 {strides = array<i32>} : memref<296x128xbf16, #tpu.memory_space<vmem>>, vector<296x128xbf16>,
      %c0_62 = arith.constant 0 : index
      %c0_63 = arith.constant 0 : index
      %62 = vector.load %arg2[%c0_62, %c0_63] : memref<264x128xbf16, #tpu.memory_space<vmem>>, vector<264x128xbf16>
      %c16_64 = arith.constant 16 : index
      %c0_65 = arith.constant 0 : index
      %63 = vector.load %arg9[%c16_64, %c0_65] : memref<296x128xbf16, #tpu.memory_space<vmem>>, vector<264x128xbf16>
      tpu.vector_store %arg9[%c16_64, %c0_65], %62 {strides = array<i32>} : memref<296x128xbf16, #tpu.memory_space<vmem>>, vector<264x128xbf16>,
    } else {
    }
    %c0 = arith.constant 0 : index
    %c0_1 = arith.constant 0 : index
    %3 = vector.load %arg3[%c0, %c0_1] : memref<264x128xbf16, #tpu.memory_space<vmem>>, vector<264x128xbf16>
    %c16 = arith.constant 16 : index
    %c0_2 = arith.constant 0 : index
    %4 = vector.load %arg9[%c16, %c0_2] : memref<296x128xbf16, #tpu.memory_space<vmem>>, vector<264x128xbf16>
    %c4 = arith.constant 4 : index
    %c0_3 = arith.constant 0 : index
    %5 = vector.load %arg9[%c4, %c0_3] : memref<296x128xbf16, #tpu.memory_space<vmem>>, vector<264x128xbf16>
    %c0_4 = arith.constant 0 : index
    %c0_5 = arith.constant 0 : index
    %c0_6 = arith.constant 0 : index
    %c0_7 = arith.constant 0 : index
    %6 = vector.load %arg4[%c0_4, %c0_5, %c0_6, %c0_7] : memref<1x18x128x128xbf16, #tpu.memory_space<vmem>>, vector<1x1x128x128xbf16>
    %7 = vector.shape_cast %6 : vector<1x1x128x128xbf16> to vector<128x128xbf16>
    %cst = arith.constant dense<0.000000e+00> : vector<264x128xf32>
    %8 = tpu.matmul %5, %7, %cst {dimension_numbers = #tpu.dot_dimension_numbers<[1], [0], [0], [1], [0, 0, 1, 1], [], []>} : vector<264x128xbf16>, vector<128x128xbf16>, vector<264x128xf32> -> vector<264x128xf32>
    %c5 = arith.constant 5 : index
    %c0_8 = arith.constant 0 : index
    %9 = vector.load %arg9[%c5, %c0_8] : memref<296x128xbf16, #tpu.memory_space<vmem>>, vector<264x128xbf16>
    %c0_9 = arith.constant 0 : index
    %c1 = arith.constant 1 : index
    %c0_10 = arith.constant 0 : index
    %c0_11 = arith.constant 0 : index
    %10 = vector.load %arg4[%c0_9, %c1, %c0_10, %c0_11] : memref<1x18x128x128xbf16, #tpu.memory_space<vmem>>, vector<1x1x128x128xbf16>
    %11 = vector.shape_cast %10 : vector<1x1x128x128xbf16> to vector<128x128xbf16>
    %cst_12 = arith.constant dense<0.000000e+00> : vector<264x128xf32>
    %12 = tpu.matmul %9, %11, %cst_12 {dimension_numbers = #tpu.dot_dimension_numbers<[1], [0], [0], [1], [0, 0, 1, 1], [], []>} : vector<264x128xbf16>, vector<128x128xbf16>, vector<264x128xf32> -> vector<264x128xf32>
    %13 = arith.addf %8, %12 : vector<264x128xf32>
    %c6 = arith.constant 6 : index
    %c0_13 = arith.constant 0 : index
    %14 = vector.load %arg9[%c6, %c0_13] : memref<296x128xbf16, #tpu.memory_space<vmem>>, vector<264x128xbf16>
    %c0_14 = arith.constant 0 : index
    %c2 = arith.constant 2 : index
    %c0_15 = arith.constant 0 : index
    %c0_16 = arith.constant 0 : index
    %15 = vector.load %arg4[%c0_14, %c2, %c0_15, %c0_16] : memref<1x18x128x128xbf16, #tpu.memory_space<vmem>>, vector<1x1x128x128xbf16>
    %16 = vector.shape_cast %15 : vector<1x1x128x128xbf16> to vector<128x128xbf16>
    %cst_17 = arith.constant dense<0.000000e+00> : vector<264x128xf32>
    %17 = tpu.matmul %14, %16, %cst_17 {dimension_numbers = #tpu.dot_dimension_numbers<[1], [0], [0], [1], [0, 0, 1, 1], [], []>} : vector<264x128xbf16>, vector<128x128xbf16>, vector<264x128xf32> -> vector<264x128xf32>
    %18 = arith.addf %13, %17 : vector<264x128xf32>
    %c15 = arith.constant 15 : index
    %c0_18 = arith.constant 0 : index
    %19 = vector.load %arg9[%c15, %c0_18] : memref<296x128xbf16, #tpu.memory_space<vmem>>, vector<264x128xbf16>
    %c0_19 = arith.constant 0 : index
    %c3 = arith.constant 3 : index
    %c0_20 = arith.constant 0 : index
    %c0_21 = arith.constant 0 : index
    %20 = vector.load %arg4[%c0_19, %c3, %c0_20, %c0_21] : memref<1x18x128x128xbf16, #tpu.memory_space<vmem>>, vector<1x1x128x128xbf16>
    %21 = vector.shape_cast %20 : vector<1x1x128x128xbf16> to vector<128x128xbf16>
    %cst_22 = arith.constant dense<0.000000e+00> : vector<264x128xf32>
    %22 = tpu.matmul %19, %21, %cst_22 {dimension_numbers = #tpu.dot_dimension_numbers<[1], [0], [0], [1], [0, 0, 1, 1], [], []>} : vector<264x128xbf16>, vector<128x128xbf16>, vector<264x128xf32> -> vector<264x128xf32>
    %23 = arith.addf %18, %22 : vector<264x128xf32>
    %c0_23 = arith.constant 0 : index
    %c4_24 = arith.constant 4 : index
    %c0_25 = arith.constant 0 : index
    %c0_26 = arith.constant 0 : index
    %24 = vector.load %arg4[%c0_23, %c4_24, %c0_25, %c0_26] : memref<1x18x128x128xbf16, #tpu.memory_space<vmem>>, vector<1x1x128x128xbf16>
    %25 = vector.shape_cast %24 : vector<1x1x128x128xbf16> to vector<128x128xbf16>
    %cst_27 = arith.constant dense<0.000000e+00> : vector<264x128xf32>
    %26 = tpu.matmul %4, %25, %cst_27 {dimension_numbers = #tpu.dot_dimension_numbers<[1], [0], [0], [1], [0, 0, 1, 1], [], []>} : vector<264x128xbf16>, vector<128x128xbf16>, vector<264x128xf32> -> vector<264x128xf32>
    %27 = arith.addf %23, %26 : vector<264x128xf32>
    %c17 = arith.constant 17 : index
    %c0_28 = arith.constant 0 : index
    %28 = vector.load %arg9[%c17, %c0_28] : memref<296x128xbf16, #tpu.memory_space<vmem>>, vector<264x128xbf16>
    %c0_29 = arith.constant 0 : index
    %c5_30 = arith.constant 5 : index
    %c0_31 = arith.constant 0 : index
    %c0_32 = arith.constant 0 : index
    %29 = vector.load %arg4[%c0_29, %c5_30, %c0_31, %c0_32] : memref<1x18x128x128xbf16, #tpu.memory_space<vmem>>, vector<1x1x128x128xbf16>
    %30 = vector.shape_cast %29 : vector<1x1x128x128xbf16> to vector<128x128xbf16>
    %cst_33 = arith.constant dense<0.000000e+00> : vector<264x128xf32>
    %31 = tpu.matmul %28, %30, %cst_33 {dimension_numbers = #tpu.dot_dimension_numbers<[1], [0], [0], [1], [0, 0, 1, 1], [], []>} : vector<264x128xbf16>, vector<128x128xbf16>, vector<264x128xf32> -> vector<264x128xf32>
    %32 = arith.addf %27, %31 : vector<264x128xf32>
    %c26 = arith.constant 26 : index
    %c0_34 = arith.constant 0 : index
    %33 = vector.load %arg9[%c26, %c0_34] : memref<296x128xbf16, #tpu.memory_space<vmem>>, vector<264x128xbf16>
    %c0_35 = arith.constant 0 : index
    %c6_36 = arith.constant 6 : index
    %c0_37 = arith.constant 0 : index
    %c0_38 = arith.constant 0 : index
    %34 = vector.load %arg4[%c0_35, %c6_36, %c0_37, %c0_38] : memref<1x18x128x128xbf16, #tpu.memory_space<vmem>>, vector<1x1x128x128xbf16>
    %35 = vector.shape_cast %34 : vector<1x1x128x128xbf16> to vector<128x128xbf16>
    %cst_39 = arith.constant dense<0.000000e+00> : vector<264x128xf32>
    %36 = tpu.matmul %33, %35, %cst_39 {dimension_numbers = #tpu.dot_dimension_numbers<[1], [0], [0], [1], [0, 0, 1, 1], [], []>} : vector<264x128xbf16>, vector<128x128xbf16>, vector<264x128xf32> -> vector<264x128xf32>
    %37 = arith.addf %32, %36 : vector<264x128xf32>
    %c27 = arith.constant 27 : index
    %c0_40 = arith.constant 0 : index
    %38 = vector.load %arg9[%c27, %c0_40] : memref<296x128xbf16, #tpu.memory_space<vmem>>, vector<264x128xbf16>
    %c0_41 = arith.constant 0 : index
    %c7 = arith.constant 7 : index
    %c0_42 = arith.constant 0 : index
    %c0_43 = arith.constant 0 : index
    %39 = vector.load %arg4[%c0_41, %c7, %c0_42, %c0_43] : memref<1x18x128x128xbf16, #tpu.memory_space<vmem>>, vector<1x1x128x128xbf16>
    %40 = vector.shape_cast %39 : vector<1x1x128x128xbf16> to vector<128x128xbf16>
    %cst_44 = arith.constant dense<0.000000e+00> : vector<264x128xf32>
    %41 = tpu.matmul %38, %40, %cst_44 {dimension_numbers = #tpu.dot_dimension_numbers<[1], [0], [0], [1], [0, 0, 1, 1], [], []>} : vector<264x128xbf16>, vector<128x128xbf16>, vector<264x128xf32> -> vector<264x128xf32>
    %42 = arith.addf %37, %41 : vector<264x128xf32>
    %c28 = arith.constant 28 : index
    %c0_45 = arith.constant 0 : index
    %43 = vector.load %arg9[%c28, %c0_45] : memref<296x128xbf16, #tpu.memory_space<vmem>>, vector<264x128xbf16>
    %c0_46 = arith.constant 0 : index
    %c8 = arith.constant 8 : index
    %c0_47 = arith.constant 0 : index
    %c0_48 = arith.constant 0 : index
    %44 = vector.load %arg4[%c0_46, %c8, %c0_47, %c0_48] : memref<1x18x128x128xbf16, #tpu.memory_space<vmem>>, vector<1x1x128x128xbf16>
    %45 = vector.shape_cast %44 : vector<1x1x128x128xbf16> to vector<128x128xbf16>
    %cst_49 = arith.constant dense<0.000000e+00> : vector<264x128xf32>
    %46 = tpu.matmul %43, %45, %cst_49 {dimension_numbers = #tpu.dot_dimension_numbers<[1], [0], [0], [1], [0, 0, 1, 1], [], []>} : vector<264x128xbf16>, vector<128x128xbf16>, vector<264x128xf32> -> vector<264x128xf32>
    %47 = arith.addf %42, %46 : vector<264x128xf32>
    %c0_50 = arith.constant 0 : index
    %c0_51 = arith.constant 0 : index
    %c0_52 = arith.constant 0 : index
    %c0_53 = arith.constant 0 : index
    %48 = vector.load %arg5[%c0_50, %c0_51, %c0_52, %c0_53] : memref<1x2x1x128xf32, #tpu.memory_space<vmem>>, vector<1x1x1x128xf32>
    %49 = vector.shape_cast %48 : vector<1x1x1x128xf32> to vector<1x128xf32>
    %50 = vector.broadcast %49 : vector<1x128xf32> to vector<264x128xf32>
    %51 = arith.addf %47, %50 : vector<264x128xf32>
    %cst_54 = arith.constant 0.000000e+00 : f32
    %52 = vector.broadcast %cst_54 : f32 to vector<264x128xf32>
    %53 = arith.maximumf %51, %52 : vector<264x128xf32>
    %54 = arith.truncf %53 : vector<264x128xf32> to vector<264x128xbf16>
    %55 = arith.mulf %54, %3 : vector<264x128xbf16>
    %c16_55 = arith.constant 16 : index
    %c0_56 = arith.constant 0 : index
    %56 = vector.load %arg9[%c16_55, %c0_56] : memref<296x128xbf16, #tpu.memory_space<vmem>>, vector<264x128xbf16>
    tpu.vector_store %arg9[%c16_55, %c0_56], %55 {strides = array<i32>} : memref<296x128xbf16, #tpu.memory_space<vmem>>, vector<264x128xbf16>,
    %c0_i32_57 = arith.constant 0 : i32
    %57 = arith.cmpi sgt, %arg1, %c0_i32_57 : i32
    %58 = arith.extui %57 : i1 to i32
    %c0_i32_58 = arith.constant 0 : i32
    %59 = arith.cmpi ne, %58, %c0_i32_58 : i32
    scf.if %59 {
      %c4_59 = arith.constant 4 : index
      %c0_60 = arith.constant 0 : index
      %60 = vector.load %arg9[%c4_59, %c0_60] : memref<296x128xbf16, #tpu.memory_space<vmem>>, vector<264x128xbf16>
      %c0_61 = arith.constant 0 : index
      %c9 = arith.constant 9 : index
      %c0_62 = arith.constant 0 : index
      %c0_63 = arith.constant 0 : index
      %61 = vector.load %arg4[%c0_61, %c9, %c0_62, %c0_63] : memref<1x18x128x128xbf16, #tpu.memory_space<vmem>>, vector<1x1x128x128xbf16>
      %62 = vector.shape_cast %61 : vector<1x1x128x128xbf16> to vector<128x128xbf16>
      %cst_64 = arith.constant dense<0.000000e+00> : vector<264x128xf32>
      %63 = tpu.matmul %60, %62, %cst_64 {dimension_numbers = #tpu.dot_dimension_numbers<[1], [0], [0], [1], [0, 0, 1, 1], [], []>} : vector<264x128xbf16>, vector<128x128xbf16>, vector<264x128xf32> -> vector<264x128xf32>
      %c5_65 = arith.constant 5 : index
      %c0_66 = arith.constant 0 : index
      %64 = vector.load %arg9[%c5_65, %c0_66] : memref<296x128xbf16, #tpu.memory_space<vmem>>, vector<264x128xbf16>
      %c0_67 = arith.constant 0 : index
      %c10 = arith.constant 10 : index
      %c0_68 = arith.constant 0 : index
      %c0_69 = arith.constant 0 : index
      %65 = vector.load %arg4[%c0_67, %c10, %c0_68, %c0_69] : memref<1x18x128x128xbf16, #tpu.memory_space<vmem>>, vector<1x1x128x128xbf16>
      %66 = vector.shape_cast %65 : vector<1x1x128x128xbf16> to vector<128x128xbf16>
      %cst_70 = arith.constant dense<0.000000e+00> : vector<264x128xf32>
      %67 = tpu.matmul %64, %66, %cst_70 {dimension_numbers = #tpu.dot_dimension_numbers<[1], [0], [0], [1], [0, 0, 1, 1], [], []>} : vector<264x128xbf16>, vector<128x128xbf16>, vector<264x128xf32> -> vector<264x128xf32>
      %68 = arith.addf %63, %67 : vector<264x128xf32>
      %c6_71 = arith.constant 6 : index
      %c0_72 = arith.constant 0 : index
      %69 = vector.load %arg9[%c6_71, %c0_72] : memref<296x128xbf16, #tpu.memory_space<vmem>>, vector<264x128xbf16>
      %c0_73 = arith.constant 0 : index
      %c11 = arith.constant 11 : index
      %c0_74 = arith.constant 0 : index
      %c0_75 = arith.constant 0 : index
      %70 = vector.load %arg4[%c0_73, %c11, %c0_74, %c0_75] : memref<1x18x128x128xbf16, #tpu.memory_space<vmem>>, vector<1x1x128x128xbf16>
      %71 = vector.shape_cast %70 : vector<1x1x128x128xbf16> to vector<128x128xbf16>
      %cst_76 = arith.constant dense<0.000000e+00> : vector<264x128xf32>
      %72 = tpu.matmul %69, %71, %cst_76 {dimension_numbers = #tpu.dot_dimension_numbers<[1], [0], [0], [1], [0, 0, 1, 1], [], []>} : vector<264x128xbf16>, vector<128x128xbf16>, vector<264x128xf32> -> vector<264x128xf32>
      %73 = arith.addf %68, %72 : vector<264x128xf32>
      %c15_77 = arith.constant 15 : index
      %c0_78 = arith.constant 0 : index
      %74 = vector.load %arg9[%c15_77, %c0_78] : memref<296x128xbf16, #tpu.memory_space<vmem>>, vector<264x128xbf16>
      %c0_79 = arith.constant 0 : index
      %c12 = arith.constant 12 : index
      %c0_80 = arith.constant 0 : index
      %c0_81 = arith.constant 0 : index
      %75 = vector.load %arg4[%c0_79, %c12, %c0_80, %c0_81] : memref<1x18x128x128xbf16, #tpu.memory_space<vmem>>, vector<1x1x128x128xbf16>
      %76 = vector.shape_cast %75 : vector<1x1x128x128xbf16> to vector<128x128xbf16>
      %cst_82 = arith.constant dense<0.000000e+00> : vector<264x128xf32>
      %77 = tpu.matmul %74, %76, %cst_82 {dimension_numbers = #tpu.dot_dimension_numbers<[1], [0], [0], [1], [0, 0, 1, 1], [], []>} : vector<264x128xbf16>, vector<128x128xbf16>, vector<264x128xf32> -> vector<264x128xf32>
      %78 = arith.addf %73, %77 : vector<264x128xf32>
      %c0_83 = arith.constant 0 : index
      %c13 = arith.constant 13 : index
      %c0_84 = arith.constant 0 : index
      %c0_85 = arith.constant 0 : index
      %79 = vector.load %arg4[%c0_83, %c13, %c0_84, %c0_85] : memref<1x18x128x128xbf16, #tpu.memory_space<vmem>>, vector<1x1x128x128xbf16>
      %80 = vector.shape_cast %79 : vector<1x1x128x128xbf16> to vector<128x128xbf16>
      %cst_86 = arith.constant dense<0.000000e+00> : vector<264x128xf32>
      %81 = tpu.matmul %55, %80, %cst_86 {dimension_numbers = #tpu.dot_dimension_numbers<[1], [0], [0], [1], [0, 0, 1, 1], [], []>} : vector<264x128xbf16>, vector<128x128xbf16>, vector<264x128xf32> -> vector<264x128xf32>
      %82 = arith.addf %78, %81 : vector<264x128xf32>
      %c17_87 = arith.constant 17 : index
      %c0_88 = arith.constant 0 : index
      %83 = vector.load %arg9[%c17_87, %c0_88] : memref<296x128xbf16, #tpu.memory_space<vmem>>, vector<264x128xbf16>
      %c0_89 = arith.constant 0 : index
      %c14 = arith.constant 14 : index
      %c0_90 = arith.constant 0 : index
      %c0_91 = arith.constant 0 : index
      %84 = vector.load %arg4[%c0_89, %c14, %c0_90, %c0_91] : memref<1x18x128x128xbf16, #tpu.memory_space<vmem>>, vector<1x1x128x128xbf16>
      %85 = vector.shape_cast %84 : vector<1x1x128x128xbf16> to vector<128x128xbf16>
      %cst_92 = arith.constant dense<0.000000e+00> : vector<264x128xf32>
      %86 = tpu.matmul %83, %85, %cst_92 {dimension_numbers = #tpu.dot_dimension_numbers<[1], [0], [0], [1], [0, 0, 1, 1], [], []>} : vector<264x128xbf16>, vector<128x128xbf16>, vector<264x128xf32> -> vector<264x128xf32>
      %87 = arith.addf %82, %86 : vector<264x128xf32>
      %c26_93 = arith.constant 26 : index
      %c0_94 = arith.constant 0 : index
      %88 = vector.load %arg9[%c26_93, %c0_94] : memref<296x128xbf16, #tpu.memory_space<vmem>>, vector<264x128xbf16>
      %c0_95 = arith.constant 0 : index
      %c15_96 = arith.constant 15 : index
      %c0_97 = arith.constant 0 : index
      %c0_98 = arith.constant 0 : index
      %89 = vector.load %arg4[%c0_95, %c15_96, %c0_97, %c0_98] : memref<1x18x128x128xbf16, #tpu.memory_space<vmem>>, vector<1x1x128x128xbf16>
      %90 = vector.shape_cast %89 : vector<1x1x128x128xbf16> to vector<128x128xbf16>
      %cst_99 = arith.constant dense<0.000000e+00> : vector<264x128xf32>
      %91 = tpu.matmul %88, %90, %cst_99 {dimension_numbers = #tpu.dot_dimension_numbers<[1], [0], [0], [1], [0, 0, 1, 1], [], []>} : vector<264x128xbf16>, vector<128x128xbf16>, vector<264x128xf32> -> vector<264x128xf32>
      %92 = arith.addf %87, %91 : vector<264x128xf32>
      %c27_100 = arith.constant 27 : index
      %c0_101 = arith.constant 0 : index
      %93 = vector.load %arg9[%c27_100, %c0_101] : memref<296x128xbf16, #tpu.memory_space<vmem>>, vector<264x128xbf16>
      %c0_102 = arith.constant 0 : index
      %c16_103 = arith.constant 16 : index
      %c0_104 = arith.constant 0 : index
      %c0_105 = arith.constant 0 : index
      %94 = vector.load %arg4[%c0_102, %c16_103, %c0_104, %c0_105] : memref<1x18x128x128xbf16, #tpu.memory_space<vmem>>, vector<1x1x128x128xbf16>
      %95 = vector.shape_cast %94 : vector<1x1x128x128xbf16> to vector<128x128xbf16>
      %cst_106 = arith.constant dense<0.000000e+00> : vector<264x128xf32>
      %96 = tpu.matmul %93, %95, %cst_106 {dimension_numbers = #tpu.dot_dimension_numbers<[1], [0], [0], [1], [0, 0, 1, 1], [], []>} : vector<264x128xbf16>, vector<128x128xbf16>, vector<264x128xf32> -> vector<264x128xf32>
      %97 = arith.addf %92, %96 : vector<264x128xf32>
      %c28_107 = arith.constant 28 : index
      %c0_108 = arith.constant 0 : index
      %98 = vector.load %arg9[%c28_107, %c0_108] : memref<296x128xbf16, #tpu.memory_space<vmem>>, vector<264x128xbf16>
      %c0_109 = arith.constant 0 : index
      %c17_110 = arith.constant 17 : index
      %c0_111 = arith.constant 0 : index
      %c0_112 = arith.constant 0 : index
      %99 = vector.load %arg4[%c0_109, %c17_110, %c0_111, %c0_112] : memref<1x18x128x128xbf16, #tpu.memory_space<vmem>>, vector<1x1x128x128xbf16>
      %100 = vector.shape_cast %99 : vector<1x1x128x128xbf16> to vector<128x128xbf16>
      %cst_113 = arith.constant dense<0.000000e+00> : vector<264x128xf32>
      %101 = tpu.matmul %98, %100, %cst_113 {dimension_numbers = #tpu.dot_dimension_numbers<[1], [0], [0], [1], [0, 0, 1, 1], [], []>} : vector<264x128xbf16>, vector<128x128xbf16>, vector<264x128xf32> -> vector<264x128xf32>
      %102 = arith.addf %97, %101 : vector<264x128xf32>
      %c0_114 = arith.constant 0 : index
      %c1_115 = arith.constant 1 : index
      %c0_116 = arith.constant 0 : index
      %c0_117 = arith.constant 0 : index
      %103 = vector.load %arg5[%c0_114, %c1_115, %c0_116, %c0_117] : memref<1x2x1x128xf32, #tpu.memory_space<vmem>>, vector<1x1x1x128xf32>
      %104 = vector.shape_cast %103 : vector<1x1x1x128xf32> to vector<1x128xf32>
      %105 = vector.broadcast %104 : vector<1x128xf32> to vector<264x128xf32>
      %106 = arith.addf %102, %105 : vector<264x128xf32>
      %107 = arith.extf %4 : vector<264x128xbf16> to vector<264x128xf32>
      %108 = arith.addf %106, %107 : vector<264x128xf32>
      %cst_118 = arith.constant 0.000000e+00 : f32
      %109 = vector.broadcast %cst_118 : f32 to vector<264x128xf32>
      %110 = arith.maximumf %108, %109 : vector<264x128xf32>
      %111 = arith.truncf %110 : vector<264x128xf32> to vector<264x128xbf16>
      %112 = arith.mulf %111, %3 : vector<264x128xbf16>
      %c16_119 = arith.constant 16 : index
      %c0_120 = arith.constant 0 : index
      %113 = vector.load %arg9[%c16_119, %c0_120] : memref<296x128xbf16, #tpu.memory_space<vmem>>, vector<264x128xbf16>
      tpu.vector_store %arg9[%c16_119, %c0_120], %112 {strides = array<i32>} : memref<296x128xbf16, #tpu.memory_space<vmem>>, vector<264x128xbf16>,
      %c7_i32 = arith.constant 7 : i32
      %114 = arith.cmpi eq, %arg1, %c7_i32 : i32
      %115 = arith.extui %114 : i1 to i32
      %c0_i32_121 = arith.constant 0 : i32
      %116 = arith.cmpi ne, %115, %c0_i32_121 : i32
      scf.if %116 {
        %c0_122 = arith.constant 0 : index
        %c0_123 = arith.constant 0 : index
        %117 = vector.load %arg6[%c0_122, %c0_123] : memref<128x8xbf16, #tpu.memory_space<vmem>>, vector<128x8xbf16>
        %cst_124 = arith.constant dense<0.000000e+00> : vector<264x8xf32>
        %118 = tpu.matmul %112, %117, %cst_124 {dimension_numbers = #tpu.dot_dimension_numbers<[1], [0], [0], [1], [0, 0, 1, 1], [], []>} : vector<264x128xbf16>, vector<128x8xbf16>, vector<264x8xf32> -> vector<264x8xf32>
        %c0_125 = arith.constant 0 : index
        %c0_126 = arith.constant 0 : index
        %119 = vector.load %arg7[%c0_125, %c0_126] : memref<1x8xf32, #tpu.memory_space<vmem>>, vector<1x8xf32>
        %120 = vector.broadcast %119 : vector<1x8xf32> to vector<264x8xf32>
        %121 = arith.addf %118, %120 : vector<264x8xf32>
        %cst_127 = arith.constant 0.000000e+00 : f32
        %122 = vector.broadcast %cst_127 : f32 to vector<264x8xf32>
        %123 = arith.maximumf %121, %122 : vector<264x8xf32>
        %c0_128 = arith.constant 0 : index
        %c0_129 = arith.constant 0 : index
        %124 = vector.load %arg8[%c0_128, %c0_129] : memref<264x8xf32, #tpu.memory_space<vmem>>, vector<264x8xf32>
        tpu.vector_store %arg8[%c0_128, %c0_129], %123 {strides = array<i32>} : memref<264x8xf32, #tpu.memory_space<vmem>>, vector<264x8xf32>,
      } else {
      }
    } else {
    }
    return
  }
  func.func @transform_0(%arg0: i32, %arg1: i32) -> (i32, i32) {
    %c0_i32 = arith.constant 0 : i32
    %c0_i32_0 = arith.constant 0 : i32
    return %arg0, %c0_i32 : i32, i32
  }
  func.func @transform_1(%arg0: i32, %arg1: i32) -> (i32, i32) {
    %c0_i32 = arith.constant 0 : i32
    %c0_i32_0 = arith.constant 0 : i32
    %c0_i32_1 = arith.constant 0 : i32
    return %c0_i32, %c0_i32_0 : i32, i32
  }
  func.func @transform_2(%arg0: i32, %arg1: i32) -> (i32, i32, i32, i32) {
    %c0_i32 = arith.constant 0 : i32
    %c0_i32_0 = arith.constant 0 : i32
    %c0_i32_1 = arith.constant 0 : i32
    %c0_i32_2 = arith.constant 0 : i32
    return %arg1, %c0_i32, %c0_i32_0, %c0_i32_1 : i32, i32, i32, i32
  }
  func.func @transform_3(%arg0: i32, %arg1: i32) -> (i32, i32, i32, i32) {
    %c0_i32 = arith.constant 0 : i32
    %c0_i32_0 = arith.constant 0 : i32
    %c0_i32_1 = arith.constant 0 : i32
    %c0_i32_2 = arith.constant 0 : i32
    return %arg1, %c0_i32, %c0_i32_0, %c0_i32_1 : i32, i32, i32, i32
  }
  func.func @transform_4(%arg0: i32, %arg1: i32) -> (i32, i32) {
    %c0_i32 = arith.constant 0 : i32
    %c0_i32_0 = arith.constant 0 : i32
    %c0_i32_1 = arith.constant 0 : i32
    return %c0_i32, %c0_i32_0 : i32, i32
  }
  func.func @transform_5(%arg0: i32, %arg1: i32) -> (i32, i32) {
    %c0_i32 = arith.constant 0 : i32
    %c0_i32_0 = arith.constant 0 : i32
    %c0_i32_1 = arith.constant 0 : i32
    return %c0_i32, %c0_i32_0 : i32, i32
  }
  func.func @transform_6(%arg0: i32, %arg1: i32) -> (i32, i32) {
    %c0_i32 = arith.constant 0 : i32
    %c0_i32_0 = arith.constant 0 : i32
    return %arg0, %c0_i32 : i32, i32
  }
}

module attributes {stable_mosaic.version = 11 : i64} {
  func.func @_heads_kernel(%arg0: i32, %arg1: memref<2x180xbf16, #tpu.memory_space<vmem>>, %arg2: memref<2x90xbf16, #tpu.memory_space<vmem>>, %arg3: memref<180x2176xbf16, #tpu.memory_space<vmem>>, %arg4: memref<1x2176xf32, #tpu.memory_space<vmem>>, %arg5: memref<90x256xbf16, #tpu.memory_space<vmem>>, %arg6: memref<1x256xf32, #tpu.memory_space<vmem>>, %arg7: memref<1x256xf32, #tpu.memory_space<vmem>>, %arg8: memref<1x1xf32, #tpu.memory_space<vmem>>, %arg9: memref<2x2176xf32, #tpu.memory_space<vmem>>, %arg10: memref<2x1xf32, #tpu.memory_space<vmem>>) attributes {dimension_semantics = [#tpu.dimension_semantics<parallel>], iteration_bounds = array<i64: 1>, scalar_prefetch = 0 : i64, scratch_operands = 0 : i64, tpu.core_type = #tpu.core_type<tc>, window_params = [{transform_indices = @transform_0, window_bounds = array<i64: 2, 180>}, {transform_indices = @transform_1, window_bounds = array<i64: 2, 90>}, {pipeline_mode = #tpu.pipeline_mode<synchronous>, transform_indices = @transform_2, window_bounds = array<i64: 180, 2176>}, {pipeline_mode = #tpu.pipeline_mode<synchronous>, transform_indices = @transform_3, window_bounds = array<i64: 1, 2176>}, {pipeline_mode = #tpu.pipeline_mode<synchronous>, transform_indices = @transform_4, window_bounds = array<i64: 90, 256>}, {pipeline_mode = #tpu.pipeline_mode<synchronous>, transform_indices = @transform_5, window_bounds = array<i64: 1, 256>}, {pipeline_mode = #tpu.pipeline_mode<synchronous>, transform_indices = @transform_6, window_bounds = array<i64: 1, 256>}, {pipeline_mode = #tpu.pipeline_mode<synchronous>, transform_indices = @transform_7, window_bounds = array<i64: 1, 1>}, {transform_indices = @transform_8, window_bounds = array<i64: 2, 2176>}, {transform_indices = @transform_9, window_bounds = array<i64: 2, 1>}]} {
    %c0 = arith.constant 0 : index
    %c0_0 = arith.constant 0 : index
    %0 = vector.load %arg1[%c0, %c0_0] : memref<2x180xbf16, #tpu.memory_space<vmem>>, vector<2x180xbf16>
    %c0_1 = arith.constant 0 : index
    %c0_2 = arith.constant 0 : index
    %1 = vector.load %arg3[%c0_1, %c0_2] : memref<180x2176xbf16, #tpu.memory_space<vmem>>, vector<180x2176xbf16>
    %cst = arith.constant dense<0.000000e+00> : vector<2x2176xf32>
    %2 = tpu.matmul %0, %1, %cst {dimension_numbers = #tpu.dot_dimension_numbers<[1], [0], [0], [1], [0, 0, 1, 1], [], []>} : vector<2x180xbf16>, vector<180x2176xbf16>, vector<2x2176xf32> -> vector<2x2176xf32>
    %c0_3 = arith.constant 0 : index
    %c0_4 = arith.constant 0 : index
    %3 = vector.load %arg4[%c0_3, %c0_4] : memref<1x2176xf32, #tpu.memory_space<vmem>>, vector<1x2176xf32>
    %4 = vector.broadcast %3 : vector<1x2176xf32> to vector<2x2176xf32>
    %5 = arith.addf %2, %4 : vector<2x2176xf32>
    %cst_5 = arith.constant dense<0xFF800000> : vector<2xf32>
    %6 = vector.multi_reduction <maximumf>, %5, %cst_5 [1] : vector<2x2176xf32> to vector<2xf32>
    %7 = vector.shape_cast %6 : vector<2xf32> to vector<2x1xf32>
    %8 = vector.broadcast %7 : vector<2x1xf32> to vector<2x2176xf32>
    %9 = arith.subf %5, %8 : vector<2x2176xf32>
    %10 = math.exp %9 : vector<2x2176xf32>
    %cst_6 = arith.constant dense<0.000000e+00> : vector<2xf32>
    %11 = vector.multi_reduction <add>, %10, %cst_6 [1] : vector<2x2176xf32> to vector<2xf32>
    %12 = vector.shape_cast %11 : vector<2xf32> to vector<2x1xf32>
    %13 = math.log %12 : vector<2x1xf32>
    %14 = arith.addf %13, %7 : vector<2x1xf32>
    %15 = vector.broadcast %14 : vector<2x1xf32> to vector<2x2176xf32>
    %16 = arith.subf %5, %15 : vector<2x2176xf32>
    %c0_7 = arith.constant 0 : index
    %c0_8 = arith.constant 0 : index
    %17 = vector.load %arg9[%c0_7, %c0_8] : memref<2x2176xf32, #tpu.memory_space<vmem>>, vector<2x2176xf32>
    tpu.vector_store %arg9[%c0_7, %c0_8], %16 {strides = array<i32>} : memref<2x2176xf32, #tpu.memory_space<vmem>>, vector<2x2176xf32>,
    %c0_9 = arith.constant 0 : index
    %c0_10 = arith.constant 0 : index
    %18 = vector.load %arg2[%c0_9, %c0_10] : memref<2x90xbf16, #tpu.memory_space<vmem>>, vector<2x90xbf16>
    %c0_11 = arith.constant 0 : index
    %c0_12 = arith.constant 0 : index
    %19 = vector.load %arg5[%c0_11, %c0_12] : memref<90x256xbf16, #tpu.memory_space<vmem>>, vector<90x256xbf16>
    %cst_13 = arith.constant dense<0.000000e+00> : vector<2x256xf32>
    %20 = tpu.matmul %18, %19, %cst_13 {dimension_numbers = #tpu.dot_dimension_numbers<[1], [0], [0], [1], [0, 0, 1, 1], [], []>} : vector<2x90xbf16>, vector<90x256xbf16>, vector<2x256xf32> -> vector<2x256xf32>
    %c0_14 = arith.constant 0 : index
    %c0_15 = arith.constant 0 : index
    %21 = vector.load %arg6[%c0_14, %c0_15] : memref<1x256xf32, #tpu.memory_space<vmem>>, vector<1x256xf32>
    %22 = vector.broadcast %21 : vector<1x256xf32> to vector<2x256xf32>
    %23 = arith.addf %20, %22 : vector<2x256xf32>
    %cst_16 = arith.constant 0.000000e+00 : f32
    %24 = vector.broadcast %cst_16 : f32 to vector<2x256xf32>
    %25 = arith.maximumf %23, %24 : vector<2x256xf32>
    %c0_17 = arith.constant 0 : index
    %c0_18 = arith.constant 0 : index
    %26 = vector.load %arg7[%c0_17, %c0_18] : memref<1x256xf32, #tpu.memory_space<vmem>>, vector<1x256xf32>
    %27 = vector.broadcast %26 : vector<1x256xf32> to vector<2x256xf32>
    %28 = arith.mulf %25, %27 : vector<2x256xf32>
    %cst_19 = arith.constant dense<0.000000e+00> : vector<2xf32>
    %29 = vector.multi_reduction <add>, %28, %cst_19 [1] : vector<2x256xf32> to vector<2xf32>
    %30 = vector.shape_cast %29 : vector<2xf32> to vector<2x1xf32>
    %c0_20 = arith.constant 0 : index
    %c0_21 = arith.constant 0 : index
    %31 = vector.load %arg8[%c0_20, %c0_21] : memref<1x1xf32, #tpu.memory_space<vmem>>, vector<1x1xf32>
    %32 = vector.broadcast %31 : vector<1x1xf32> to vector<2x1xf32>
    %33 = arith.addf %30, %32 : vector<2x1xf32>
    %34 = math.tanh %33 : vector<2x1xf32>
    %c0_22 = arith.constant 0 : index
    %c0_23 = arith.constant 0 : index
    %35 = vector.load %arg10[%c0_22, %c0_23] : memref<2x1xf32, #tpu.memory_space<vmem>>, vector<2x1xf32>
    tpu.vector_store %arg10[%c0_22, %c0_23], %34 {strides = array<i32>} : memref<2x1xf32, #tpu.memory_space<vmem>>, vector<2x1xf32>,
    return
  }
  func.func @transform_0(%arg0: i32) -> (i32, i32) {
    %c0_i32 = arith.constant 0 : i32
    %c0_i32_0 = arith.constant 0 : i32
    return %arg0, %c0_i32 : i32, i32
  }
  func.func @transform_1(%arg0: i32) -> (i32, i32) {
    %c0_i32 = arith.constant 0 : i32
    %c0_i32_0 = arith.constant 0 : i32
    return %arg0, %c0_i32 : i32, i32
  }
  func.func @transform_2(%arg0: i32) -> (i32, i32) {
    %c0_i32 = arith.constant 0 : i32
    %c0_i32_0 = arith.constant 0 : i32
    %c0_i32_1 = arith.constant 0 : i32
    return %c0_i32, %c0_i32_0 : i32, i32
  }
  func.func @transform_3(%arg0: i32) -> (i32, i32) {
    %c0_i32 = arith.constant 0 : i32
    %c0_i32_0 = arith.constant 0 : i32
    %c0_i32_1 = arith.constant 0 : i32
    return %c0_i32, %c0_i32_0 : i32, i32
  }
  func.func @transform_4(%arg0: i32) -> (i32, i32) {
    %c0_i32 = arith.constant 0 : i32
    %c0_i32_0 = arith.constant 0 : i32
    %c0_i32_1 = arith.constant 0 : i32
    return %c0_i32, %c0_i32_0 : i32, i32
  }
  func.func @transform_5(%arg0: i32) -> (i32, i32) {
    %c0_i32 = arith.constant 0 : i32
    %c0_i32_0 = arith.constant 0 : i32
    %c0_i32_1 = arith.constant 0 : i32
    return %c0_i32, %c0_i32_0 : i32, i32
  }
  func.func @transform_6(%arg0: i32) -> (i32, i32) {
    %c0_i32 = arith.constant 0 : i32
    %c0_i32_0 = arith.constant 0 : i32
    %c0_i32_1 = arith.constant 0 : i32
    return %c0_i32, %c0_i32_0 : i32, i32
  }
  func.func @transform_7(%arg0: i32) -> (i32, i32) {
    %c0_i32 = arith.constant 0 : i32
    %c0_i32_0 = arith.constant 0 : i32
    %c0_i32_1 = arith.constant 0 : i32
    return %c0_i32, %c0_i32_0 : i32, i32
  }
  func.func @transform_8(%arg0: i32) -> (i32, i32) {
    %c0_i32 = arith.constant 0 : i32
    %c0_i32_0 = arith.constant 0 : i32
    return %arg0, %c0_i32 : i32, i32
  }
  func.func @transform_9(%arg0: i32) -> (i32, i32) {
    %c0_i32 = arith.constant 0 : i32
    %c0_i32_0 = arith.constant 0 : i32
    return %arg0, %c0_i32 : i32, i32
  }
}

</mosaic_0001>

<llo_original>
// kernel: forward.3
$region0: #{forward.3}
  #allocation0 [shape = 'u32[]', space=smem, size = 0x4, offset = 0x4, fixed_abs, tag = 'smem constant byte address 0x4 - core index']
  #allocation1 [shape = 'u32[144,128]{1,0:T(1,128)}', space=vmem, size = 0x12000, scoped, tag = 'internal scratch']
  #allocation2 [shape = 'f32[1,1]{1,0:T(1,128)S(1)}', space=vmem, size = 0x200, scoped, tag = 'scoped memory for forward.3']
  %s0 = inlined_call_operand.vmem [shape: bf16[2,180], index: 0, kind: input, shape index: {}]
  %s1 = inlined_call_operand.vmem [shape: bf16[2,90], index: 1, kind: input, shape index: {}]
  %s2 = inlined_call_operand.vmem [shape: bf16[180,2176], index: 2, kind: input, shape index: {}]
  %s3 = inlined_call_operand.vmem [shape: f32[1,2176], index: 3, kind: input, shape index: {}]
  %s4 = inlined_call_operand.vmem [shape: bf16[90,256], index: 4, kind: input, shape index: {}]
  %s5 = inlined_call_operand.vmem [shape: f32[1,256], index: 5, kind: input, shape index: {}]
  %s6 = inlined_call_operand.vmem [shape: f32[1,256], index: 6, kind: input, shape index: {}]
  %s7 = inlined_call_operand.<no memory space> [shape: f32[1,1], index: 7, kind: input, shape index: {}]
  %s8 = inlined_call_operand.hbm [shape: f32[2,2176], index: 8, kind: output, shape index: {0}]
  %s9 = inlined_call_operand.vmem [shape: f32[2,1], index: 9, kind: output, shape index: {1}]
  %10 = xla_tuple %s8, %s9
  %s11 = sld [smem:[#allocation0]]
  $region50: #{forward.3} parent=0
    _
  %s13 = ssub.s32 1, %s11
  %s14 = scalar_select 0, %s13, %s11
  %v15 = vstv %s7
  %16 = vst [vmem:[#allocation2] sm:$0x1] %v15
  $region1: #{forward.3} parent=0
    #allocation3 [shape = 'u8[17408]{0}', space=vmem, size = 0x4400, scoped, tag = 'output window, operand 0, single buffered']
    #allocation4 [shape = 's32[1]{0}', space=sflag, size = 0x4, scoped, tag = 'scoped memory for forward.3']
    %17 = vsyncpa [#allocation4], 0
    // Predicated region
    $region2: #{forward.3} parent=1 // pred_check
      _
    $region3: #{forward.3} parent=1 // pred_check_branch
      %19 = sbr.rel (0) target = $region5
    $region4: #{forward.3} parent=1 // pred_region
      _
    $region5: #{forward.3} parent=1 // pred_fallthru
      _
    // Predicated region
    $region6: #{forward.3} parent=1 // pred_check
      _
    $region7: #{forward.3} parent=1 // pred_check_branch
      %21 = sbr.rel (0) target = $region9
    $region8: #{forward.3} parent=1 // pred_region
      _
    $region9: #{forward.3} parent=1 // pred_fallthru
      _
    // Predicated region
    $region10: #{forward.3} parent=1 // pred_check
      _
    $region11: #{forward.3} parent=1 // pred_check_branch
      %23 = sbr.rel (0) target = $region13
    $region12: #{forward.3} parent=1 // pred_region
      _
    $region13: #{forward.3} parent=1 // pred_fallthru
      _
    // Predicated region
    $region14: #{forward.3} parent=1 // pred_check
      _
    $region15: #{forward.3} parent=1 // pred_check_branch
      %25 = sbr.rel (0) target = $region17
    $region16: #{forward.3} parent=1 // pred_region
      _
    $region17: #{forward.3} parent=1 // pred_fallthru
      _
    // Predicated region
    $region18: #{forward.3} parent=1 // pred_check
      _
    $region19: #{forward.3} parent=1 // pred_check_branch
      %27 = sbr.rel (0) target = $region21
    $region20: #{forward.3} parent=1 // pred_region
      _
    $region21: #{forward.3} parent=1 // pred_fallthru
      _
    // Predicated region
    $region22: #{forward.3} parent=1 // pred_check
      _
    $region23: #{forward.3} parent=1 // pred_check_branch
      %29 = sbr.rel (0) target = $region25
    $region24: #{forward.3} parent=1 // pred_region
      _
    $region25: #{forward.3} parent=1 // pred_fallthru
      _
    // Predicated region
    $region26: #{forward.3} parent=1 // pred_check
      _
    $region27: #{forward.3} parent=1 // pred_check_branch
      %31 = sbr.rel (0) target = $region29
    $region28: #{forward.3} parent=1 // pred_region
      _
    $region29: #{forward.3} parent=1 // pred_fallthru
      _
    // Predicated region
    $region30: #{forward.3} parent=1 // pred_check
      _
    $region31: #{forward.3} parent=1 // pred_check_branch
      %33 = sbr.rel (0) target = $region33
    $region32: #{forward.3} parent=1 // pred_region
      _
    $region33: #{forward.3} parent=1 // pred_fallthru
      _
    %v35 = vld [vmem:[%s0] sm:$0x3]
    %v36 = vld [vmem:[%s2] sm:$0xff]
    %v37 = vld [vmem:[%s2 + $0x8] sm:$0xff]
    %v38 = vld [vmem:[%s2 + $0x10] sm:$0xff]
    %v39 = vld [vmem:[%s2 + $0x18] sm:$0xff]
    %v40 = vld [vmem:[%s2 + $0x20] sm:$0xff]
    %v41 = vld [vmem:[%s2 + $0x28] sm:$0xff]
    %v42 = vld [vmem:[%s2 + $0x30] sm:$0xff]
    %v43 = vld [vmem:[%s2 + $0x38] sm:$0xff]
    %v44 = vld [vmem:[%s2 + $0x40] sm:$0xf]
    %v45 = vld [vmem:[%s2 + $0x44] sm:$0xff]
    %v46 = vld [vmem:[%s2 + $0x4c] sm:$0xff]
    %v47 = vld [vmem:[%s2 + $0x54] sm:$0xff]
    %v48 = vld [vmem:[%s2 + $0x5c] sm:$0xff]
    %v49 = vld [vmem:[%s2 + $0x64] sm:$0xff]
    %v50 = vld [vmem:[%s2 + $0x6c] sm:$0xff]
    %v51 = vld [vmem:[%s2 + $0x74] sm:$0xff]
    %v52 = vld [vmem:[%s2 + $0x7c] sm:$0xff]
    %v53 = vld [vmem:[%s2 + $0x84] sm:$0xf]
    %v54 = vld [vmem:[%s2 + $0x88] sm:$0xff]
    %v55 = vld [vmem:[%s2 + $0x90] sm:$0xff]
    %v56 = vld [vmem:[%s2 + $0x98] sm:$0xff]
    %v57 = vld [vmem:[%s2 + $0xa0] sm:$0xff]
    %v58 = vld [vmem:[%s2 + $0xa8] sm:$0xff]
    %v59 = vld [vmem:[%s2 + $0xb0] sm:$0xff]
    %v60 = vld [vmem:[%s2 + $0xb8] sm:$0xff]
    %v61 = vld [vmem:[%s2 + $0xc0] sm:$0xff]
    %v62 = vld [vmem:[%s2 + $0xc8] sm:$0xf]
    %v63 = vld [vmem:[%s2 + $0xcc] sm:$0xff]
    %v64 = vld [vmem:[%s2 + $0xd4] sm:$0xff]
    %v65 = vld [vmem:[%s2 + $0xdc] sm:$0xff]
    %v66 = vld [vmem:[%s2 + $0xe4] sm:$0xff]
    %v67 = vld [vmem:[%s2 + $0xec] sm:$0xff]
    %v68 = vld [vmem:[%s2 + $0xf4] sm:$0xff]
    %v69 = vld [vmem:[%s2 + $0xfc] sm:$0xff]
    %v70 = vld [vmem:[%s2 + $0x104] sm:$0xff]
    %v71 = vld [vmem:[%s2 + $0x10c] sm:$0xf]
    %v72 = vld [vmem:[%s2 + $0x110] sm:$0xff]
    %v73 = vld [vmem:[%s2 + $0x118] sm:$0xff]
    %v74 = vld [vmem:[%s2 + $0x120] sm:$0xff]
    %v75 = vld [vmem:[%s2 + $0x128] sm:$0xff]
    %v76 = vld [vmem:[%s2 + $0x130] sm:$0xff]
    %v77 = vld [vmem:[%s2 + $0x138] sm:$0xff]
    %v78 = vld [vmem:[%s2 + $0x140] sm:$0xff]
    %v79 = vld [vmem:[%s2 + $0x148] sm:$0xff]
    %v80 = vld [vmem:[%s2 + $0x150] sm:$0xf]
    %v81 = vld [vmem:[%s2 + $0x154] sm:$0xff]
    %v82 = vld [vmem:[%s2 + $0x15c] sm:$0xff]
    %v83 = vld [vmem:[%s2 + $0x164] sm:$0xff]
    %v84 = vld [vmem:[%s2 + $0x16c] sm:$0xff]
    %v85 = vld [vmem:[%s2 + $0x174] sm:$0xff]
    %v86 = vld [vmem:[%s2 + $0x17c] sm:$0xff]
    %v87 = vld [vmem:[%s2 + $0x184] sm:$0xff]
    %v88 = vld [vmem:[%s2 + $0x18c] sm:$0xff]
    %v89 = vld [vmem:[%s2 + $0x194] sm:$0xf]
    %v90 = vld [vmem:[%s2 + $0x198] sm:$0xff]
    %v91 = vld [vmem:[%s2 + $0x1a0] sm:$0xff]
    %v92 = vld [vmem:[%s2 + $0x1a8] sm:$0xff]
    %v93 = vld [vmem:[%s2 + $0x1b0] sm:$0xff]
    %v94 = vld [vmem:[%s2 + $0x1b8] sm:$0xff]
    %v95 = vld [vmem:[%s2 + $0x1c0] sm:$0xff]
    %v96 = vld [vmem:[%s2 + $0x1c8] sm:$0xff]
    %v97 = vld [vmem:[%s2 + $0x1d0] sm:$0xff]
    %v98 = vld [vmem:[%s2 + $0x1d8] sm:$0xf]
    %v99 = vld [vmem:[%s2 + $0x1dc] sm:$0xff]
    %v100 = vld [vmem:[%s2 + $0x1e4] sm:$0xff]
    %v101 = vld [vmem:[%s2 + $0x1ec] sm:$0xff]
    %v102 = vld [vmem:[%s2 + $0x1f4] sm:$0xff]
    %v103 = vld [vmem:[%s2 + $0x1fc] sm:$0xff]
    %v104 = vld [vmem:[%s2 + $0x204] sm:$0xff]
    %v105 = vld [vmem:[%s2 + $0x20c] sm:$0xff]
    %v106 = vld [vmem:[%s2 + $0x214] sm:$0xff]
    %v107 = vld [vmem:[%s2 + $0x21c] sm:$0xf]
    %v108 = vld [vmem:[%s2 + $0x220] sm:$0xff]
    %v109 = vld [vmem:[%s2 + $0x228] sm:$0xff]
    %v110 = vld [vmem:[%s2 + $0x230] sm:$0xff]
    %v111 = vld [vmem:[%s2 + $0x238] sm:$0xff]
    %v112 = vld [vmem:[%s2 + $0x240] sm:$0xff]
    %v113 = vld [vmem:[%s2 + $0x248] sm:$0xff]
    %v114 = vld [vmem:[%s2 + $0x250] sm:$0xff]
    %v115 = vld [vmem:[%s2 + $0x258] sm:$0xff]
    %v116 = vld [vmem:[%s2 + $0x260] sm:$0xf]
    %v117 = vld [vmem:[%s2 + $0x264] sm:$0xff]
    %v118 = vld [vmem:[%s2 + $0x26c] sm:$0xff]
    %v119 = vld [vmem:[%s2 + $0x274] sm:$0xff]
    %v120 = vld [vmem:[%s2 + $0x27c] sm:$0xff]
    %v121 = vld [vmem:[%s2 + $0x284] sm:$0xff]
    %v122 = vld [vmem:[%s2 + $0x28c] sm:$0xff]
    %v123 = vld [vmem:[%s2 + $0x294] sm:$0xff]
    %v124 = vld [vmem:[%s2 + $0x29c] sm:$0xff]
    %v125 = vld [vmem:[%s2 + $0x2a4] sm:$0xf]
    %v126 = vld [vmem:[%s2 + $0x2a8] sm:$0xff]
    %v127 = vld [vmem:[%s2 + $0x2b0] sm:$0xff]
    %v128 = vld [vmem:[%s2 + $0x2b8] sm:$0xff]
    %v129 = vld [vmem:[%s2 + $0x2c0] sm:$0xff]
    %v130 = vld [vmem:[%s2 + $0x2c8] sm:$0xff]
    %v131 = vld [vmem:[%s2 + $0x2d0] sm:$0xff]
    %v132 = vld [vmem:[%s2 + $0x2d8] sm:$0xff]
    %v133 = vld [vmem:[%s2 + $0x2e0] sm:$0xff]
    %v134 = vld [vmem:[%s2 + $0x2e8] sm:$0xf]
    %v135 = vld [vmem:[%s2 + $0x2ec] sm:$0xff]
    %v136 = vld [vmem:[%s2 + $0x2f4] sm:$0xff]
    %v137 = vld [vmem:[%s2 + $0x2fc] sm:$0xff]
    %v138 = vld [vmem:[%s2 + $0x304] sm:$0xff]
    %v139 = vld [vmem:[%s2 + $0x30c] sm:$0xff]
    %v140 = vld [vmem:[%s2 + $0x314] sm:$0xff]
    %v141 = vld [vmem:[%s2 + $0x31c] sm:$0xff]
    %v142 = vld [vmem:[%s2 + $0x324] sm:$0xff]
    %v143 = vld [vmem:[%s2 + $0x32c] sm:$0xf]
    %v144 = vld [vmem:[%s2 + $0x330] sm:$0xff]
    %v145 = vld [vmem:[%s2 + $0x338] sm:$0xff]
    %v146 = vld [vmem:[%s2 + $0x340] sm:$0xff]
    %v147 = vld [vmem:[%s2 + $0x348] sm:$0xff]
    %v148 = vld [vmem:[%s2 + $0x350] sm:$0xff]
    %v149 = vld [vmem:[%s2 + $0x358] sm:$0xff]
    %v150 = vld [vmem:[%s2 + $0x360] sm:$0xff]
    %v151 = vld [vmem:[%s2 + $0x368] sm:$0xff]
    %v152 = vld [vmem:[%s2 + $0x370] sm:$0xf]
    %v153 = vld [vmem:[%s2 + $0x374] sm:$0xff]
    %v154 = vld [vmem:[%s2 + $0x37c] sm:$0xff]
    %v155 = vld [vmem:[%s2 + $0x384] sm:$0xff]
    %v156 = vld [vmem:[%s2 + $0x38c] sm:$0xff]
    %v157 = vld [vmem:[%s2 + $0x394] sm:$0xff]
    %v158 = vld [vmem:[%s2 + $0x39c] sm:$0xff]
    %v159 = vld [vmem:[%s2 + $0x3a4] sm:$0xff]
    %v160 = vld [vmem:[%s2 + $0x3ac] sm:$0xff]
    %v161 = vld [vmem:[%s2 + $0x3b4] sm:$0xf]
    %v162 = vld [vmem:[%s2 + $0x3b8] sm:$0xff]
    %v163 = vld [vmem:[%s2 + $0x3c0] sm:$0xff]
    %v164 = vld [vmem:[%s2 + $0x3c8] sm:$0xff]
    %v165 = vld [vmem:[%s2 + $0x3d0] sm:$0xff]
    %v166 = vld [vmem:[%s2 + $0x3d8] sm:$0xff]
    %v167 = vld [vmem:[%s2 + $0x3e0] sm:$0xff]
    %v168 = vld [vmem:[%s2 + $0x3e8] sm:$0xff]
    %v169 = vld [vmem:[%s2 + $0x3f0] sm:$0xff]
    %v170 = vld [vmem:[%s2 + $0x3f8] sm:$0xf]
    %v171 = vld [vmem:[%s2 + $0x3fc] sm:$0xff]
    %v172 = vld [vmem:[%s2 + $0x404] sm:$0xff]
    %v173 = vld [vmem:[%s2 + $0x40c] sm:$0xff]
    %v174 = vld [vmem:[%s2 + $0x414] sm:$0xff]
    %v175 = vld [vmem:[%s2 + $0x41c] sm:$0xff]
    %v176 = vld [vmem:[%s2 + $0x424] sm:$0xff]
    %v177 = vld [vmem:[%s2 + $0x42c] sm:$0xff]
    %v178 = vld [vmem:[%s2 + $0x434] sm:$0xff]
    %v179 = vld [vmem:[%s2 + $0x43c] sm:$0xf]
    %v180 = vld [vmem:[%s2 + $0x440] sm:$0xff]
    %v181 = vld [vmem:[%s2 + $0x448] sm:$0xff]
    %v182 = vld [vmem:[%s2 + $0x450] sm:$0xff]
    %v183 = vld [vmem:[%s2 + $0x458] sm:$0xff]
    %v184 = vld [vmem:[%s2 + $0x460] sm:$0xff]
    %v185 = vld [vmem:[%s2 + $0x468] sm:$0xff]
    %v186 = vld [vmem:[%s2 + $0x470] sm:$0xff]
    %v187 = vld [vmem:[%s2 + $0x478] sm:$0xff]
    %v188 = vld [vmem:[%s2 + $0x480] sm:$0xf]
    %v189 = vld [vmem:[%s2 + $0x484] sm:$0xff]
    %v190 = vld [vmem:[%s2 + $0x48c] sm:$0xff]
    %v191 = vld [vmem:[%s2 + $0x494] sm:$0xff]
    %v192 = vld [vmem:[%s2 + $0x49c] sm:$0xff]
    %v193 = vld [vmem:[%s2 + $0x4a4] sm:$0xff]
    %v194 = vld [vmem:[%s2 + $0x4ac] sm:$0xff]
    %v195 = vld [vmem:[%s2 + $0x4b4] sm:$0xff]
    %v196 = vld [vmem:[%s2 + $0x4bc] sm:$0xff]
    %v197 = vld [vmem:[%s2 + $0x4c4] sm:$0xf]
    %v198 = vld [vmem:[%s2 + $0x4c8] sm:$0xff]
    %v199 = vld [vmem:[%s2 + $0x4d0] sm:$0xff]
    %v200 = vld [vmem:[%s2 + $0x4d8] sm:$0xff]
    %v201 = vld [vmem:[%s2 + $0x4e0] sm:$0xff]
    %v202 = vld [vmem:[%s2 + $0x4e8] sm:$0xff]
    %v203 = vld [vmem:[%s2 + $0x4f0] sm:$0xff]
    %v204 = vld [vmem:[%s2 + $0x4f8] sm:$0xff]
    %v205 = vld [vmem:[%s2 + $0x500] sm:$0xff]
    %v206 = vld [vmem:[%s2 + $0x508] sm:$0xf]
    %v207 = vld [vmem:[%s2 + $0x50c] sm:$0xff]
    %v208 = vld [vmem:[%s2 + $0x514] sm:$0xff]
    %v209 = vld [vmem:[%s2 + $0x51c] sm:$0xff]
    %v210 = vld [vmem:[%s2 + $0x524] sm:$0xff]
    %v211 = vld [vmem:[%s2 + $0x52c] sm:$0xff]
    %v212 = vld [vmem:[%s2 + $0x534] sm:$0xff]
    %v213 = vld [vmem:[%s2 + $0x53c] sm:$0xff]
    %v214 = vld [vmem:[%s2 + $0x544] sm:$0xff]
    %v215 = vld [vmem:[%s2 + $0x54c] sm:$0xf]
    %v216 = vld [vmem:[%s2 + $0x550] sm:$0xff]
    %v217 = vld [vmem:[%s2 + $0x558] sm:$0xff]
    %v218 = vld [vmem:[%s2 + $0x560] sm:$0xff]
    %v219 = vld [vmem:[%s2 + $0x568] sm:$0xff]
    %v220 = vld [vmem:[%s2 + $0x570] sm:$0xff]
    %v221 = vld [vmem:[%s2 + $0x578] sm:$0xff]
    %v222 = vld [vmem:[%s2 + $0x580] sm:$0xff]
    %v223 = vld [vmem:[%s2 + $0x588] sm:$0xff]
    %v224 = vld [vmem:[%s2 + $0x590] sm:$0xf]
    %v225 = vld [vmem:[%s2 + $0x594] sm:$0xff]
    %v226 = vld [vmem:[%s2 + $0x59c] sm:$0xff]
    %v227 = vld [vmem:[%s2 + $0x5a4] sm:$0xff]
    %v228 = vld [vmem:[%s2 + $0x5ac] sm:$0xff]
    %v229 = vld [vmem:[%s2 + $0x5b4] sm:$0xff]
    %v230 = vld [vmem:[%s2 + $0x5bc] sm:$0xff]
    %v231 = vld [vmem:[%s2 + $0x5c4] sm:$0xff]
    %v232 = vld [vmem:[%s2 + $0x5cc] sm:$0xff]
    %v233 = vld [vmem:[%s2 + $0x5d4] sm:$0xf]
    %v234 = vld [vmem:[%s2 + $0x5d8] sm:$0x33]
    %v235 = vld [vmem:[%s2 + $0x5e0] sm:$0x33]
    %v236 = vld [vmem:[%s2 + $0x5e8] sm:$0x33]
    %v237 = vld [vmem:[%s2 + $0x5f0] sm:$0x33]
    %v238 = vld [vmem:[%s2 + $0x5f8] sm:$0x33]
    %v239 = vld [vmem:[%s2 + $0x600] sm:$0x33]
    %v240 = vld [vmem:[%s2 + $0x608] sm:$0x33]
    %v241 = vld [vmem:[%s2 + $0x610] sm:$0x33]
    %v242 = vld [vmem:[%s2 + $0x618] sm:$0x3]
    %v243 = vld [vmem:[%s3] sm:$0xff]
    %v244 = vld [vmem:[%s3 + $0x8] sm:$0xff]
    %v245 = vld [vmem:[%s3 + $0x10] sm:$0x1]
    %v249 = vlaneseq
    %v250 = vshrl.u32 %v249, 7
    %v251 = vsub.s32 0, %v250
    %v252 = vrot.slane %v243, %v251
    %v253 = vlaneseq
    %v254 = vshrl.u32 %v253, 7
    %v255 = vsub.s32 1, %v254
    %v256 = vrot.slane %v243, %v255
    %v257 = vlaneseq
    %v258 = vshrl.u32 %v257, 7
    %v259 = vsub.s32 2, %v258
    %v260 = vrot.slane %v243, %v259
    %v261 = vlaneseq
    %v262 = vshrl.u32 %v261, 7
    %v263 = vsub.s32 3, %v262
    %v264 = vrot.slane %v243, %v263
    %v265 = vlaneseq
    %v266 = vshrl.u32 %v265, 7
    %v267 = vsub.s32 4, %v266
    %v268 = vrot.slane %v243, %v267
    %v269 = vlaneseq
    %v270 = vshrl.u32 %v269, 7
    %v271 = vsub.s32 5, %v270
    %v272 = vrot.slane %v243, %v271
    %v273 = vlaneseq
    %v274 = vshrl.u32 %v273, 7
    %v275 = vsub.s32 6, %v274
    %v276 = vrot.slane %v243, %v275
    %v277 = vlaneseq
    %v278 = vshrl.u32 %v277, 7
    %v279 = vsub.s32 7, %v278
    %v280 = vrot.slane %v243, %v279
    %v281 = vlaneseq
    %v282 = vshrl.u32 %v281, 7
    %v283 = vsub.s32 0, %v282
    %v284 = vrot.slane %v244, %v283
    %v285 = vlaneseq
    %v286 = vshrl.u32 %v285, 7
    %v287 = vsub.s32 1, %v286
    %v288 = vrot.slane %v244, %v287
    %v289 = vlaneseq
    %v290 = vshrl.u32 %v289, 7
    %v291 = vsub.s32 2, %v290
    %v292 = vrot.slane %v244, %v291
    %v293 = vlaneseq
    %v294 = vshrl.u32 %v293, 7
    %v295 = vsub.s32 3, %v294
    %v296 = vrot.slane %v244, %v295
    %v297 = vlaneseq
    %v298 = vshrl.u32 %v297, 7
    %v299 = vsub.s32 4, %v298
    %v300 = vrot.slane %v244, %v299
    %v301 = vlaneseq
    %v302 = vshrl.u32 %v301, 7
    %v303 = vsub.s32 5, %v302
    %v304 = vrot.slane %v244, %v303
    %v305 = vlaneseq
    %v306 = vshrl.u32 %v305, 7
    %v307 = vsub.s32 6, %v306
    %v308 = vrot.slane %v244, %v307
    %v309 = vlaneseq
    %v310 = vshrl.u32 %v309, 7
    %v311 = vsub.s32 7, %v310
    %v312 = vrot.slane %v244, %v311
    %v313 = vlaneseq
    %v314 = vshrl.u32 %v313, 7
    %v315 = vsub.s32 0, %v314
    %v316 = vrot.slane %v245, %v315
    %v336 = vunpack.c.l.s4 1966171168
    %v337 = vunpack.c.0.s8 %v336
    %v338 = vlaneseq
    %v339 = vshrl.u32 %v338, 7
    %v340 = vsub.s32 %v337, %v339
    %v341 = vrot.slane %v35, %v340
    %v342 = vcombine.high %v341, %v341
    %v344 = vunpack.c.l.s4 1966171168
    %v345 = vunpack.c.0.s8 %v344
    %v346 = vlaneseq
    %v347 = vshrl.u32 %v346, 7
    %v348 = vsub.s32 %v345, %v347
    %v349 = vrot.slane %v341, %v348
    %v351 = vunpack.c.l.s4 1966171168
    %v352 = vunpack.c.0.s8 %v351
    %v353 = vlaneseq
    %v354 = vshrl.u32 %v353, 7
    %v355 = vsub.s32 %v352, %v354
    %v356 = vrot.slane %v342, %v355
    %v565 = vunpack.c.l.b16 %v36
    %v566 = vunpack.c.h.b16 %v36
    %v567 = vunpack.c.l.b16 %v37
    %v568 = vunpack.c.h.b16 %v37
    %v569 = vunpack.c.l.b16 %v38
    %v570 = vunpack.c.h.b16 %v38
    %v571 = vunpack.c.l.b16 %v39
    %v572 = vunpack.c.h.b16 %v39
    %v573 = vunpack.c.l.b16 %v40
    %v574 = vunpack.c.h.b16 %v40
    %v575 = vunpack.c.l.b16 %v41
    %v576 = vunpack.c.h.b16 %v41
    %v577 = vunpack.c.l.b16 %v42
    %v578 = vunpack.c.h.b16 %v42
    %v579 = vunpack.c.l.b16 %v43
    %v580 = vunpack.c.h.b16 %v43
    %v581 = vunpack.c.l.b16 %v44
    %v582 = vunpack.c.l.b16 %v45
    %v583 = vunpack.c.h.b16 %v45
    %v584 = vunpack.c.l.b16 %v46
    %v585 = vunpack.c.h.b16 %v46
    %v586 = vunpack.c.l.b16 %v47
    %v587 = vunpack.c.h.b16 %v47
    %v588 = vunpack.c.l.b16 %v48
    %v589 = vunpack.c.h.b16 %v48
    %v590 = vunpack.c.l.b16 %v49
    %v591 = vunpack.c.h.b16 %v49
    %v592 = vunpack.c.l.b16 %v50
    %v593 = vunpack.c.h.b16 %v50
    %v594 = vunpack.c.l.b16 %v51
    %v595 = vunpack.c.h.b16 %v51
    %v596 = vunpack.c.l.b16 %v52
    %v597 = vunpack.c.h.b16 %v52
    %v598 = vunpack.c.l.b16 %v53
    %v599 = vunpack.c.l.b16 %v54
    %v600 = vunpack.c.h.b16 %v54
    %v601 = vunpack.c.l.b16 %v55
    %v602 = vunpack.c.h.b16 %v55
    %v603 = vunpack.c.l.b16 %v56
    %v604 = vunpack.c.h.b16 %v56
    %v605 = vunpack.c.l.b16 %v57
    %v606 = vunpack.c.h.b16 %v57
    %v607 = vunpack.c.l.b16 %v58
    %v608 = vunpack.c.h.b16 %v58
    %v609 = vunpack.c.l.b16 %v59
    %v610 = vunpack.c.h.b16 %v59
    %v611 = vunpack.c.l.b16 %v60
    %v612 = vunpack.c.h.b16 %v60
    %v613 = vunpack.c.l.b16 %v61
    %v614 = vunpack.c.h.b16 %v61
    %v615 = vunpack.c.l.b16 %v62
    %v616 = vunpack.c.l.b16 %v63
    %v617 = vunpack.c.h.b16 %v63
    %v618 = vunpack.c.l.b16 %v64
    %v619 = vunpack.c.h.b16 %v64
    %v620 = vunpack.c.l.b16 %v65
    %v621 = vunpack.c.h.b16 %v65
    %v622 = vunpack.c.l.b16 %v66
    %v623 = vunpack.c.h.b16 %v66
    %v624 = vunpack.c.l.b16 %v67
    %v625 = vunpack.c.h.b16 %v67
    %v626 = vunpack.c.l.b16 %v68
    %v627 = vunpack.c.h.b16 %v68
    %v628 = vunpack.c.l.b16 %v69
    %v629 = vunpack.c.h.b16 %v69
    %v630 = vunpack.c.l.b16 %v70
    %v631 = vunpack.c.h.b16 %v70
    %v632 = vunpack.c.l.b16 %v71
    %v633 = vunpack.c.l.b16 %v72
    %v634 = vunpack.c.h.b16 %v72
    %v635 = vunpack.c.l.b16 %v73
    %v636 = vunpack.c.h.b16 %v73
    %v637 = vunpack.c.l.b16 %v74
    %v638 = vunpack.c.h.b16 %v74
    %v639 = vunpack.c.l.b16 %v75
    %v640 = vunpack.c.h.b16 %v75
    %v641 = vunpack.c.l.b16 %v76
    %v642 = vunpack.c.h.b16 %v76
    %v643 = vunpack.c.l.b16 %v77
    %v644 = vunpack.c.h.b16 %v77
    %v645 = vunpack.c.l.b16 %v78
    %v646 = vunpack.c.h.b16 %v78
    %v647 = vunpack.c.l.b16 %v79
    %v648 = vunpack.c.h.b16 %v79
    %v649 = vunpack.c.l.b16 %v80
    %v650 = vunpack.c.l.b16 %v81
    %v651 = vunpack.c.h.b16 %v81
    %v652 = vunpack.c.l.b16 %v82
    %v653 = vunpack.c.h.b16 %v82
    %v654 = vunpack.c.l.b16 %v83
    %v655 = vunpack.c.h.b16 %v83
    %v656 = vunpack.c.l.b16 %v84
    %v657 = vunpack.c.h.b16 %v84
    %v658 = vunpack.c.l.b16 %v85
    %v659 = vunpack.c.h.b16 %v85
    %v660 = vunpack.c.l.b16 %v86
    %v661 = vunpack.c.h.b16 %v86
    %v662 = vunpack.c.l.b16 %v87
    %v663 = vunpack.c.h.b16 %v87
    %v664 = vunpack.c.l.b16 %v88
    %v665 = vunpack.c.h.b16 %v88
    %v666 = vunpack.c.l.b16 %v89
    %v667 = vunpack.c.l.b16 %v90
    %v668 = vunpack.c.h.b16 %v90
    %v669 = vunpack.c.l.b16 %v91
    %v670 = vunpack.c.h.b16 %v91
    %v671 = vunpack.c.l.b16 %v92
    %v672 = vunpack.c.h.b16 %v92
    %v673 = vunpack.c.l.b16 %v93
    %v674 = vunpack.c.h.b16 %v93
    %v675 = vunpack.c.l.b16 %v94
    %v676 = vunpack.c.h.b16 %v94
    %v677 = vunpack.c.l.b16 %v95
    %v678 = vunpack.c.h.b16 %v95
    %v679 = vunpack.c.l.b16 %v96
    %v680 = vunpack.c.h.b16 %v96
    %v681 = vunpack.c.l.b16 %v97
    %v682 = vunpack.c.h.b16 %v97
    %v683 = vunpack.c.l.b16 %v98
    %v684 = vunpack.c.l.b16 %v99
    %v685 = vunpack.c.h.b16 %v99
    %v686 = vunpack.c.l.b16 %v100
    %v687 = vunpack.c.h.b16 %v100
    %v688 = vunpack.c.l.b16 %v101
    %v689 = vunpack.c.h.b16 %v101
    %v690 = vunpack.c.l.b16 %v102
    %v691 = vunpack.c.h.b16 %v102
    %v692 = vunpack.c.l.b16 %v103
    %v693 = vunpack.c.h.b16 %v103
    %v694 = vunpack.c.l.b16 %v104
    %v695 = vunpack.c.h.b16 %v104
    %v696 = vunpack.c.l.b16 %v105
    %v697 = vunpack.c.h.b16 %v105
    %v698 = vunpack.c.l.b16 %v106
    %v699 = vunpack.c.h.b16 %v106
    %v700 = vunpack.c.l.b16 %v107
    %v701 = vunpack.c.l.b16 %v108
    %v702 = vunpack.c.h.b16 %v108
    %v703 = vunpack.c.l.b16 %v109
    %v704 = vunpack.c.h.b16 %v109
    %v705 = vunpack.c.l.b16 %v110
    %v706 = vunpack.c.h.b16 %v110
    %v707 = vunpack.c.l.b16 %v111
    %v708 = vunpack.c.h.b16 %v111
    %v709 = vunpack.c.l.b16 %v112
    %v710 = vunpack.c.h.b16 %v112
    %v711 = vunpack.c.l.b16 %v113
    %v712 = vunpack.c.h.b16 %v113
    %v713 = vunpack.c.l.b16 %v114
    %v714 = vunpack.c.h.b16 %v114
    %v715 = vunpack.c.l.b16 %v115
    %v716 = vunpack.c.h.b16 %v115
    %v717 = vunpack.c.l.b16 %v116
    %v718 = vunpack.c.l.b16 %v117
    %v719 = vunpack.c.h.b16 %v117
    %v720 = vunpack.c.l.b16 %v118
    %v721 = vunpack.c.h.b16 %v118
    %v722 = vunpack.c.l.b16 %v119
    %v723 = vunpack.c.h.b16 %v119
    %v724 = vunpack.c.l.b16 %v120
    %v725 = vunpack.c.h.b16 %v120
    %v726 = vunpack.c.l.b16 %v121
    %v727 = vunpack.c.h.b16 %v121
    %v728 = vunpack.c.l.b16 %v122
    %v729 = vunpack.c.h.b16 %v122
    %v730 = vunpack.c.l.b16 %v123
    %v731 = vunpack.c.h.b16 %v123
    %v732 = vunpack.c.l.b16 %v124
    %v733 = vunpack.c.h.b16 %v124
    %v734 = vunpack.c.l.b16 %v125
    %v735 = vunpack.c.l.b16 %v126
    %v736 = vunpack.c.h.b16 %v126
    %v737 = vunpack.c.l.b16 %v127
    %v738 = vunpack.c.h.b16 %v127
    %v739 = vunpack.c.l.b16 %v128
    %v740 = vunpack.c.h.b16 %v128
    %v741 = vunpack.c.l.b16 %v129
    %v742 = vunpack.c.h.b16 %v129
    %v743 = vunpack.c.l.b16 %v130
    %v744 = vunpack.c.h.b16 %v130
    %v745 = vunpack.c.l.b16 %v131
    %v746 = vunpack.c.h.b16 %v131
    %v747 = vunpack.c.l.b16 %v132
    %v748 = vunpack.c.h.b16 %v132
    %v749 = vunpack.c.l.b16 %v133
    %v750 = vunpack.c.h.b16 %v133
    %v751 = vunpack.c.l.b16 %v134
    %v752 = vunpack.c.l.b16 %v135
    %v753 = vunpack.c.h.b16 %v135
    %v754 = vunpack.c.l.b16 %v136
    %v755 = vunpack.c.h.b16 %v136
    %v756 = vunpack.c.l.b16 %v137
    %v757 = vunpack.c.h.b16 %v137
    %v758 = vunpack.c.l.b16 %v138
    %v759 = vunpack.c.h.b16 %v138
    %v760 = vunpack.c.l.b16 %v139
    %v761 = vunpack.c.h.b16 %v139
    %v762 = vunpack.c.l.b16 %v140
    %v763 = vunpack.c.h.b16 %v140
    %v764 = vunpack.c.l.b16 %v141
    %v765 = vunpack.c.h.b16 %v141
    %v766 = vunpack.c.l.b16 %v142
    %v767 = vunpack.c.h.b16 %v142
    %v768 = vunpack.c.l.b16 %v143
    %v769 = vunpack.c.l.b16 %v144
    %v770 = vunpack.c.h.b16 %v144
    %v771 = vunpack.c.l.b16 %v145
    %v772 = vunpack.c.h.b16 %v145
    %v773 = vunpack.c.l.b16 %v146
    %v774 = vunpack.c.h.b16 %v146
    %v775 = vunpack.c.l.b16 %v147
    %v776 = vunpack.c.h.b16 %v147
    %v777 = vunpack.c.l.b16 %v148
    %v778 = vunpack.c.h.b16 %v148
    %v779 = vunpack.c.l.b16 %v149
    %v780 = vunpack.c.h.b16 %v149
    %v781 = vunpack.c.l.b16 %v150
    %v782 = vunpack.c.h.b16 %v150
    %v783 = vunpack.c.l.b16 %v151
    %v784 = vunpack.c.h.b16 %v151
    %v785 = vunpack.c.l.b16 %v152
    %v786 = vunpack.c.l.b16 %v153
    %v787 = vunpack.c.h.b16 %v153
    %v788 = vunpack.c.l.b16 %v154
    %v789 = vunpack.c.h.b16 %v154
    %v790 = vunpack.c.l.b16 %v155
    %v791 = vunpack.c.h.b16 %v155
    %v792 = vunpack.c.l.b16 %v156
    %v793 = vunpack.c.h.b16 %v156
    %v794 = vunpack.c.l.b16 %v157
    %v795 = vunpack.c.h.b16 %v157
    %v796 = vunpack.c.l.b16 %v158
    %v797 = vunpack.c.h.b16 %v158
    %v798 = vunpack.c.l.b16 %v159
    %v799 = vunpack.c.h.b16 %v159
    %v800 = vunpack.c.l.b16 %v160
    %v801 = vunpack.c.h.b16 %v160
    %v802 = vunpack.c.l.b16 %v161
    %v803 = vunpack.c.l.b16 %v162
    %v804 = vunpack.c.h.b16 %v162
    %v805 = vunpack.c.l.b16 %v163
    %v806 = vunpack.c.h.b16 %v163
    %v807 = vunpack.c.l.b16 %v164
    %v808 = vunpack.c.h.b16 %v164
    %v809 = vunpack.c.l.b16 %v165
    %v810 = vunpack.c.h.b16 %v165
    %v811 = vunpack.c.l.b16 %v166
    %v812 = vunpack.c.h.b16 %v166
    %v813 = vunpack.c.l.b16 %v167
    %v814 = vunpack.c.h.b16 %v167
    %v815 = vunpack.c.l.b16 %v168
    %v816 = vunpack.c.h.b16 %v168
    %v817 = vunpack.c.l.b16 %v169
    %v818 = vunpack.c.h.b16 %v169
    %v819 = vunpack.c.l.b16 %v170
    %v820 = vunpack.c.l.b16 %v171
    %v821 = vunpack.c.h.b16 %v171
    %v822 = vunpack.c.l.b16 %v172
    %v823 = vunpack.c.h.b16 %v172
    %v824 = vunpack.c.l.b16 %v173
    %v825 = vunpack.c.h.b16 %v173
    %v826 = vunpack.c.l.b16 %v174
    %v827 = vunpack.c.h.b16 %v174
    %v828 = vunpack.c.l.b16 %v175
    %v829 = vunpack.c.h.b16 %v175
    %v830 = vunpack.c.l.b16 %v176
    %v831 = vunpack.c.h.b16 %v176
    %v832 = vunpack.c.l.b16 %v177
    %v833 = vunpack.c.h.b16 %v177
    %v834 = vunpack.c.l.b16 %v178
    %v835 = vunpack.c.h.b16 %v178
    %v836 = vunpack.c.l.b16 %v179
    %v837 = vunpack.c.l.b16 %v180
    %v838 = vunpack.c.h.b16 %v180
    %v839 = vunpack.c.l.b16 %v181
    %v840 = vunpack.c.h.b16 %v181
    %v841 = vunpack.c.l.b16 %v182
    %v842 = vunpack.c.h.b16 %v182
    %v843 = vunpack.c.l.b16 %v183
    %v844 = vunpack.c.h.b16 %v183
    %v845 = vunpack.c.l.b16 %v184
    %v846 = vunpack.c.h.b16 %v184
    %v847 = vunpack.c.l.b16 %v185
    %v848 = vunpack.c.h.b16 %v185
    %v849 = vunpack.c.l.b16 %v186
    %v850 = vunpack.c.h.b16 %v186
    %v851 = vunpack.c.l.b16 %v187
    %v852 = vunpack.c.h.b16 %v187
    %v853 = vunpack.c.l.b16 %v188
    %v854 = vunpack.c.l.b16 %v189
    %v855 = vunpack.c.h.b16 %v189
    %v856 = vunpack.c.l.b16 %v190
    %v857 = vunpack.c.h.b16 %v190
    %v858 = vunpack.c.l.b16 %v191
    %v859 = vunpack.c.h.b16 %v191
    %v860 = vunpack.c.l.b16 %v192
    %v861 = vunpack.c.h.b16 %v192
    %v862 = vunpack.c.l.b16 %v193
    %v863 = vunpack.c.h.b16 %v193
    %v864 = vunpack.c.l.b16 %v194
    %v865 = vunpack.c.h.b16 %v194
    %v866 = vunpack.c.l.b16 %v195
    %v867 = vunpack.c.h.b16 %v195
    %v868 = vunpack.c.l.b16 %v196
    %v869 = vunpack.c.h.b16 %v196
    %v870 = vunpack.c.l.b16 %v197
    %v871 = vunpack.c.l.b16 %v198
    %v872 = vunpack.c.h.b16 %v198
    %v873 = vunpack.c.l.b16 %v199
    %v874 = vunpack.c.h.b16 %v199
    %v875 = vunpack.c.l.b16 %v200
    %v876 = vunpack.c.h.b16 %v200
    %v877 = vunpack.c.l.b16 %v201
    %v878 = vunpack.c.h.b16 %v201
    %v879 = vunpack.c.l.b16 %v202
    %v880 = vunpack.c.h.b16 %v202
    %v881 = vunpack.c.l.b16 %v203
    %v882 = vunpack.c.h.b16 %v203
    %v883 = vunpack.c.l.b16 %v204
    %v884 = vunpack.c.h.b16 %v204
    %v885 = vunpack.c.l.b16 %v205
    %v886 = vunpack.c.h.b16 %v205
    %v887 = vunpack.c.l.b16 %v206
    %v888 = vunpack.c.l.b16 %v207
    %v889 = vunpack.c.h.b16 %v207
    %v890 = vunpack.c.l.b16 %v208
    %v891 = vunpack.c.h.b16 %v208
    %v892 = vunpack.c.l.b16 %v209
    %v893 = vunpack.c.h.b16 %v209
    %v894 = vunpack.c.l.b16 %v210
    %v895 = vunpack.c.h.b16 %v210
    %v896 = vunpack.c.l.b16 %v211
    %v897 = vunpack.c.h.b16 %v211
    %v898 = vunpack.c.l.b16 %v212
    %v899 = vunpack.c.h.b16 %v212
    %v900 = vunpack.c.l.b16 %v213
    %v901 = vunpack.c.h.b16 %v213
    %v902 = vunpack.c.l.b16 %v214
    %v903 = vunpack.c.h.b16 %v214
    %v904 = vunpack.c.l.b16 %v215
    %v905 = vunpack.c.l.b16 %v216
    %v906 = vunpack.c.h.b16 %v216
    %v907 = vunpack.c.l.b16 %v217
    %v908 = vunpack.c.h.b16 %v217
    %v909 = vunpack.c.l.b16 %v218
    %v910 = vunpack.c.h.b16 %v218
    %v911 = vunpack.c.l.b16 %v219
    %v912 = vunpack.c.h.b16 %v219
    %v913 = vunpack.c.l.b16 %v220
    %v914 = vunpack.c.h.b16 %v220
    %v915 = vunpack.c.l.b16 %v221
    %v916 = vunpack.c.h.b16 %v221
    %v917 = vunpack.c.l.b16 %v222
    %v918 = vunpack.c.h.b16 %v222
    %v919 = vunpack.c.l.b16 %v223
    %v920 = vunpack.c.h.b16 %v223
    %v921 = vunpack.c.l.b16 %v224
    %v922 = vunpack.c.l.b16 %v225
    %v923 = vunpack.c.h.b16 %v225
    %v924 = vunpack.c.l.b16 %v226
    %v925 = vunpack.c.h.b16 %v226
    %v926 = vunpack.c.l.b16 %v227
    %v927 = vunpack.c.h.b16 %v227
    %v928 = vunpack.c.l.b16 %v228
    %v929 = vunpack.c.h.b16 %v228
    %v930 = vunpack.c.l.b16 %v229
    %v931 = vunpack.c.h.b16 %v229
    %v932 = vunpack.c.l.b16 %v230
    %v933 = vunpack.c.h.b16 %v230
    %v934 = vunpack.c.l.b16 %v231
    %v935 = vunpack.c.h.b16 %v231
    %v936 = vunpack.c.l.b16 %v232
    %v937 = vunpack.c.h.b16 %v232
    %v938 = vunpack.c.l.b16 %v233
    %v939 = vunpack.c.l.b16 %v234
    %v940 = vunpack.c.h.b16 %v234
    %v941 = vunpack.c.l.b16 %v235
    %v942 = vunpack.c.h.b16 %v235
    %v943 = vunpack.c.l.b16 %v236
    %v944 = vunpack.c.h.b16 %v236
    %v945 = vunpack.c.l.b16 %v237
    %v946 = vunpack.c.h.b16 %v237
    %v947 = vunpack.c.l.b16 %v238
    %v948 = vunpack.c.h.b16 %v238
    %v949 = vunpack.c.l.b16 %v239
    %v950 = vunpack.c.h.b16 %v239
    %v951 = vunpack.c.l.b16 %v240
    %v952 = vunpack.c.h.b16 %v240
    %v953 = vunpack.c.l.b16 %v241
    %v954 = vunpack.c.h.b16 %v241
    %v955 = vunpack.c.l.b16 %v242
    %v956 = vpack.c.b16 %v582, %v565
    %v957 = vpack.c.b16 %v583, %v566
    %v958 = vpack.c.b16 %v584, %v567
    %v959 = vpack.c.b16 %v585, %v568
    %v960 = vpack.c.b16 %v586, %v569
    %v961 = vpack.c.b16 %v587, %v570
    %v962 = vpack.c.b16 %v588, %v571
    %v963 = vpack.c.b16 %v589, %v572
    %v964 = vpack.c.b16 %v590, %v573
    %v965 = vpack.c.b16 %v591, %v574
    %v966 = vpack.c.b16 %v592, %v575
    %v967 = vpack.c.b16 %v593, %v576
    %v968 = vpack.c.b16 %v594, %v577
    %v969 = vpack.c.b16 %v595, %v578
    %v970 = vpack.c.b16 %v596, %v579
    %v971 = vpack.c.b16 %v597, %v580
    %v972 = vpack.c.b16 %v598, %v581
    %v973 = vpack.c.b16 %v616, %v599
    %v974 = vpack.c.b16 %v617, %v600
    %v975 = vpack.c.b16 %v618, %v601
    %v976 = vpack.c.b16 %v619, %v602
    %v977 = vpack.c.b16 %v620, %v603
    %v978 = vpack.c.b16 %v621, %v604
    %v979 = vpack.c.b16 %v622, %v605
    %v980 = vpack.c.b16 %v623, %v606
    %v981 = vpack.c.b16 %v624, %v607
    %v982 = vpack.c.b16 %v625, %v608
    %v983 = vpack.c.b16 %v626, %v609
    %v984 = vpack.c.b16 %v627, %v610
    %v985 = vpack.c.b16 %v628, %v611
    %v986 = vpack.c.b16 %v629, %v612
    %v987 = vpack.c.b16 %v630, %v613
    %v988 = vpack.c.b16 %v631, %v614
    %v989 = vpack.c.b16 %v632, %v615
    %v990 = vpack.c.b16 %v650, %v633
    %v991 = vpack.c.b16 %v651, %v634
    %v992 = vpack.c.b16 %v652, %v635
    %v993 = vpack.c.b16 %v653, %v636
    %v994 = vpack.c.b16 %v654, %v637
    %v995 = vpack.c.b16 %v655, %v638
    %v996 = vpack.c.b16 %v656, %v639
    %v997 = vpack.c.b16 %v657, %v640
    %v998 = vpack.c.b16 %v658, %v641
    %v999 = vpack.c.b16 %v659, %v642
    %v1000 = vpack.c.b16 %v660, %v643
    %v1001 = vpack.c.b16 %v661, %v644
    %v1002 = vpack.c.b16 %v662, %v645
    %v1003 = vpack.c.b16 %v663, %v646
    %v1004 = vpack.c.b16 %v664, %v647
    %v1005 = vpack.c.b16 %v665, %v648
    %v1006 = vpack.c.b16 %v666, %v649
    %v1007 = vpack.c.b16 %v684, %v667
    %v1008 = vpack.c.b16 %v685, %v668
    %v1009 = vpack.c.b16 %v686, %v669
    %v1010 = vpack.c.b16 %v687, %v670
    %v1011 = vpack.c.b16 %v688, %v671
    %v1012 = vpack.c.b16 %v689, %v672
    %v1013 = vpack.c.b16 %v690, %v673
    %v1014 = vpack.c.b16 %v691, %v674
    %v1015 = vpack.c.b16 %v692, %v675
    %v1016 = vpack.c.b16 %v693, %v676
    %v1017 = vpack.c.b16 %v694, %v677
    %v1018 = vpack.c.b16 %v695, %v678
    %v1019 = vpack.c.b16 %v696, %v679
    %v1020 = vpack.c.b16 %v697, %v680
    %v1021 = vpack.c.b16 %v698, %v681
    %v1022 = vpack.c.b16 %v699, %v682
    %v1023 = vpack.c.b16 %v700, %v683
    %v1024 = vpack.c.b16 %v718, %v701
    %v1025 = vpack.c.b16 %v719, %v702
    %v1026 = vpack.c.b16 %v720, %v703
    %v1027 = vpack.c.b16 %v721, %v704
    %v1028 = vpack.c.b16 %v722, %v705
    %v1029 = vpack.c.b16 %v723, %v706
    %v1030 = vpack.c.b16 %v724, %v707
    %v1031 = vpack.c.b16 %v725, %v708
    %v1032 = vpack.c.b16 %v726, %v709
    %v1033 = vpack.c.b16 %v727, %v710
    %v1034 = vpack.c.b16 %v728, %v711
    %v1035 = vpack.c.b16 %v729, %v712
    %v1036 = vpack.c.b16 %v730, %v713
    %v1037 = vpack.c.b16 %v731, %v714
    %v1038 = vpack.c.b16 %v732, %v715
    %v1039 = vpack.c.b16 %v733, %v716
    %v1040 = vpack.c.b16 %v734, %v717
    %v1041 = vpack.c.b16 %v752, %v735
    %v1042 = vpack.c.b16 %v753, %v736
    %v1043 = vpack.c.b16 %v754, %v737
    %v1044 = vpack.c.b16 %v755, %v738
    %v1045 = vpack.c.b16 %v756, %v739
    %v1046 = vpack.c.b16 %v757, %v740
    %v1047 = vpack.c.b16 %v758, %v741
    %v1048 = vpack.c.b16 %v759, %v742
    %v1049 = vpack.c.b16 %v760, %v743
    %v1050 = vpack.c.b16 %v761, %v744
    %v1051 = vpack.c.b16 %v762, %v745
    %v1052 = vpack.c.b16 %v763, %v746
    %v1053 = vpack.c.b16 %v764, %v747
    %v1054 = vpack.c.b16 %v765, %v748
    %v1055 = vpack.c.b16 %v766, %v749
    %v1056 = vpack.c.b16 %v767, %v750
    %v1057 = vpack.c.b16 %v768, %v751
    %v1058 = vpack.c.b16 %v786, %v769
    %v1059 = vpack.c.b16 %v787, %v770
    %v1060 = vpack.c.b16 %v788, %v771
    %v1061 = vpack.c.b16 %v789, %v772
    %v1062 = vpack.c.b16 %v790, %v773
    %v1063 = vpack.c.b16 %v791, %v774
    %v1064 = vpack.c.b16 %v792, %v775
    %v1065 = vpack.c.b16 %v793, %v776
    %v1066 = vpack.c.b16 %v794, %v777
    %v1067 = vpack.c.b16 %v795, %v778
    %v1068 = vpack.c.b16 %v796, %v779
    %v1069 = vpack.c.b16 %v797, %v780
    %v1070 = vpack.c.b16 %v798, %v781
    %v1071 = vpack.c.b16 %v799, %v782
    %v1072 = vpack.c.b16 %v800, %v783
    %v1073 = vpack.c.b16 %v801, %v784
    %v1074 = vpack.c.b16 %v802, %v785
    %v1075 = vpack.c.b16 %v820, %v803
    %v1076 = vpack.c.b16 %v821, %v804
    %v1077 = vpack.c.b16 %v822, %v805
    %v1078 = vpack.c.b16 %v823, %v806
    %v1079 = vpack.c.b16 %v824, %v807
    %v1080 = vpack.c.b16 %v825, %v808
    %v1081 = vpack.c.b16 %v826, %v809
    %v1082 = vpack.c.b16 %v827, %v810
    %v1083 = vpack.c.b16 %v828, %v811
    %v1084 = vpack.c.b16 %v829, %v812
    %v1085 = vpack.c.b16 %v830, %v813
    %v1086 = vpack.c.b16 %v831, %v814
    %v1087 = vpack.c.b16 %v832, %v815
    %v1088 = vpack.c.b16 %v833, %v816
    %v1089 = vpack.c.b16 %v834, %v817
    %v1090 = vpack.c.b16 %v835, %v818
    %v1091 = vpack.c.b16 %v836, %v819
    %v1092 = vpack.c.b16 %v854, %v837
    %v1093 = vpack.c.b16 %v855, %v838
    %v1094 = vpack.c.b16 %v856, %v839
    %v1095 = vpack.c.b16 %v857, %v840
    %v1096 = vpack.c.b16 %v858, %v841
    %v1097 = vpack.c.b16 %v859, %v842
    %v1098 = vpack.c.b16 %v860, %v843
    %v1099 = vpack.c.b16 %v861, %v844
    %v1100 = vpack.c.b16 %v862, %v845
    %v1101 = vpack.c.b16 %v863, %v846
    %v1102 = vpack.c.b16 %v864, %v847
    %v1103 = vpack.c.b16 %v865, %v848
    %v1104 = vpack.c.b16 %v866, %v849
    %v1105 = vpack.c.b16 %v867, %v850
    %v1106 = vpack.c.b16 %v868, %v851
    %v1107 = vpack.c.b16 %v869, %v852
    %v1108 = vpack.c.b16 %v870, %v853
    %v1109 = vpack.c.b16 %v888, %v871
    %v1110 = vpack.c.b16 %v889, %v872
    %v1111 = vpack.c.b16 %v890, %v873
    %v1112 = vpack.c.b16 %v891, %v874
    %v1113 = vpack.c.b16 %v892, %v875
    %v1114 = vpack.c.b16 %v893, %v876
    %v1115 = vpack.c.b16 %v894, %v877
    %v1116 = vpack.c.b16 %v895, %v878
    %v1117 = vpack.c.b16 %v896, %v879
    %v1118 = vpack.c.b16 %v897, %v880
    %v1119 = vpack.c.b16 %v898, %v881
    %v1120 = vpack.c.b16 %v899, %v882
    %v1121 = vpack.c.b16 %v900, %v883
    %v1122 = vpack.c.b16 %v901, %v884
    %v1123 = vpack.c.b16 %v902, %v885
    %v1124 = vpack.c.b16 %v903, %v886
    %v1125 = vpack.c.b16 %v904, %v887
    %v1126 = vpack.c.b16 %v922, %v905
    %v1127 = vpack.c.b16 %v923, %v906
    %v1128 = vpack.c.b16 %v924, %v907
    %v1129 = vpack.c.b16 %v925, %v908
    %v1130 = vpack.c.b16 %v926, %v909
    %v1131 = vpack.c.b16 %v927, %v910
    %v1132 = vpack.c.b16 %v928, %v911
    %v1133 = vpack.c.b16 %v929, %v912
    %v1134 = vpack.c.b16 %v930, %v913
    %v1135 = vpack.c.b16 %v931, %v914
    %v1136 = vpack.c.b16 %v932, %v915
    %v1137 = vpack.c.b16 %v933, %v916
    %v1138 = vpack.c.b16 %v934, %v917
    %v1139 = vpack.c.b16 %v935, %v918
    %v1140 = vpack.c.b16 %v936, %v919
    %v1141 = vpack.c.b16 %v937, %v920
    %v1142 = vpack.c.b16 %v938, %v921
    %v1143 = vpack.c.b16 %v939, %v939
    %v1144 = vpack.c.b16 %v940, %v940
    %v1145 = vpack.c.b16 %v941, %v941
    %v1146 = vpack.c.b16 %v942, %v942
    %v1147 = vpack.c.b16 %v943, %v943
    %v1148 = vpack.c.b16 %v944, %v944
    %v1149 = vpack.c.b16 %v945, %v945
    %v1150 = vpack.c.b16 %v946, %v946
    %v1151 = vpack.c.b16 %v947, %v947
    %v1152 = vpack.c.b16 %v948, %v948
    %v1153 = vpack.c.b16 %v949, %v949
    %v1154 = vpack.c.b16 %v950, %v950
    %v1155 = vpack.c.b16 %v951, %v951
    %v1156 = vpack.c.b16 %v952, %v952
    %v1157 = vpack.c.b16 %v953, %v953
    %v1158 = vpack.c.b16 %v954, %v954
    %v1159 = vpack.c.b16 %v955, %v955
    %vm1347 = vcmask 424960
    %v1349 = vsel %vm1347, %v356, 0
    %vm1351 = vcmask 1041408
    %v1353 = vsel %vm1351, %v1143, 0
    %v1356 = vsel %vm1351, %v1144, 0
    %v1359 = vsel %vm1351, %v1145, 0
    %v1362 = vsel %vm1351, %v1146, 0
    %v1365 = vsel %vm1351, %v1147, 0
    %v1368 = vsel %vm1351, %v1148, 0
    %v1371 = vsel %vm1351, %v1149, 0
    %v1374 = vsel %vm1351, %v1150, 0
    %v1377 = vsel %vm1351, %v1151, 0
    %v1380 = vsel %vm1351, %v1152, 0
    %v1383 = vsel %vm1351, %v1153, 0
    %v1386 = vsel %vm1351, %v1154, 0
    %v1389 = vsel %vm1351, %v1155, 0
    %v1392 = vsel %vm1351, %v1156, 0
    %v1395 = vsel %vm1351, %v1157, 0
    %v1398 = vsel %vm1351, %v1158, 0
    %v1401 = vsel %vm1351, %v1159, 0
    %1403 = vmatprep.subr.bf16.mxu0 %v1076
    %1404 = vmatpush1.bf16.msra.mxu0 %v1075
    %1405 = vmatprep.subr.bf16.mxu0 %v1059
    %1406 = vmatpush1.bf16.msra.mxu0 %v1058
    %1407 = vmatprep.subr.bf16.mxu0 %v1042
    %1408 = vmatpush1.bf16.msra.mxu0 %v1041
    %1409 = vmatprep.subr.bf16.mxu0 %v1025
    %1410 = vmatpush1.bf16.msra.mxu0 %v1024
    %1411 = vmatprep.subr.bf16.mxu0 %v1008
    %1412 = vmatpush1.bf16.msra.mxu0 %v1007
    %1413 = vmatprep.subr.bf16.mxu0 %v991
    %1414 = vmatpush1.bf16.msra.mxu0 %v990
    %1415 = vmatprep.subr.bf16.mxu0 %v974
    %1416 = vmatpush1.bf16.msra.mxu0 %v973
    %1417 = vmatprep.subr.bf16.mxu0 %v957
    %1418 = vmatpush1.bf16.msra.mxu0 %v956
    %1419 = vmatprep.subr.bf16.mxu0 0
    %1420 = vmatpush2.bf16.msra.mxu0 0
    %1421 = vmatprep.subr.bf16.mxu0 0
    %1422 = vmatpush2.bf16.msra.mxu0 0
    %1423 = vmatprep.subr.bf16.mxu0 0
    %1424 = vmatpush2.bf16.msra.mxu0 0
    %1425 = vmatprep.subr.bf16.mxu0 0
    %1426 = vmatpush2.bf16.msra.mxu0 0
    %1427 = vmatprep.subr.bf16.mxu0 %v1356
    %1428 = vmatpush2.bf16.msra.mxu0 %v1353
    %1429 = vmatprep.subr.bf16.mxu0 %v1127
    %1430 = vmatpush2.bf16.msra.mxu0 %v1126
    %1431 = vmatprep.subr.bf16.mxu0 %v1110
    %1432 = vmatpush2.bf16.msra.mxu0 %v1109
    %1433 = vmatprep.subr.bf16.mxu0 %v1093
    %1434 = vmatpush2.bf16.msra.mxu0 %v1092
    %1435 = vmatprep.mubr.bf16.mxu0 %v1349
    %1436 = vmatmul.mubr.bf16.gmra.mxu0 %v349
    %v1437 = vpop.f32.mrf.mxu0
    %v1438 = vadd.f32 %v252, %v1437
    %v1439 = vpop.f32.mrf.mxu0
    %v1440 = vadd.f32 %v256, %v1439
    %v1441 = vpop.f32.mrf.mxu0
    %v1442 = vpop.f32.mrf.mxu0
    %1443 = vdwg.mxu0
    %1444 = vmatprep.subr.bf16.mxu0 %v1078
    %1445 = vmatpush1.bf16.msra.mxu0 %v1077
    %1446 = vmatprep.subr.bf16.mxu0 %v1061
    %1447 = vmatpush1.bf16.msra.mxu0 %v1060
    %1448 = vmatprep.subr.bf16.mxu0 %v1044
    %1449 = vmatpush1.bf16.msra.mxu0 %v1043
    %1450 = vmatprep.subr.bf16.mxu0 %v1027
    %1451 = vmatpush1.bf16.msra.mxu0 %v1026
    %1452 = vmatprep.subr.bf16.mxu0 %v1010
    %1453 = vmatpush1.bf16.msra.mxu0 %v1009
    %1454 = vmatprep.subr.bf16.mxu0 %v993
    %1455 = vmatpush1.bf16.msra.mxu0 %v992
    %1456 = vmatprep.subr.bf16.mxu0 %v976
    %1457 = vmatpush1.bf16.msra.mxu0 %v975
    %1458 = vmatprep.subr.bf16.mxu0 %v959
    %1459 = vmatpush1.bf16.msra.mxu0 %v958
    %1460 = vmatprep.subr.bf16.mxu0 0
    %1461 = vmatpush2.bf16.msra.mxu0 0
    %1462 = vmatprep.subr.bf16.mxu0 0
    %1463 = vmatpush2.bf16.msra.mxu0 0
    %1464 = vmatprep.subr.bf16.mxu0 0
    %1465 = vmatpush2.bf16.msra.mxu0 0
    %1466 = vmatprep.subr.bf16.mxu0 0
    %1467 = vmatpush2.bf16.msra.mxu0 0
    %1468 = vmatprep.subr.bf16.mxu0 %v1362
    %1469 = vmatpush2.bf16.msra.mxu0 %v1359
    %1470 = vmatprep.subr.bf16.mxu0 %v1129
    %1471 = vmatpush2.bf16.msra.mxu0 %v1128
    %1472 = vmatprep.subr.bf16.mxu0 %v1112
    %1473 = vmatpush2.bf16.msra.mxu0 %v1111
    %1474 = vmatprep.subr.bf16.mxu0 %v1095
    %1475 = vmatpush2.bf16.msra.mxu0 %v1094
    %1476 = vmatprep.mubr.bf16.mxu0 %v1349
    %1477 = vmatmul.mubr.bf16.gmra.mxu0 %v349
    %v1478 = vpop.f32.mrf.mxu0
    %v1479 = vadd.f32 %v260, %v1478
    %v1480 = vpop.f32.mrf.mxu0
    %v1481 = vadd.f32 %v264, %v1480
    %v1482 = vpop.f32.mrf.mxu0
    %v1483 = vpop.f32.mrf.mxu0
    %1484 = vdwg.mxu0
    %1485 = vmatprep.subr.bf16.mxu0 %v1080
    %1486 = vmatpush1.bf16.msra.mxu0 %v1079
    %1487 = vmatprep.subr.bf16.mxu0 %v1063
    %1488 = vmatpush1.bf16.msra.mxu0 %v1062
    %1489 = vmatprep.subr.bf16.mxu0 %v1046
    %1490 = vmatpush1.bf16.msra.mxu0 %v1045
    %1491 = vmatprep.subr.bf16.mxu0 %v1029
    %1492 = vmatpush1.bf16.msra.mxu0 %v1028
    %1493 = vmatprep.subr.bf16.mxu0 %v1012
    %1494 = vmatpush1.bf16.msra.mxu0 %v1011
    %1495 = vmatprep.subr.bf16.mxu0 %v995
    %1496 = vmatpush1.bf16.msra.mxu0 %v994
    %1497 = vmatprep.subr.bf16.mxu0 %v978
    %1498 = vmatpush1.bf16.msra.mxu0 %v977
    %1499 = vmatprep.subr.bf16.mxu0 %v961
    %1500 = vmatpush1.bf16.msra.mxu0 %v960
    %1501 = vmatprep.subr.bf16.mxu0 0
    %1502 = vmatpush2.bf16.msra.mxu0 0
    %1503 = vmatprep.subr.bf16.mxu0 0
    %1504 = vmatpush2.bf16.msra.mxu0 0
    %1505 = vmatprep.subr.bf16.mxu0 0
    %1506 = vmatpush2.bf16.msra.mxu0 0
    %1507 = vmatprep.subr.bf16.mxu0 0
    %1508 = vmatpush2.bf16.msra.mxu0 0
    %1509 = vmatprep.subr.bf16.mxu0 %v1368
    %1510 = vmatpush2.bf16.msra.mxu0 %v1365
    %1511 = vmatprep.subr.bf16.mxu0 %v1131
    %1512 = vmatpush2.bf16.msra.mxu0 %v1130
    %1513 = vmatprep.subr.bf16.mxu0 %v1114
    %1514 = vmatpush2.bf16.msra.mxu0 %v1113
    %1515 = vmatprep.subr.bf16.mxu0 %v1097
    %1516 = vmatpush2.bf16.msra.mxu0 %v1096
    %1517 = vmatprep.mubr.bf16.mxu0 %v1349
    %1518 = vmatmul.mubr.bf16.gmra.mxu0 %v349
    %v1519 = vpop.f32.mrf.mxu0
    %v1520 = vadd.f32 %v268, %v1519
    %v1521 = vpop.f32.mrf.mxu0
    %v1522 = vadd.f32 %v272, %v1521
    %v1523 = vpop.f32.mrf.mxu0
    %v1524 = vpop.f32.mrf.mxu0
    %1525 = vdwg.mxu0
    %1526 = vmatprep.subr.bf16.mxu0 %v1082
    %1527 = vmatpush1.bf16.msra.mxu0 %v1081
    %1528 = vmatprep.subr.bf16.mxu0 %v1065
    %1529 = vmatpush1.bf16.msra.mxu0 %v1064
    %1530 = vmatprep.subr.bf16.mxu0 %v1048
    %1531 = vmatpush1.bf16.msra.mxu0 %v1047
    %1532 = vmatprep.subr.bf16.mxu0 %v1031
    %1533 = vmatpush1.bf16.msra.mxu0 %v1030
    %1534 = vmatprep.subr.bf16.mxu0 %v1014
    %1535 = vmatpush1.bf16.msra.mxu0 %v1013
    %1536 = vmatprep.subr.bf16.mxu0 %v997
    %1537 = vmatpush1.bf16.msra.mxu0 %v996
    %1538 = vmatprep.subr.bf16.mxu0 %v980
    %1539 = vmatpush1.bf16.msra.mxu0 %v979
    %1540 = vmatprep.subr.bf16.mxu0 %v963
    %1541 = vmatpush1.bf16.msra.mxu0 %v962
    %1542 = vmatprep.subr.bf16.mxu0 0
    %1543 = vmatpush2.bf16.msra.mxu0 0
    %1544 = vmatprep.subr.bf16.mxu0 0
    %1545 = vmatpush2.bf16.msra.mxu0 0
    %1546 = vmatprep.subr.bf16.mxu0 0
    %1547 = vmatpush2.bf16.msra.mxu0 0
    %1548 = vmatprep.subr.bf16.mxu0 0
    %1549 = vmatpush2.bf16.msra.mxu0 0
    %1550 = vmatprep.subr.bf16.mxu0 %v1374
    %1551 = vmatpush2.bf16.msra.mxu0 %v1371
    %1552 = vmatprep.subr.bf16.mxu0 %v1133
    %1553 = vmatpush2.bf16.msra.mxu0 %v1132
    %1554 = vmatprep.subr.bf16.mxu0 %v1116
    %1555 = vmatpush2.bf16.msra.mxu0 %v1115
    %1556 = vmatprep.subr.bf16.mxu0 %v1099
    %1557 = vmatpush2.bf16.msra.mxu0 %v1098
    %1558 = vmatprep.mubr.bf16.mxu0 %v1349
    %1559 = vmatmul.mubr.bf16.gmra.mxu0 %v349
    %v1560 = vpop.f32.mrf.mxu0
    %v1561 = vadd.f32 %v276, %v1560
    %v1562 = vpop.f32.mrf.mxu0
    %v1563 = vadd.f32 %v280, %v1562
    %v1564 = vpop.f32.mrf.mxu0
    %v1565 = vpop.f32.mrf.mxu0
    %1566 = vdwg.mxu0
    %1567 = vmatprep.subr.bf16.mxu0 %v1084
    %1568 = vmatpush1.bf16.msra.mxu0 %v1083
    %1569 = vmatprep.subr.bf16.mxu0 %v1067
    %1570 = vmatpush1.bf16.msra.mxu0 %v1066
    %1571 = vmatprep.subr.bf16.mxu0 %v1050
    %1572 = vmatpush1.bf16.msra.mxu0 %v1049
    %1573 = vmatprep.subr.bf16.mxu0 %v1033
    %1574 = vmatpush1.bf16.msra.mxu0 %v1032
    %1575 = vmatprep.subr.bf16.mxu0 %v1016
    %1576 = vmatpush1.bf16.msra.mxu0 %v1015
    %1577 = vmatprep.subr.bf16.mxu0 %v999
    %1578 = vmatpush1.bf16.msra.mxu0 %v998
    %1579 = vmatprep.subr.bf16.mxu0 %v982
    %1580 = vmatpush1.bf16.msra.mxu0 %v981
    %1581 = vmatprep.subr.bf16.mxu0 %v965
    %1582 = vmatpush1.bf16.msra.mxu0 %v964
    %1583 = vmatprep.subr.bf16.mxu0 0
    %1584 = vmatpush2.bf16.msra.mxu0 0
    %1585 = vmatprep.subr.bf16.mxu0 0
    %1586 = vmatpush2.bf16.msra.mxu0 0
    %1587 = vmatprep.subr.bf16.mxu0 0
    %1588 = vmatpush2.bf16.msra.mxu0 0
    %1589 = vmatprep.subr.bf16.mxu0 0
    %1590 = vmatpush2.bf16.msra.mxu0 0
    %1591 = vmatprep.subr.bf16.mxu0 %v1380
    %1592 = vmatpush2.bf16.msra.mxu0 %v1377
    %1593 = vmatprep.subr.bf16.mxu0 %v1135
    %1594 = vmatpush2.bf16.msra.mxu0 %v1134
    %1595 = vmatprep.subr.bf16.mxu0 %v1118
    %1596 = vmatpush2.bf16.msra.mxu0 %v1117
    %1597 = vmatprep.subr.bf16.mxu0 %v1101
    %1598 = vmatpush2.bf16.msra.mxu0 %v1100
    %1599 = vmatprep.mubr.bf16.mxu0 %v1349
    %1600 = vmatmul.mubr.bf16.gmra.mxu0 %v349
    %v1601 = vpop.f32.mrf.mxu0
    %v1602 = vadd.f32 %v284, %v1601
    %v1603 = vpop.f32.mrf.mxu0
    %v1604 = vadd.f32 %v288, %v1603
    %v1605 = vpop.f32.mrf.mxu0
    %v1606 = vpop.f32.mrf.mxu0
    %1607 = vdwg.mxu0
    %1608 = vmatprep.subr.bf16.mxu0 %v1086
    %1609 = vmatpush1.bf16.msra.mxu0 %v1085
    %1610 = vmatprep.subr.bf16.mxu0 %v1069
    %1611 = vmatpush1.bf16.msra.mxu0 %v1068
    %1612 = vmatprep.subr.bf16.mxu0 %v1052
    %1613 = vmatpush1.bf16.msra.mxu0 %v1051
    %1614 = vmatprep.subr.bf16.mxu0 %v1035
    %1615 = vmatpush1.bf16.msra.mxu0 %v1034
    %1616 = vmatprep.subr.bf16.mxu0 %v1018
    %1617 = vmatpush1.bf16.msra.mxu0 %v1017
    %1618 = vmatprep.subr.bf16.mxu0 %v1001
    %1619 = vmatpush1.bf16.msra.mxu0 %v1000
    %1620 = vmatprep.subr.bf16.mxu0 %v984
    %1621 = vmatpush1.bf16.msra.mxu0 %v983
    %1622 = vmatprep.subr.bf16.mxu0 %v967
    %1623 = vmatpush1.bf16.msra.mxu0 %v966
    %1624 = vmatprep.subr.bf16.mxu0 0
    %1625 = vmatpush2.bf16.msra.mxu0 0
    %1626 = vmatprep.subr.bf16.mxu0 0
    %1627 = vmatpush2.bf16.msra.mxu0 0
    %1628 = vmatprep.subr.bf16.mxu0 0
    %1629 = vmatpush2.bf16.msra.mxu0 0
    %1630 = vmatprep.subr.bf16.mxu0 0
    %1631 = vmatpush2.bf16.msra.mxu0 0
    %1632 = vmatprep.subr.bf16.mxu0 %v1386
    %1633 = vmatpush2.bf16.msra.mxu0 %v1383
    %1634 = vmatprep.subr.bf16.mxu0 %v1137
    %1635 = vmatpush2.bf16.msra.mxu0 %v1136
    %1636 = vmatprep.subr.bf16.mxu0 %v1120
    %1637 = vmatpush2.bf16.msra.mxu0 %v1119
    %1638 = vmatprep.subr.bf16.mxu0 %v1103
    %1639 = vmatpush2.bf16.msra.mxu0 %v1102
    %1640 = vmatprep.mubr.bf16.mxu0 %v1349
    %1641 = vmatmul.mubr.bf16.gmra.mxu0 %v349
    %v1642 = vpop.f32.mrf.mxu0
    %v1643 = vadd.f32 %v292, %v1642
    %v1644 = vpop.f32.mrf.mxu0
    %v1645 = vadd.f32 %v296, %v1644
    %v1646 = vpop.f32.mrf.mxu0
    %v1647 = vpop.f32.mrf.mxu0
    %1648 = vdwg.mxu0
    %1649 = vmatprep.subr.bf16.mxu0 %v1088
    %1650 = vmatpush1.bf16.msra.mxu0 %v1087
    %1651 = vmatprep.subr.bf16.mxu0 %v1071
    %1652 = vmatpush1.bf16.msra.mxu0 %v1070
    %1653 = vmatprep.subr.bf16.mxu0 %v1054
    %1654 = vmatpush1.bf16.msra.mxu0 %v1053
    %1655 = vmatprep.subr.bf16.mxu0 %v1037
    %1656 = vmatpush1.bf16.msra.mxu0 %v1036
    %1657 = vmatprep.subr.bf16.mxu0 %v1020
    %1658 = vmatpush1.bf16.msra.mxu0 %v1019
    %1659 = vmatprep.subr.bf16.mxu0 %v1003
    %1660 = vmatpush1.bf16.msra.mxu0 %v1002
    %1661 = vmatprep.subr.bf16.mxu0 %v986
    %1662 = vmatpush1.bf16.msra.mxu0 %v985
    %1663 = vmatprep.subr.bf16.mxu0 %v969
    %1664 = vmatpush1.bf16.msra.mxu0 %v968
    %1665 = vmatprep.subr.bf16.mxu0 0
    %1666 = vmatpush2.bf16.msra.mxu0 0
    %1667 = vmatprep.subr.bf16.mxu0 0
    %1668 = vmatpush2.bf16.msra.mxu0 0
    %1669 = vmatprep.subr.bf16.mxu0 0
    %1670 = vmatpush2.bf16.msra.mxu0 0
    %1671 = vmatprep.subr.bf16.mxu0 0
    %1672 = vmatpush2.bf16.msra.mxu0 0
    %1673 = vmatprep.subr.bf16.mxu0 %v1392
    %1674 = vmatpush2.bf16.msra.mxu0 %v1389
    %1675 = vmatprep.subr.bf16.mxu0 %v1139
    %1676 = vmatpush2.bf16.msra.mxu0 %v1138
    %1677 = vmatprep.subr.bf16.mxu0 %v1122
    %1678 = vmatpush2.bf16.msra.mxu0 %v1121
    %1679 = vmatprep.subr.bf16.mxu0 %v1105
    %1680 = vmatpush2.bf16.msra.mxu0 %v1104
    %1681 = vmatprep.mubr.bf16.mxu0 %v1349
    %1682 = vmatmul.mubr.bf16.gmra.mxu0 %v349
    %v1683 = vpop.f32.mrf.mxu0
    %v1684 = vadd.f32 %v300, %v1683
    %v1685 = vpop.f32.mrf.mxu0
    %v1686 = vadd.f32 %v304, %v1685
    %v1687 = vpop.f32.mrf.mxu0
    %v1688 = vpop.f32.mrf.mxu0
    %1689 = vdwg.mxu0
    %1690 = vmatprep.subr.bf16.mxu0 %v1090
    %1691 = vmatpush1.bf16.msra.mxu0 %v1089
    %1692 = vmatprep.subr.bf16.mxu0 %v1073
    %1693 = vmatpush1.bf16.msra.mxu0 %v1072
    %1694 = vmatprep.subr.bf16.mxu0 %v1056
    %1695 = vmatpush1.bf16.msra.mxu0 %v1055
    %1696 = vmatprep.subr.bf16.mxu0 %v1039
    %1697 = vmatpush1.bf16.msra.mxu0 %v1038
    %1698 = vmatprep.subr.bf16.mxu0 %v1022
    %1699 = vmatpush1.bf16.msra.mxu0 %v1021
    %1700 = vmatprep.subr.bf16.mxu0 %v1005
    %1701 = vmatpush1.bf16.msra.mxu0 %v1004
    %1702 = vmatprep.subr.bf16.mxu0 %v988
    %1703 = vmatpush1.bf16.msra.mxu0 %v987
    %1704 = vmatprep.subr.bf16.mxu0 %v971
    %1705 = vmatpush1.bf16.msra.mxu0 %v970
    %1706 = vmatprep.subr.bf16.mxu0 0
    %1707 = vmatpush2.bf16.msra.mxu0 0
    %1708 = vmatprep.subr.bf16.mxu0 0
    %1709 = vmatpush2.bf16.msra.mxu0 0
    %1710 = vmatprep.subr.bf16.mxu0 0
    %1711 = vmatpush2.bf16.msra.mxu0 0
    %1712 = vmatprep.subr.bf16.mxu0 0
    %1713 = vmatpush2.bf16.msra.mxu0 0
    %1714 = vmatprep.subr.bf16.mxu0 %v1398
    %1715 = vmatpush2.bf16.msra.mxu0 %v1395
    %1716 = vmatprep.subr.bf16.mxu0 %v1141
    %1717 = vmatpush2.bf16.msra.mxu0 %v1140
    %1718 = vmatprep.subr.bf16.mxu0 %v1124
    %1719 = vmatpush2.bf16.msra.mxu0 %v1123
    %1720 = vmatprep.subr.bf16.mxu0 %v1107
    %1721 = vmatpush2.bf16.msra.mxu0 %v1106
    %1722 = vmatprep.mubr.bf16.mxu0 %v1349
    %1723 = vmatmul.mubr.bf16.gmra.mxu0 %v349
    %v1724 = vpop.f32.mrf.mxu0
    %v1725 = vadd.f32 %v308, %v1724
    %v1726 = vpop.f32.mrf.mxu0
    %v1727 = vadd.f32 %v312, %v1726
    %v1728 = vpop.f32.mrf.mxu0
    %v1729 = vpop.f32.mrf.mxu0
    %1730 = vdwg.mxu0
    %1731 = vmatprep.subr.bf16.mxu0 0
    %1732 = vmatpush1.bf16.msra.mxu0 %v1091
    %1733 = vmatprep.subr.bf16.mxu0 0
    %1734 = vmatpush1.bf16.msra.mxu0 %v1074
    %1735 = vmatprep.subr.bf16.mxu0 0
    %1736 = vmatpush1.bf16.msra.mxu0 %v1057
    %1737 = vmatprep.subr.bf16.mxu0 0
    %1738 = vmatpush1.bf16.msra.mxu0 %v1040
    %1739 = vmatprep.subr.bf16.mxu0 0
    %1740 = vmatpush1.bf16.msra.mxu0 %v1023
    %1741 = vmatprep.subr.bf16.mxu0 0
    %1742 = vmatpush1.bf16.msra.mxu0 %v1006
    %1743 = vmatprep.subr.bf16.mxu0 0
    %1744 = vmatpush1.bf16.msra.mxu0 %v989
    %1745 = vmatprep.subr.bf16.mxu0 0
    %1746 = vmatpush1.bf16.msra.mxu0 %v972
    %1747 = vmatprep.subr.bf16.mxu0 0
    %1748 = vmatpush2.bf16.msra.mxu0 0
    %1749 = vmatprep.subr.bf16.mxu0 0
    %1750 = vmatpush2.bf16.msra.mxu0 0
    %1751 = vmatprep.subr.bf16.mxu0 0
    %1752 = vmatpush2.bf16.msra.mxu0 0
    %1753 = vmatprep.subr.bf16.mxu0 0
    %1754 = vmatpush2.bf16.msra.mxu0 0
    %1755 = vmatprep.subr.bf16.mxu0 0
    %1756 = vmatpush2.bf16.msra.mxu0 %v1401
    %1757 = vmatprep.subr.bf16.mxu0 0
    %1758 = vmatpush2.bf16.msra.mxu0 %v1142
    %1759 = vmatprep.subr.bf16.mxu0 0
    %1760 = vmatpush2.bf16.msra.mxu0 %v1125
    %1761 = vmatprep.subr.bf16.mxu0 0
    %1762 = vmatpush2.bf16.msra.mxu0 %v1108
    %1763 = vmatprep.mubr.bf16.mxu0 %v1349
    %1764 = vmatmul.mubr.bf16.gmra.mxu0 %v349
    %v1765 = vpop.f32.mrf.mxu0
    %v1766 = vadd.f32 %v316, %v1765
    %v1767 = vpop.f32.mrf.mxu0
    %v1768 = vpop.f32.mrf.mxu0
    %v1769 = vpop.f32.mrf.mxu0
    %1770 = vdwg.mxu0
    %v1771 = vsel %vm1351, %v1438, -inf
    %v1772 = vsel %vm1351, %v1440, -inf
    %v1773 = vsel %vm1351, %v1479, -inf
    %v1774 = vsel %vm1351, %v1481, -inf
    %v1775 = vsel %vm1351, %v1520, -inf
    %v1776 = vmax.f32 %v1771, %v1775
    %v1777 = vsel %vm1351, %v1522, -inf
    %v1778 = vmax.f32 %v1772, %v1777
    %v1779 = vsel %vm1351, %v1561, -inf
    %v1780 = vmax.f32 %v1773, %v1779
    %v1781 = vsel %vm1351, %v1563, -inf
    %v1782 = vmax.f32 %v1774, %v1781
    %v1783 = vsel %vm1351, %v1602, -inf
    %v1784 = vmax.f32 %v1776, %v1783
    %v1785 = vsel %vm1351, %v1604, -inf
    %v1786 = vmax.f32 %v1778, %v1785
    %v1787 = vsel %vm1351, %v1643, -inf
    %v1788 = vmax.f32 %v1780, %v1787
    %v1789 = vsel %vm1351, %v1645, -inf
    %v1790 = vmax.f32 %v1782, %v1789
    %v1791 = vsel %vm1351, %v1684, -inf
    %v1792 = vmax.f32 %v1784, %v1791
    %v1793 = vsel %vm1351, %v1686, -inf
    %v1794 = vmax.f32 %v1786, %v1793
    %v1795 = vsel %vm1351, %v1725, -inf
    %v1796 = vmax.f32 %v1788, %v1795
    %v1797 = vsel %vm1351, %v1727, -inf
    %v1798 = vmax.f32 %v1790, %v1797
    %v1799 = vsel %vm1351, %v1766, -inf
    %v1800 = vmax.f32 %v1792, %v1799
    %v1801 = vmax.f32 %v1800, %v1794
    %v1802 = vmax.f32 %v1796, %v1798
    %v1803 = vmax.f32 %v1801, %v1802
    %1804 = vmax.xlane.f32.xlu0 %v1803
    %v1805 = vpop.xlane.xlu0 %1804
    %v1806 = vsub.f32 %v1438, %v1805
    %v1807 = vsub.f32 %v1440, %v1805
    %v1808 = vsub.f32 %v1479, %v1805
    %v1809 = vsub.f32 %v1481, %v1805
    %v1810 = vsub.f32 %v1520, %v1805
    %v1811 = vsub.f32 %v1522, %v1805
    %v1812 = vsub.f32 %v1561, %v1805
    %v1813 = vsub.f32 %v1563, %v1805
    %v1814 = vsub.f32 %v1602, %v1805
    %v1815 = vsub.f32 %v1604, %v1805
    %v1816 = vsub.f32 %v1643, %v1805
    %v1817 = vsub.f32 %v1645, %v1805
    %v1818 = vsub.f32 %v1684, %v1805
    %v1819 = vsub.f32 %v1686, %v1805
    %v1820 = vsub.f32 %v1725, %v1805
    %v1821 = vsub.f32 %v1727, %v1805
    %v1822 = vsub.f32 %v1766, %v1805
    %v1823 = vmul.f32 %v1806, 1.442695
    %v1824 = vpow.pop %v1823
    %v1825 = vmul.f32 %v1807, 1.442695
    %v1826 = vpow.pop %v1825
    %v1827 = vmul.f32 %v1808, 1.442695
    %v1828 = vpow.pop %v1827
    %v1829 = vmul.f32 %v1809, 1.442695
    %v1830 = vpow.pop %v1829
    %v1831 = vmul.f32 %v1810, 1.442695
    %v1832 = vpow.pop %v1831
    %v1833 = vmul.f32 %v1811, 1.442695
    %v1834 = vpow.pop %v1833
    %v1835 = vmul.f32 %v1812, 1.442695
    %v1836 = vpow.pop %v1835
    %v1837 = vmul.f32 %v1813, 1.442695
    %v1838 = vpow.pop %v1837
    %v1839 = vmul.f32 %v1814, 1.442695
    %v1840 = vpow.pop %v1839
    %v1841 = vmul.f32 %v1815, 1.442695
    %v1842 = vpow.pop %v1841
    %v1843 = vmul.f32 %v1816, 1.442695
    %v1844 = vpow.pop %v1843
    %v1845 = vmul.f32 %v1817, 1.442695
    %v1846 = vpow.pop %v1845
    %v1847 = vmul.f32 %v1818, 1.442695
    %v1848 = vpow.pop %v1847
    %v1849 = vmul.f32 %v1819, 1.442695
    %v1850 = vpow.pop %v1849
    %v1851 = vmul.f32 %v1820, 1.442695
    %v1852 = vpow.pop %v1851
    %v1853 = vmul.f32 %v1821, 1.442695
    %v1854 = vpow.pop %v1853
    %v1855 = vmul.f32 %v1822, 1.442695
    %v1856 = vpow.pop %v1855
    %v1857 = vsel %vm1351, %v1824, 0.0
    %v1858 = vsel %vm1351, %v1826, 0.0
    %v1859 = vadd.f32 %v1857, %v1858
    %v1860 = vsel %vm1351, %v1828, 0.0
    %v1861 = vadd.f32 %v1859, %v1860
    %v1862 = vsel %vm1351, %v1830, 0.0
    %v1863 = vadd.f32 %v1861, %v1862
    %v1864 = vsel %vm1351, %v1832, 0.0
    %v1865 = vadd.f32 %v1863, %v1864
    %v1866 = vsel %vm1351, %v1834, 0.0
    %v1867 = vadd.f32 %v1865, %v1866
    %v1868 = vsel %vm1351, %v1836, 0.0
    %v1869 = vadd.f32 %v1867, %v1868
    %v1870 = vsel %vm1351, %v1838, 0.0
    %v1871 = vadd.f32 %v1869, %v1870
    %v1872 = vsel %vm1351, %v1840, 0.0
    %v1873 = vadd.f32 %v1871, %v1872
    %v1874 = vsel %vm1351, %v1842, 0.0
    %v1875 = vadd.f32 %v1873, %v1874
    %v1876 = vsel %vm1351, %v1844, 0.0
    %v1877 = vadd.f32 %v1875, %v1876
    %v1878 = vsel %vm1351, %v1846, 0.0
    %v1879 = vadd.f32 %v1877, %v1878
    %v1880 = vsel %vm1351, %v1848, 0.0
    %v1881 = vadd.f32 %v1879, %v1880
    %v1882 = vsel %vm1351, %v1850, 0.0
    %v1883 = vadd.f32 %v1881, %v1882
    %v1884 = vsel %vm1351, %v1852, 0.0
    %v1885 = vadd.f32 %v1883, %v1884
    %v1886 = vsel %vm1351, %v1854, 0.0
    %v1887 = vadd.f32 %v1885, %v1886
    %v1888 = vsel %vm1351, %v1856, 0.0
    %v1889 = vadd.f32 %v1887, %v1888
    %1890 = vadd.xlane.f32.xlu0 %v1889
    %v1891 = vpop.xlane.xlu0 %1890
    %v1892 = vlog2.pop %v1891
    %v1893 = vmul.f32 %v1892, 0.6931472
    %v1894 = vadd.f32 %v1893, %v1805
    %v1895 = vsub.f32 %v1438, %v1894
    %v1896 = vsub.f32 %v1440, %v1894
    %v1897 = vsub.f32 %v1479, %v1894
    %v1898 = vsub.f32 %v1481, %v1894
    %v1899 = vsub.f32 %v1520, %v1894
    %v1900 = vsub.f32 %v1522, %v1894
    %v1901 = vsub.f32 %v1561, %v1894
    %v1902 = vsub.f32 %v1563, %v1894
    %v1903 = vsub.f32 %v1602, %v1894
    %v1904 = vsub.f32 %v1604, %v1894
    %v1905 = vsub.f32 %v1643, %v1894
    %v1906 = vsub.f32 %v1645, %v1894
    %v1907 = vsub.f32 %v1684, %v1894
    %v1908 = vsub.f32 %v1686, %v1894
    %v1909 = vsub.f32 %v1725, %v1894
    %v1910 = vsub.f32 %v1727, %v1894
    %v1911 = vsub.f32 %v1766, %v1894
    %v1929 = vcombine.low %v1895, %v1896
    %v1930 = vcombine.low %v1897, %v1898
    %v1932 = vunpack.c.l.s4 1983009808
    %v1933 = vunpack.c.0.s8 %v1932
    %v1934 = vlaneseq
    %v1935 = vshrl.u32 %v1934, 7
    %v1936 = vsub.s32 %v1933, %v1935
    %v1937 = vrot.slane %v1929, %v1936
    %v1939 = vunpack.c.l.s4 1983009808
    %v1940 = vunpack.c.0.s8 %v1939
    %v1941 = vlaneseq
    %v1942 = vshrl.u32 %v1941, 7
    %v1943 = vsub.s32 %v1940, %v1942
    %v1944 = vrot.slane %v1930, %v1943
    %v1945 = vcombine.low %v1937, %v1944
    %v1946 = vcombine.low %v1899, %v1900
    %v1947 = vcombine.low %v1901, %v1902
    %v1949 = vunpack.c.l.s4 1983009808
    %v1950 = vunpack.c.0.s8 %v1949
    %v1951 = vlaneseq
    %v1952 = vshrl.u32 %v1951, 7
    %v1953 = vsub.s32 %v1950, %v1952
    %v1954 = vrot.slane %v1946, %v1953
    %v1956 = vunpack.c.l.s4 1983009808
    %v1957 = vunpack.c.0.s8 %v1956
    %v1958 = vlaneseq
    %v1959 = vshrl.u32 %v1958, 7
    %v1960 = vsub.s32 %v1957, %v1959
    %v1961 = vrot.slane %v1947, %v1960
    %v1962 = vcombine.low %v1954, %v1961
    %v1963 = vcombine.low %v1903, %v1904
    %v1964 = vcombine.low %v1905, %v1906
    %v1966 = vunpack.c.l.s4 1983009808
    %v1967 = vunpack.c.0.s8 %v1966
    %v1968 = vlaneseq
    %v1969 = vshrl.u32 %v1968, 7
    %v1970 = vsub.s32 %v1967, %v1969
    %v1971 = vrot.slane %v1963, %v1970
    %v1973 = vunpack.c.l.s4 1983009808
    %v1974 = vunpack.c.0.s8 %v1973
    %v1975 = vlaneseq
    %v1976 = vshrl.u32 %v1975, 7
    %v1977 = vsub.s32 %v1974, %v1976
    %v1978 = vrot.slane %v1964, %v1977
    %v1979 = vcombine.low %v1971, %v1978
    %v1980 = vcombine.low %v1907, %v1908
    %v1981 = vcombine.low %v1909, %v1910
    %v1983 = vunpack.c.l.s4 1983009808
    %v1984 = vunpack.c.0.s8 %v1983
    %v1985 = vlaneseq
    %v1986 = vshrl.u32 %v1985, 7
    %v1987 = vsub.s32 %v1984, %v1986
    %v1988 = vrot.slane %v1980, %v1987
    %v1990 = vunpack.c.l.s4 1983009808
    %v1991 = vunpack.c.0.s8 %v1990
    %v1992 = vlaneseq
    %v1993 = vshrl.u32 %v1992, 7
    %v1994 = vsub.s32 %v1991, %v1993
    %v1995 = vrot.slane %v1981, %v1994
    %v1996 = vcombine.low %v1988, %v1995
    %v1998 = vunpack.c.l.s4 1983009808
    %v1999 = vunpack.c.0.s8 %v1998
    %v2000 = vlaneseq
    %v2001 = vshrl.u32 %v2000, 7
    %v2002 = vsub.s32 %v1999, %v2001
    %v2003 = vrot.slane %v1911, %v2002
    %2009 = vst [vmem:[#allocation3] sm:$0xff] %v1945
    %2010 = vst [vmem:[#allocation3 + $0x8] sm:$0xff] %v1962
    %2011 = vst [vmem:[#allocation3 + $0x10] sm:$0xff] %v1979
    %2012 = vst [vmem:[#allocation3 + $0x18] sm:$0xff] %v1996
    %2013 = vst [vmem:[#allocation3 + $0x20] sm:$0x3] %v2003
    %v2014 = vld [vmem:[%s1] sm:$0x1]
    %v2015 = vld [vmem:[%s4] sm:$0xff]
    %v2016 = vld [vmem:[%s4 + $0x8] sm:$0xff]
    %v2017 = vld [vmem:[%s4 + $0x10] sm:$0xff]
    %v2018 = vld [vmem:[%s4 + $0x18] sm:$0xff]
    %v2019 = vld [vmem:[%s4 + $0x20] sm:$0xff]
    %v2020 = vld [vmem:[%s4 + $0x28] sm:$0xff]
    %v2021 = vld [vmem:[%s4 + $0x30] sm:$0xff]
    %v2022 = vld [vmem:[%s4 + $0x38] sm:$0xff]
    %v2023 = vld [vmem:[%s4 + $0x40] sm:$0xff]
    %v2024 = vld [vmem:[%s4 + $0x48] sm:$0xff]
    %v2025 = vld [vmem:[%s4 + $0x50] sm:$0xff]
    %v2026 = vld [vmem:[%s4 + $0x58] sm:$0x11]
    %v2027 = vld [vmem:[%s5] sm:$0x3]
    %v2029 = vlaneseq
    %v2030 = vshrl.u32 %v2029, 7
    %v2031 = vsub.s32 0, %v2030
    %v2032 = vrot.slane %v2027, %v2031
    %v2033 = vlaneseq
    %v2034 = vshrl.u32 %v2033, 7
    %v2035 = vsub.s32 1, %v2034
    %v2036 = vrot.slane %v2027, %v2035
    %v2051 = vunpack.c.l.b16 %v2015
    %v2052 = vunpack.c.h.b16 %v2015
    %v2053 = vunpack.c.l.b16 %v2016
    %v2054 = vunpack.c.h.b16 %v2016
    %v2055 = vunpack.c.l.b16 %v2017
    %v2056 = vunpack.c.h.b16 %v2017
    %v2057 = vunpack.c.l.b16 %v2018
    %v2058 = vunpack.c.h.b16 %v2018
    %v2059 = vunpack.c.l.b16 %v2019
    %v2060 = vunpack.c.h.b16 %v2019
    %v2061 = vunpack.c.l.b16 %v2020
    %v2062 = vunpack.c.h.b16 %v2020
    %v2063 = vunpack.c.l.b16 %v2021
    %v2064 = vunpack.c.h.b16 %v2021
    %v2065 = vunpack.c.l.b16 %v2022
    %v2066 = vunpack.c.h.b16 %v2022
    %v2067 = vunpack.c.l.b16 %v2023
    %v2068 = vunpack.c.h.b16 %v2023
    %v2069 = vunpack.c.l.b16 %v2024
    %v2070 = vunpack.c.h.b16 %v2024
    %v2071 = vunpack.c.l.b16 %v2025
    %v2072 = vunpack.c.h.b16 %v2025
    %v2073 = vunpack.c.l.b16 %v2026
    %v2074 = vunpack.c.h.b16 %v2026
    %v2075 = vpack.c.b16 %v2053, %v2051
    %v2076 = vpack.c.b16 %v2054, %v2052
    %v2077 = vpack.c.b16 %v2057, %v2055
    %v2078 = vpack.c.b16 %v2058, %v2056
    %v2079 = vpack.c.b16 %v2061, %v2059
    %v2080 = vpack.c.b16 %v2062, %v2060
    %v2081 = vpack.c.b16 %v2065, %v2063
    %v2082 = vpack.c.b16 %v2066, %v2064
    %v2083 = vpack.c.b16 %v2069, %v2067
    %v2084 = vpack.c.b16 %v2070, %v2068
    %v2085 = vpack.c.b16 %v2073, %v2071
    %v2086 = vpack.c.b16 %v2074, %v2072
    %vm2097 = vcmask 736256
    %v2099 = vsel %vm2097, %v2014, 0
    %vm2101 = vcmask 1044480
    %v2103 = vsel %vm2101, %v2085, 0
    %v2106 = vsel %vm2101, %v2086, 0
    %2108 = vmatprep.subr.bf16.mxu0 0
    %2109 = vmatpush1.bf16.msra.mxu0 0
    %2110 = vmatprep.subr.bf16.mxu0 0
    %2111 = vmatpush1.bf16.msra.mxu0 0
    %2112 = vmatprep.subr.bf16.mxu0 %v2106
    %2113 = vmatpush1.bf16.msra.mxu0 %v2103
    %2114 = vmatprep.subr.bf16.mxu0 %v2084
    %2115 = vmatpush1.bf16.msra.mxu0 %v2083
    %2116 = vmatprep.subr.bf16.mxu0 %v2082
    %2117 = vmatpush1.bf16.msra.mxu0 %v2081
    %2118 = vmatprep.subr.bf16.mxu0 %v2080
    %2119 = vmatpush1.bf16.msra.mxu0 %v2079
    %2120 = vmatprep.subr.bf16.mxu0 %v2078
    %2121 = vmatpush1.bf16.msra.mxu0 %v2077
    %2122 = vmatprep.subr.bf16.mxu0 %v2076
    %2123 = vmatpush1.bf16.msra.mxu0 %v2075
    %2124 = vmatprep.subr.bf16.mxu0 0
    %2125 = vmatpush2.bf16.msra.mxu0 0
    %2126 = vmatprep.subr.bf16.mxu0 0
    %2127 = vmatpush2.bf16.msra.mxu0 0
    %2128 = vmatprep.subr.bf16.mxu0 0
    %2129 = vmatpush2.bf16.msra.mxu0 0
    %2130 = vmatprep.subr.bf16.mxu0 0
    %2131 = vmatpush2.bf16.msra.mxu0 0
    %2132 = vmatprep.subr.bf16.mxu0 0
    %2133 = vmatpush2.bf16.msra.mxu0 0
    %2134 = vmatprep.subr.bf16.mxu0 0
    %2135 = vmatpush2.bf16.msra.mxu0 0
    %2136 = vmatprep.subr.bf16.mxu0 0
    %2137 = vmatpush2.bf16.msra.mxu0 0
    %2138 = vmatprep.subr.bf16.mxu0 0
    %2139 = vmatpush2.bf16.msra.mxu0 0
    %2140 = vmatprep.mubr.bf16.mxu0 0
    %2141 = vmatmul.mubr.bf16.gmra.mxu0 %v2099
    %v2142 = vpop.f32.mrf.mxu0
    %v2143 = vadd.f32 %v2032, %v2142
    %v2144 = vpop.f32.mrf.mxu0
    %v2145 = vadd.f32 %v2036, %v2144
    %v2146 = vpop.f32.mrf.mxu0
    %v2147 = vpop.f32.mrf.mxu0
    %2148 = vdwg.mxu0
    %v2149 = vmax.f32 %v2143, 0.0
    %v2150 = vmax.f32 %v2145, 0.0
    %v2151 = vld [vmem:[%s6] sm:$0x3]
    %v2153 = vlaneseq
    %v2154 = vshrl.u32 %v2153, 7
    %v2155 = vsub.s32 0, %v2154
    %v2156 = vrot.slane %v2151, %v2155
    %v2157 = vlaneseq
    %v2158 = vshrl.u32 %v2157, 7
    %v2159 = vsub.s32 1, %v2158
    %v2160 = vrot.slane %v2151, %v2159
    %v2163 = vmul.f32 %v2149, %v2156
    %v2164 = vmul.f32 %v2150, %v2160
    %v2165 = vsel %vm1351, %v2163, 0.0
    %v2166 = vsel %vm1351, %v2164, 0.0
    %v2167 = vadd.f32 %v2165, %v2166
    %2168 = vadd.xlane.f32.xlu0 %v2167
    %v2169 = vpop.xlane.xlu0 %2168
    %v2170 = vld [vmem:[#allocation2] sm:$0x1]
    %v2172 = vlaneseq
    %v2173 = vshrl.u32 %v2172, 7
    %v2174 = vsub.s32 0, %v2173
    %v2175 = vrot.slane %v2170, %v2174
    %v2177 = vadd.f32 %v2169, %v2175
    %v2178 = vtanh.pop %v2177
    %vm2179 = vcmask 1024
    %2180 = vst.msk [vmem:[%s9] sm:$0x3] %vm2179, %v2178
    // Predicated region
    $region34: #{forward.3} parent=1 // pred_check
      _
    $region35: #{forward.3} parent=1 // pred_check_branch
      %2182 = sbr.rel (0) target = $region37
    $region36: #{forward.3} parent=1 // pred_region
      %s2184 = ssub.s32 544, 544
      %2185 = vsyncadd [#allocation4], %s2184
      %s2187 = sshll.u32 [#allocation3], 4
      %s2188 = int_to_ptr.vmem [resolvable:$true] %s2187
      %2190 = dma.vmem_to_hbm [thread:$0]  %s2188, 544, %s8, [#allocation4]
    $region37: #{forward.3} parent=1 // pred_fallthru
      _
    // Predicated region
    $region38: #{forward.3} parent=1 // pred_check
      _
    $region39: #{forward.3} parent=1 // pred_check_branch
      %2192 = sbr.rel (0) target = $region41
    $region40: #{forward.3} parent=1 // pred_region
      _
    $region41: #{forward.3} parent=1 // pred_fallthru
      _
    // Predicated region
    $region42: #{forward.3} parent=1 // pred_check
      _
    $region43: #{forward.3} parent=1 // pred_check_branch
      %2194 = sbr.rel (0) target = $region45
    $region44: #{forward.3} parent=1 // pred_region
      %2195 = dma.done [#allocation4], 544
    $region45: #{forward.3} parent=1 // pred_fallthru
      _
    // Predicated region
    $region46: #{forward.3} parent=1 // pred_check
      _
    $region47: #{forward.3} parent=1 // pred_check_branch
      %2197 = sbr.rel (0) target = $region49
    $region48: #{forward.3} parent=1 // pred_region
      _
    $region49: #{forward.3} parent=1 // pred_fallthru
      _
    %2198 = vsyncpa [#allocation4], 1

// kernel: forward.2
$region0: #{forward.2}
  #allocation0 [shape = 'u32[]', space=smem, size = 0x4, offset = 0x4, fixed_abs, tag = 'smem constant byte address 0x4 - core index']
  #allocation1 [shape = 'u32[144,128]{1,0:T(1,128)}', space=vmem, size = 0x12000, scoped, tag = 'internal scratch']
  #allocation2 [shape = 'bf16[296,128]{1,0:T(8,128)(2,1)}', space=vmem, size = 0x12800, scoped, tag = 'scratch operand']
  %s0 = inlined_call_operand.vmem [shape: bf16[264,128], index: 0, kind: input, shape index: {}]
  %s1 = inlined_call_operand.vmem [shape: bf16[264,128], index: 1, kind: input, shape index: {}]
  %s2 = inlined_call_operand.hbm [shape: bf16[8,18,128,128], index: 2, kind: input, shape index: {}]
  %s3 = inlined_call_operand.hbm [shape: f32[8,2,1,128], index: 3, kind: input, shape index: {}]
  %s4 = inlined_call_operand.vmem [shape: bf16[128,8], index: 4, kind: input, shape index: {}]
  %s5 = inlined_call_operand.hbm [shape: f32[1,8], index: 5, kind: input, shape index: {}]
  %s6 = inlined_call_operand.vmem [shape: f32[264,8], index: 6, kind: output, shape index: {}]
  %s7 = sld [smem:[#allocation0]]
  $region81: #{forward.2} parent=0
    _
  %s9 = ssub.s32 1, %s7
  %s10 = scalar_select 0, %s9, %s7
  $region1: #{forward.2} parent=0
    #allocation3 [shape = 'u8[1179648]{0}', space=vmem, size = 0x120000, scoped, tag = 'input window, operand 2']
    #allocation4 [shape = 's32[2]{0}', space=sflag, size = 0x8, scoped, tag = 'scoped memory for forward.2']
    #allocation5 [shape = 'u8[2048]{0}', space=vmem, size = 0x800, scoped, tag = 'input window, operand 3']
    #allocation6 [shape = 's32[2]{0}', space=sflag, size = 0x8, scoped, tag = 'scoped memory for forward.2']
    #allocation7 [shape = 'u8[512]{0}', space=vmem, size = 0x400, scoped, tag = 'input window, operand 5, single buffered']
    %11 = vsyncpa [#allocation4], 0
    %s12 = scalar_lea.sflag [#allocation4], 1
    %13 = vsyncpa %s12, 0
    %14 = vsyncpa [#allocation6], 0
    %s15 = scalar_lea.sflag [#allocation6], 1
    %16 = vsyncpa %s15, 0
    loop: start=0, step=1, limit=10
    $region2: #{forward.2} parent=1 // loop_pre_header
      _
    $region3: #{forward.2} parent=1 // loop_header
      %s18 = sphi 0, %s22
      %p19 = scmp.ge.s32.totalorder %s18, 10
      %s25 = sphi 0, %s37
      %s26 = sphi 0, %s33
      %s27 = sphi 0, %s25
      %s28 = sphi 0, %s26
      %s29 = sphi 0, %s27
      %s30 = sphi 0, %s28
      %s40 = sphi 0, %s42
      %s43 = sphi 0, %s40
      %s44 = sphi 0, %s43
      %s60 = sphi 0, %s44
      %s64 = sphi 0, %s64
      %s66 = sphi 0, %s64
      %s67 = sphi 0, %s66
      %s81 = sphi 0, %s67
      %s87 = sphi 0, %s89
      %s90 = sphi 0, %s87
      %s91 = sphi 0, %s90
      %s107 = sphi 0, %s91
      %s113 = sphi 0, %s115
      %s116 = sphi 0, %s113
      %s117 = sphi 0, %s116
      %s133 = sphi 0, %s117
      %s137 = sphi 0, %s137
      %s139 = sphi 0, %s137
      %s140 = sphi 0, %s139
      %s154 = sphi 0, %s140
      %s158 = sphi 0, %s158
      %s160 = sphi 0, %s158
      %s161 = sphi 0, %s160
      %s175 = sphi 0, %s161
      %s181 = sphi 0, %s183
      %s184 = sphi 0, %s181
      %s185 = sphi 0, %s184
      %s201 = sphi 0, %s185
    $region4: #{forward.2} parent=1 // loop_header_branch
      %21 = sbr.rel (%p19) target = $region8
    $region5: #{forward.2} parent=1 // loop_body
      %s23 = ssub.s32 %s18, 1
      %s24 = ssub.s32 %s18, 2
      %s31 = sadd.s32 1, %s26
      %p32 = scmp.ge.s32.totalorder %s31, 8
      %s33 = scalar_select %p32, 0, %s31
      %s34 = sadd.s32 1, %s25
      %s35 = scalar_select %p32, %s34, %s25
      %p36 = scmp.ge.s32.totalorder %s35, 1
      %s37 = scalar_select %p36, 0, %s35
      %s38 = ssub.s32 %s25, %s37
      %p39 = scmp.eq.s32.totalorder %s38, 0
      %s41 = sadd.s32 %s40, 1
      %s42 = scalar_select %p39, %s40, %s41
      %p45 = pneg %p39
      %p46 = scmp.eq.s32.totalorder %s18, 7
      %p47 = por %p45, %p46
      %p48 = scmp.ne.s32.totalorder %s40, %s43
      %p49 = scmp.eq.s32.totalorder %s18, 0
      %p50 = por %p48, %p49
      %p51 = scmp.ne.s32.totalorder %s40, %s43
      %p52 = scmp.eq.s32.totalorder %s23, 7
      %p53 = por %p51, %p52
      %p54 = scmp.ne.s32.totalorder %s43, %s44
      %p55 = scmp.eq.s32.totalorder %s23, 0
      %p56 = por %p54, %p55
      %p57 = scmp.ne.s32.totalorder %s43, %s44
      %p58 = scmp.eq.s32.totalorder %s24, 7
      %p59 = por %p57, %p58
      %p61 = scmp.ne.s32.totalorder %s44, %s60
      %p62 = scmp.eq.s32.totalorder %s24, 0
      %p63 = por %p61, %p62
      %s65 = sadd.s32 %s64, 1
      %p68 = scmp.eq.s32.totalorder %s18, 7
      %p69 = scmp.ne.s32.totalorder %s64, %s66
      %p70 = scmp.eq.s32.totalorder %s18, 0
      %p71 = por %p69, %p70
      %p72 = scmp.ne.s32.totalorder %s64, %s66
      %p73 = scmp.eq.s32.totalorder %s23, 7
      %p74 = por %p72, %p73
      %p75 = scmp.ne.s32.totalorder %s66, %s67
      %p76 = scmp.eq.s32.totalorder %s23, 0
      %p77 = por %p75, %p76
      %p78 = scmp.ne.s32.totalorder %s66, %s67
      %p79 = scmp.eq.s32.totalorder %s24, 7
      %p80 = por %p78, %p79
      %p82 = scmp.ne.s32.totalorder %s67, %s81
      %p83 = scmp.eq.s32.totalorder %s24, 0
      %p84 = por %p82, %p83
      %s85 = ssub.s32 %s26, %s33
      %p86 = scmp.eq.s32.totalorder %s85, 0
      %s88 = sadd.s32 %s87, 1
      %s89 = scalar_select %p86, %s87, %s88
      %p92 = pneg %p86
      %p93 = scmp.eq.s32.totalorder %s18, 7
      %p94 = por %p92, %p93
      %p95 = scmp.ne.s32.totalorder %s87, %s90
      %p96 = scmp.eq.s32.totalorder %s18, 0
      %p97 = por %p95, %p96
      %p98 = scmp.ne.s32.totalorder %s87, %s90
      %p99 = scmp.eq.s32.totalorder %s23, 7
      %p100 = por %p98, %p99
      %p101 = scmp.ne.s32.totalorder %s90, %s91
      %p102 = scmp.eq.s32.totalorder %s23, 0
      %p103 = por %p101, %p102
      %p104 = scmp.ne.s32.totalorder %s90, %s91
      %p105 = scmp.eq.s32.totalorder %s24, 7
      %p106 = por %p104, %p105
      %p108 = scmp.ne.s32.totalorder %s91, %s107
      %p109 = scmp.eq.s32.totalorder %s24, 0
      %p110 = por %p108, %p109
      %s111 = ssub.s32 %s26, %s33
      %p112 = scmp.eq.s32.totalorder %s111, 0
      %s114 = sadd.s32 %s113, 1
      %s115 = scalar_select %p112, %s113, %s114
      %p118 = pneg %p112
      %p119 = scmp.eq.s32.totalorder %s18, 7
      %p120 = por %p118, %p119
      %p121 = scmp.ne.s32.totalorder %s113, %s116
      %p122 = scmp.eq.s32.totalorder %s18, 0
      %p123 = por %p121, %p122
      %p124 = scmp.ne.s32.totalorder %s113, %s116
      %p125 = scmp.eq.s32.totalorder %s23, 7
      %p126 = por %p124, %p125
      %p127 = scmp.ne.s32.totalorder %s116, %s117
      %p128 = scmp.eq.s32.totalorder %s23, 0
      %p129 = por %p127, %p128
      %p130 = scmp.ne.s32.totalorder %s116, %s117
      %p131 = scmp.eq.s32.totalorder %s24, 7
      %p132 = por %p130, %p131
      %p134 = scmp.ne.s32.totalorder %s117, %s133
      %p135 = scmp.eq.s32.totalorder %s24, 0
      %p136 = por %p134, %p135
      %s138 = sadd.s32 %s137, 1
      %p141 = scmp.eq.s32.totalorder %s18, 7
      %p142 = scmp.ne.s32.totalorder %s137, %s139
      %p143 = scmp.eq.s32.totalorder %s18, 0
      %p144 = por %p142, %p143
      %p145 = scmp.ne.s32.totalorder %s137, %s139
      %p146 = scmp.eq.s32.totalorder %s23, 7
      %p147 = por %p145, %p146
      %p148 = scmp.ne.s32.totalorder %s139, %s140
      %p149 = scmp.eq.s32.totalorder %s23, 0
      %p150 = por %p148, %p149
      %p151 = scmp.ne.s32.totalorder %s139, %s140
      %p152 = scmp.eq.s32.totalorder %s24, 7
      %p153 = por %p151, %p152
      %p155 = scmp.ne.s32.totalorder %s140, %s154
      %p156 = scmp.eq.s32.totalorder %s24, 0
      %p157 = por %p155, %p156
      %s159 = sadd.s32 %s158, 1
      %p162 = scmp.eq.s32.totalorder %s18, 7
      %p163 = scmp.ne.s32.totalorder %s158, %s160
      %p164 = scmp.eq.s32.totalorder %s18, 0
      %p165 = por %p163, %p164
      %p166 = scmp.ne.s32.totalorder %s158, %s160
      %p167 = scmp.eq.s32.totalorder %s23, 7
      %p168 = por %p166, %p167
      %p169 = scmp.ne.s32.totalorder %s160, %s161
      %p170 = scmp.eq.s32.totalorder %s23, 0
      %p171 = por %p169, %p170
      %p172 = scmp.ne.s32.totalorder %s160, %s161
      %p173 = scmp.eq.s32.totalorder %s24, 7
      %p174 = por %p172, %p173
      %p176 = scmp.ne.s32.totalorder %s161, %s175
      %p177 = scmp.eq.s32.totalorder %s24, 0
      %p178 = por %p176, %p177
      %s179 = ssub.s32 %s25, %s37
      %p180 = scmp.eq.s32.totalorder %s179, 0
      %s182 = sadd.s32 %s181, 1
      %s183 = scalar_select %p180, %s181, %s182
      %p186 = pneg %p180
      %p187 = scmp.eq.s32.totalorder %s18, 7
      %p188 = por %p186, %p187
      %p189 = scmp.ne.s32.totalorder %s181, %s184
      %p190 = scmp.eq.s32.totalorder %s18, 0
      %p191 = por %p189, %p190
      %p192 = scmp.ne.s32.totalorder %s181, %s184
      %p193 = scmp.eq.s32.totalorder %s23, 7
      %p194 = por %p192, %p193
      %p195 = scmp.ne.s32.totalorder %s184, %s185
      %p196 = scmp.eq.s32.totalorder %s23, 0
      %p197 = por %p195, %p196
      %p198 = scmp.ne.s32.totalorder %s184, %s185
      %p199 = scmp.eq.s32.totalorder %s24, 7
      %p200 = por %p198, %p199
      %p202 = scmp.ne.s32.totalorder %s185, %s201
      %p203 = scmp.eq.s32.totalorder %s24, 0
      %p204 = por %p202, %p203
      %p205 = scmp.le.s32.totalorder 1, %s18
      %p206 = scmp.lt.s32.totalorder %s18, 9
      %p207 = pnand %p205, %p206
      %p208 = pneg %p207
      // Predicated region
      $region9: #{forward.2} parent=5 // pred_check
        _
      $region10: #{forward.2} parent=5 // pred_check_branch
        %210 = sbr.rel (%p207) target = $region12
      $region11: #{forward.2} parent=5 // pred_region
        %s211 = ssub.s32 %s18, 1
        // Predicated region
        $region13: #{forward.2} parent=11 // pred_check
          %p212 = pneg %p56
        $region14: #{forward.2} parent=11 // pred_check_branch
          %214 = sbr.rel (%p212) target = $region16
        $region15: #{forward.2} parent=11 // pred_region
          %s215 = smul.u32 33, %s27
          %p216 = scmp.lt.s32.totalorder %s215, 32
          %s217 = scalar_select %p216, %s215, 32
          %s218 = smul.addr %s217, 4
          %s219 = scalar_lea.vmem %s0, %s218
          %s220 = smul.u32 33, %s27
        $region16: #{forward.2} parent=11 // pred_fallthru
          _
        // Predicated region
        $region17: #{forward.2} parent=11 // pred_check
          %p221 = pneg %p77
        $region18: #{forward.2} parent=11 // pred_check_branch
          %223 = sbr.rel (%p221) target = $region20
        $region19: #{forward.2} parent=11 // pred_region
          _
        $region20: #{forward.2} parent=11 // pred_fallthru
          _
        // Predicated region
        $region21: #{forward.2} parent=11 // pred_check
          %p224 = pneg %p150
        $region22: #{forward.2} parent=11 // pred_check_branch
          %226 = sbr.rel (%p224) target = $region24
        $region23: #{forward.2} parent=11 // pred_region
          _
        $region24: #{forward.2} parent=11 // pred_fallthru
          _
        // Predicated region
        $region25: #{forward.2} parent=11 // pred_check
          %p227 = pneg %p171
        $region26: #{forward.2} parent=11 // pred_check_branch
          %229 = sbr.rel (%p227) target = $region28
        $region27: #{forward.2} parent=11 // pred_region
          %s231 = ssub.s32 16, 16
          %232 = vsyncadd [#allocation6], %s231
          %s234 = sshll.u32 [#allocation7], 4
          %s235 = int_to_ptr.vmem [resolvable:$true] %s234
          %237 = dma.hbm_to_vmem [thread:$0]  %s5, 16, %s235, [#allocation6]
        $region28: #{forward.2} parent=11 // pred_fallthru
          _
      $region12: #{forward.2} parent=5 // pred_fallthru
        _
      %p238 = scmp.lt.s32.totalorder %s18, 8
      // Predicated region
      $region29: #{forward.2} parent=5 // pred_check
        %p239 = pneg %p238
      $region30: #{forward.2} parent=5 // pred_check_branch
        %241 = sbr.rel (%p239) target = $region32
      $region31: #{forward.2} parent=5 // pred_region
        // Predicated region
        $region33: #{forward.2} parent=31 // pred_check
          %p242 = pneg %p97
        $region34: #{forward.2} parent=31 // pred_check_branch
          %244 = sbr.rel (%p242) target = $region36
        $region35: #{forward.2} parent=31 // pred_region
          %s245 = sand.u32 %s87, 1
          %s246 = scalar_lea.sflag [#allocation4], %s245
          %s247 = sand.u32 %s87, 1
          %s248 = smul.addr %s247, 1152
          %s249 = scalar_lea.vmem [#allocation3], %s248
          %s251 = ssub.s32 18432, 18432
          %252 = vsyncadd %s246, %s251
          %s253 = smul.addr %s26, 288
          %s254 = smul.addr %s253, 64
          %s255 = scalar_lea.hbm %s2, %s254
          %s256 = sshll.u32 %s249, 4
          %s257 = int_to_ptr.vmem [resolvable:$true] %s256
          %262 = dma.hbm_to_vmem [thread:$0]  %s255, 18432, %s257, %s246, 64, 64, 4
        $region36: #{forward.2} parent=31 // pred_fallthru
          _
        // Predicated region
        $region37: #{forward.2} parent=31 // pred_check
          %p263 = pneg %p123
        $region38: #{forward.2} parent=31 // pred_check_branch
          %265 = sbr.rel (%p263) target = $region40
        $region39: #{forward.2} parent=31 // pred_region
          %s266 = sand.u32 %s18, 1
          %s267 = scalar_lea.sflag [#allocation6], %s266
          %s268 = sand.u32 %s113, 1
          %s269 = smul.addr %s268, 2
          %s270 = scalar_lea.vmem [#allocation5], %s269
          %s272 = ssub.s32 32, 32
          %273 = vsyncadd %s267, %s272
          %s274 = smul.addr %s26, 2
          %s275 = smul.addr %s274, 16
          %s276 = scalar_lea.hbm %s3, %s275
          %s277 = sshll.u32 %s270, 4
          %s278 = int_to_ptr.vmem [resolvable:$true] %s277
          %283 = dma.hbm_to_vmem [thread:$0]  %s276, 32, %s278, %s267, 16, 16, 1
        $region40: #{forward.2} parent=31 // pred_fallthru
          _
      $region32: #{forward.2} parent=5 // pred_fallthru
        _
      %p284 = scmp.le.s32.totalorder 1, %s18
      %p285 = scmp.lt.s32.totalorder %s18, 9
      %p286 = pnand %p284, %p285
      %p287 = pneg %p286
      // Predicated region
      $region41: #{forward.2} parent=5 // pred_check
        _
      $region42: #{forward.2} parent=5 // pred_check_branch
        %289 = sbr.rel (%p286) target = $region44
      $region43: #{forward.2} parent=5 // pred_region
        %s290 = ssub.s32 %s18, 1
        %s291 = sand.u32 %s90, 1
        %s292 = scalar_lea.sflag [#allocation4], %s291
        %s293 = sand.u32 %s90, 1
        %s294 = smul.addr %s293, 1152
        %s295 = scalar_lea.vmem [#allocation3], %s294
        // Predicated region
        $region45: #{forward.2} parent=43 // pred_check
          %p296 = pneg %p103
        $region46: #{forward.2} parent=43 // pred_check_branch
          %298 = sbr.rel (%p296) target = $region48
        $region47: #{forward.2} parent=43 // pred_region
          %299 = dma.done %s292, 18432
        $region48: #{forward.2} parent=43 // pred_fallthru
          _
        %s300 = sand.u32 %s23, 1
        %s301 = scalar_lea.sflag [#allocation6], %s300
        %s302 = sand.u32 %s116, 1
        %s303 = smul.addr %s302, 2
        %s304 = scalar_lea.vmem [#allocation5], %s303
        // Predicated region
        $region49: #{forward.2} parent=43 // pred_check
          %p305 = pneg %p129
        $region50: #{forward.2} parent=43 // pred_check_branch
          %307 = sbr.rel (%p305) target = $region52
        $region51: #{forward.2} parent=43 // pred_region
          %308 = dma.done %s301, 32
        $region52: #{forward.2} parent=43 // pred_fallthru
          _
        // Predicated region
        $region53: #{forward.2} parent=43 // pred_check
          %p309 = pneg %p171
        $region54: #{forward.2} parent=43 // pred_check_branch
          %311 = sbr.rel (%p309) target = $region56
        $region55: #{forward.2} parent=43 // pred_region
          %312 = dma.done [#allocation6], 16
        $region56: #{forward.2} parent=43 // pred_fallthru
          _
        %s313 = smul.u32 33, %s27
        %p314 = scmp.lt.s32.totalorder %s313, 32
        %s315 = scalar_select %p314, %s313, 32
        %s316 = smul.addr %s315, 4
        %s317 = scalar_lea.vmem %s0, %s316
        %p318 = pneg %p56
        %p319 = pneg %p53
        %p320 = pneg %p77
        %p321 = pneg %p74
        %s322 = sand.u32 %s90, 1
        %s323 = scalar_lea.sflag [#allocation4], %s322
        %s324 = sand.u32 %s90, 1
        %s325 = smul.addr %s324, 1152
        %s326 = scalar_lea.vmem [#allocation3], %s325
        %p327 = pneg %p103
        %p328 = pneg %p100
        %s329 = sand.u32 %s23, 1
        %s330 = scalar_lea.sflag [#allocation6], %s329
        %s331 = sand.u32 %s116, 1
        %s332 = smul.addr %s331, 2
        %s333 = scalar_lea.vmem [#allocation5], %s332
        %p334 = pneg %p129
        %p335 = pneg %p126
        %p336 = pneg %p150
        %p337 = pneg %p147
        %p338 = pneg %p171
        %p339 = pneg %p168
        %p340 = pneg %p197
        %p341 = pneg %p194
        %s342 = smul.u32 33, %s27
        %p343 = scmp.lt.s32.totalorder %s342, 32
        %s344 = scalar_select %p343, %s342, 32
        %s345 = smul.addr %s344, 8
        %s346 = scalar_lea.vmem %s6, %s345
        %s347 = smul.u32 33, %s27
        %p348 = scmp.lt.s32.totalorder %s347, 32
        %s349 = scalar_select %p348, %s347, 32
        %s350 = smul.addr %s349, 4
        %s351 = scalar_lea.vmem %s0, %s350
        %s352 = smul.u32 33, %s27
        %s353 = smul.u32 33, %s27
        %p354 = scmp.lt.s32.totalorder %s353, 32
        %s355 = scalar_select %p354, %s353, 32
        %s356 = smul.addr %s355, 8
        %s357 = scalar_lea.vmem %s6, %s356
        %s358 = smul.u32 33, %s27
        %p360 = scmp.eq.s32.totalorder %s28, 0
        // Predicated region
        $region57: #{forward.2} parent=43 // pred_check
          %p361 = pneg %p360
        $region58: #{forward.2} parent=43 // pred_check_branch
          %363 = sbr.rel (%p361) target = $region60
        $region59: #{forward.2} parent=43 // pred_region
          %364 = vst [vmem:[#allocation2] sm:$0xf] 0
          %365 = vst [vmem:[#allocation2 + $0x4] sm:$0xf] 0
          %366 = vst [vmem:[#allocation2 + $0x8] sm:$0xf] 0
          %367 = vst [vmem:[#allocation2 + $0xc] sm:$0xf] 0
          %368 = vst [vmem:[#allocation2 + $0x10] sm:$0xf] 0
          %369 = vst [vmem:[#allocation2 + $0x14] sm:$0xf] 0
          %370 = vst [vmem:[#allocation2 + $0x18] sm:$0xf] 0
          %371 = vst [vmem:[#allocation2 + $0x1c] sm:$0xf] 0
          %372 = vst [vmem:[#allocation2 + $0x20] sm:$0xf] 0
          %373 = vst [vmem:[#allocation2 + $0x24] sm:$0xf] 0
          %374 = vst [vmem:[#allocation2 + $0x28] sm:$0xf] 0
          %375 = vst [vmem:[#allocation2 + $0x2c] sm:$0xf] 0
          %376 = vst [vmem:[#allocation2 + $0x30] sm:$0xf] 0
          %377 = vst [vmem:[#allocation2 + $0x34] sm:$0xf] 0
          %378 = vst [vmem:[#allocation2 + $0x38] sm:$0xf] 0
          %379 = vst [vmem:[#allocation2 + $0x3c] sm:$0xf] 0
          %380 = vst [vmem:[#allocation2 + $0x40] sm:$0xf] 0
          %381 = vst [vmem:[#allocation2 + $0x44] sm:$0xf] 0
          %382 = vst [vmem:[#allocation2 + $0x48] sm:$0xf] 0
          %383 = vst [vmem:[#allocation2 + $0x4c] sm:$0xf] 0
          %384 = vst [vmem:[#allocation2 + $0x50] sm:$0xf] 0
          %385 = vst [vmem:[#allocation2 + $0x54] sm:$0xf] 0
          %386 = vst [vmem:[#allocation2 + $0x58] sm:$0xf] 0
          %387 = vst [vmem:[#allocation2 + $0x5c] sm:$0xf] 0
          %388 = vst [vmem:[#allocation2 + $0x60] sm:$0xf] 0
          %389 = vst [vmem:[#allocation2 + $0x64] sm:$0xf] 0
          %390 = vst [vmem:[#allocation2 + $0x68] sm:$0xf] 0
          %391 = vst [vmem:[#allocation2 + $0x6c] sm:$0xf] 0
          %392 = vst [vmem:[#allocation2 + $0x70] sm:$0xf] 0
          %393 = vst [vmem:[#allocation2 + $0x74] sm:$0xf] 0
          %394 = vst [vmem:[#allocation2 + $0x78] sm:$0xf] 0
          %395 = vst [vmem:[#allocation2 + $0x7c] sm:$0xf] 0
          %396 = vst [vmem:[#allocation2 + $0x80] sm:$0xf] 0
          %397 = vst [vmem:[#allocation2 + $0x84] sm:$0xf] 0
          %398 = vst [vmem:[#allocation2 + $0x88] sm:$0xf] 0
          %399 = vst [vmem:[#allocation2 + $0x8c] sm:$0xf] 0
          %400 = vst [vmem:[#allocation2 + $0x90] sm:$0xf] 0
          %v401 = vld [vmem:[%s351] sm:$0xf]
          %v402 = vld [vmem:[%s351 + $0x4] sm:$0xf]
          %v403 = vld [vmem:[%s351 + $0x8] sm:$0xf]
          %v404 = vld [vmem:[%s351 + $0xc] sm:$0xf]
          %v405 = vld [vmem:[%s351 + $0x10] sm:$0xf]
          %v406 = vld [vmem:[%s351 + $0x14] sm:$0xf]
          %v407 = vld [vmem:[%s351 + $0x18] sm:$0xf]
          %v408 = vld [vmem:[%s351 + $0x1c] sm:$0xf]
          %v409 = vld [vmem:[%s351 + $0x20] sm:$0xf]
          %v410 = vld [vmem:[%s351 + $0x24] sm:$0xf]
          %v411 = vld [vmem:[%s351 + $0x28] sm:$0xf]
          %v412 = vld [vmem:[%s351 + $0x2c] sm:$0xf]
          %v413 = vld [vmem:[%s351 + $0x30] sm:$0xf]
          %v414 = vld [vmem:[%s351 + $0x34] sm:$0xf]
          %v415 = vld [vmem:[%s351 + $0x38] sm:$0xf]
          %v416 = vld [vmem:[%s351 + $0x3c] sm:$0xf]
          %v417 = vld [vmem:[%s351 + $0x40] sm:$0xf]
          %v418 = vld [vmem:[%s351 + $0x44] sm:$0xf]
          %v419 = vld [vmem:[%s351 + $0x48] sm:$0xf]
          %v420 = vld [vmem:[%s351 + $0x4c] sm:$0xf]
          %v421 = vld [vmem:[%s351 + $0x50] sm:$0xf]
          %v422 = vld [vmem:[%s351 + $0x54] sm:$0xf]
          %v423 = vld [vmem:[%s351 + $0x58] sm:$0xf]
          %v424 = vld [vmem:[%s351 + $0x5c] sm:$0xf]
          %v425 = vld [vmem:[%s351 + $0x60] sm:$0xf]
          %v426 = vld [vmem:[%s351 + $0x64] sm:$0xf]
          %v427 = vld [vmem:[%s351 + $0x68] sm:$0xf]
          %v428 = vld [vmem:[%s351 + $0x6c] sm:$0xf]
          %v429 = vld [vmem:[%s351 + $0x70] sm:$0xf]
          %v430 = vld [vmem:[%s351 + $0x74] sm:$0xf]
          %v431 = vld [vmem:[%s351 + $0x78] sm:$0xf]
          %v432 = vld [vmem:[%s351 + $0x7c] sm:$0xf]
          %v433 = vld [vmem:[%s351 + $0x80] sm:$0xf]
          %434 = vst [vmem:[#allocation2 + $0x8] sm:$0xf] %v401
          %435 = vst [vmem:[#allocation2 + $0xc] sm:$0xf] %v402
          %436 = vst [vmem:[#allocation2 + $0x10] sm:$0xf] %v403
          %437 = vst [vmem:[#allocation2 + $0x14] sm:$0xf] %v404
          %438 = vst [vmem:[#allocation2 + $0x18] sm:$0xf] %v405
          %439 = vst [vmem:[#allocation2 + $0x1c] sm:$0xf] %v406
          %440 = vst [vmem:[#allocation2 + $0x20] sm:$0xf] %v407
          %441 = vst [vmem:[#allocation2 + $0x24] sm:$0xf] %v408
          %442 = vst [vmem:[#allocation2 + $0x28] sm:$0xf] %v409
          %443 = vst [vmem:[#allocation2 + $0x2c] sm:$0xf] %v410
          %444 = vst [vmem:[#allocation2 + $0x30] sm:$0xf] %v411
          %445 = vst [vmem:[#allocation2 + $0x34] sm:$0xf] %v412
          %446 = vst [vmem:[#allocation2 + $0x38] sm:$0xf] %v413
          %447 = vst [vmem:[#allocation2 + $0x3c] sm:$0xf] %v414
          %448 = vst [vmem:[#allocation2 + $0x40] sm:$0xf] %v415
          %449 = vst [vmem:[#allocation2 + $0x44] sm:$0xf] %v416
          %450 = vst [vmem:[#allocation2 + $0x48] sm:$0xf] %v417
          %451 = vst [vmem:[#allocation2 + $0x4c] sm:$0xf] %v418
          %452 = vst [vmem:[#allocation2 + $0x50] sm:$0xf] %v419
          %453 = vst [vmem:[#allocation2 + $0x54] sm:$0xf] %v420
          %454 = vst [vmem:[#allocation2 + $0x58] sm:$0xf] %v421
          %455 = vst [vmem:[#allocation2 + $0x5c] sm:$0xf] %v422
          %456 = vst [vmem:[#allocation2 + $0x60] sm:$0xf] %v423
          %457 = vst [vmem:[#allocation2 + $0x64] sm:$0xf] %v424
          %458 = vst [vmem:[#allocation2 + $0x68] sm:$0xf] %v425
          %459 = vst [vmem:[#allocation2 + $0x6c] sm:$0xf] %v426
          %460 = vst [vmem:[#allocation2 + $0x70] sm:$0xf] %v427
          %461 = vst [vmem:[#allocation2 + $0x74] sm:$0xf] %v428
          %462 = vst [vmem:[#allocation2 + $0x78] sm:$0xf] %v429
          %463 = vst [vmem:[#allocation2 + $0x7c] sm:$0xf] %v430
          %464 = vst [vmem:[#allocation2 + $0x80] sm:$0xf] %v431
          %465 = vst [vmem:[#allocation2 + $0x84] sm:$0xf] %v432
          %466 = vst [vmem:[#allocation2 + $0x88] sm:$0xf] %v433
        $region60: #{forward.2} parent=43 // pred_fallthru
          _
        %v467 = vld [vmem:[%s1] sm:$0xf]
        %v468 = vld [vmem:[%s1 + $0x4] sm:$0xf]
        %v469 = vld [vmem:[%s1 + $0x8] sm:$0xf]
        %v470 = vld [vmem:[%s1 + $0xc] sm:$0xf]
        %v471 = vld [vmem:[%s1 + $0x10] sm:$0xf]
        %v472 = vld [vmem:[%s1 + $0x14] sm:$0xf]
        %v473 = vld [vmem:[%s1 + $0x18] sm:$0xf]
        %v474 = vld [vmem:[%s1 + $0x1c] sm:$0xf]
        %v475 = vld [vmem:[%s1 + $0x20] sm:$0xf]
        %v476 = vld [vmem:[%s1 + $0x24] sm:$0xf]
        %v477 = vld [vmem:[%s1 + $0x28] sm:$0xf]
        %v478 = vld [vmem:[%s1 + $0x2c] sm:$0xf]
        %v479 = vld [vmem:[%s1 + $0x30] sm:$0xf]
        %v480 = vld [vmem:[%s1 + $0x34] sm:$0xf]
        %v481 = vld [vmem:[%s1 + $0x38] sm:$0xf]
        %v482 = vld [vmem:[%s1 + $0x3c] sm:$0xf]
        %v483 = vld [vmem:[%s1 + $0x40] sm:$0xf]
        %v484 = vld [vmem:[%s1 + $0x44] sm:$0xf]
        %v485 = vld [vmem:[%s1 + $0x48] sm:$0xf]
        %v486 = vld [vmem:[%s1 + $0x4c] sm:$0xf]
        %v487 = vld [vmem:[%s1 + $0x50] sm:$0xf]
        %v488 = vld [vmem:[%s1 + $0x54] sm:$0xf]
        %v489 = vld [vmem:[%s1 + $0x58] sm:$0xf]
        %v490 = vld [vmem:[%s1 + $0x5c] sm:$0xf]
        %v491 = vld [vmem:[%s1 + $0x60] sm:$0xf]
        %v492 = vld [vmem:[%s1 + $0x64] sm:$0xf]
        %v493 = vld [vmem:[%s1 + $0x68] sm:$0xf]
        %v494 = vld [vmem:[%s1 + $0x6c] sm:$0xf]
        %v495 = vld [vmem:[%s1 + $0x70] sm:$0xf]
        %v496 = vld [vmem:[%s1 + $0x74] sm:$0xf]
        %v497 = vld [vmem:[%s1 + $0x78] sm:$0xf]
        %v498 = vld [vmem:[%s1 + $0x7c] sm:$0xf]
        %v499 = vld [vmem:[%s1 + $0x80] sm:$0xf]
        %v500 = vld [vmem:[#allocation2 + $0x8] sm:$0xf]
        %v501 = vld [vmem:[#allocation2 + $0xc] sm:$0xf]
        %v502 = vld [vmem:[#allocation2 + $0x10] sm:$0xf]
        %v503 = vld [vmem:[#allocation2 + $0x14] sm:$0xf]
        %v504 = vld [vmem:[#allocation2 + $0x18] sm:$0xf]
        %v505 = vld [vmem:[#allocation2 + $0x1c] sm:$0xf]
        %v506 = vld [vmem:[#allocation2 + $0x20] sm:$0xf]
        %v507 = vld [vmem:[#allocation2 + $0x24] sm:$0xf]
        %v508 = vld [vmem:[#allocation2 + $0x28] sm:$0xf]
        %v509 = vld [vmem:[#allocation2 + $0x2c] sm:$0xf]
        %v510 = vld [vmem:[#allocation2 + $0x30] sm:$0xf]
        %v511 = vld [vmem:[#allocation2 + $0x34] sm:$0xf]
        %v512 = vld [vmem:[#allocation2 + $0x38] sm:$0xf]
        %v513 = vld [vmem:[#allocation2 + $0x3c] sm:$0xf]
        %v514 = vld [vmem:[#allocation2 + $0x40] sm:$0xf]
        %v515 = vld [vmem:[#allocation2 + $0x44] sm:$0xf]
        %v516 = vld [vmem:[#allocation2 + $0x48] sm:$0xf]
        %v517 = vld [vmem:[#allocation2 + $0x4c] sm:$0xf]
        %v518 = vld [vmem:[#allocation2 + $0x50] sm:$0xf]
        %v519 = vld [vmem:[#allocation2 + $0x54] sm:$0xf]
        %v520 = vld [vmem:[#allocation2 + $0x58] sm:$0xf]
        %v521 = vld [vmem:[#allocation2 + $0x5c] sm:$0xf]
        %v522 = vld [vmem:[#allocation2 + $0x60] sm:$0xf]
        %v523 = vld [vmem:[#allocation2 + $0x64] sm:$0xf]
        %v524 = vld [vmem:[#allocation2 + $0x68] sm:$0xf]
        %v525 = vld [vmem:[#allocation2 + $0x6c] sm:$0xf]
        %v526 = vld [vmem:[#allocation2 + $0x70] sm:$0xf]
        %v527 = vld [vmem:[#allocation2 + $0x74] sm:$0xf]
        %v528 = vld [vmem:[#allocation2 + $0x78] sm:$0xf]
        %v529 = vld [vmem:[#allocation2 + $0x7c] sm:$0xf]
        %v530 = vld [vmem:[#allocation2 + $0x80] sm:$0xf]
        %v531 = vld [vmem:[#allocation2 + $0x84] sm:$0xf]
        %v532 = vld [vmem:[#allocation2 + $0x88] sm:$0xf]
        %v533 = vld [vmem:[#allocation2] sm:$0xc]
        %v534 = vld [vmem:[#allocation2 + $0x4] sm:$0xf]
        %v535 = vld [vmem:[#allocation2 + $0x84] sm:$0x3]
        %v536 = vld [vmem:[%s295] sm:$0xf]
        %v537 = vld [vmem:[%s295 + $0x4] sm:$0xf]
        %v538 = vld [vmem:[%s295 + $0x8] sm:$0xf]
        %v539 = vld [vmem:[%s295 + $0xc] sm:$0xf]
        %v540 = vld [vmem:[%s295 + $0x10] sm:$0xf]
        %v541 = vld [vmem:[%s295 + $0x14] sm:$0xf]
        %v542 = vld [vmem:[%s295 + $0x18] sm:$0xf]
        %v543 = vld [vmem:[%s295 + $0x1c] sm:$0xf]
        %v544 = vld [vmem:[%s295 + $0x20] sm:$0xf]
        %v545 = vld [vmem:[%s295 + $0x24] sm:$0xf]
        %v546 = vld [vmem:[%s295 + $0x28] sm:$0xf]
        %v547 = vld [vmem:[%s295 + $0x2c] sm:$0xf]
        %v548 = vld [vmem:[%s295 + $0x30] sm:$0xf]
        %v549 = vld [vmem:[%s295 + $0x34] sm:$0xf]
        %v550 = vld [vmem:[%s295 + $0x38] sm:$0xf]
        %v551 = vld [vmem:[%s295 + $0x3c] sm:$0xf]
        %v552 = vld [vmem:[#allocation2 + $0x84] sm:$0x7]
        %s553 = scalar_lea.vmem %s295, 64 [#allocation3]
        %v554 = vld [vmem:[%s553] sm:$0xf]
        %v555 = vld [vmem:[%s553 + $0x4] sm:$0xf]
        %v556 = vld [vmem:[%s553 + $0x8] sm:$0xf]
        %v557 = vld [vmem:[%s553 + $0xc] sm:$0xf]
        %v558 = vld [vmem:[%s553 + $0x10] sm:$0xf]
        %v559 = vld [vmem:[%s553 + $0x14] sm:$0xf]
        %v560 = vld [vmem:[%s553 + $0x18] sm:$0xf]
        %v561 = vld [vmem:[%s553 + $0x1c] sm:$0xf]
        %v562 = vld [vmem:[%s553 + $0x20] sm:$0xf]
        %v563 = vld [vmem:[%s553 + $0x24] sm:$0xf]
        %v564 = vld [vmem:[%s553 + $0x28] sm:$0xf]
        %v565 = vld [vmem:[%s553 + $0x2c] sm:$0xf]
        %v566 = vld [vmem:[%s553 + $0x30] sm:$0xf]
        %v567 = vld [vmem:[%s553 + $0x34] sm:$0xf]
        %v568 = vld [vmem:[%s553 + $0x38] sm:$0xf]
        %v569 = vld [vmem:[%s553 + $0x3c] sm:$0xf]
        %v604 = vunpack.c.l.b16 %v533
        %v605 = vunpack.c.l.b16 %v534
        %v606 = vunpack.c.l.b16 %v500
        %v607 = vunpack.c.l.b16 %v501
        %v608 = vunpack.c.l.b16 %v502
        %v609 = vunpack.c.l.b16 %v503
        %v610 = vunpack.c.l.b16 %v504
        %v611 = vunpack.c.l.b16 %v505
        %v612 = vunpack.c.l.b16 %v506
        %v613 = vunpack.c.l.b16 %v507
        %v614 = vunpack.c.l.b16 %v508
        %v615 = vunpack.c.l.b16 %v509
        %v616 = vunpack.c.l.b16 %v510
        %v617 = vunpack.c.l.b16 %v511
        %v618 = vunpack.c.l.b16 %v512
        %v619 = vunpack.c.l.b16 %v513
        %v620 = vunpack.c.l.b16 %v514
        %v621 = vunpack.c.l.b16 %v515
        %v622 = vunpack.c.l.b16 %v516
        %v623 = vunpack.c.l.b16 %v517
        %v624 = vunpack.c.l.b16 %v518
        %v625 = vunpack.c.l.b16 %v519
        %v626 = vunpack.c.l.b16 %v520
        %v627 = vunpack.c.l.b16 %v521
        %v628 = vunpack.c.l.b16 %v522
        %v629 = vunpack.c.l.b16 %v523
        %v630 = vunpack.c.l.b16 %v524
        %v631 = vunpack.c.l.b16 %v525
        %v632 = vunpack.c.l.b16 %v526
        %v633 = vunpack.c.l.b16 %v527
        %v634 = vunpack.c.l.b16 %v528
        %v635 = vunpack.c.l.b16 %v529
        %v636 = vunpack.c.l.b16 %v530
        %v637 = vunpack.c.l.b16 %v552
        %v638 = vpack.c.b16 %v605, %v604
        %v639 = vpack.c.b16 %v607, %v606
        %v640 = vpack.c.b16 %v609, %v608
        %v641 = vpack.c.b16 %v611, %v610
        %v642 = vpack.c.b16 %v613, %v612
        %v643 = vpack.c.b16 %v615, %v614
        %v644 = vpack.c.b16 %v617, %v616
        %v645 = vpack.c.b16 %v619, %v618
        %v646 = vpack.c.b16 %v621, %v620
        %v647 = vpack.c.b16 %v623, %v622
        %v648 = vpack.c.b16 %v625, %v624
        %v649 = vpack.c.b16 %v627, %v626
        %v650 = vpack.c.b16 %v629, %v628
        %v651 = vpack.c.b16 %v631, %v630
        %v652 = vpack.c.b16 %v633, %v632
        %v653 = vpack.c.b16 %v635, %v634
        %v654 = vpack.c.b16 %v637, %v636
        %vm655 = vsmask.f32 5376
        %v657 = vshrl.u32 %v638, 16
        %v659 = vrot.slane %v657, 2
        %v660 = vshll.u32 %v638, 16
        %v662 = vrot.slane %v660, 3
        %v663 = vor.u32 %v659, %v662
        %v665 = vshrl.u32 %v639, 16
        %v667 = vrot.slane %v665, 2
        %v668 = vshll.u32 %v639, 16
        %v670 = vrot.slane %v668, 3
        %v671 = vor.u32 %v667, %v670
        %v672 = vsel %vm655, %v663, %v671
        %v674 = vshrl.u32 %v640, 16
        %v676 = vrot.slane %v674, 2
        %v677 = vshll.u32 %v640, 16
        %v679 = vrot.slane %v677, 3
        %v680 = vor.u32 %v676, %v679
        %v681 = vsel %vm655, %v671, %v680
        %v683 = vshrl.u32 %v641, 16
        %v685 = vrot.slane %v683, 2
        %v686 = vshll.u32 %v641, 16
        %v688 = vrot.slane %v686, 3
        %v689 = vor.u32 %v685, %v688
        %v690 = vsel %vm655, %v680, %v689
        %v692 = vshrl.u32 %v642, 16
        %v694 = vrot.slane %v692, 2
        %v695 = vshll.u32 %v642, 16
        %v697 = vrot.slane %v695, 3
        %v698 = vor.u32 %v694, %v697
        %v699 = vsel %vm655, %v689, %v698
        %v701 = vshrl.u32 %v643, 16
        %v703 = vrot.slane %v701, 2
        %v704 = vshll.u32 %v643, 16
        %v706 = vrot.slane %v704, 3
        %v707 = vor.u32 %v703, %v706
        %v708 = vsel %vm655, %v698, %v707
        %v710 = vshrl.u32 %v644, 16
        %v712 = vrot.slane %v710, 2
        %v713 = vshll.u32 %v644, 16
        %v715 = vrot.slane %v713, 3
        %v716 = vor.u32 %v712, %v715
        %v717 = vsel %vm655, %v707, %v716
        %v719 = vshrl.u32 %v645, 16
        %v721 = vrot.slane %v719, 2
        %v722 = vshll.u32 %v645, 16
        %v724 = vrot.slane %v722, 3
        %v725 = vor.u32 %v721, %v724
        %v726 = vsel %vm655, %v716, %v725
        %v728 = vshrl.u32 %v646, 16
        %v730 = vrot.slane %v728, 2
        %v731 = vshll.u32 %v646, 16
        %v733 = vrot.slane %v731, 3
        %v734 = vor.u32 %v730, %v733
        %v735 = vsel %vm655, %v725, %v734
        %v737 = vshrl.u32 %v647, 16
        %v739 = vrot.slane %v737, 2
        %v740 = vshll.u32 %v647, 16
        %v742 = vrot.slane %v740, 3
        %v743 = vor.u32 %v739, %v742
        %v744 = vsel %vm655, %v734, %v743
        %v746 = vshrl.u32 %v648, 16
        %v748 = vrot.slane %v746, 2
        %v749 = vshll.u32 %v648, 16
        %v751 = vrot.slane %v749, 3
        %v752 = vor.u32 %v748, %v751
        %v753 = vsel %vm655, %v743, %v752
        %v755 = vshrl.u32 %v649, 16
        %v757 = vrot.slane %v755, 2
        %v758 = vshll.u32 %v649, 16
        %v760 = vrot.slane %v758, 3
        %v761 = vor.u32 %v757, %v760
        %v762 = vsel %vm655, %v752, %v761
        %v764 = vshrl.u32 %v650, 16
        %v766 = vrot.slane %v764, 2
        %v767 = vshll.u32 %v650, 16
        %v769 = vrot.slane %v767, 3
        %v770 = vor.u32 %v766, %v769
        %v771 = vsel %vm655, %v761, %v770
        %v773 = vshrl.u32 %v651, 16
        %v775 = vrot.slane %v773, 2
        %v776 = vshll.u32 %v651, 16
        %v778 = vrot.slane %v776, 3
        %v779 = vor.u32 %v775, %v778
        %v780 = vsel %vm655, %v770, %v779
        %v782 = vshrl.u32 %v652, 16
        %v784 = vrot.slane %v782, 2
        %v785 = vshll.u32 %v652, 16
        %v787 = vrot.slane %v785, 3
        %v788 = vor.u32 %v784, %v787
        %v789 = vsel %vm655, %v779, %v788
        %v791 = vshrl.u32 %v653, 16
        %v793 = vrot.slane %v791, 2
        %v794 = vshll.u32 %v653, 16
        %v796 = vrot.slane %v794, 3
        %v797 = vor.u32 %v793, %v796
        %v798 = vsel %vm655, %v788, %v797
        %v800 = vshrl.u32 %v654, 16
        %v802 = vrot.slane %v800, 2
        %v803 = vshll.u32 %v654, 16
        %v805 = vrot.slane %v803, 3
        %v806 = vor.u32 %v802, %v805
        %v807 = vsel %vm655, %v797, %v806
        %v841 = vunpack.c.l.b16 %v554
        %v842 = vunpack.c.l.b16 %v555
        %v843 = vunpack.c.l.b16 %v556
        %v844 = vunpack.c.l.b16 %v557
        %v845 = vunpack.c.l.b16 %v558
        %v846 = vunpack.c.l.b16 %v559
        %v847 = vunpack.c.l.b16 %v560
        %v848 = vunpack.c.l.b16 %v561
        %v849 = vunpack.c.l.b16 %v562
        %v850 = vunpack.c.l.b16 %v563
        %v851 = vunpack.c.l.b16 %v564
        %v852 = vunpack.c.l.b16 %v565
        %v853 = vunpack.c.l.b16 %v566
        %v854 = vunpack.c.l.b16 %v567
        %v855 = vunpack.c.l.b16 %v568
        %v856 = vunpack.c.l.b16 %v569
        %v857 = vpack.c.b16 %v842, %v841
        %v858 = vpack.c.b16 %v844, %v843
        %v859 = vpack.c.b16 %v846, %v845
        %v860 = vpack.c.b16 %v848, %v847
        %v861 = vpack.c.b16 %v850, %v849
        %v862 = vpack.c.b16 %v852, %v851
        %v863 = vpack.c.b16 %v854, %v853
        %v864 = vpack.c.b16 %v856, %v855
        %873 = vmatprep.subr.bf16.mxu0 0
        %874 = vmatpush1.bf16.msra.mxu0 %v864
        %875 = vmatprep.subr.bf16.mxu0 0
        %876 = vmatpush1.bf16.msra.mxu0 %v863
        %877 = vmatprep.subr.bf16.mxu0 0
        %878 = vmatpush1.bf16.msra.mxu0 %v862
        %879 = vmatprep.subr.bf16.mxu0 0
        %880 = vmatpush1.bf16.msra.mxu0 %v861
        %881 = vmatprep.subr.bf16.mxu0 0
        %882 = vmatpush1.bf16.msra.mxu0 %v860
        %883 = vmatprep.subr.bf16.mxu0 0
        %884 = vmatpush1.bf16.msra.mxu0 %v859
        %885 = vmatprep.subr.bf16.mxu0 0
        %886 = vmatpush1.bf16.msra.mxu0 %v858
        %887 = vmatprep.subr.bf16.mxu0 0
        %888 = vmatpush1.bf16.msra.mxu0 %v857
        %889 = vmatprep.subr.bf16.mxu0 0
        %890 = vmatpush2.bf16.msra.mxu0 0
        %891 = vmatprep.subr.bf16.mxu0 0
        %892 = vmatpush2.bf16.msra.mxu0 0
        %893 = vmatprep.subr.bf16.mxu0 0
        %894 = vmatpush2.bf16.msra.mxu0 0
        %895 = vmatprep.subr.bf16.mxu0 0
        %896 = vmatpush2.bf16.msra.mxu0 0
        %897 = vmatprep.subr.bf16.mxu0 0
        %898 = vmatpush2.bf16.msra.mxu0 0
        %899 = vmatprep.subr.bf16.mxu0 0
        %900 = vmatpush2.bf16.msra.mxu0 0
        %901 = vmatprep.subr.bf16.mxu0 0
        %902 = vmatpush2.bf16.msra.mxu0 0
        %903 = vmatprep.subr.bf16.mxu0 0
        %904 = vmatpush2.bf16.msra.mxu0 0
        %905 = vmatprep.mubr.bf16.mxu0 0
        %906 = vmatmul.mubr.bf16.gmra.mxu0 %v672
        %v907 = vpop.f32.mrf.mxu0
        %v908 = vadd.f32 0.0, %v907
        %v909 = vpop.f32.mrf.mxu0
        %v910 = vpop.f32.mrf.mxu0
        %v911 = vadd.f32 0.0, %v910
        %v912 = vpop.f32.mrf.mxu0
        %913 = vmatprep.mubr.bf16.mxu0 0
        %914 = vmatmul.mubr.bf16.gmra.mxu0 %v681
        %v915 = vpop.f32.mrf.mxu0
        %v916 = vadd.f32 0.0, %v915
        %v917 = vpop.f32.mrf.mxu0
        %v918 = vpop.f32.mrf.mxu0
        %v919 = vadd.f32 0.0, %v918
        %v920 = vpop.f32.mrf.mxu0
        %921 = vmatprep.mubr.bf16.mxu0 0
        %922 = vmatmul.mubr.bf16.gmra.mxu0 %v690
        %v923 = vpop.f32.mrf.mxu0
        %v924 = vadd.f32 0.0, %v923
        %v925 = vpop.f32.mrf.mxu0
        %v926 = vpop.f32.mrf.mxu0
        %v927 = vadd.f32 0.0, %v926
        %v928 = vpop.f32.mrf.mxu0
        %929 = vmatprep.mubr.bf16.mxu0 0
        %930 = vmatmul.mubr.bf16.gmra.mxu0 %v699
        %v931 = vpop.f32.mrf.mxu0
        %v932 = vadd.f32 0.0, %v931
        %v933 = vpop.f32.mrf.mxu0
        %v934 = vpop.f32.mrf.mxu0
        %v935 = vadd.f32 0.0, %v934
        %v936 = vpop.f32.mrf.mxu0
        %937 = vmatprep.mubr.bf16.mxu0 0
        %938 = vmatmul.mubr.bf16.gmra.mxu0 %v708
        %v939 = vpop.f32.mrf.mxu0
        %v940 = vadd.f32 0.0, %v939
        %v941 = vpop.f32.mrf.mxu0
        %v942 = vpop.f32.mrf.mxu0
        %v943 = vadd.f32 0.0, %v942
        %v944 = vpop.f32.mrf.mxu0
        %945 = vmatprep.mubr.bf16.mxu0 0
        %946 = vmatmul.mubr.bf16.gmra.mxu0 %v717
        %v947 = vpop.f32.mrf.mxu0
        %v948 = vadd.f32 0.0, %v947
        %v949 = vpop.f32.mrf.mxu0
        %v950 = vpop.f32.mrf.mxu0
        %v951 = vadd.f32 0.0, %v950
        %v952 = vpop.f32.mrf.mxu0
        %953 = vmatprep.mubr.bf16.mxu0 0
        %954 = vmatmul.mubr.bf16.gmra.mxu0 %v726
        %v955 = vpop.f32.mrf.mxu0
        %v956 = vadd.f32 0.0, %v955
        %v957 = vpop.f32.mrf.mxu0
        %v958 = vpop.f32.mrf.mxu0
        %v959 = vadd.f32 0.0, %v958
        %v960 = vpop.f32.mrf.mxu0
        %961 = vmatprep.mubr.bf16.mxu0 0
        %962 = vmatmul.mubr.bf16.gmra.mxu0 %v735
        %v963 = vpop.f32.mrf.mxu0
        %v964 = vadd.f32 0.0, %v963
        %v965 = vpop.f32.mrf.mxu0
        %v966 = vpop.f32.mrf.mxu0
        %v967 = vadd.f32 0.0, %v966
        %v968 = vpop.f32.mrf.mxu0
        %969 = vmatprep.mubr.bf16.mxu0 0
        %970 = vmatmul.mubr.bf16.gmra.mxu0 %v744
        %v971 = vpop.f32.mrf.mxu0
        %v972 = vadd.f32 0.0, %v971
        %v973 = vpop.f32.mrf.mxu0
        %v974 = vpop.f32.mrf.mxu0
        %v975 = vadd.f32 0.0, %v974
        %v976 = vpop.f32.mrf.mxu0
        %977 = vmatprep.mubr.bf16.mxu0 0
        %978 = vmatmul.mubr.bf16.gmra.mxu0 %v753
        %v979 = vpop.f32.mrf.mxu0
        %v980 = vadd.f32 0.0, %v979
        %v981 = vpop.f32.mrf.mxu0
        %v982 = vpop.f32.mrf.mxu0
        %v983 = vadd.f32 0.0, %v982
        %v984 = vpop.f32.mrf.mxu0
        %985 = vmatprep.mubr.bf16.mxu0 0
        %986 = vmatmul.mubr.bf16.gmra.mxu0 %v762
        %v987 = vpop.f32.mrf.mxu0
        %v988 = vadd.f32 0.0, %v987
        %v989 = vpop.f32.mrf.mxu0
        %v990 = vpop.f32.mrf.mxu0
        %v991 = vadd.f32 0.0, %v990
        %v992 = vpop.f32.mrf.mxu0
        %993 = vmatprep.mubr.bf16.mxu0 0
        %994 = vmatmul.mubr.bf16.gmra.mxu0 %v771
        %v995 = vpop.f32.mrf.mxu0
        %v996 = vadd.f32 0.0, %v995
        %v997 = vpop.f32.mrf.mxu0
        %v998 = vpop.f32.mrf.mxu0
        %v999 = vadd.f32 0.0, %v998
        %v1000 = vpop.f32.mrf.mxu0
        %1001 = vmatprep.mubr.bf16.mxu0 0
        %1002 = vmatmul.mubr.bf16.gmra.mxu0 %v780
        %v1003 = vpop.f32.mrf.mxu0
        %v1004 = vadd.f32 0.0, %v1003
        %v1005 = vpop.f32.mrf.mxu0
        %v1006 = vpop.f32.mrf.mxu0
        %v1007 = vadd.f32 0.0, %v1006
        %v1008 = vpop.f32.mrf.mxu0
        %1009 = vmatprep.mubr.bf16.mxu0 0
        %1010 = vmatmul.mubr.bf16.gmra.mxu0 %v789
        %v1011 = vpop.f32.mrf.mxu0
        %v1012 = vadd.f32 0.0, %v1011
        %v1013 = vpop.f32.mrf.mxu0
        %v1014 = vpop.f32.mrf.mxu0
        %v1015 = vadd.f32 0.0, %v1014
        %v1016 = vpop.f32.mrf.mxu0
        %1017 = vmatprep.mubr.bf16.mxu0 0
        %1018 = vmatmul.mubr.bf16.gmra.mxu0 %v798
        %v1019 = vpop.f32.mrf.mxu0
        %v1020 = vadd.f32 0.0, %v1019
        %v1021 = vpop.f32.mrf.mxu0
        %v1022 = vpop.f32.mrf.mxu0
        %v1023 = vadd.f32 0.0, %v1022
        %v1024 = vpop.f32.mrf.mxu0
        %1025 = vmatprep.mubr.bf16.mxu0 0
        %1026 = vmatmul.mubr.bf16.gmra.mxu0 %v807
        %v1027 = vpop.f32.mrf.mxu0
        %v1028 = vadd.f32 0.0, %v1027
        %v1029 = vpop.f32.mrf.mxu0
        %v1030 = vpop.f32.mrf.mxu0
        %v1031 = vadd.f32 0.0, %v1030
        %v1032 = vpop.f32.mrf.mxu0
        %1033 = vmatprep.mubr.bf16.mxu0 0
        %1034 = vmatmul.mubr.bf16.gmra.mxu0 %v806
        %v1035 = vpop.f32.mrf.mxu0
        %v1036 = vadd.f32 0.0, %v1035
        %v1037 = vpop.f32.mrf.mxu0
        %v1038 = vpop.f32.mrf.mxu0
        %v1039 = vpop.f32.mrf.mxu0
        %1040 = vdwg.mxu0
        %v1042 = vunpack.c.l.b16 %v535
        %v1043 = vpack.c.b16 %v1042, %v636
        %vm1044 = vcmask 1045504
        %v1045 = vrot.slane %v638, 2
        %v1046 = vrot.slane %v639, 2
        %v1047 = vsel %vm1044, %v1045, %v1046
        %v1048 = vrot.slane %v640, 2
        %v1049 = vsel %vm1044, %v1046, %v1048
        %v1050 = vrot.slane %v641, 2
        %v1051 = vsel %vm1044, %v1048, %v1050
        %v1052 = vrot.slane %v642, 2
        %v1053 = vsel %vm1044, %v1050, %v1052
        %v1054 = vrot.slane %v643, 2
        %v1055 = vsel %vm1044, %v1052, %v1054
        %v1056 = vrot.slane %v644, 2
        %v1057 = vsel %vm1044, %v1054, %v1056
        %v1058 = vrot.slane %v645, 2
        %v1059 = vsel %vm1044, %v1056, %v1058
        %v1060 = vrot.slane %v646, 2
        %v1061 = vsel %vm1044, %v1058, %v1060
        %v1062 = vrot.slane %v647, 2
        %v1063 = vsel %vm1044, %v1060, %v1062
        %v1064 = vrot.slane %v648, 2
        %v1065 = vsel %vm1044, %v1062, %v1064
        %v1066 = vrot.slane %v649, 2
        %v1067 = vsel %vm1044, %v1064, %v1066
        %v1068 = vrot.slane %v650, 2
        %v1069 = vsel %vm1044, %v1066, %v1068
        %v1070 = vrot.slane %v651, 2
        %v1071 = vsel %vm1044, %v1068, %v1070
        %v1072 = vrot.slane %v652, 2
        %v1073 = vsel %vm1044, %v1070, %v1072
        %v1074 = vrot.slane %v653, 2
        %v1075 = vsel %vm1044, %v1072, %v1074
        %v1076 = vrot.slane %v1043, 2
        %v1077 = vsel %vm1044, %v1074, %v1076
        %v1111 = vunpack.c.l.b16 %v536
        %v1112 = vunpack.c.l.b16 %v537
        %v1113 = vunpack.c.l.b16 %v538
        %v1114 = vunpack.c.l.b16 %v539
        %v1115 = vunpack.c.l.b16 %v540
        %v1116 = vunpack.c.l.b16 %v541
        %v1117 = vunpack.c.l.b16 %v542
        %v1118 = vunpack.c.l.b16 %v543
        %v1119 = vunpack.c.l.b16 %v544
        %v1120 = vunpack.c.l.b16 %v545
        %v1121 = vunpack.c.l.b16 %v546
        %v1122 = vunpack.c.l.b16 %v547
        %v1123 = vunpack.c.l.b16 %v548
        %v1124 = vunpack.c.l.b16 %v549
        %v1125 = vunpack.c.l.b16 %v550
        %v1126 = vunpack.c.l.b16 %v551
        %v1127 = vpack.c.b16 %v1112, %v1111
        %v1128 = vpack.c.b16 %v1114, %v1113
        %v1129 = vpack.c.b16 %v1116, %v1115
        %v1130 = vpack.c.b16 %v1118, %v1117
        %v1131 = vpack.c.b16 %v1120, %v1119
        %v1132 = vpack.c.b16 %v1122, %v1121
        %v1133 = vpack.c.b16 %v1124, %v1123
        %v1134 = vpack.c.b16 %v1126, %v1125
        %1143 = vmatprep.subr.bf16.mxu0 0
        %1144 = vmatpush1.bf16.msra.mxu0 %v1134
        %1145 = vmatprep.subr.bf16.mxu0 0
        %1146 = vmatpush1.bf16.msra.mxu0 %v1133
        %1147 = vmatprep.subr.bf16.mxu0 0
        %1148 = vmatpush1.bf16.msra.mxu0 %v1132
        %1149 = vmatprep.subr.bf16.mxu0 0
        %1150 = vmatpush1.bf16.msra.mxu0 %v1131
        %1151 = vmatprep.subr.bf16.mxu0 0
        %1152 = vmatpush1.bf16.msra.mxu0 %v1130
        %1153 = vmatprep.subr.bf16.mxu0 0
        %1154 = vmatpush1.bf16.msra.mxu0 %v1129
        %1155 = vmatprep.subr.bf16.mxu0 0
        %1156 = vmatpush1.bf16.msra.mxu0 %v1128
        %1157 = vmatprep.subr.bf16.mxu0 0
        %1158 = vmatpush1.bf16.msra.mxu0 %v1127
        %1159 = vmatprep.subr.bf16.mxu0 0
        %1160 = vmatpush2.bf16.msra.mxu0 0
        %1161 = vmatprep.subr.bf16.mxu0 0
        %1162 = vmatpush2.bf16.msra.mxu0 0
        %1163 = vmatprep.subr.bf16.mxu0 0
        %1164 = vmatpush2.bf16.msra.mxu0 0
        %1165 = vmatprep.subr.bf16.mxu0 0
        %1166 = vmatpush2.bf16.msra.mxu0 0
        %1167 = vmatprep.subr.bf16.mxu0 0
        %1168 = vmatpush2.bf16.msra.mxu0 0
        %1169 = vmatprep.subr.bf16.mxu0 0
        %1170 = vmatpush2.bf16.msra.mxu0 0
        %1171 = vmatprep.subr.bf16.mxu0 0
        %1172 = vmatpush2.bf16.msra.mxu0 0
        %1173 = vmatprep.subr.bf16.mxu0 0
        %1174 = vmatpush2.bf16.msra.mxu0 0
        %1175 = vmatprep.mubr.bf16.mxu0 0
        %1176 = vmatmul.mubr.bf16.gmra.mxu0 %v1047
        %v1177 = vpop.f32.mrf.mxu0
        %v1178 = vadd.f32 %v908, %v1177
        %v1179 = vpop.f32.mrf.mxu0
        %v1180 = vpop.f32.mrf.mxu0
        %v1181 = vadd.f32 %v911, %v1180
        %v1182 = vpop.f32.mrf.mxu0
        %1183 = vmatprep.mubr.bf16.mxu0 0
        %1184 = vmatmul.mubr.bf16.gmra.mxu0 %v1049
        %v1185 = vpop.f32.mrf.mxu0
        %v1186 = vadd.f32 %v916, %v1185
        %v1187 = vpop.f32.mrf.mxu0
        %v1188 = vpop.f32.mrf.mxu0
        %v1189 = vadd.f32 %v919, %v1188
        %v1190 = vpop.f32.mrf.mxu0
        %1191 = vmatprep.mubr.bf16.mxu0 0
        %1192 = vmatmul.mubr.bf16.gmra.mxu0 %v1051
        %v1193 = vpop.f32.mrf.mxu0
        %v1194 = vadd.f32 %v924, %v1193
        %v1195 = vpop.f32.mrf.mxu0
        %v1196 = vpop.f32.mrf.mxu0
        %v1197 = vadd.f32 %v927, %v1196
        %v1198 = vpop.f32.mrf.mxu0
        %1199 = vmatprep.mubr.bf16.mxu0 0
        %1200 = vmatmul.mubr.bf16.gmra.mxu0 %v1053
        %v1201 = vpop.f32.mrf.mxu0
        %v1202 = vadd.f32 %v932, %v1201
        %v1203 = vpop.f32.mrf.mxu0
        %v1204 = vpop.f32.mrf.mxu0
        %v1205 = vadd.f32 %v935, %v1204
        %v1206 = vpop.f32.mrf.mxu0
        %1207 = vmatprep.mubr.bf16.mxu0 0
        %1208 = vmatmul.mubr.bf16.gmra.mxu0 %v1055
        %v1209 = vpop.f32.mrf.mxu0
        %v1210 = vadd.f32 %v940, %v1209
        %v1211 = vpop.f32.mrf.mxu0
        %v1212 = vpop.f32.mrf.mxu0
        %v1213 = vadd.f32 %v943, %v1212
        %v1214 = vpop.f32.mrf.mxu0
        %1215 = vmatprep.mubr.bf16.mxu0 0
        %1216 = vmatmul.mubr.bf16.gmra.mxu0 %v1057
        %v1217 = vpop.f32.mrf.mxu0
        %v1218 = vadd.f32 %v948, %v1217
        %v1219 = vpop.f32.mrf.mxu0
        %v1220 = vpop.f32.mrf.mxu0
        %v1221 = vadd.f32 %v951, %v1220
        %v1222 = vpop.f32.mrf.mxu0
        %1223 = vmatprep.mubr.bf16.mxu0 0
        %1224 = vmatmul.mubr.bf16.gmra.mxu0 %v1059
        %v1225 = vpop.f32.mrf.mxu0
        %v1226 = vadd.f32 %v956, %v1225
        %v1227 = vpop.f32.mrf.mxu0
        %v1228 = vpop.f32.mrf.mxu0
        %v1229 = vadd.f32 %v959, %v1228
        %v1230 = vpop.f32.mrf.mxu0
        %1231 = vmatprep.mubr.bf16.mxu0 0
        %1232 = vmatmul.mubr.bf16.gmra.mxu0 %v1061
        %v1233 = vpop.f32.mrf.mxu0
        %v1234 = vadd.f32 %v964, %v1233
        %v1235 = vpop.f32.mrf.mxu0
        %v1236 = vpop.f32.mrf.mxu0
        %v1237 = vadd.f32 %v967, %v1236
        %v1238 = vpop.f32.mrf.mxu0
        %1239 = vmatprep.mubr.bf16.mxu0 0
        %1240 = vmatmul.mubr.bf16.gmra.mxu0 %v1063
        %v1241 = vpop.f32.mrf.mxu0
        %v1242 = vadd.f32 %v972, %v1241
        %v1243 = vpop.f32.mrf.mxu0
        %v1244 = vpop.f32.mrf.mxu0
        %v1245 = vadd.f32 %v975, %v1244
        %v1246 = vpop.f32.mrf.mxu0
        %1247 = vmatprep.mubr.bf16.mxu0 0
        %1248 = vmatmul.mubr.bf16.gmra.mxu0 %v1065
        %v1249 = vpop.f32.mrf.mxu0
        %v1250 = vadd.f32 %v980, %v1249
        %v1251 = vpop.f32.mrf.mxu0
        %v1252 = vpop.f32.mrf.mxu0
        %v1253 = vadd.f32 %v983, %v1252
        %v1254 = vpop.f32.mrf.mxu0
        %1255 = vmatprep.mubr.bf16.mxu0 0
        %1256 = vmatmul.mubr.bf16.gmra.mxu0 %v1067
        %v1257 = vpop.f32.mrf.mxu0
        %v1258 = vadd.f32 %v988, %v1257
        %v1259 = vpop.f32.mrf.mxu0
        %v1260 = vpop.f32.mrf.mxu0
        %v1261 = vadd.f32 %v991, %v1260
        %v1262 = vpop.f32.mrf.mxu0
        %1263 = vmatprep.mubr.bf16.mxu0 0
        %1264 = vmatmul.mubr.bf16.gmra.mxu0 %v1069
        %v1265 = vpop.f32.mrf.mxu0
        %v1266 = vadd.f32 %v996, %v1265
        %v1267 = vpop.f32.mrf.mxu0
        %v1268 = vpop.f32.mrf.mxu0
        %v1269 = vadd.f32 %v999, %v1268
        %v1270 = vpop.f32.mrf.mxu0
        %1271 = vmatprep.mubr.bf16.mxu0 0
        %1272 = vmatmul.mubr.bf16.gmra.mxu0 %v1071
        %v1273 = vpop.f32.mrf.mxu0
        %v1274 = vadd.f32 %v1004, %v1273
        %v1275 = vpop.f32.mrf.mxu0
        %v1276 = vpop.f32.mrf.mxu0
        %v1277 = vadd.f32 %v1007, %v1276
        %v1278 = vpop.f32.mrf.mxu0
        %1279 = vmatprep.mubr.bf16.mxu0 0
        %1280 = vmatmul.mubr.bf16.gmra.mxu0 %v1073
        %v1281 = vpop.f32.mrf.mxu0
        %v1282 = vadd.f32 %v1012, %v1281
        %v1283 = vpop.f32.mrf.mxu0
        %v1284 = vpop.f32.mrf.mxu0
        %v1285 = vadd.f32 %v1015, %v1284
        %v1286 = vpop.f32.mrf.mxu0
        %1287 = vmatprep.mubr.bf16.mxu0 0
        %1288 = vmatmul.mubr.bf16.gmra.mxu0 %v1075
        %v1289 = vpop.f32.mrf.mxu0
        %v1290 = vadd.f32 %v1020, %v1289
        %v1291 = vpop.f32.mrf.mxu0
        %v1292 = vpop.f32.mrf.mxu0
        %v1293 = vadd.f32 %v1023, %v1292
        %v1294 = vpop.f32.mrf.mxu0
        %1295 = vmatprep.mubr.bf16.mxu0 0
        %1296 = vmatmul.mubr.bf16.gmra.mxu0 %v1077
        %v1297 = vpop.f32.mrf.mxu0
        %v1298 = vadd.f32 %v1028, %v1297
        %v1299 = vpop.f32.mrf.mxu0
        %v1300 = vpop.f32.mrf.mxu0
        %v1301 = vadd.f32 %v1031, %v1300
        %v1302 = vpop.f32.mrf.mxu0
        %1303 = vmatprep.mubr.bf16.mxu0 0
        %1304 = vmatmul.mubr.bf16.gmra.mxu0 %v1076
        %v1305 = vpop.f32.mrf.mxu0
        %v1306 = vadd.f32 %v1036, %v1305
        %v1307 = vpop.f32.mrf.mxu0
        %v1308 = vpop.f32.mrf.mxu0
        %v1309 = vpop.f32.mrf.mxu0
        %1310 = vdwg.mxu0
        %v1311 = vld [vmem:[#allocation2] sm:$0x8]
        %s1312 = scalar_lea.vmem %s295, 128 [#allocation3]
        %v1313 = vld [vmem:[%s1312] sm:$0xf]
        %v1314 = vld [vmem:[%s1312 + $0x4] sm:$0xf]
        %v1315 = vld [vmem:[%s1312 + $0x8] sm:$0xf]
        %v1316 = vld [vmem:[%s1312 + $0xc] sm:$0xf]
        %v1317 = vld [vmem:[%s1312 + $0x10] sm:$0xf]
        %v1318 = vld [vmem:[%s1312 + $0x14] sm:$0xf]
        %v1319 = vld [vmem:[%s1312 + $0x18] sm:$0xf]
        %v1320 = vld [vmem:[%s1312 + $0x1c] sm:$0xf]
        %v1321 = vld [vmem:[%s1312 + $0x20] sm:$0xf]
        %v1322 = vld [vmem:[%s1312 + $0x24] sm:$0xf]
        %v1323 = vld [vmem:[%s1312 + $0x28] sm:$0xf]
        %v1324 = vld [vmem:[%s1312 + $0x2c] sm:$0xf]
        %v1325 = vld [vmem:[%s1312 + $0x30] sm:$0xf]
        %v1326 = vld [vmem:[%s1312 + $0x34] sm:$0xf]
        %v1327 = vld [vmem:[%s1312 + $0x38] sm:$0xf]
        %v1328 = vld [vmem:[%s1312 + $0x3c] sm:$0xf]
        %v1330 = vunpack.c.l.b16 %v1311
        %v1331 = vpack.c.b16 %v605, %v1330
        %vm1332 = vcmask 1044480
        %v1333 = vrot.slane %v1331, 3
        %v1334 = vrot.slane %v639, 3
        %v1335 = vsel %vm1332, %v1333, %v1334
        %v1336 = vrot.slane %v640, 3
        %v1337 = vsel %vm1332, %v1334, %v1336
        %v1338 = vrot.slane %v641, 3
        %v1339 = vsel %vm1332, %v1336, %v1338
        %v1340 = vrot.slane %v642, 3
        %v1341 = vsel %vm1332, %v1338, %v1340
        %v1342 = vrot.slane %v643, 3
        %v1343 = vsel %vm1332, %v1340, %v1342
        %v1344 = vrot.slane %v644, 3
        %v1345 = vsel %vm1332, %v1342, %v1344
        %v1346 = vrot.slane %v645, 3
        %v1347 = vsel %vm1332, %v1344, %v1346
        %v1348 = vrot.slane %v646, 3
        %v1349 = vsel %vm1332, %v1346, %v1348
        %v1350 = vrot.slane %v647, 3
        %v1351 = vsel %vm1332, %v1348, %v1350
        %v1352 = vrot.slane %v648, 3
        %v1353 = vsel %vm1332, %v1350, %v1352
        %v1354 = vrot.slane %v649, 3
        %v1355 = vsel %vm1332, %v1352, %v1354
        %v1356 = vrot.slane %v650, 3
        %v1357 = vsel %vm1332, %v1354, %v1356
        %v1358 = vrot.slane %v651, 3
        %v1359 = vsel %vm1332, %v1356, %v1358
        %v1360 = vrot.slane %v652, 3
        %v1361 = vsel %vm1332, %v1358, %v1360
        %v1362 = vrot.slane %v653, 3
        %v1363 = vsel %vm1332, %v1360, %v1362
        %v1364 = vrot.slane %v654, 3
        %v1365 = vsel %vm1332, %v1362, %v1364
        %v1399 = vunpack.c.l.b16 %v1313
        %v1400 = vunpack.c.l.b16 %v1314
        %v1401 = vunpack.c.l.b16 %v1315
        %v1402 = vunpack.c.l.b16 %v1316
        %v1403 = vunpack.c.l.b16 %v1317
        %v1404 = vunpack.c.l.b16 %v1318
        %v1405 = vunpack.c.l.b16 %v1319
        %v1406 = vunpack.c.l.b16 %v1320
        %v1407 = vunpack.c.l.b16 %v1321
        %v1408 = vunpack.c.l.b16 %v1322
        %v1409 = vunpack.c.l.b16 %v1323
        %v1410 = vunpack.c.l.b16 %v1324
        %v1411 = vunpack.c.l.b16 %v1325
        %v1412 = vunpack.c.l.b16 %v1326
        %v1413 = vunpack.c.l.b16 %v1327
        %v1414 = vunpack.c.l.b16 %v1328
        %v1415 = vpack.c.b16 %v1400, %v1399
        %v1416 = vpack.c.b16 %v1402, %v1401
        %v1417 = vpack.c.b16 %v1404, %v1403
        %v1418 = vpack.c.b16 %v1406, %v1405
        %v1419 = vpack.c.b16 %v1408, %v1407
        %v1420 = vpack.c.b16 %v1410, %v1409
        %v1421 = vpack.c.b16 %v1412, %v1411
        %v1422 = vpack.c.b16 %v1414, %v1413
        %1431 = vmatprep.subr.bf16.mxu0 0
        %1432 = vmatpush1.bf16.msra.mxu0 %v1422
        %1433 = vmatprep.subr.bf16.mxu0 0
        %1434 = vmatpush1.bf16.msra.mxu0 %v1421
        %1435 = vmatprep.subr.bf16.mxu0 0
        %1436 = vmatpush1.bf16.msra.mxu0 %v1420
        %1437 = vmatprep.subr.bf16.mxu0 0
        %1438 = vmatpush1.bf16.msra.mxu0 %v1419
        %1439 = vmatprep.subr.bf16.mxu0 0
        %1440 = vmatpush1.bf16.msra.mxu0 %v1418
        %1441 = vmatprep.subr.bf16.mxu0 0
        %1442 = vmatpush1.bf16.msra.mxu0 %v1417
        %1443 = vmatprep.subr.bf16.mxu0 0
        %1444 = vmatpush1.bf16.msra.mxu0 %v1416
        %1445 = vmatprep.subr.bf16.mxu0 0
        %1446 = vmatpush1.bf16.msra.mxu0 %v1415
        %1447 = vmatprep.subr.bf16.mxu0 0
        %1448 = vmatpush2.bf16.msra.mxu0 0
        %1449 = vmatprep.subr.bf16.mxu0 0
        %1450 = vmatpush2.bf16.msra.mxu0 0
        %1451 = vmatprep.subr.bf16.mxu0 0
        %1452 = vmatpush2.bf16.msra.mxu0 0
        %1453 = vmatprep.subr.bf16.mxu0 0
        %1454 = vmatpush2.bf16.msra.mxu0 0
        %1455 = vmatprep.subr.bf16.mxu0 0
        %1456 = vmatpush2.bf16.msra.mxu0 0
        %1457 = vmatprep.subr.bf16.mxu0 0
        %1458 = vmatpush2.bf16.msra.mxu0 0
        %1459 = vmatprep.subr.bf16.mxu0 0
        %1460 = vmatpush2.bf16.msra.mxu0 0
        %1461 = vmatprep.subr.bf16.mxu0 0
        %1462 = vmatpush2.bf16.msra.mxu0 0
        %1463 = vmatprep.mubr.bf16.mxu0 0
        %1464 = vmatmul.mubr.bf16.gmra.mxu0 %v1335
        %v1465 = vpop.f32.mrf.mxu0
        %v1466 = vadd.f32 0.0, %v1465
        %v1467 = vpop.f32.mrf.mxu0
        %v1468 = vpop.f32.mrf.mxu0
        %v1469 = vadd.f32 0.0, %v1468
        %v1470 = vpop.f32.mrf.mxu0
        %1471 = vmatprep.mubr.bf16.mxu0 0
        %1472 = vmatmul.mubr.bf16.gmra.mxu0 %v1337
        %v1473 = vpop.f32.mrf.mxu0
        %v1474 = vadd.f32 0.0, %v1473
        %v1475 = vpop.f32.mrf.mxu0
        %v1476 = vpop.f32.mrf.mxu0
        %v1477 = vadd.f32 0.0, %v1476
        %v1478 = vpop.f32.mrf.mxu0
        %1479 = vmatprep.mubr.bf16.mxu0 0
        %1480 = vmatmul.mubr.bf16.gmra.mxu0 %v1339
        %v1481 = vpop.f32.mrf.mxu0
        %v1482 = vadd.f32 0.0, %v1481
        %v1483 = vpop.f32.mrf.mxu0
        %v1484 = vpop.f32.mrf.mxu0
        %v1485 = vadd.f32 0.0, %v1484
        %v1486 = vpop.f32.mrf.mxu0
        %1487 = vmatprep.mubr.bf16.mxu0 0
        %1488 = vmatmul.mubr.bf16.gmra.mxu0 %v1341
        %v1489 = vpop.f32.mrf.mxu0
        %v1490 = vadd.f32 0.0, %v1489
        %v1491 = vpop.f32.mrf.mxu0
        %v1492 = vpop.f32.mrf.mxu0
        %v1493 = vadd.f32 0.0, %v1492
        %v1494 = vpop.f32.mrf.mxu0
        %1495 = vmatprep.mubr.bf16.mxu0 0
        %1496 = vmatmul.mubr.bf16.gmra.mxu0 %v1343
        %v1497 = vpop.f32.mrf.mxu0
        %v1498 = vadd.f32 0.0, %v1497
        %v1499 = vpop.f32.mrf.mxu0
        %v1500 = vpop.f32.mrf.mxu0
        %v1501 = vadd.f32 0.0, %v1500
        %v1502 = vpop.f32.mrf.mxu0
        %1503 = vmatprep.mubr.bf16.mxu0 0
        %1504 = vmatmul.mubr.bf16.gmra.mxu0 %v1345
        %v1505 = vpop.f32.mrf.mxu0
        %v1506 = vadd.f32 0.0, %v1505
        %v1507 = vpop.f32.mrf.mxu0
        %v1508 = vpop.f32.mrf.mxu0
        %v1509 = vadd.f32 0.0, %v1508
        %v1510 = vpop.f32.mrf.mxu0
        %1511 = vmatprep.mubr.bf16.mxu0 0
        %1512 = vmatmul.mubr.bf16.gmra.mxu0 %v1347
        %v1513 = vpop.f32.mrf.mxu0
        %v1514 = vadd.f32 0.0, %v1513
        %v1515 = vpop.f32.mrf.mxu0
        %v1516 = vpop.f32.mrf.mxu0
        %v1517 = vadd.f32 0.0, %v1516
        %v1518 = vpop.f32.mrf.mxu0
        %1519 = vmatprep.mubr.bf16.mxu0 0
        %1520 = vmatmul.mubr.bf16.gmra.mxu0 %v1349
        %v1521 = vpop.f32.mrf.mxu0
        %v1522 = vadd.f32 0.0, %v1521
        %v1523 = vpop.f32.mrf.mxu0
        %v1524 = vpop.f32.mrf.mxu0
        %v1525 = vadd.f32 0.0, %v1524
        %v1526 = vpop.f32.mrf.mxu0
        %1527 = vmatprep.mubr.bf16.mxu0 0
        %1528 = vmatmul.mubr.bf16.gmra.mxu0 %v1351
        %v1529 = vpop.f32.mrf.mxu0
        %v1530 = vadd.f32 0.0, %v1529
        %v1531 = vpop.f32.mrf.mxu0
        %v1532 = vpop.f32.mrf.mxu0
        %v1533 = vadd.f32 0.0, %v1532
        %v1534 = vpop.f32.mrf.mxu0
        %1535 = vmatprep.mubr.bf16.mxu0 0
        %1536 = vmatmul.mubr.bf16.gmra.mxu0 %v1353
        %v1537 = vpop.f32.mrf.mxu0
        %v1538 = vadd.f32 0.0, %v1537
        %v1539 = vpop.f32.mrf.mxu0
        %v1540 = vpop.f32.mrf.mxu0
        %v1541 = vadd.f32 0.0, %v1540
        %v1542 = vpop.f32.mrf.mxu0
        %1543 = vmatprep.mubr.bf16.mxu0 0
        %1544 = vmatmul.mubr.bf16.gmra.mxu0 %v1355
        %v1545 = vpop.f32.mrf.mxu0
        %v1546 = vadd.f32 0.0, %v1545
        %v1547 = vpop.f32.mrf.mxu0
        %v1548 = vpop.f32.mrf.mxu0
        %v1549 = vadd.f32 0.0, %v1548
        %v1550 = vpop.f32.mrf.mxu0
        %1551 = vmatprep.mubr.bf16.mxu0 0
        %1552 = vmatmul.mubr.bf16.gmra.mxu0 %v1357
        %v1553 = vpop.f32.mrf.mxu0
        %v1554 = vadd.f32 0.0, %v1553
        %v1555 = vpop.f32.mrf.mxu0
        %v1556 = vpop.f32.mrf.mxu0
        %v1557 = vadd.f32 0.0, %v1556
        %v1558 = vpop.f32.mrf.mxu0
        %1559 = vmatprep.mubr.bf16.mxu0 0
        %1560 = vmatmul.mubr.bf16.gmra.mxu0 %v1359
        %v1561 = vpop.f32.mrf.mxu0
        %v1562 = vadd.f32 0.0, %v1561
        %v1563 = vpop.f32.mrf.mxu0
        %v1564 = vpop.f32.mrf.mxu0
        %v1565 = vadd.f32 0.0, %v1564
        %v1566 = vpop.f32.mrf.mxu0
        %1567 = vmatprep.mubr.bf16.mxu0 0
        %1568 = vmatmul.mubr.bf16.gmra.mxu0 %v1361
        %v1569 = vpop.f32.mrf.mxu0
        %v1570 = vadd.f32 0.0, %v1569
        %v1571 = vpop.f32.mrf.mxu0
        %v1572 = vpop.f32.mrf.mxu0
        %v1573 = vadd.f32 0.0, %v1572
        %v1574 = vpop.f32.mrf.mxu0
        %1575 = vmatprep.mubr.bf16.mxu0 0
        %1576 = vmatmul.mubr.bf16.gmra.mxu0 %v1363
        %v1577 = vpop.f32.mrf.mxu0
        %v1578 = vadd.f32 0.0, %v1577
        %v1579 = vpop.f32.mrf.mxu0
        %v1580 = vpop.f32.mrf.mxu0
        %v1581 = vadd.f32 0.0, %v1580
        %v1582 = vpop.f32.mrf.mxu0
        %1583 = vmatprep.mubr.bf16.mxu0 0
        %1584 = vmatmul.mubr.bf16.gmra.mxu0 %v1365
        %v1585 = vpop.f32.mrf.mxu0
        %v1586 = vadd.f32 0.0, %v1585
        %v1587 = vpop.f32.mrf.mxu0
        %v1588 = vpop.f32.mrf.mxu0
        %v1589 = vadd.f32 0.0, %v1588
        %v1590 = vpop.f32.mrf.mxu0
        %1591 = vmatprep.mubr.bf16.mxu0 0
        %1592 = vmatmul.mubr.bf16.gmra.mxu0 %v1364
        %v1593 = vpop.f32.mrf.mxu0
        %v1594 = vadd.f32 0.0, %v1593
        %v1595 = vpop.f32.mrf.mxu0
        %v1596 = vpop.f32.mrf.mxu0
        %v1597 = vpop.f32.mrf.mxu0
        %1598 = vdwg.mxu0
        %v1599 = vadd.f32 %v1178, %v1466
        %v1600 = vadd.f32 %v1181, %v1469
        %v1601 = vadd.f32 %v1186, %v1474
        %v1602 = vadd.f32 %v1189, %v1477
        %v1603 = vadd.f32 %v1194, %v1482
        %v1604 = vadd.f32 %v1197, %v1485
        %v1605 = vadd.f32 %v1202, %v1490
        %v1606 = vadd.f32 %v1205, %v1493
        %v1607 = vadd.f32 %v1210, %v1498
        %v1608 = vadd.f32 %v1213, %v1501
        %v1609 = vadd.f32 %v1218, %v1506
        %v1610 = vadd.f32 %v1221, %v1509
        %v1611 = vadd.f32 %v1226, %v1514
        %v1612 = vadd.f32 %v1229, %v1517
        %v1613 = vadd.f32 %v1234, %v1522
        %v1614 = vadd.f32 %v1237, %v1525
        %v1615 = vadd.f32 %v1242, %v1530
        %v1616 = vadd.f32 %v1245, %v1533
        %v1617 = vadd.f32 %v1250, %v1538
        %v1618 = vadd.f32 %v1253, %v1541
        %v1619 = vadd.f32 %v1258, %v1546
        %v1620 = vadd.f32 %v1261, %v1549
        %v1621 = vadd.f32 %v1266, %v1554
        %v1622 = vadd.f32 %v1269, %v1557
        %v1623 = vadd.f32 %v1274, %v1562
        %v1624 = vadd.f32 %v1277, %v1565
        %v1625 = vadd.f32 %v1282, %v1570
        %v1626 = vadd.f32 %v1285, %v1573
        %v1627 = vadd.f32 %v1290, %v1578
        %v1628 = vadd.f32 %v1293, %v1581
        %v1629 = vadd.f32 %v1298, %v1586
        %v1630 = vadd.f32 %v1301, %v1589
        %v1631 = vadd.f32 %v1306, %v1594
        %v1632 = vld [vmem:[#allocation2 + $0x4] sm:$0x8]
        %s1633 = scalar_lea.vmem %s295, 192 [#allocation3]
        %v1634 = vld [vmem:[%s1633] sm:$0xf]
        %v1635 = vld [vmem:[%s1633 + $0x4] sm:$0xf]
        %v1636 = vld [vmem:[%s1633 + $0x8] sm:$0xf]
        %v1637 = vld [vmem:[%s1633 + $0xc] sm:$0xf]
        %v1638 = vld [vmem:[%s1633 + $0x10] sm:$0xf]
        %v1639 = vld [vmem:[%s1633 + $0x14] sm:$0xf]
        %v1640 = vld [vmem:[%s1633 + $0x18] sm:$0xf]
        %v1641 = vld [vmem:[%s1633 + $0x1c] sm:$0xf]
        %v1642 = vld [vmem:[%s1633 + $0x20] sm:$0xf]
        %v1643 = vld [vmem:[%s1633 + $0x24] sm:$0xf]
        %v1644 = vld [vmem:[%s1633 + $0x28] sm:$0xf]
        %v1645 = vld [vmem:[%s1633 + $0x2c] sm:$0xf]
        %v1646 = vld [vmem:[%s1633 + $0x30] sm:$0xf]
        %v1647 = vld [vmem:[%s1633 + $0x34] sm:$0xf]
        %v1648 = vld [vmem:[%s1633 + $0x38] sm:$0xf]
        %v1649 = vld [vmem:[%s1633 + $0x3c] sm:$0xf]
        %v1653 = vunpack.c.l.b16 %v1632
        %v1654 = vunpack.c.l.b16 %v531
        %v1655 = vunpack.c.l.b16 %v532
        %v1656 = vpack.c.b16 %v606, %v1653
        %v1657 = vpack.c.b16 %v608, %v607
        %v1658 = vpack.c.b16 %v610, %v609
        %v1659 = vpack.c.b16 %v612, %v611
        %v1660 = vpack.c.b16 %v614, %v613
        %v1661 = vpack.c.b16 %v616, %v615
        %v1662 = vpack.c.b16 %v618, %v617
        %v1663 = vpack.c.b16 %v620, %v619
        %v1664 = vpack.c.b16 %v622, %v621
        %v1665 = vpack.c.b16 %v624, %v623
        %v1666 = vpack.c.b16 %v626, %v625
        %v1667 = vpack.c.b16 %v628, %v627
        %v1668 = vpack.c.b16 %v630, %v629
        %v1669 = vpack.c.b16 %v632, %v631
        %v1670 = vpack.c.b16 %v634, %v633
        %v1671 = vpack.c.b16 %v636, %v635
        %v1672 = vpack.c.b16 %v1655, %v1654
        %vm1673 = vsmask.f32 4352
        %v1675 = vshrl.u32 %v1656, 16
        %v1677 = vrot.slane %v1675, 3
        %v1678 = vshll.u32 %v1656, 16
        %v1680 = vrot.slane %v1678, 4
        %v1681 = vor.u32 %v1677, %v1680
        %v1683 = vshrl.u32 %v1657, 16
        %v1685 = vrot.slane %v1683, 3
        %v1686 = vshll.u32 %v1657, 16
        %v1688 = vrot.slane %v1686, 4
        %v1689 = vor.u32 %v1685, %v1688
        %v1690 = vsel %vm1673, %v1681, %v1689
        %v1692 = vshrl.u32 %v1658, 16
        %v1694 = vrot.slane %v1692, 3
        %v1695 = vshll.u32 %v1658, 16
        %v1697 = vrot.slane %v1695, 4
        %v1698 = vor.u32 %v1694, %v1697
        %v1699 = vsel %vm1673, %v1689, %v1698
        %v1701 = vshrl.u32 %v1659, 16
        %v1703 = vrot.slane %v1701, 3
        %v1704 = vshll.u32 %v1659, 16
        %v1706 = vrot.slane %v1704, 4
        %v1707 = vor.u32 %v1703, %v1706
        %v1708 = vsel %vm1673, %v1698, %v1707
        %v1710 = vshrl.u32 %v1660, 16
        %v1712 = vrot.slane %v1710, 3
        %v1713 = vshll.u32 %v1660, 16
        %v1715 = vrot.slane %v1713, 4
        %v1716 = vor.u32 %v1712, %v1715
        %v1717 = vsel %vm1673, %v1707, %v1716
        %v1719 = vshrl.u32 %v1661, 16
        %v1721 = vrot.slane %v1719, 3
        %v1722 = vshll.u32 %v1661, 16
        %v1724 = vrot.slane %v1722, 4
        %v1725 = vor.u32 %v1721, %v1724
        %v1726 = vsel %vm1673, %v1716, %v1725
        %v1728 = vshrl.u32 %v1662, 16
        %v1730 = vrot.slane %v1728, 3
        %v1731 = vshll.u32 %v1662, 16
        %v1733 = vrot.slane %v1731, 4
        %v1734 = vor.u32 %v1730, %v1733
        %v1735 = vsel %vm1673, %v1725, %v1734
        %v1737 = vshrl.u32 %v1663, 16
        %v1739 = vrot.slane %v1737, 3
        %v1740 = vshll.u32 %v1663, 16
        %v1742 = vrot.slane %v1740, 4
        %v1743 = vor.u32 %v1739, %v1742
        %v1744 = vsel %vm1673, %v1734, %v1743
        %v1746 = vshrl.u32 %v1664, 16
        %v1748 = vrot.slane %v1746, 3
        %v1749 = vshll.u32 %v1664, 16
        %v1751 = vrot.slane %v1749, 4
        %v1752 = vor.u32 %v1748, %v1751
        %v1753 = vsel %vm1673, %v1743, %v1752
        %v1755 = vshrl.u32 %v1665, 16
        %v1757 = vrot.slane %v1755, 3
        %v1758 = vshll.u32 %v1665, 16
        %v1760 = vrot.slane %v1758, 4
        %v1761 = vor.u32 %v1757, %v1760
        %v1762 = vsel %vm1673, %v1752, %v1761
        %v1764 = vshrl.u32 %v1666, 16
        %v1766 = vrot.slane %v1764, 3
        %v1767 = vshll.u32 %v1666, 16
        %v1769 = vrot.slane %v1767, 4
        %v1770 = vor.u32 %v1766, %v1769
        %v1771 = vsel %vm1673, %v1761, %v1770
        %v1773 = vshrl.u32 %v1667, 16
        %v1775 = vrot.slane %v1773, 3
        %v1776 = vshll.u32 %v1667, 16
        %v1778 = vrot.slane %v1776, 4
        %v1779 = vor.u32 %v1775, %v1778
        %v1780 = vsel %vm1673, %v1770, %v1779
        %v1782 = vshrl.u32 %v1668, 16
        %v1784 = vrot.slane %v1782, 3
        %v1785 = vshll.u32 %v1668, 16
        %v1787 = vrot.slane %v1785, 4
        %v1788 = vor.u32 %v1784, %v1787
        %v1789 = vsel %vm1673, %v1779, %v1788
        %v1791 = vshrl.u32 %v1669, 16
        %v1793 = vrot.slane %v1791, 3
        %v1794 = vshll.u32 %v1669, 16
        %v1796 = vrot.slane %v1794, 4
        %v1797 = vor.u32 %v1793, %v1796
        %v1798 = vsel %vm1673, %v1788, %v1797
        %v1800 = vshrl.u32 %v1670, 16
        %v1802 = vrot.slane %v1800, 3
        %v1803 = vshll.u32 %v1670, 16
        %v1805 = vrot.slane %v1803, 4
        %v1806 = vor.u32 %v1802, %v1805
        %v1807 = vsel %vm1673, %v1797, %v1806
        %v1809 = vshrl.u32 %v1671, 16
        %v1811 = vrot.slane %v1809, 3
        %v1812 = vshll.u32 %v1671, 16
        %v1814 = vrot.slane %v1812, 4
        %v1815 = vor.u32 %v1811, %v1814
        %v1816 = vsel %vm1673, %v1806, %v1815
        %v1818 = vshrl.u32 %v1672, 16
        %v1820 = vrot.slane %v1818, 3
        %v1821 = vshll.u32 %v1672, 16
        %v1823 = vrot.slane %v1821, 4
        %v1824 = vor.u32 %v1820, %v1823
        %v1825 = vsel %vm1673, %v1815, %v1824
        %v1859 = vunpack.c.l.b16 %v1634
        %v1860 = vunpack.c.l.b16 %v1635
        %v1861 = vunpack.c.l.b16 %v1636
        %v1862 = vunpack.c.l.b16 %v1637
        %v1863 = vunpack.c.l.b16 %v1638
        %v1864 = vunpack.c.l.b16 %v1639
        %v1865 = vunpack.c.l.b16 %v1640
        %v1866 = vunpack.c.l.b16 %v1641
        %v1867 = vunpack.c.l.b16 %v1642
        %v1868 = vunpack.c.l.b16 %v1643
        %v1869 = vunpack.c.l.b16 %v1644
        %v1870 = vunpack.c.l.b16 %v1645
        %v1871 = vunpack.c.l.b16 %v1646
        %v1872 = vunpack.c.l.b16 %v1647
        %v1873 = vunpack.c.l.b16 %v1648
        %v1874 = vunpack.c.l.b16 %v1649
        %v1875 = vpack.c.b16 %v1860, %v1859
        %v1876 = vpack.c.b16 %v1862, %v1861
        %v1877 = vpack.c.b16 %v1864, %v1863
        %v1878 = vpack.c.b16 %v1866, %v1865
        %v1879 = vpack.c.b16 %v1868, %v1867
        %v1880 = vpack.c.b16 %v1870, %v1869
        %v1881 = vpack.c.b16 %v1872, %v1871
        %v1882 = vpack.c.b16 %v1874, %v1873
        %1891 = vmatprep.subr.bf16.mxu0 0
        %1892 = vmatpush1.bf16.msra.mxu0 %v1882
        %1893 = vmatprep.subr.bf16.mxu0 0
        %1894 = vmatpush1.bf16.msra.mxu0 %v1881
        %1895 = vmatprep.subr.bf16.mxu0 0
        %1896 = vmatpush1.bf16.msra.mxu0 %v1880
        %1897 = vmatprep.subr.bf16.mxu0 0
        %1898 = vmatpush1.bf16.msra.mxu0 %v1879
        %1899 = vmatprep.subr.bf16.mxu0 0
        %1900 = vmatpush1.bf16.msra.mxu0 %v1878
        %1901 = vmatprep.subr.bf16.mxu0 0
        %1902 = vmatpush1.bf16.msra.mxu0 %v1877
        %1903 = vmatprep.subr.bf16.mxu0 0
        %1904 = vmatpush1.bf16.msra.mxu0 %v1876
        %1905 = vmatprep.subr.bf16.mxu0 0
        %1906 = vmatpush1.bf16.msra.mxu0 %v1875
        %1907 = vmatprep.subr.bf16.mxu0 0
        %1908 = vmatpush2.bf16.msra.mxu0 0
        %1909 = vmatprep.subr.bf16.mxu0 0
        %1910 = vmatpush2.bf16.msra.mxu0 0
        %1911 = vmatprep.subr.bf16.mxu0 0
        %1912 = vmatpush2.bf16.msra.mxu0 0
        %1913 = vmatprep.subr.bf16.mxu0 0
        %1914 = vmatpush2.bf16.msra.mxu0 0
        %1915 = vmatprep.subr.bf16.mxu0 0
        %1916 = vmatpush2.bf16.msra.mxu0 0
        %1917 = vmatprep.subr.bf16.mxu0 0
        %1918 = vmatpush2.bf16.msra.mxu0 0
        %1919 = vmatprep.subr.bf16.mxu0 0
        %1920 = vmatpush2.bf16.msra.mxu0 0
        %1921 = vmatprep.subr.bf16.mxu0 0
        %1922 = vmatpush2.bf16.msra.mxu0 0
        %1923 = vmatprep.mubr.bf16.mxu0 0
        %1924 = vmatmul.mubr.bf16.gmra.mxu0 %v1690
        %v1925 = vpop.f32.mrf.mxu0
        %v1926 = vadd.f32 0.0, %v1925
        %v1927 = vpop.f32.mrf.mxu0
        %v1928 = vpop.f32.mrf.mxu0
        %v1929 = vadd.f32 0.0, %v1928
        %v1930 = vpop.f32.mrf.mxu0
        %1931 = vmatprep.mubr.bf16.mxu0 0
        %1932 = vmatmul.mubr.bf16.gmra.mxu0 %v1699
        %v1933 = vpop.f32.mrf.mxu0
        %v1934 = vadd.f32 0.0, %v1933
        %v1935 = vpop.f32.mrf.mxu0
        %v1936 = vpop.f32.mrf.mxu0
        %v1937 = vadd.f32 0.0, %v1936
        %v1938 = vpop.f32.mrf.mxu0
        %1939 = vmatprep.mubr.bf16.mxu0 0
        %1940 = vmatmul.mubr.bf16.gmra.mxu0 %v1708
        %v1941 = vpop.f32.mrf.mxu0
        %v1942 = vadd.f32 0.0, %v1941
        %v1943 = vpop.f32.mrf.mxu0
        %v1944 = vpop.f32.mrf.mxu0
        %v1945 = vadd.f32 0.0, %v1944
        %v1946 = vpop.f32.mrf.mxu0
        %1947 = vmatprep.mubr.bf16.mxu0 0
        %1948 = vmatmul.mubr.bf16.gmra.mxu0 %v1717
        %v1949 = vpop.f32.mrf.mxu0
        %v1950 = vadd.f32 0.0, %v1949
        %v1951 = vpop.f32.mrf.mxu0
        %v1952 = vpop.f32.mrf.mxu0
        %v1953 = vadd.f32 0.0, %v1952
        %v1954 = vpop.f32.mrf.mxu0
        %1955 = vmatprep.mubr.bf16.mxu0 0
        %1956 = vmatmul.mubr.bf16.gmra.mxu0 %v1726
        %v1957 = vpop.f32.mrf.mxu0
        %v1958 = vadd.f32 0.0, %v1957
        %v1959 = vpop.f32.mrf.mxu0
        %v1960 = vpop.f32.mrf.mxu0
        %v1961 = vadd.f32 0.0, %v1960
        %v1962 = vpop.f32.mrf.mxu0
        %1963 = vmatprep.mubr.bf16.mxu0 0
        %1964 = vmatmul.mubr.bf16.gmra.mxu0 %v1735
        %v1965 = vpop.f32.mrf.mxu0
        %v1966 = vadd.f32 0.0, %v1965
        %v1967 = vpop.f32.mrf.mxu0
        %v1968 = vpop.f32.mrf.mxu0
        %v1969 = vadd.f32 0.0, %v1968
        %v1970 = vpop.f32.mrf.mxu0
        %1971 = vmatprep.mubr.bf16.mxu0 0
        %1972 = vmatmul.mubr.bf16.gmra.mxu0 %v1744
        %v1973 = vpop.f32.mrf.mxu0
        %v1974 = vadd.f32 0.0, %v1973
        %v1975 = vpop.f32.mrf.mxu0
        %v1976 = vpop.f32.mrf.mxu0
        %v1977 = vadd.f32 0.0, %v1976
        %v1978 = vpop.f32.mrf.mxu0
        %1979 = vmatprep.mubr.bf16.mxu0 0
        %1980 = vmatmul.mubr.bf16.gmra.mxu0 %v1753
        %v1981 = vpop.f32.mrf.mxu0
        %v1982 = vadd.f32 0.0, %v1981
        %v1983 = vpop.f32.mrf.mxu0
        %v1984 = vpop.f32.mrf.mxu0
        %v1985 = vadd.f32 0.0, %v1984
        %v1986 = vpop.f32.mrf.mxu0
        %1987 = vmatprep.mubr.bf16.mxu0 0
        %1988 = vmatmul.mubr.bf16.gmra.mxu0 %v1762
        %v1989 = vpop.f32.mrf.mxu0
        %v1990 = vadd.f32 0.0, %v1989
        %v1991 = vpop.f32.mrf.mxu0
        %v1992 = vpop.f32.mrf.mxu0
        %v1993 = vadd.f32 0.0, %v1992
        %v1994 = vpop.f32.mrf.mxu0
        %1995 = vmatprep.mubr.bf16.mxu0 0
        %1996 = vmatmul.mubr.bf16.gmra.mxu0 %v1771
        %v1997 = vpop.f32.mrf.mxu0
        %v1998 = vadd.f32 0.0, %v1997
        %v1999 = vpop.f32.mrf.mxu0
        %v2000 = vpop.f32.mrf.mxu0
        %v2001 = vadd.f32 0.0, %v2000
        %v2002 = vpop.f32.mrf.mxu0
        %2003 = vmatprep.mubr.bf16.mxu0 0
        %2004 = vmatmul.mubr.bf16.gmra.mxu0 %v1780
        %v2005 = vpop.f32.mrf.mxu0
        %v2006 = vadd.f32 0.0, %v2005
        %v2007 = vpop.f32.mrf.mxu0
        %v2008 = vpop.f32.mrf.mxu0
        %v2009 = vadd.f32 0.0, %v2008
        %v2010 = vpop.f32.mrf.mxu0
        %2011 = vmatprep.mubr.bf16.mxu0 0
        %2012 = vmatmul.mubr.bf16.gmra.mxu0 %v1789
        %v2013 = vpop.f32.mrf.mxu0
        %v2014 = vadd.f32 0.0, %v2013
        %v2015 = vpop.f32.mrf.mxu0
        %v2016 = vpop.f32.mrf.mxu0
        %v2017 = vadd.f32 0.0, %v2016
        %v2018 = vpop.f32.mrf.mxu0
        %2019 = vmatprep.mubr.bf16.mxu0 0
        %2020 = vmatmul.mubr.bf16.gmra.mxu0 %v1798
        %v2021 = vpop.f32.mrf.mxu0
        %v2022 = vadd.f32 0.0, %v2021
        %v2023 = vpop.f32.mrf.mxu0
        %v2024 = vpop.f32.mrf.mxu0
        %v2025 = vadd.f32 0.0, %v2024
        %v2026 = vpop.f32.mrf.mxu0
        %2027 = vmatprep.mubr.bf16.mxu0 0
        %2028 = vmatmul.mubr.bf16.gmra.mxu0 %v1807
        %v2029 = vpop.f32.mrf.mxu0
        %v2030 = vadd.f32 0.0, %v2029
        %v2031 = vpop.f32.mrf.mxu0
        %v2032 = vpop.f32.mrf.mxu0
        %v2033 = vadd.f32 0.0, %v2032
        %v2034 = vpop.f32.mrf.mxu0
        %2035 = vmatprep.mubr.bf16.mxu0 0
        %2036 = vmatmul.mubr.bf16.gmra.mxu0 %v1816
        %v2037 = vpop.f32.mrf.mxu0
        %v2038 = vadd.f32 0.0, %v2037
        %v2039 = vpop.f32.mrf.mxu0
        %v2040 = vpop.f32.mrf.mxu0
        %v2041 = vadd.f32 0.0, %v2040
        %v2042 = vpop.f32.mrf.mxu0
        %2043 = vmatprep.mubr.bf16.mxu0 0
        %2044 = vmatmul.mubr.bf16.gmra.mxu0 %v1825
        %v2045 = vpop.f32.mrf.mxu0
        %v2046 = vadd.f32 0.0, %v2045
        %v2047 = vpop.f32.mrf.mxu0
        %v2048 = vpop.f32.mrf.mxu0
        %v2049 = vadd.f32 0.0, %v2048
        %v2050 = vpop.f32.mrf.mxu0
        %2051 = vmatprep.mubr.bf16.mxu0 0
        %2052 = vmatmul.mubr.bf16.gmra.mxu0 %v1824
        %v2053 = vpop.f32.mrf.mxu0
        %v2054 = vadd.f32 0.0, %v2053
        %v2055 = vpop.f32.mrf.mxu0
        %v2056 = vpop.f32.mrf.mxu0
        %v2057 = vpop.f32.mrf.mxu0
        %2058 = vdwg.mxu0
        %v2059 = vadd.f32 %v1599, %v1926
        %v2060 = vadd.f32 %v1600, %v1929
        %v2061 = vadd.f32 %v1601, %v1934
        %v2062 = vadd.f32 %v1602, %v1937
        %v2063 = vadd.f32 %v1603, %v1942
        %v2064 = vadd.f32 %v1604, %v1945
        %v2065 = vadd.f32 %v1605, %v1950
        %v2066 = vadd.f32 %v1606, %v1953
        %v2067 = vadd.f32 %v1607, %v1958
        %v2068 = vadd.f32 %v1608, %v1961
        %v2069 = vadd.f32 %v1609, %v1966
        %v2070 = vadd.f32 %v1610, %v1969
        %v2071 = vadd.f32 %v1611, %v1974
        %v2072 = vadd.f32 %v1612, %v1977
        %v2073 = vadd.f32 %v1613, %v1982
        %v2074 = vadd.f32 %v1614, %v1985
        %v2075 = vadd.f32 %v1615, %v1990
        %v2076 = vadd.f32 %v1616, %v1993
        %v2077 = vadd.f32 %v1617, %v1998
        %v2078 = vadd.f32 %v1618, %v2001
        %v2079 = vadd.f32 %v1619, %v2006
        %v2080 = vadd.f32 %v1620, %v2009
        %v2081 = vadd.f32 %v1621, %v2014
        %v2082 = vadd.f32 %v1622, %v2017
        %v2083 = vadd.f32 %v1623, %v2022
        %v2084 = vadd.f32 %v1624, %v2025
        %v2085 = vadd.f32 %v1625, %v2030
        %v2086 = vadd.f32 %v1626, %v2033
        %v2087 = vadd.f32 %v1627, %v2038
        %v2088 = vadd.f32 %v1628, %v2041
        %v2089 = vadd.f32 %v1629, %v2046
        %v2090 = vadd.f32 %v1630, %v2049
        %v2091 = vadd.f32 %v1631, %v2054
        %s2092 = scalar_lea.vmem %s295, 256 [#allocation3]
        %v2093 = vld [vmem:[%s2092] sm:$0xf]
        %v2094 = vld [vmem:[%s2092 + $0x4] sm:$0xf]
        %v2095 = vld [vmem:[%s2092 + $0x8] sm:$0xf]
        %v2096 = vld [vmem:[%s2092 + $0xc] sm:$0xf]
        %v2097 = vld [vmem:[%s2092 + $0x10] sm:$0xf]
        %v2098 = vld [vmem:[%s2092 + $0x14] sm:$0xf]
        %v2099 = vld [vmem:[%s2092 + $0x18] sm:$0xf]
        %v2100 = vld [vmem:[%s2092 + $0x1c] sm:$0xf]
        %v2101 = vld [vmem:[%s2092 + $0x20] sm:$0xf]
        %v2102 = vld [vmem:[%s2092 + $0x24] sm:$0xf]
        %v2103 = vld [vmem:[%s2092 + $0x28] sm:$0xf]
        %v2104 = vld [vmem:[%s2092 + $0x2c] sm:$0xf]
        %v2105 = vld [vmem:[%s2092 + $0x30] sm:$0xf]
        %v2106 = vld [vmem:[%s2092 + $0x34] sm:$0xf]
        %v2107 = vld [vmem:[%s2092 + $0x38] sm:$0xf]
        %v2108 = vld [vmem:[%s2092 + $0x3c] sm:$0xf]
        %v2109 = vpack.c.b16 %v1654, %v636
        %v2110 = vpack.c.b16 %v1655, %v1655
        %v2144 = vunpack.c.l.b16 %v2093
        %v2145 = vunpack.c.l.b16 %v2094
        %v2146 = vunpack.c.l.b16 %v2095
        %v2147 = vunpack.c.l.b16 %v2096
        %v2148 = vunpack.c.l.b16 %v2097
        %v2149 = vunpack.c.l.b16 %v2098
        %v2150 = vunpack.c.l.b16 %v2099
        %v2151 = vunpack.c.l.b16 %v2100
        %v2152 = vunpack.c.l.b16 %v2101
        %v2153 = vunpack.c.l.b16 %v2102
        %v2154 = vunpack.c.l.b16 %v2103
        %v2155 = vunpack.c.l.b16 %v2104
        %v2156 = vunpack.c.l.b16 %v2105
        %v2157 = vunpack.c.l.b16 %v2106
        %v2158 = vunpack.c.l.b16 %v2107
        %v2159 = vunpack.c.l.b16 %v2108
        %v2160 = vpack.c.b16 %v2145, %v2144
        %v2161 = vpack.c.b16 %v2147, %v2146
        %v2162 = vpack.c.b16 %v2149, %v2148
        %v2163 = vpack.c.b16 %v2151, %v2150
        %v2164 = vpack.c.b16 %v2153, %v2152
        %v2165 = vpack.c.b16 %v2155, %v2154
        %v2166 = vpack.c.b16 %v2157, %v2156
        %v2167 = vpack.c.b16 %v2159, %v2158
        %2176 = vmatprep.subr.bf16.mxu0 0
        %2177 = vmatpush1.bf16.msra.mxu0 %v2167
        %2178 = vmatprep.subr.bf16.mxu0 0
        %2179 = vmatpush1.bf16.msra.mxu0 %v2166
        %2180 = vmatprep.subr.bf16.mxu0 0
        %2181 = vmatpush1.bf16.msra.mxu0 %v2165
        %2182 = vmatprep.subr.bf16.mxu0 0
        %2183 = vmatpush1.bf16.msra.mxu0 %v2164
        %2184 = vmatprep.subr.bf16.mxu0 0
        %2185 = vmatpush1.bf16.msra.mxu0 %v2163
        %2186 = vmatprep.subr.bf16.mxu0 0
        %2187 = vmatpush1.bf16.msra.mxu0 %v2162
        %2188 = vmatprep.subr.bf16.mxu0 0
        %2189 = vmatpush1.bf16.msra.mxu0 %v2161
        %2190 = vmatprep.subr.bf16.mxu0 0
        %2191 = vmatpush1.bf16.msra.mxu0 %v2160
        %2192 = vmatprep.subr.bf16.mxu0 0
        %2193 = vmatpush2.bf16.msra.mxu0 0
        %2194 = vmatprep.subr.bf16.mxu0 0
        %2195 = vmatpush2.bf16.msra.mxu0 0
        %2196 = vmatprep.subr.bf16.mxu0 0
        %2197 = vmatpush2.bf16.msra.mxu0 0
        %2198 = vmatprep.subr.bf16.mxu0 0
        %2199 = vmatpush2.bf16.msra.mxu0 0
        %2200 = vmatprep.subr.bf16.mxu0 0
        %2201 = vmatpush2.bf16.msra.mxu0 0
        %2202 = vmatprep.subr.bf16.mxu0 0
        %2203 = vmatpush2.bf16.msra.mxu0 0
        %2204 = vmatprep.subr.bf16.mxu0 0
        %2205 = vmatpush2.bf16.msra.mxu0 0
        %2206 = vmatprep.subr.bf16.mxu0 0
        %2207 = vmatpush2.bf16.msra.mxu0 0
        %2208 = vmatprep.mubr.bf16.mxu0 0
        %2209 = vmatmul.mubr.bf16.gmra.mxu0 %v639
        %v2210 = vpop.f32.mrf.mxu0
        %v2211 = vadd.f32 0.0, %v2210
        %v2212 = vpop.f32.mrf.mxu0
        %v2213 = vpop.f32.mrf.mxu0
        %v2214 = vadd.f32 0.0, %v2213
        %v2215 = vpop.f32.mrf.mxu0
        %2216 = vmatprep.mubr.bf16.mxu0 0
        %2217 = vmatmul.mubr.bf16.gmra.mxu0 %v640
        %v2218 = vpop.f32.mrf.mxu0
        %v2219 = vadd.f32 0.0, %v2218
        %v2220 = vpop.f32.mrf.mxu0
        %v2221 = vpop.f32.mrf.mxu0
        %v2222 = vadd.f32 0.0, %v2221
        %v2223 = vpop.f32.mrf.mxu0
        %2224 = vmatprep.mubr.bf16.mxu0 0
        %2225 = vmatmul.mubr.bf16.gmra.mxu0 %v641
        %v2226 = vpop.f32.mrf.mxu0
        %v2227 = vadd.f32 0.0, %v2226
        %v2228 = vpop.f32.mrf.mxu0
        %v2229 = vpop.f32.mrf.mxu0
        %v2230 = vadd.f32 0.0, %v2229
        %v2231 = vpop.f32.mrf.mxu0
        %2232 = vmatprep.mubr.bf16.mxu0 0
        %2233 = vmatmul.mubr.bf16.gmra.mxu0 %v642
        %v2234 = vpop.f32.mrf.mxu0
        %v2235 = vadd.f32 0.0, %v2234
        %v2236 = vpop.f32.mrf.mxu0
        %v2237 = vpop.f32.mrf.mxu0
        %v2238 = vadd.f32 0.0, %v2237
        %v2239 = vpop.f32.mrf.mxu0
        %2240 = vmatprep.mubr.bf16.mxu0 0
        %2241 = vmatmul.mubr.bf16.gmra.mxu0 %v643
        %v2242 = vpop.f32.mrf.mxu0
        %v2243 = vadd.f32 0.0, %v2242
        %v2244 = vpop.f32.mrf.mxu0
        %v2245 = vpop.f32.mrf.mxu0
        %v2246 = vadd.f32 0.0, %v2245
        %v2247 = vpop.f32.mrf.mxu0
        %2248 = vmatprep.mubr.bf16.mxu0 0
        %2249 = vmatmul.mubr.bf16.gmra.mxu0 %v644
        %v2250 = vpop.f32.mrf.mxu0
        %v2251 = vadd.f32 0.0, %v2250
        %v2252 = vpop.f32.mrf.mxu0
        %v2253 = vpop.f32.mrf.mxu0
        %v2254 = vadd.f32 0.0, %v2253
        %v2255 = vpop.f32.mrf.mxu0
        %2256 = vmatprep.mubr.bf16.mxu0 0
        %2257 = vmatmul.mubr.bf16.gmra.mxu0 %v645
        %v2258 = vpop.f32.mrf.mxu0
        %v2259 = vadd.f32 0.0, %v2258
        %v2260 = vpop.f32.mrf.mxu0
        %v2261 = vpop.f32.mrf.mxu0
        %v2262 = vadd.f32 0.0, %v2261
        %v2263 = vpop.f32.mrf.mxu0
        %2264 = vmatprep.mubr.bf16.mxu0 0
        %2265 = vmatmul.mubr.bf16.gmra.mxu0 %v646
        %v2266 = vpop.f32.mrf.mxu0
        %v2267 = vadd.f32 0.0, %v2266
        %v2268 = vpop.f32.mrf.mxu0
        %v2269 = vpop.f32.mrf.mxu0
        %v2270 = vadd.f32 0.0, %v2269
        %v2271 = vpop.f32.mrf.mxu0
        %2272 = vmatprep.mubr.bf16.mxu0 0
        %2273 = vmatmul.mubr.bf16.gmra.mxu0 %v647
        %v2274 = vpop.f32.mrf.mxu0
        %v2275 = vadd.f32 0.0, %v2274
        %v2276 = vpop.f32.mrf.mxu0
        %v2277 = vpop.f32.mrf.mxu0
        %v2278 = vadd.f32 0.0, %v2277
        %v2279 = vpop.f32.mrf.mxu0
        %2280 = vmatprep.mubr.bf16.mxu0 0
        %2281 = vmatmul.mubr.bf16.gmra.mxu0 %v648
        %v2282 = vpop.f32.mrf.mxu0
        %v2283 = vadd.f32 0.0, %v2282
        %v2284 = vpop.f32.mrf.mxu0
        %v2285 = vpop.f32.mrf.mxu0
        %v2286 = vadd.f32 0.0, %v2285
        %v2287 = vpop.f32.mrf.mxu0
        %2288 = vmatprep.mubr.bf16.mxu0 0
        %2289 = vmatmul.mubr.bf16.gmra.mxu0 %v649
        %v2290 = vpop.f32.mrf.mxu0
        %v2291 = vadd.f32 0.0, %v2290
        %v2292 = vpop.f32.mrf.mxu0
        %v2293 = vpop.f32.mrf.mxu0
        %v2294 = vadd.f32 0.0, %v2293
        %v2295 = vpop.f32.mrf.mxu0
        %2296 = vmatprep.mubr.bf16.mxu0 0
        %2297 = vmatmul.mubr.bf16.gmra.mxu0 %v650
        %v2298 = vpop.f32.mrf.mxu0
        %v2299 = vadd.f32 0.0, %v2298
        %v2300 = vpop.f32.mrf.mxu0
        %v2301 = vpop.f32.mrf.mxu0
        %v2302 = vadd.f32 0.0, %v2301
        %v2303 = vpop.f32.mrf.mxu0
        %2304 = vmatprep.mubr.bf16.mxu0 0
        %2305 = vmatmul.mubr.bf16.gmra.mxu0 %v651
        %v2306 = vpop.f32.mrf.mxu0
        %v2307 = vadd.f32 0.0, %v2306
        %v2308 = vpop.f32.mrf.mxu0
        %v2309 = vpop.f32.mrf.mxu0
        %v2310 = vadd.f32 0.0, %v2309
        %v2311 = vpop.f32.mrf.mxu0
        %2312 = vmatprep.mubr.bf16.mxu0 0
        %2313 = vmatmul.mubr.bf16.gmra.mxu0 %v652
        %v2314 = vpop.f32.mrf.mxu0
        %v2315 = vadd.f32 0.0, %v2314
        %v2316 = vpop.f32.mrf.mxu0
        %v2317 = vpop.f32.mrf.mxu0
        %v2318 = vadd.f32 0.0, %v2317
        %v2319 = vpop.f32.mrf.mxu0
        %2320 = vmatprep.mubr.bf16.mxu0 0
        %2321 = vmatmul.mubr.bf16.gmra.mxu0 %v653
        %v2322 = vpop.f32.mrf.mxu0
        %v2323 = vadd.f32 0.0, %v2322
        %v2324 = vpop.f32.mrf.mxu0
        %v2325 = vpop.f32.mrf.mxu0
        %v2326 = vadd.f32 0.0, %v2325
        %v2327 = vpop.f32.mrf.mxu0
        %2328 = vmatprep.mubr.bf16.mxu0 0
        %2329 = vmatmul.mubr.bf16.gmra.mxu0 %v2109
        %v2330 = vpop.f32.mrf.mxu0
        %v2331 = vadd.f32 0.0, %v2330
        %v2332 = vpop.f32.mrf.mxu0
        %v2333 = vpop.f32.mrf.mxu0
        %v2334 = vadd.f32 0.0, %v2333
        %v2335 = vpop.f32.mrf.mxu0
        %2336 = vmatprep.mubr.bf16.mxu0 0
        %2337 = vmatmul.mubr.bf16.gmra.mxu0 %v2110
        %v2338 = vpop.f32.mrf.mxu0
        %v2339 = vadd.f32 0.0, %v2338
        %v2340 = vpop.f32.mrf.mxu0
        %v2341 = vpop.f32.mrf.mxu0
        %v2342 = vpop.f32.mrf.mxu0
        %2343 = vdwg.mxu0
        %v2344 = vadd.f32 %v2059, %v2211
        %v2345 = vadd.f32 %v2060, %v2214
        %v2346 = vadd.f32 %v2061, %v2219
        %v2347 = vadd.f32 %v2062, %v2222
        %v2348 = vadd.f32 %v2063, %v2227
        %v2349 = vadd.f32 %v2064, %v2230
        %v2350 = vadd.f32 %v2065, %v2235
        %v2351 = vadd.f32 %v2066, %v2238
        %v2352 = vadd.f32 %v2067, %v2243
        %v2353 = vadd.f32 %v2068, %v2246
        %v2354 = vadd.f32 %v2069, %v2251
        %v2355 = vadd.f32 %v2070, %v2254
        %v2356 = vadd.f32 %v2071, %v2259
        %v2357 = vadd.f32 %v2072, %v2262
        %v2358 = vadd.f32 %v2073, %v2267
        %v2359 = vadd.f32 %v2074, %v2270
        %v2360 = vadd.f32 %v2075, %v2275
        %v2361 = vadd.f32 %v2076, %v2278
        %v2362 = vadd.f32 %v2077, %v2283
        %v2363 = vadd.f32 %v2078, %v2286
        %v2364 = vadd.f32 %v2079, %v2291
        %v2365 = vadd.f32 %v2080, %v2294
        %v2366 = vadd.f32 %v2081, %v2299
        %v2367 = vadd.f32 %v2082, %v2302
        %v2368 = vadd.f32 %v2083, %v2307
        %v2369 = vadd.f32 %v2084, %v2310
        %v2370 = vadd.f32 %v2085, %v2315
        %v2371 = vadd.f32 %v2086, %v2318
        %v2372 = vadd.f32 %v2087, %v2323
        %v2373 = vadd.f32 %v2088, %v2326
        %v2374 = vadd.f32 %v2089, %v2331
        %v2375 = vadd.f32 %v2090, %v2334
        %v2376 = vadd.f32 %v2091, %v2339
        %v2377 = vld [vmem:[#allocation2 + $0x8] sm:$0xf]
        %v2378 = vld [vmem:[#allocation2 + $0xc] sm:$0xf]
        %v2379 = vld [vmem:[#allocation2 + $0x10] sm:$0xf]
        %v2380 = vld [vmem:[#allocation2 + $0x14] sm:$0xf]
        %v2381 = vld [vmem:[#allocation2 + $0x18] sm:$0xf]
        %v2382 = vld [vmem:[#allocation2 + $0x1c] sm:$0xf]
        %v2383 = vld [vmem:[#allocation2 + $0x20] sm:$0xf]
        %v2384 = vld [vmem:[#allocation2 + $0x24] sm:$0xf]
        %v2385 = vld [vmem:[#allocation2 + $0x28] sm:$0xf]
        %v2386 = vld [vmem:[#allocation2 + $0x2c] sm:$0xf]
        %v2387 = vld [vmem:[#allocation2 + $0x30] sm:$0xf]
        %v2388 = vld [vmem:[#allocation2 + $0x34] sm:$0xf]
        %v2389 = vld [vmem:[#allocation2 + $0x38] sm:$0xf]
        %v2390 = vld [vmem:[#allocation2 + $0x3c] sm:$0xf]
        %v2391 = vld [vmem:[#allocation2 + $0x40] sm:$0xf]
        %v2392 = vld [vmem:[#allocation2 + $0x44] sm:$0xf]
        %v2393 = vld [vmem:[#allocation2 + $0x48] sm:$0xf]
        %v2394 = vld [vmem:[#allocation2 + $0x4c] sm:$0xf]
        %v2395 = vld [vmem:[#allocation2 + $0x50] sm:$0xf]
        %v2396 = vld [vmem:[#allocation2 + $0x54] sm:$0xf]
        %v2397 = vld [vmem:[#allocation2 + $0x58] sm:$0xf]
        %v2398 = vld [vmem:[#allocation2 + $0x5c] sm:$0xf]
        %v2399 = vld [vmem:[#allocation2 + $0x60] sm:$0xf]
        %v2400 = vld [vmem:[#allocation2 + $0x64] sm:$0xf]
        %v2401 = vld [vmem:[#allocation2 + $0x68] sm:$0xf]
        %v2402 = vld [vmem:[#allocation2 + $0x6c] sm:$0xf]
        %v2403 = vld [vmem:[#allocation2 + $0x70] sm:$0xf]
        %v2404 = vld [vmem:[#allocation2 + $0x74] sm:$0xf]
        %v2405 = vld [vmem:[#allocation2 + $0x78] sm:$0xf]
        %v2406 = vld [vmem:[#allocation2 + $0x7c] sm:$0xf]
        %v2407 = vld [vmem:[#allocation2 + $0x80] sm:$0xf]
        %v2408 = vld [vmem:[#allocation2 + $0x84] sm:$0xf]
        %v2409 = vld [vmem:[#allocation2 + $0x88] sm:$0xf]
        %v2410 = vld [vmem:[#allocation2 + $0x8c] sm:$0x1]
        %s2411 = scalar_lea.vmem %s295, 320 [#allocation3]
        %v2412 = vld [vmem:[%s2411] sm:$0xf]
        %v2413 = vld [vmem:[%s2411 + $0x4] sm:$0xf]
        %v2414 = vld [vmem:[%s2411 + $0x8] sm:$0xf]
        %v2415 = vld [vmem:[%s2411 + $0xc] sm:$0xf]
        %v2416 = vld [vmem:[%s2411 + $0x10] sm:$0xf]
        %v2417 = vld [vmem:[%s2411 + $0x14] sm:$0xf]
        %v2418 = vld [vmem:[%s2411 + $0x18] sm:$0xf]
        %v2419 = vld [vmem:[%s2411 + $0x1c] sm:$0xf]
        %v2420 = vld [vmem:[%s2411 + $0x20] sm:$0xf]
        %v2421 = vld [vmem:[%s2411 + $0x24] sm:$0xf]
        %v2422 = vld [vmem:[%s2411 + $0x28] sm:$0xf]
        %v2423 = vld [vmem:[%s2411 + $0x2c] sm:$0xf]
        %v2424 = vld [vmem:[%s2411 + $0x30] sm:$0xf]
        %v2425 = vld [vmem:[%s2411 + $0x34] sm:$0xf]
        %v2426 = vld [vmem:[%s2411 + $0x38] sm:$0xf]
        %v2427 = vld [vmem:[%s2411 + $0x3c] sm:$0xf]
        %v2462 = vunpack.c.l.b16 %v2377
        %v2463 = vunpack.c.l.b16 %v2378
        %v2464 = vunpack.c.l.b16 %v2379
        %v2465 = vunpack.c.l.b16 %v2380
        %v2466 = vunpack.c.l.b16 %v2381
        %v2467 = vunpack.c.l.b16 %v2382
        %v2468 = vunpack.c.l.b16 %v2383
        %v2469 = vunpack.c.l.b16 %v2384
        %v2470 = vunpack.c.l.b16 %v2385
        %v2471 = vunpack.c.l.b16 %v2386
        %v2472 = vunpack.c.l.b16 %v2387
        %v2473 = vunpack.c.l.b16 %v2388
        %v2474 = vunpack.c.l.b16 %v2389
        %v2475 = vunpack.c.l.b16 %v2390
        %v2476 = vunpack.c.l.b16 %v2391
        %v2477 = vunpack.c.l.b16 %v2392
        %v2478 = vunpack.c.l.b16 %v2393
        %v2479 = vunpack.c.l.b16 %v2394
        %v2480 = vunpack.c.l.b16 %v2395
        %v2481 = vunpack.c.l.b16 %v2396
        %v2482 = vunpack.c.l.b16 %v2397
        %v2483 = vunpack.c.l.b16 %v2398
        %v2484 = vunpack.c.l.b16 %v2399
        %v2485 = vunpack.c.l.b16 %v2400
        %v2486 = vunpack.c.l.b16 %v2401
        %v2487 = vunpack.c.l.b16 %v2402
        %v2488 = vunpack.c.l.b16 %v2403
        %v2489 = vunpack.c.l.b16 %v2404
        %v2490 = vunpack.c.l.b16 %v2405
        %v2491 = vunpack.c.l.b16 %v2406
        %v2492 = vunpack.c.l.b16 %v2407
        %v2493 = vunpack.c.l.b16 %v2408
        %v2494 = vunpack.c.l.b16 %v2409
        %v2495 = vunpack.c.l.b16 %v2410
        %v2496 = vpack.c.b16 %v2463, %v2462
        %v2497 = vpack.c.b16 %v2465, %v2464
        %v2498 = vpack.c.b16 %v2467, %v2466
        %v2499 = vpack.c.b16 %v2469, %v2468
        %v2500 = vpack.c.b16 %v2471, %v2470
        %v2501 = vpack.c.b16 %v2473, %v2472
        %v2502 = vpack.c.b16 %v2475, %v2474
        %v2503 = vpack.c.b16 %v2477, %v2476
        %v2504 = vpack.c.b16 %v2479, %v2478
        %v2505 = vpack.c.b16 %v2481, %v2480
        %v2506 = vpack.c.b16 %v2483, %v2482
        %v2507 = vpack.c.b16 %v2485, %v2484
        %v2508 = vpack.c.b16 %v2487, %v2486
        %v2509 = vpack.c.b16 %v2489, %v2488
        %v2510 = vpack.c.b16 %v2491, %v2490
        %v2511 = vpack.c.b16 %v2493, %v2492
        %v2512 = vpack.c.b16 %v2495, %v2494
        %vm2513 = vsmask.f32 7424
        %v2515 = vshrl.u32 %v2496, 16
        %v2517 = vshll.u32 %v2496, 16
        %v2519 = vrot.slane %v2517, 1
        %v2520 = vor.u32 %v2515, %v2519
        %v2522 = vshll.u32 %v2497, 16
        %v2524 = vrot.slane %v2522, 1
        %v2525 = vsel %vm2513, %v2520, %v2524
        %v2526 = vshrl.u32 %v2497, 16
        %v2528 = vor.u32 %v2526, %v2524
        %v2530 = vshll.u32 %v2498, 16
        %v2532 = vrot.slane %v2530, 1
        %v2533 = vsel %vm2513, %v2528, %v2532
        %v2534 = vshrl.u32 %v2498, 16
        %v2536 = vor.u32 %v2534, %v2532
        %v2538 = vshll.u32 %v2499, 16
        %v2540 = vrot.slane %v2538, 1
        %v2541 = vsel %vm2513, %v2536, %v2540
        %v2542 = vshrl.u32 %v2499, 16
        %v2544 = vor.u32 %v2542, %v2540
        %v2546 = vshll.u32 %v2500, 16
        %v2548 = vrot.slane %v2546, 1
        %v2549 = vsel %vm2513, %v2544, %v2548
        %v2550 = vshrl.u32 %v2500, 16
        %v2552 = vor.u32 %v2550, %v2548
        %v2554 = vshll.u32 %v2501, 16
        %v2556 = vrot.slane %v2554, 1
        %v2557 = vsel %vm2513, %v2552, %v2556
        %v2558 = vshrl.u32 %v2501, 16
        %v2560 = vor.u32 %v2558, %v2556
        %v2562 = vshll.u32 %v2502, 16
        %v2564 = vrot.slane %v2562, 1
        %v2565 = vsel %vm2513, %v2560, %v2564
        %v2566 = vshrl.u32 %v2502, 16
        %v2568 = vor.u32 %v2566, %v2564
        %v2570 = vshll.u32 %v2503, 16
        %v2572 = vrot.slane %v2570, 1
        %v2573 = vsel %vm2513, %v2568, %v2572
        %v2574 = vshrl.u32 %v2503, 16
        %v2576 = vor.u32 %v2574, %v2572
        %v2578 = vshll.u32 %v2504, 16
        %v2580 = vrot.slane %v2578, 1
        %v2581 = vsel %vm2513, %v2576, %v2580
        %v2582 = vshrl.u32 %v2504, 16
        %v2584 = vor.u32 %v2582, %v2580
        %v2586 = vshll.u32 %v2505, 16
        %v2588 = vrot.slane %v2586, 1
        %v2589 = vsel %vm2513, %v2584, %v2588
        %v2590 = vshrl.u32 %v2505, 16
        %v2592 = vor.u32 %v2590, %v2588
        %v2594 = vshll.u32 %v2506, 16
        %v2596 = vrot.slane %v2594, 1
        %v2597 = vsel %vm2513, %v2592, %v2596
        %v2598 = vshrl.u32 %v2506, 16
        %v2600 = vor.u32 %v2598, %v2596
        %v2602 = vshll.u32 %v2507, 16
        %v2604 = vrot.slane %v2602, 1
        %v2605 = vsel %vm2513, %v2600, %v2604
        %v2606 = vshrl.u32 %v2507, 16
        %v2608 = vor.u32 %v2606, %v2604
        %v2610 = vshll.u32 %v2508, 16
        %v2612 = vrot.slane %v2610, 1
        %v2613 = vsel %vm2513, %v2608, %v2612
        %v2614 = vshrl.u32 %v2508, 16
        %v2616 = vor.u32 %v2614, %v2612
        %v2618 = vshll.u32 %v2509, 16
        %v2620 = vrot.slane %v2618, 1
        %v2621 = vsel %vm2513, %v2616, %v2620
        %v2622 = vshrl.u32 %v2509, 16
        %v2624 = vor.u32 %v2622, %v2620
        %v2626 = vshll.u32 %v2510, 16
        %v2628 = vrot.slane %v2626, 1
        %v2629 = vsel %vm2513, %v2624, %v2628
        %v2630 = vshrl.u32 %v2510, 16
        %v2632 = vor.u32 %v2630, %v2628
        %v2634 = vshll.u32 %v2511, 16
        %v2636 = vrot.slane %v2634, 1
        %v2637 = vsel %vm2513, %v2632, %v2636
        %v2638 = vshrl.u32 %v2511, 16
        %v2640 = vor.u32 %v2638, %v2636
        %v2642 = vshll.u32 %v2512, 16
        %v2644 = vrot.slane %v2642, 1
        %v2645 = vsel %vm2513, %v2640, %v2644
        %v2646 = vshrl.u32 %v2512, 16
        %v2648 = vor.u32 %v2646, %v2644
        %v2682 = vunpack.c.l.b16 %v2412
        %v2683 = vunpack.c.l.b16 %v2413
        %v2684 = vunpack.c.l.b16 %v2414
        %v2685 = vunpack.c.l.b16 %v2415
        %v2686 = vunpack.c.l.b16 %v2416
        %v2687 = vunpack.c.l.b16 %v2417
        %v2688 = vunpack.c.l.b16 %v2418
        %v2689 = vunpack.c.l.b16 %v2419
        %v2690 = vunpack.c.l.b16 %v2420
        %v2691 = vunpack.c.l.b16 %v2421
        %v2692 = vunpack.c.l.b16 %v2422
        %v2693 = vunpack.c.l.b16 %v2423
        %v2694 = vunpack.c.l.b16 %v2424
        %v2695 = vunpack.c.l.b16 %v2425
        %v2696 = vunpack.c.l.b16 %v2426
        %v2697 = vunpack.c.l.b16 %v2427
        %v2698 = vpack.c.b16 %v2683, %v2682
        %v2699 = vpack.c.b16 %v2685, %v2684
        %v2700 = vpack.c.b16 %v2687, %v2686
        %v2701 = vpack.c.b16 %v2689, %v2688
        %v2702 = vpack.c.b16 %v2691, %v2690
        %v2703 = vpack.c.b16 %v2693, %v2692
        %v2704 = vpack.c.b16 %v2695, %v2694
        %v2705 = vpack.c.b16 %v2697, %v2696
        %2714 = vmatprep.subr.bf16.mxu0 0
        %2715 = vmatpush1.bf16.msra.mxu0 %v2705
        %2716 = vmatprep.subr.bf16.mxu0 0
        %2717 = vmatpush1.bf16.msra.mxu0 %v2704
        %2718 = vmatprep.subr.bf16.mxu0 0
        %2719 = vmatpush1.bf16.msra.mxu0 %v2703
        %2720 = vmatprep.subr.bf16.mxu0 0
        %2721 = vmatpush1.bf16.msra.mxu0 %v2702
        %2722 = vmatprep.subr.bf16.mxu0 0
        %2723 = vmatpush1.bf16.msra.mxu0 %v2701
        %2724 = vmatprep.subr.bf16.mxu0 0
        %2725 = vmatpush1.bf16.msra.mxu0 %v2700
        %2726 = vmatprep.subr.bf16.mxu0 0
        %2727 = vmatpush1.bf16.msra.mxu0 %v2699
        %2728 = vmatprep.subr.bf16.mxu0 0
        %2729 = vmatpush1.bf16.msra.mxu0 %v2698
        %2730 = vmatprep.subr.bf16.mxu0 0
        %2731 = vmatpush2.bf16.msra.mxu0 0
        %2732 = vmatprep.subr.bf16.mxu0 0
        %2733 = vmatpush2.bf16.msra.mxu0 0
        %2734 = vmatprep.subr.bf16.mxu0 0
        %2735 = vmatpush2.bf16.msra.mxu0 0
        %2736 = vmatprep.subr.bf16.mxu0 0
        %2737 = vmatpush2.bf16.msra.mxu0 0
        %2738 = vmatprep.subr.bf16.mxu0 0
        %2739 = vmatpush2.bf16.msra.mxu0 0
        %2740 = vmatprep.subr.bf16.mxu0 0
        %2741 = vmatpush2.bf16.msra.mxu0 0
        %2742 = vmatprep.subr.bf16.mxu0 0
        %2743 = vmatpush2.bf16.msra.mxu0 0
        %2744 = vmatprep.subr.bf16.mxu0 0
        %2745 = vmatpush2.bf16.msra.mxu0 0
        %2746 = vmatprep.mubr.bf16.mxu0 0
        %2747 = vmatmul.mubr.bf16.gmra.mxu0 %v2525
        %v2748 = vpop.f32.mrf.mxu0
        %v2749 = vadd.f32 0.0, %v2748
        %v2750 = vpop.f32.mrf.mxu0
        %v2751 = vpop.f32.mrf.mxu0
        %v2752 = vadd.f32 0.0, %v2751
        %v2753 = vpop.f32.mrf.mxu0
        %2754 = vmatprep.mubr.bf16.mxu0 0
        %2755 = vmatmul.mubr.bf16.gmra.mxu0 %v2533
        %v2756 = vpop.f32.mrf.mxu0
        %v2757 = vadd.f32 0.0, %v2756
        %v2758 = vpop.f32.mrf.mxu0
        %v2759 = vpop.f32.mrf.mxu0
        %v2760 = vadd.f32 0.0, %v2759
        %v2761 = vpop.f32.mrf.mxu0
        %2762 = vmatprep.mubr.bf16.mxu0 0
        %2763 = vmatmul.mubr.bf16.gmra.mxu0 %v2541
        %v2764 = vpop.f32.mrf.mxu0
        %v2765 = vadd.f32 0.0, %v2764
        %v2766 = vpop.f32.mrf.mxu0
        %v2767 = vpop.f32.mrf.mxu0
        %v2768 = vadd.f32 0.0, %v2767
        %v2769 = vpop.f32.mrf.mxu0
        %2770 = vmatprep.mubr.bf16.mxu0 0
        %2771 = vmatmul.mubr.bf16.gmra.mxu0 %v2549
        %v2772 = vpop.f32.mrf.mxu0
        %v2773 = vadd.f32 0.0, %v2772
        %v2774 = vpop.f32.mrf.mxu0
        %v2775 = vpop.f32.mrf.mxu0
        %v2776 = vadd.f32 0.0, %v2775
        %v2777 = vpop.f32.mrf.mxu0
        %2778 = vmatprep.mubr.bf16.mxu0 0
        %2779 = vmatmul.mubr.bf16.gmra.mxu0 %v2557
        %v2780 = vpop.f32.mrf.mxu0
        %v2781 = vadd.f32 0.0, %v2780
        %v2782 = vpop.f32.mrf.mxu0
        %v2783 = vpop.f32.mrf.mxu0
        %v2784 = vadd.f32 0.0, %v2783
        %v2785 = vpop.f32.mrf.mxu0
        %2786 = vmatprep.mubr.bf16.mxu0 0
        %2787 = vmatmul.mubr.bf16.gmra.mxu0 %v2565
        %v2788 = vpop.f32.mrf.mxu0
        %v2789 = vadd.f32 0.0, %v2788
        %v2790 = vpop.f32.mrf.mxu0
        %v2791 = vpop.f32.mrf.mxu0
        %v2792 = vadd.f32 0.0, %v2791
        %v2793 = vpop.f32.mrf.mxu0
        %2794 = vmatprep.mubr.bf16.mxu0 0
        %2795 = vmatmul.mubr.bf16.gmra.mxu0 %v2573
        %v2796 = vpop.f32.mrf.mxu0
        %v2797 = vadd.f32 0.0, %v2796
        %v2798 = vpop.f32.mrf.mxu0
        %v2799 = vpop.f32.mrf.mxu0
        %v2800 = vadd.f32 0.0, %v2799
        %v2801 = vpop.f32.mrf.mxu0
        %2802 = vmatprep.mubr.bf16.mxu0 0
        %2803 = vmatmul.mubr.bf16.gmra.mxu0 %v2581
        %v2804 = vpop.f32.mrf.mxu0
        %v2805 = vadd.f32 0.0, %v2804
        %v2806 = vpop.f32.mrf.mxu0
        %v2807 = vpop.f32.mrf.mxu0
        %v2808 = vadd.f32 0.0, %v2807
        %v2809 = vpop.f32.mrf.mxu0
        %2810 = vmatprep.mubr.bf16.mxu0 0
        %2811 = vmatmul.mubr.bf16.gmra.mxu0 %v2589
        %v2812 = vpop.f32.mrf.mxu0
        %v2813 = vadd.f32 0.0, %v2812
        %v2814 = vpop.f32.mrf.mxu0
        %v2815 = vpop.f32.mrf.mxu0
        %v2816 = vadd.f32 0.0, %v2815
        %v2817 = vpop.f32.mrf.mxu0
        %2818 = vmatprep.mubr.bf16.mxu0 0
        %2819 = vmatmul.mubr.bf16.gmra.mxu0 %v2597
        %v2820 = vpop.f32.mrf.mxu0
        %v2821 = vadd.f32 0.0, %v2820
        %v2822 = vpop.f32.mrf.mxu0
        %v2823 = vpop.f32.mrf.mxu0
        %v2824 = vadd.f32 0.0, %v2823
        %v2825 = vpop.f32.mrf.mxu0
        %2826 = vmatprep.mubr.bf16.mxu0 0
        %2827 = vmatmul.mubr.bf16.gmra.mxu0 %v2605
        %v2828 = vpop.f32.mrf.mxu0
        %v2829 = vadd.f32 0.0, %v2828
        %v2830 = vpop.f32.mrf.mxu0
        %v2831 = vpop.f32.mrf.mxu0
        %v2832 = vadd.f32 0.0, %v2831
        %v2833 = vpop.f32.mrf.mxu0
        %2834 = vmatprep.mubr.bf16.mxu0 0
        %2835 = vmatmul.mubr.bf16.gmra.mxu0 %v2613
        %v2836 = vpop.f32.mrf.mxu0
        %v2837 = vadd.f32 0.0, %v2836
        %v2838 = vpop.f32.mrf.mxu0
        %v2839 = vpop.f32.mrf.mxu0
        %v2840 = vadd.f32 0.0, %v2839
        %v2841 = vpop.f32.mrf.mxu0
        %2842 = vmatprep.mubr.bf16.mxu0 0
        %2843 = vmatmul.mubr.bf16.gmra.mxu0 %v2621
        %v2844 = vpop.f32.mrf.mxu0
        %v2845 = vadd.f32 0.0, %v2844
        %v2846 = vpop.f32.mrf.mxu0
        %v2847 = vpop.f32.mrf.mxu0
        %v2848 = vadd.f32 0.0, %v2847
        %v2849 = vpop.f32.mrf.mxu0
        %2850 = vmatprep.mubr.bf16.mxu0 0
        %2851 = vmatmul.mubr.bf16.gmra.mxu0 %v2629
        %v2852 = vpop.f32.mrf.mxu0
        %v2853 = vadd.f32 0.0, %v2852
        %v2854 = vpop.f32.mrf.mxu0
        %v2855 = vpop.f32.mrf.mxu0
        %v2856 = vadd.f32 0.0, %v2855
        %v2857 = vpop.f32.mrf.mxu0
        %2858 = vmatprep.mubr.bf16.mxu0 0
        %2859 = vmatmul.mubr.bf16.gmra.mxu0 %v2637
        %v2860 = vpop.f32.mrf.mxu0
        %v2861 = vadd.f32 0.0, %v2860
        %v2862 = vpop.f32.mrf.mxu0
        %v2863 = vpop.f32.mrf.mxu0
        %v2864 = vadd.f32 0.0, %v2863
        %v2865 = vpop.f32.mrf.mxu0
        %2866 = vmatprep.mubr.bf16.mxu0 0
        %2867 = vmatmul.mubr.bf16.gmra.mxu0 %v2645
        %v2868 = vpop.f32.mrf.mxu0
        %v2869 = vadd.f32 0.0, %v2868
        %v2870 = vpop.f32.mrf.mxu0
        %v2871 = vpop.f32.mrf.mxu0
        %v2872 = vadd.f32 0.0, %v2871
        %v2873 = vpop.f32.mrf.mxu0
        %2874 = vmatprep.mubr.bf16.mxu0 0
        %2875 = vmatmul.mubr.bf16.gmra.mxu0 %v2648
        %v2876 = vpop.f32.mrf.mxu0
        %v2877 = vadd.f32 0.0, %v2876
        %v2878 = vpop.f32.mrf.mxu0
        %v2879 = vpop.f32.mrf.mxu0
        %v2880 = vpop.f32.mrf.mxu0
        %2881 = vdwg.mxu0
        %v2882 = vadd.f32 %v2344, %v2749
        %v2883 = vadd.f32 %v2345, %v2752
        %v2884 = vadd.f32 %v2346, %v2757
        %v2885 = vadd.f32 %v2347, %v2760
        %v2886 = vadd.f32 %v2348, %v2765
        %v2887 = vadd.f32 %v2349, %v2768
        %v2888 = vadd.f32 %v2350, %v2773
        %v2889 = vadd.f32 %v2351, %v2776
        %v2890 = vadd.f32 %v2352, %v2781
        %v2891 = vadd.f32 %v2353, %v2784
        %v2892 = vadd.f32 %v2354, %v2789
        %v2893 = vadd.f32 %v2355, %v2792
        %v2894 = vadd.f32 %v2356, %v2797
        %v2895 = vadd.f32 %v2357, %v2800
        %v2896 = vadd.f32 %v2358, %v2805
        %v2897 = vadd.f32 %v2359, %v2808
        %v2898 = vadd.f32 %v2360, %v2813
        %v2899 = vadd.f32 %v2361, %v2816
        %v2900 = vadd.f32 %v2362, %v2821
        %v2901 = vadd.f32 %v2363, %v2824
        %v2902 = vadd.f32 %v2364, %v2829
        %v2903 = vadd.f32 %v2365, %v2832
        %v2904 = vadd.f32 %v2366, %v2837
        %v2905 = vadd.f32 %v2367, %v2840
        %v2906 = vadd.f32 %v2368, %v2845
        %v2907 = vadd.f32 %v2369, %v2848
        %v2908 = vadd.f32 %v2370, %v2853
        %v2909 = vadd.f32 %v2371, %v2856
        %v2910 = vadd.f32 %v2372, %v2861
        %v2911 = vadd.f32 %v2373, %v2864
        %v2912 = vadd.f32 %v2374, %v2869
        %v2913 = vadd.f32 %v2375, %v2872
        %v2914 = vadd.f32 %v2376, %v2877
        %v2915 = vld [vmem:[#allocation2 + $0xc] sm:$0xe]
        %v2916 = vld [vmem:[#allocation2 + $0x10] sm:$0xf]
        %v2917 = vld [vmem:[#allocation2 + $0x14] sm:$0xf]
        %v2918 = vld [vmem:[#allocation2 + $0x18] sm:$0xf]
        %v2919 = vld [vmem:[#allocation2 + $0x1c] sm:$0xf]
        %v2920 = vld [vmem:[#allocation2 + $0x20] sm:$0xf]
        %v2921 = vld [vmem:[#allocation2 + $0x24] sm:$0xf]
        %v2922 = vld [vmem:[#allocation2 + $0x28] sm:$0xf]
        %v2923 = vld [vmem:[#allocation2 + $0x2c] sm:$0xf]
        %v2924 = vld [vmem:[#allocation2 + $0x30] sm:$0xf]
        %v2925 = vld [vmem:[#allocation2 + $0x34] sm:$0xf]
        %v2926 = vld [vmem:[#allocation2 + $0x38] sm:$0xf]
        %v2927 = vld [vmem:[#allocation2 + $0x3c] sm:$0xf]
        %v2928 = vld [vmem:[#allocation2 + $0x40] sm:$0xf]
        %v2929 = vld [vmem:[#allocation2 + $0x44] sm:$0xf]
        %v2930 = vld [vmem:[#allocation2 + $0x48] sm:$0xf]
        %v2931 = vld [vmem:[#allocation2 + $0x4c] sm:$0xf]
        %v2932 = vld [vmem:[#allocation2 + $0x50] sm:$0xf]
        %v2933 = vld [vmem:[#allocation2 + $0x54] sm:$0xf]
        %v2934 = vld [vmem:[#allocation2 + $0x58] sm:$0xf]
        %v2935 = vld [vmem:[#allocation2 + $0x5c] sm:$0xf]
        %v2936 = vld [vmem:[#allocation2 + $0x60] sm:$0xf]
        %v2937 = vld [vmem:[#allocation2 + $0x64] sm:$0xf]
        %v2938 = vld [vmem:[#allocation2 + $0x68] sm:$0xf]
        %v2939 = vld [vmem:[#allocation2 + $0x6c] sm:$0xf]
        %v2940 = vld [vmem:[#allocation2 + $0x70] sm:$0xf]
        %v2941 = vld [vmem:[#allocation2 + $0x74] sm:$0xf]
        %v2942 = vld [vmem:[#allocation2 + $0x78] sm:$0xf]
        %v2943 = vld [vmem:[#allocation2 + $0x7c] sm:$0xf]
        %v2944 = vld [vmem:[#allocation2 + $0x80] sm:$0xf]
        %v2945 = vld [vmem:[#allocation2 + $0x84] sm:$0xf]
        %v2946 = vld [vmem:[#allocation2 + $0x88] sm:$0xf]
        %v2947 = vld [vmem:[#allocation2 + $0x8c] sm:$0xf]
        %v2948 = vld [vmem:[#allocation2 + $0x90] sm:$0x1]
        %s2949 = scalar_lea.vmem %s295, 384 [#allocation3]
        %v2950 = vld [vmem:[%s2949] sm:$0xf]
        %v2951 = vld [vmem:[%s2949 + $0x4] sm:$0xf]
        %v2952 = vld [vmem:[%s2949 + $0x8] sm:$0xf]
        %v2953 = vld [vmem:[%s2949 + $0xc] sm:$0xf]
        %v2954 = vld [vmem:[%s2949 + $0x10] sm:$0xf]
        %v2955 = vld [vmem:[%s2949 + $0x14] sm:$0xf]
        %v2956 = vld [vmem:[%s2949 + $0x18] sm:$0xf]
        %v2957 = vld [vmem:[%s2949 + $0x1c] sm:$0xf]
        %v2958 = vld [vmem:[%s2949 + $0x20] sm:$0xf]
        %v2959 = vld [vmem:[%s2949 + $0x24] sm:$0xf]
        %v2960 = vld [vmem:[%s2949 + $0x28] sm:$0xf]
        %v2961 = vld [vmem:[%s2949 + $0x2c] sm:$0xf]
        %v2962 = vld [vmem:[%s2949 + $0x30] sm:$0xf]
        %v2963 = vld [vmem:[%s2949 + $0x34] sm:$0xf]
        %v2964 = vld [vmem:[%s2949 + $0x38] sm:$0xf]
        %v2965 = vld [vmem:[%s2949 + $0x3c] sm:$0xf]
        %v3000 = vunpack.c.l.b16 %v2915
        %v3001 = vunpack.c.l.b16 %v2916
        %v3002 = vunpack.c.l.b16 %v2917
        %v3003 = vunpack.c.l.b16 %v2918
        %v3004 = vunpack.c.l.b16 %v2919
        %v3005 = vunpack.c.l.b16 %v2920
        %v3006 = vunpack.c.l.b16 %v2921
        %v3007 = vunpack.c.l.b16 %v2922
        %v3008 = vunpack.c.l.b16 %v2923
        %v3009 = vunpack.c.l.b16 %v2924
        %v3010 = vunpack.c.l.b16 %v2925
        %v3011 = vunpack.c.l.b16 %v2926
        %v3012 = vunpack.c.l.b16 %v2927
        %v3013 = vunpack.c.l.b16 %v2928
        %v3014 = vunpack.c.l.b16 %v2929
        %v3015 = vunpack.c.l.b16 %v2930
        %v3016 = vunpack.c.l.b16 %v2931
        %v3017 = vunpack.c.l.b16 %v2932
        %v3018 = vunpack.c.l.b16 %v2933
        %v3019 = vunpack.c.l.b16 %v2934
        %v3020 = vunpack.c.l.b16 %v2935
        %v3021 = vunpack.c.l.b16 %v2936
        %v3022 = vunpack.c.l.b16 %v2937
        %v3023 = vunpack.c.l.b16 %v2938
        %v3024 = vunpack.c.l.b16 %v2939
        %v3025 = vunpack.c.l.b16 %v2940
        %v3026 = vunpack.c.l.b16 %v2941
        %v3027 = vunpack.c.l.b16 %v2942
        %v3028 = vunpack.c.l.b16 %v2943
        %v3029 = vunpack.c.l.b16 %v2944
        %v3030 = vunpack.c.l.b16 %v2945
        %v3031 = vunpack.c.l.b16 %v2946
        %v3032 = vunpack.c.l.b16 %v2947
        %v3033 = vunpack.c.l.b16 %v2948
        %v3034 = vpack.c.b16 %v3001, %v3000
        %v3035 = vpack.c.b16 %v3003, %v3002
        %v3036 = vpack.c.b16 %v3005, %v3004
        %v3037 = vpack.c.b16 %v3007, %v3006
        %v3038 = vpack.c.b16 %v3009, %v3008
        %v3039 = vpack.c.b16 %v3011, %v3010
        %v3040 = vpack.c.b16 %v3013, %v3012
        %v3041 = vpack.c.b16 %v3015, %v3014
        %v3042 = vpack.c.b16 %v3017, %v3016
        %v3043 = vpack.c.b16 %v3019, %v3018
        %v3044 = vpack.c.b16 %v3021, %v3020
        %v3045 = vpack.c.b16 %v3023, %v3022
        %v3046 = vpack.c.b16 %v3025, %v3024
        %v3047 = vpack.c.b16 %v3027, %v3026
        %v3048 = vpack.c.b16 %v3029, %v3028
        %v3049 = vpack.c.b16 %v3031, %v3030
        %v3050 = vpack.c.b16 %v3033, %v3032
        %vm3051 = vcmask 1046528
        %v3052 = vrot.slane %v3034, 1
        %v3053 = vrot.slane %v3035, 1
        %v3054 = vsel %vm3051, %v3052, %v3053
        %v3055 = vrot.slane %v3036, 1
        %v3056 = vsel %vm3051, %v3053, %v3055
        %v3057 = vrot.slane %v3037, 1
        %v3058 = vsel %vm3051, %v3055, %v3057
        %v3059 = vrot.slane %v3038, 1
        %v3060 = vsel %vm3051, %v3057, %v3059
        %v3061 = vrot.slane %v3039, 1
        %v3062 = vsel %vm3051, %v3059, %v3061
        %v3063 = vrot.slane %v3040, 1
        %v3064 = vsel %vm3051, %v3061, %v3063
        %v3065 = vrot.slane %v3041, 1
        %v3066 = vsel %vm3051, %v3063, %v3065
        %v3067 = vrot.slane %v3042, 1
        %v3068 = vsel %vm3051, %v3065, %v3067
        %v3069 = vrot.slane %v3043, 1
        %v3070 = vsel %vm3051, %v3067, %v3069
        %v3071 = vrot.slane %v3044, 1
        %v3072 = vsel %vm3051, %v3069, %v3071
        %v3073 = vrot.slane %v3045, 1
        %v3074 = vsel %vm3051, %v3071, %v3073
        %v3075 = vrot.slane %v3046, 1
        %v3076 = vsel %vm3051, %v3073, %v3075
        %v3077 = vrot.slane %v3047, 1
        %v3078 = vsel %vm3051, %v3075, %v3077
        %v3079 = vrot.slane %v3048, 1
        %v3080 = vsel %vm3051, %v3077, %v3079
        %v3081 = vrot.slane %v3049, 1
        %v3082 = vsel %vm3051, %v3079, %v3081
        %v3083 = vrot.slane %v3050, 1
        %v3084 = vsel %vm3051, %v3081, %v3083
        %v3118 = vunpack.c.l.b16 %v2950
        %v3119 = vunpack.c.l.b16 %v2951
        %v3120 = vunpack.c.l.b16 %v2952
        %v3121 = vunpack.c.l.b16 %v2953
        %v3122 = vunpack.c.l.b16 %v2954
        %v3123 = vunpack.c.l.b16 %v2955
        %v3124 = vunpack.c.l.b16 %v2956
        %v3125 = vunpack.c.l.b16 %v2957
        %v3126 = vunpack.c.l.b16 %v2958
        %v3127 = vunpack.c.l.b16 %v2959
        %v3128 = vunpack.c.l.b16 %v2960
        %v3129 = vunpack.c.l.b16 %v2961
        %v3130 = vunpack.c.l.b16 %v2962
        %v3131 = vunpack.c.l.b16 %v2963
        %v3132 = vunpack.c.l.b16 %v2964
        %v3133 = vunpack.c.l.b16 %v2965
        %v3134 = vpack.c.b16 %v3119, %v3118
        %v3135 = vpack.c.b16 %v3121, %v3120
        %v3136 = vpack.c.b16 %v3123, %v3122
        %v3137 = vpack.c.b16 %v3125, %v3124
        %v3138 = vpack.c.b16 %v3127, %v3126
        %v3139 = vpack.c.b16 %v3129, %v3128
        %v3140 = vpack.c.b16 %v3131, %v3130
        %v3141 = vpack.c.b16 %v3133, %v3132
        %3150 = vmatprep.subr.bf16.mxu0 0
        %3151 = vmatpush1.bf16.msra.mxu0 %v3141
        %3152 = vmatprep.subr.bf16.mxu0 0
        %3153 = vmatpush1.bf16.msra.mxu0 %v3140
        %3154 = vmatprep.subr.bf16.mxu0 0
        %3155 = vmatpush1.bf16.msra.mxu0 %v3139
        %3156 = vmatprep.subr.bf16.mxu0 0
        %3157 = vmatpush1.bf16.msra.mxu0 %v3138
        %3158 = vmatprep.subr.bf16.mxu0 0
        %3159 = vmatpush1.bf16.msra.mxu0 %v3137
        %3160 = vmatprep.subr.bf16.mxu0 0
        %3161 = vmatpush1.bf16.msra.mxu0 %v3136
        %3162 = vmatprep.subr.bf16.mxu0 0
        %3163 = vmatpush1.bf16.msra.mxu0 %v3135
        %3164 = vmatprep.subr.bf16.mxu0 0
        %3165 = vmatpush1.bf16.msra.mxu0 %v3134
        %3166 = vmatprep.subr.bf16.mxu0 0
        %3167 = vmatpush2.bf16.msra.mxu0 0
        %3168 = vmatprep.subr.bf16.mxu0 0
        %3169 = vmatpush2.bf16.msra.mxu0 0
        %3170 = vmatprep.subr.bf16.mxu0 0
        %3171 = vmatpush2.bf16.msra.mxu0 0
        %3172 = vmatprep.subr.bf16.mxu0 0
        %3173 = vmatpush2.bf16.msra.mxu0 0
        %3174 = vmatprep.subr.bf16.mxu0 0
        %3175 = vmatpush2.bf16.msra.mxu0 0
        %3176 = vmatprep.subr.bf16.mxu0 0
        %3177 = vmatpush2.bf16.msra.mxu0 0
        %3178 = vmatprep.subr.bf16.mxu0 0
        %3179 = vmatpush2.bf16.msra.mxu0 0
        %3180 = vmatprep.subr.bf16.mxu0 0
        %3181 = vmatpush2.bf16.msra.mxu0 0
        %3182 = vmatprep.mubr.bf16.mxu0 0
        %3183 = vmatmul.mubr.bf16.gmra.mxu0 %v3054
        %v3184 = vpop.f32.mrf.mxu0
        %v3185 = vadd.f32 0.0, %v3184
        %v3186 = vpop.f32.mrf.mxu0
        %v3187 = vpop.f32.mrf.mxu0
        %v3188 = vadd.f32 0.0, %v3187
        %v3189 = vpop.f32.mrf.mxu0
        %3190 = vmatprep.mubr.bf16.mxu0 0
        %3191 = vmatmul.mubr.bf16.gmra.mxu0 %v3056
        %v3192 = vpop.f32.mrf.mxu0
        %v3193 = vadd.f32 0.0, %v3192
        %v3194 = vpop.f32.mrf.mxu0
        %v3195 = vpop.f32.mrf.mxu0
        %v3196 = vadd.f32 0.0, %v3195
        %v3197 = vpop.f32.mrf.mxu0
        %3198 = vmatprep.mubr.bf16.mxu0 0
        %3199 = vmatmul.mubr.bf16.gmra.mxu0 %v3058
        %v3200 = vpop.f32.mrf.mxu0
        %v3201 = vadd.f32 0.0, %v3200
        %v3202 = vpop.f32.mrf.mxu0
        %v3203 = vpop.f32.mrf.mxu0
        %v3204 = vadd.f32 0.0, %v3203
        %v3205 = vpop.f32.mrf.mxu0
        %3206 = vmatprep.mubr.bf16.mxu0 0
        %3207 = vmatmul.mubr.bf16.gmra.mxu0 %v3060
        %v3208 = vpop.f32.mrf.mxu0
        %v3209 = vadd.f32 0.0, %v3208
        %v3210 = vpop.f32.mrf.mxu0
        %v3211 = vpop.f32.mrf.mxu0
        %v3212 = vadd.f32 0.0, %v3211
        %v3213 = vpop.f32.mrf.mxu0
        %3214 = vmatprep.mubr.bf16.mxu0 0
        %3215 = vmatmul.mubr.bf16.gmra.mxu0 %v3062
        %v3216 = vpop.f32.mrf.mxu0
        %v3217 = vadd.f32 0.0, %v3216
        %v3218 = vpop.f32.mrf.mxu0
        %v3219 = vpop.f32.mrf.mxu0
        %v3220 = vadd.f32 0.0, %v3219
        %v3221 = vpop.f32.mrf.mxu0
        %3222 = vmatprep.mubr.bf16.mxu0 0
        %3223 = vmatmul.mubr.bf16.gmra.mxu0 %v3064
        %v3224 = vpop.f32.mrf.mxu0
        %v3225 = vadd.f32 0.0, %v3224
        %v3226 = vpop.f32.mrf.mxu0
        %v3227 = vpop.f32.mrf.mxu0
        %v3228 = vadd.f32 0.0, %v3227
        %v3229 = vpop.f32.mrf.mxu0
        %3230 = vmatprep.mubr.bf16.mxu0 0
        %3231 = vmatmul.mubr.bf16.gmra.mxu0 %v3066
        %v3232 = vpop.f32.mrf.mxu0
        %v3233 = vadd.f32 0.0, %v3232
        %v3234 = vpop.f32.mrf.mxu0
        %v3235 = vpop.f32.mrf.mxu0
        %v3236 = vadd.f32 0.0, %v3235
        %v3237 = vpop.f32.mrf.mxu0
        %3238 = vmatprep.mubr.bf16.mxu0 0
        %3239 = vmatmul.mubr.bf16.gmra.mxu0 %v3068
        %v3240 = vpop.f32.mrf.mxu0
        %v3241 = vadd.f32 0.0, %v3240
        %v3242 = vpop.f32.mrf.mxu0
        %v3243 = vpop.f32.mrf.mxu0
        %v3244 = vadd.f32 0.0, %v3243
        %v3245 = vpop.f32.mrf.mxu0
        %3246 = vmatprep.mubr.bf16.mxu0 0
        %3247 = vmatmul.mubr.bf16.gmra.mxu0 %v3070
        %v3248 = vpop.f32.mrf.mxu0
        %v3249 = vadd.f32 0.0, %v3248
        %v3250 = vpop.f32.mrf.mxu0
        %v3251 = vpop.f32.mrf.mxu0
        %v3252 = vadd.f32 0.0, %v3251
        %v3253 = vpop.f32.mrf.mxu0
        %3254 = vmatprep.mubr.bf16.mxu0 0
        %3255 = vmatmul.mubr.bf16.gmra.mxu0 %v3072
        %v3256 = vpop.f32.mrf.mxu0
        %v3257 = vadd.f32 0.0, %v3256
        %v3258 = vpop.f32.mrf.mxu0
        %v3259 = vpop.f32.mrf.mxu0
        %v3260 = vadd.f32 0.0, %v3259
        %v3261 = vpop.f32.mrf.mxu0
        %3262 = vmatprep.mubr.bf16.mxu0 0
        %3263 = vmatmul.mubr.bf16.gmra.mxu0 %v3074
        %v3264 = vpop.f32.mrf.mxu0
        %v3265 = vadd.f32 0.0, %v3264
        %v3266 = vpop.f32.mrf.mxu0
        %v3267 = vpop.f32.mrf.mxu0
        %v3268 = vadd.f32 0.0, %v3267
        %v3269 = vpop.f32.mrf.mxu0
        %3270 = vmatprep.mubr.bf16.mxu0 0
        %3271 = vmatmul.mubr.bf16.gmra.mxu0 %v3076
        %v3272 = vpop.f32.mrf.mxu0
        %v3273 = vadd.f32 0.0, %v3272
        %v3274 = vpop.f32.mrf.mxu0
        %v3275 = vpop.f32.mrf.mxu0
        %v3276 = vadd.f32 0.0, %v3275
        %v3277 = vpop.f32.mrf.mxu0
        %3278 = vmatprep.mubr.bf16.mxu0 0
        %3279 = vmatmul.mubr.bf16.gmra.mxu0 %v3078
        %v3280 = vpop.f32.mrf.mxu0
        %v3281 = vadd.f32 0.0, %v3280
        %v3282 = vpop.f32.mrf.mxu0
        %v3283 = vpop.f32.mrf.mxu0
        %v3284 = vadd.f32 0.0, %v3283
        %v3285 = vpop.f32.mrf.mxu0
        %3286 = vmatprep.mubr.bf16.mxu0 0
        %3287 = vmatmul.mubr.bf16.gmra.mxu0 %v3080
        %v3288 = vpop.f32.mrf.mxu0
        %v3289 = vadd.f32 0.0, %v3288
        %v3290 = vpop.f32.mrf.mxu0
        %v3291 = vpop.f32.mrf.mxu0
        %v3292 = vadd.f32 0.0, %v3291
        %v3293 = vpop.f32.mrf.mxu0
        %3294 = vmatprep.mubr.bf16.mxu0 0
        %3295 = vmatmul.mubr.bf16.gmra.mxu0 %v3082
        %v3296 = vpop.f32.mrf.mxu0
        %v3297 = vadd.f32 0.0, %v3296
        %v3298 = vpop.f32.mrf.mxu0
        %v3299 = vpop.f32.mrf.mxu0
        %v3300 = vadd.f32 0.0, %v3299
        %v3301 = vpop.f32.mrf.mxu0
        %3302 = vmatprep.mubr.bf16.mxu0 0
        %3303 = vmatmul.mubr.bf16.gmra.mxu0 %v3084
        %v3304 = vpop.f32.mrf.mxu0
        %v3305 = vadd.f32 0.0, %v3304
        %v3306 = vpop.f32.mrf.mxu0
        %v3307 = vpop.f32.mrf.mxu0
        %v3308 = vadd.f32 0.0, %v3307
        %v3309 = vpop.f32.mrf.mxu0
        %3310 = vmatprep.mubr.bf16.mxu0 0
        %3311 = vmatmul.mubr.bf16.gmra.mxu0 %v3083
        %v3312 = vpop.f32.mrf.mxu0
        %v3313 = vadd.f32 0.0, %v3312
        %v3314 = vpop.f32.mrf.mxu0
        %v3315 = vpop.f32.mrf.mxu0
        %v3316 = vpop.f32.mrf.mxu0
        %3317 = vdwg.mxu0
        %v3318 = vadd.f32 %v2882, %v3185
        %v3319 = vadd.f32 %v2883, %v3188
        %v3320 = vadd.f32 %v2884, %v3193
        %v3321 = vadd.f32 %v2885, %v3196
        %v3322 = vadd.f32 %v2886, %v3201
        %v3323 = vadd.f32 %v2887, %v3204
        %v3324 = vadd.f32 %v2888, %v3209
        %v3325 = vadd.f32 %v2889, %v3212
        %v3326 = vadd.f32 %v2890, %v3217
        %v3327 = vadd.f32 %v2891, %v3220
        %v3328 = vadd.f32 %v2892, %v3225
        %v3329 = vadd.f32 %v2893, %v3228
        %v3330 = vadd.f32 %v2894, %v3233
        %v3331 = vadd.f32 %v2895, %v3236
        %v3332 = vadd.f32 %v2896, %v3241
        %v3333 = vadd.f32 %v2897, %v3244
        %v3334 = vadd.f32 %v2898, %v3249
        %v3335 = vadd.f32 %v2899, %v3252
        %v3336 = vadd.f32 %v2900, %v3257
        %v3337 = vadd.f32 %v2901, %v3260
        %v3338 = vadd.f32 %v2902, %v3265
        %v3339 = vadd.f32 %v2903, %v3268
        %v3340 = vadd.f32 %v2904, %v3273
        %v3341 = vadd.f32 %v2905, %v3276
        %v3342 = vadd.f32 %v2906, %v3281
        %v3343 = vadd.f32 %v2907, %v3284
        %v3344 = vadd.f32 %v2908, %v3289
        %v3345 = vadd.f32 %v2909, %v3292
        %v3346 = vadd.f32 %v2910, %v3297
        %v3347 = vadd.f32 %v2911, %v3300
        %v3348 = vadd.f32 %v2912, %v3305
        %v3349 = vadd.f32 %v2913, %v3308
        %v3350 = vadd.f32 %v2914, %v3313
        %v3351 = vld [vmem:[#allocation2 + $0x90] sm:$0x3]
        %s3352 = scalar_lea.vmem %s295, 448 [#allocation3]
        %v3353 = vld [vmem:[%s3352] sm:$0xf]
        %v3354 = vld [vmem:[%s3352 + $0x4] sm:$0xf]
        %v3355 = vld [vmem:[%s3352 + $0x8] sm:$0xf]
        %v3356 = vld [vmem:[%s3352 + $0xc] sm:$0xf]
        %v3357 = vld [vmem:[%s3352 + $0x10] sm:$0xf]
        %v3358 = vld [vmem:[%s3352 + $0x14] sm:$0xf]
        %v3359 = vld [vmem:[%s3352 + $0x18] sm:$0xf]
        %v3360 = vld [vmem:[%s3352 + $0x1c] sm:$0xf]
        %v3361 = vld [vmem:[%s3352 + $0x20] sm:$0xf]
        %v3362 = vld [vmem:[%s3352 + $0x24] sm:$0xf]
        %v3363 = vld [vmem:[%s3352 + $0x28] sm:$0xf]
        %v3364 = vld [vmem:[%s3352 + $0x2c] sm:$0xf]
        %v3365 = vld [vmem:[%s3352 + $0x30] sm:$0xf]
        %v3366 = vld [vmem:[%s3352 + $0x34] sm:$0xf]
        %v3367 = vld [vmem:[%s3352 + $0x38] sm:$0xf]
        %v3368 = vld [vmem:[%s3352 + $0x3c] sm:$0xf]
        %v3370 = vunpack.c.l.b16 %v3351
        %v3371 = vpack.c.b16 %v3370, %v3032
        %vm3372 = vsmask.f32 6400
        %v3374 = vshrl.u32 %v3034, 16
        %v3376 = vrot.slane %v3374, 1
        %v3377 = vshll.u32 %v3034, 16
        %v3379 = vrot.slane %v3377, 2
        %v3380 = vor.u32 %v3376, %v3379
        %v3382 = vshrl.u32 %v3035, 16
        %v3384 = vrot.slane %v3382, 1
        %v3385 = vshll.u32 %v3035, 16
        %v3387 = vrot.slane %v3385, 2
        %v3388 = vor.u32 %v3384, %v3387
        %v3389 = vsel %vm3372, %v3380, %v3388
        %v3391 = vshrl.u32 %v3036, 16
        %v3393 = vrot.slane %v3391, 1
        %v3394 = vshll.u32 %v3036, 16
        %v3396 = vrot.slane %v3394, 2
        %v3397 = vor.u32 %v3393, %v3396
        %v3398 = vsel %vm3372, %v3388, %v3397
        %v3400 = vshrl.u32 %v3037, 16
        %v3402 = vrot.slane %v3400, 1
        %v3403 = vshll.u32 %v3037, 16
        %v3405 = vrot.slane %v3403, 2
        %v3406 = vor.u32 %v3402, %v3405
        %v3407 = vsel %vm3372, %v3397, %v3406
        %v3409 = vshrl.u32 %v3038, 16
        %v3411 = vrot.slane %v3409, 1
        %v3412 = vshll.u32 %v3038, 16
        %v3414 = vrot.slane %v3412, 2
        %v3415 = vor.u32 %v3411, %v3414
        %v3416 = vsel %vm3372, %v3406, %v3415
        %v3418 = vshrl.u32 %v3039, 16
        %v3420 = vrot.slane %v3418, 1
        %v3421 = vshll.u32 %v3039, 16
        %v3423 = vrot.slane %v3421, 2
        %v3424 = vor.u32 %v3420, %v3423
        %v3425 = vsel %vm3372, %v3415, %v3424
        %v3427 = vshrl.u32 %v3040, 16
        %v3429 = vrot.slane %v3427, 1
        %v3430 = vshll.u32 %v3040, 16
        %v3432 = vrot.slane %v3430, 2
        %v3433 = vor.u32 %v3429, %v3432
        %v3434 = vsel %vm3372, %v3424, %v3433
        %v3436 = vshrl.u32 %v3041, 16
        %v3438 = vrot.slane %v3436, 1
        %v3439 = vshll.u32 %v3041, 16
        %v3441 = vrot.slane %v3439, 2
        %v3442 = vor.u32 %v3438, %v3441
        %v3443 = vsel %vm3372, %v3433, %v3442
        %v3445 = vshrl.u32 %v3042, 16
        %v3447 = vrot.slane %v3445, 1
        %v3448 = vshll.u32 %v3042, 16
        %v3450 = vrot.slane %v3448, 2
        %v3451 = vor.u32 %v3447, %v3450
        %v3452 = vsel %vm3372, %v3442, %v3451
        %v3454 = vshrl.u32 %v3043, 16
        %v3456 = vrot.slane %v3454, 1
        %v3457 = vshll.u32 %v3043, 16
        %v3459 = vrot.slane %v3457, 2
        %v3460 = vor.u32 %v3456, %v3459
        %v3461 = vsel %vm3372, %v3451, %v3460
        %v3463 = vshrl.u32 %v3044, 16
        %v3465 = vrot.slane %v3463, 1
        %v3466 = vshll.u32 %v3044, 16
        %v3468 = vrot.slane %v3466, 2
        %v3469 = vor.u32 %v3465, %v3468
        %v3470 = vsel %vm3372, %v3460, %v3469
        %v3472 = vshrl.u32 %v3045, 16
        %v3474 = vrot.slane %v3472, 1
        %v3475 = vshll.u32 %v3045, 16
        %v3477 = vrot.slane %v3475, 2
        %v3478 = vor.u32 %v3474, %v3477
        %v3479 = vsel %vm3372, %v3469, %v3478
        %v3481 = vshrl.u32 %v3046, 16
        %v3483 = vrot.slane %v3481, 1
        %v3484 = vshll.u32 %v3046, 16
        %v3486 = vrot.slane %v3484, 2
        %v3487 = vor.u32 %v3483, %v3486
        %v3488 = vsel %vm3372, %v3478, %v3487
        %v3490 = vshrl.u32 %v3047, 16
        %v3492 = vrot.slane %v3490, 1
        %v3493 = vshll.u32 %v3047, 16
        %v3495 = vrot.slane %v3493, 2
        %v3496 = vor.u32 %v3492, %v3495
        %v3497 = vsel %vm3372, %v3487, %v3496
        %v3499 = vshrl.u32 %v3048, 16
        %v3501 = vrot.slane %v3499, 1
        %v3502 = vshll.u32 %v3048, 16
        %v3504 = vrot.slane %v3502, 2
        %v3505 = vor.u32 %v3501, %v3504
        %v3506 = vsel %vm3372, %v3496, %v3505
        %v3508 = vshrl.u32 %v3049, 16
        %v3510 = vrot.slane %v3508, 1
        %v3511 = vshll.u32 %v3049, 16
        %v3513 = vrot.slane %v3511, 2
        %v3514 = vor.u32 %v3510, %v3513
        %v3515 = vsel %vm3372, %v3505, %v3514
        %v3517 = vshrl.u32 %v3371, 16
        %v3519 = vrot.slane %v3517, 1
        %v3520 = vshll.u32 %v3371, 16
        %v3522 = vrot.slane %v3520, 2
        %v3523 = vor.u32 %v3519, %v3522
        %v3524 = vsel %vm3372, %v3514, %v3523
        %v3558 = vunpack.c.l.b16 %v3353
        %v3559 = vunpack.c.l.b16 %v3354
        %v3560 = vunpack.c.l.b16 %v3355
        %v3561 = vunpack.c.l.b16 %v3356
        %v3562 = vunpack.c.l.b16 %v3357
        %v3563 = vunpack.c.l.b16 %v3358
        %v3564 = vunpack.c.l.b16 %v3359
        %v3565 = vunpack.c.l.b16 %v3360
        %v3566 = vunpack.c.l.b16 %v3361
        %v3567 = vunpack.c.l.b16 %v3362
        %v3568 = vunpack.c.l.b16 %v3363
        %v3569 = vunpack.c.l.b16 %v3364
        %v3570 = vunpack.c.l.b16 %v3365
        %v3571 = vunpack.c.l.b16 %v3366
        %v3572 = vunpack.c.l.b16 %v3367
        %v3573 = vunpack.c.l.b16 %v3368
        %v3574 = vpack.c.b16 %v3559, %v3558
        %v3575 = vpack.c.b16 %v3561, %v3560
        %v3576 = vpack.c.b16 %v3563, %v3562
        %v3577 = vpack.c.b16 %v3565, %v3564
        %v3578 = vpack.c.b16 %v3567, %v3566
        %v3579 = vpack.c.b16 %v3569, %v3568
        %v3580 = vpack.c.b16 %v3571, %v3570
        %v3581 = vpack.c.b16 %v3573, %v3572
        %3590 = vmatprep.subr.bf16.mxu0 0
        %3591 = vmatpush1.bf16.msra.mxu0 %v3581
        %3592 = vmatprep.subr.bf16.mxu0 0
        %3593 = vmatpush1.bf16.msra.mxu0 %v3580
        %3594 = vmatprep.subr.bf16.mxu0 0
        %3595 = vmatpush1.bf16.msra.mxu0 %v3579
        %3596 = vmatprep.subr.bf16.mxu0 0
        %3597 = vmatpush1.bf16.msra.mxu0 %v3578
        %3598 = vmatprep.subr.bf16.mxu0 0
        %3599 = vmatpush1.bf16.msra.mxu0 %v3577
        %3600 = vmatprep.subr.bf16.mxu0 0
        %3601 = vmatpush1.bf16.msra.mxu0 %v3576
        %3602 = vmatprep.subr.bf16.mxu0 0
        %3603 = vmatpush1.bf16.msra.mxu0 %v3575
        %3604 = vmatprep.subr.bf16.mxu0 0
        %3605 = vmatpush1.bf16.msra.mxu0 %v3574
        %3606 = vmatprep.subr.bf16.mxu0 0
        %3607 = vmatpush2.bf16.msra.mxu0 0
        %3608 = vmatprep.subr.bf16.mxu0 0
        %3609 = vmatpush2.bf16.msra.mxu0 0
        %3610 = vmatprep.subr.bf16.mxu0 0
        %3611 = vmatpush2.bf16.msra.mxu0 0
        %3612 = vmatprep.subr.bf16.mxu0 0
        %3613 = vmatpush2.bf16.msra.mxu0 0
        %3614 = vmatprep.subr.bf16.mxu0 0
        %3615 = vmatpush2.bf16.msra.mxu0 0
        %3616 = vmatprep.subr.bf16.mxu0 0
        %3617 = vmatpush2.bf16.msra.mxu0 0
        %3618 = vmatprep.subr.bf16.mxu0 0
        %3619 = vmatpush2.bf16.msra.mxu0 0
        %3620 = vmatprep.subr.bf16.mxu0 0
        %3621 = vmatpush2.bf16.msra.mxu0 0
        %3622 = vmatprep.mubr.bf16.mxu0 0
        %3623 = vmatmul.mubr.bf16.gmra.mxu0 %v3389
        %v3624 = vpop.f32.mrf.mxu0
        %v3625 = vadd.f32 0.0, %v3624
        %v3626 = vpop.f32.mrf.mxu0
        %v3627 = vpop.f32.mrf.mxu0
        %v3628 = vadd.f32 0.0, %v3627
        %v3629 = vpop.f32.mrf.mxu0
        %3630 = vmatprep.mubr.bf16.mxu0 0
        %3631 = vmatmul.mubr.bf16.gmra.mxu0 %v3398
        %v3632 = vpop.f32.mrf.mxu0
        %v3633 = vadd.f32 0.0, %v3632
        %v3634 = vpop.f32.mrf.mxu0
        %v3635 = vpop.f32.mrf.mxu0
        %v3636 = vadd.f32 0.0, %v3635
        %v3637 = vpop.f32.mrf.mxu0
        %3638 = vmatprep.mubr.bf16.mxu0 0
        %3639 = vmatmul.mubr.bf16.gmra.mxu0 %v3407
        %v3640 = vpop.f32.mrf.mxu0
        %v3641 = vadd.f32 0.0, %v3640
        %v3642 = vpop.f32.mrf.mxu0
        %v3643 = vpop.f32.mrf.mxu0
        %v3644 = vadd.f32 0.0, %v3643
        %v3645 = vpop.f32.mrf.mxu0
        %3646 = vmatprep.mubr.bf16.mxu0 0
        %3647 = vmatmul.mubr.bf16.gmra.mxu0 %v3416
        %v3648 = vpop.f32.mrf.mxu0
        %v3649 = vadd.f32 0.0, %v3648
        %v3650 = vpop.f32.mrf.mxu0
        %v3651 = vpop.f32.mrf.mxu0
        %v3652 = vadd.f32 0.0, %v3651
        %v3653 = vpop.f32.mrf.mxu0
        %3654 = vmatprep.mubr.bf16.mxu0 0
        %3655 = vmatmul.mubr.bf16.gmra.mxu0 %v3425
        %v3656 = vpop.f32.mrf.mxu0
        %v3657 = vadd.f32 0.0, %v3656
        %v3658 = vpop.f32.mrf.mxu0
        %v3659 = vpop.f32.mrf.mxu0
        %v3660 = vadd.f32 0.0, %v3659
        %v3661 = vpop.f32.mrf.mxu0
        %3662 = vmatprep.mubr.bf16.mxu0 0
        %3663 = vmatmul.mubr.bf16.gmra.mxu0 %v3434
        %v3664 = vpop.f32.mrf.mxu0
        %v3665 = vadd.f32 0.0, %v3664
        %v3666 = vpop.f32.mrf.mxu0
        %v3667 = vpop.f32.mrf.mxu0
        %v3668 = vadd.f32 0.0, %v3667
        %v3669 = vpop.f32.mrf.mxu0
        %3670 = vmatprep.mubr.bf16.mxu0 0
        %3671 = vmatmul.mubr.bf16.gmra.mxu0 %v3443
        %v3672 = vpop.f32.mrf.mxu0
        %v3673 = vadd.f32 0.0, %v3672
        %v3674 = vpop.f32.mrf.mxu0
        %v3675 = vpop.f32.mrf.mxu0
        %v3676 = vadd.f32 0.0, %v3675
        %v3677 = vpop.f32.mrf.mxu0
        %3678 = vmatprep.mubr.bf16.mxu0 0
        %3679 = vmatmul.mubr.bf16.gmra.mxu0 %v3452
        %v3680 = vpop.f32.mrf.mxu0
        %v3681 = vadd.f32 0.0, %v3680
        %v3682 = vpop.f32.mrf.mxu0
        %v3683 = vpop.f32.mrf.mxu0
        %v3684 = vadd.f32 0.0, %v3683
        %v3685 = vpop.f32.mrf.mxu0
        %3686 = vmatprep.mubr.bf16.mxu0 0
        %3687 = vmatmul.mubr.bf16.gmra.mxu0 %v3461
        %v3688 = vpop.f32.mrf.mxu0
        %v3689 = vadd.f32 0.0, %v3688
        %v3690 = vpop.f32.mrf.mxu0
        %v3691 = vpop.f32.mrf.mxu0
        %v3692 = vadd.f32 0.0, %v3691
        %v3693 = vpop.f32.mrf.mxu0
        %3694 = vmatprep.mubr.bf16.mxu0 0
        %3695 = vmatmul.mubr.bf16.gmra.mxu0 %v3470
        %v3696 = vpop.f32.mrf.mxu0
        %v3697 = vadd.f32 0.0, %v3696
        %v3698 = vpop.f32.mrf.mxu0
        %v3699 = vpop.f32.mrf.mxu0
        %v3700 = vadd.f32 0.0, %v3699
        %v3701 = vpop.f32.mrf.mxu0
        %3702 = vmatprep.mubr.bf16.mxu0 0
        %3703 = vmatmul.mubr.bf16.gmra.mxu0 %v3479
        %v3704 = vpop.f32.mrf.mxu0
        %v3705 = vadd.f32 0.0, %v3704
        %v3706 = vpop.f32.mrf.mxu0
        %v3707 = vpop.f32.mrf.mxu0
        %v3708 = vadd.f32 0.0, %v3707
        %v3709 = vpop.f32.mrf.mxu0
        %3710 = vmatprep.mubr.bf16.mxu0 0
        %3711 = vmatmul.mubr.bf16.gmra.mxu0 %v3488
        %v3712 = vpop.f32.mrf.mxu0
        %v3713 = vadd.f32 0.0, %v3712
        %v3714 = vpop.f32.mrf.mxu0
        %v3715 = vpop.f32.mrf.mxu0
        %v3716 = vadd.f32 0.0, %v3715
        %v3717 = vpop.f32.mrf.mxu0
        %3718 = vmatprep.mubr.bf16.mxu0 0
        %3719 = vmatmul.mubr.bf16.gmra.mxu0 %v3497
        %v3720 = vpop.f32.mrf.mxu0
        %v3721 = vadd.f32 0.0, %v3720
        %v3722 = vpop.f32.mrf.mxu0
        %v3723 = vpop.f32.mrf.mxu0
        %v3724 = vadd.f32 0.0, %v3723
        %v3725 = vpop.f32.mrf.mxu0
        %3726 = vmatprep.mubr.bf16.mxu0 0
        %3727 = vmatmul.mubr.bf16.gmra.mxu0 %v3506
        %v3728 = vpop.f32.mrf.mxu0
        %v3729 = vadd.f32 0.0, %v3728
        %v3730 = vpop.f32.mrf.mxu0
        %v3731 = vpop.f32.mrf.mxu0
        %v3732 = vadd.f32 0.0, %v3731
        %v3733 = vpop.f32.mrf.mxu0
        %3734 = vmatprep.mubr.bf16.mxu0 0
        %3735 = vmatmul.mubr.bf16.gmra.mxu0 %v3515
        %v3736 = vpop.f32.mrf.mxu0
        %v3737 = vadd.f32 0.0, %v3736
        %v3738 = vpop.f32.mrf.mxu0
        %v3739 = vpop.f32.mrf.mxu0
        %v3740 = vadd.f32 0.0, %v3739
        %v3741 = vpop.f32.mrf.mxu0
        %3742 = vmatprep.mubr.bf16.mxu0 0
        %3743 = vmatmul.mubr.bf16.gmra.mxu0 %v3524
        %v3744 = vpop.f32.mrf.mxu0
        %v3745 = vadd.f32 0.0, %v3744
        %v3746 = vpop.f32.mrf.mxu0
        %v3747 = vpop.f32.mrf.mxu0
        %v3748 = vadd.f32 0.0, %v3747
        %v3749 = vpop.f32.mrf.mxu0
        %3750 = vmatprep.mubr.bf16.mxu0 0
        %3751 = vmatmul.mubr.bf16.gmra.mxu0 %v3523
        %v3752 = vpop.f32.mrf.mxu0
        %v3753 = vadd.f32 0.0, %v3752
        %v3754 = vpop.f32.mrf.mxu0
        %v3755 = vpop.f32.mrf.mxu0
        %v3756 = vpop.f32.mrf.mxu0
        %3757 = vdwg.mxu0
        %v3758 = vadd.f32 %v3318, %v3625
        %v3759 = vadd.f32 %v3319, %v3628
        %v3760 = vadd.f32 %v3320, %v3633
        %v3761 = vadd.f32 %v3321, %v3636
        %v3762 = vadd.f32 %v3322, %v3641
        %v3763 = vadd.f32 %v3323, %v3644
        %v3764 = vadd.f32 %v3324, %v3649
        %v3765 = vadd.f32 %v3325, %v3652
        %v3766 = vadd.f32 %v3326, %v3657
        %v3767 = vadd.f32 %v3327, %v3660
        %v3768 = vadd.f32 %v3328, %v3665
        %v3769 = vadd.f32 %v3329, %v3668
        %v3770 = vadd.f32 %v3330, %v3673
        %v3771 = vadd.f32 %v3331, %v3676
        %v3772 = vadd.f32 %v3332, %v3681
        %v3773 = vadd.f32 %v3333, %v3684
        %v3774 = vadd.f32 %v3334, %v3689
        %v3775 = vadd.f32 %v3335, %v3692
        %v3776 = vadd.f32 %v3336, %v3697
        %v3777 = vadd.f32 %v3337, %v3700
        %v3778 = vadd.f32 %v3338, %v3705
        %v3779 = vadd.f32 %v3339, %v3708
        %v3780 = vadd.f32 %v3340, %v3713
        %v3781 = vadd.f32 %v3341, %v3716
        %v3782 = vadd.f32 %v3342, %v3721
        %v3783 = vadd.f32 %v3343, %v3724
        %v3784 = vadd.f32 %v3344, %v3729
        %v3785 = vadd.f32 %v3345, %v3732
        %v3786 = vadd.f32 %v3346, %v3737
        %v3787 = vadd.f32 %v3347, %v3740
        %v3788 = vadd.f32 %v3348, %v3745
        %v3789 = vadd.f32 %v3349, %v3748
        %v3790 = vadd.f32 %v3350, %v3753
        %v3791 = vld [vmem:[#allocation2 + $0xc] sm:$0xc]
        %s3792 = scalar_lea.vmem %s295, 512 [#allocation3]
        %v3793 = vld [vmem:[%s3792] sm:$0xf]
        %v3794 = vld [vmem:[%s3792 + $0x4] sm:$0xf]
        %v3795 = vld [vmem:[%s3792 + $0x8] sm:$0xf]
        %v3796 = vld [vmem:[%s3792 + $0xc] sm:$0xf]
        %v3797 = vld [vmem:[%s3792 + $0x10] sm:$0xf]
        %v3798 = vld [vmem:[%s3792 + $0x14] sm:$0xf]
        %v3799 = vld [vmem:[%s3792 + $0x18] sm:$0xf]
        %v3800 = vld [vmem:[%s3792 + $0x1c] sm:$0xf]
        %v3801 = vld [vmem:[%s3792 + $0x20] sm:$0xf]
        %v3802 = vld [vmem:[%s3792 + $0x24] sm:$0xf]
        %v3803 = vld [vmem:[%s3792 + $0x28] sm:$0xf]
        %v3804 = vld [vmem:[%s3792 + $0x2c] sm:$0xf]
        %v3805 = vld [vmem:[%s3792 + $0x30] sm:$0xf]
        %v3806 = vld [vmem:[%s3792 + $0x34] sm:$0xf]
        %v3807 = vld [vmem:[%s3792 + $0x38] sm:$0xf]
        %v3808 = vld [vmem:[%s3792 + $0x3c] sm:$0xf]
        %v3810 = vunpack.c.l.b16 %v3791
        %v3811 = vpack.c.b16 %v3001, %v3810
        %v3812 = vrot.slane %v3811, 2
        %v3813 = vrot.slane %v3035, 2
        %v3814 = vsel %vm1044, %v3812, %v3813
        %v3815 = vrot.slane %v3036, 2
        %v3816 = vsel %vm1044, %v3813, %v3815
        %v3817 = vrot.slane %v3037, 2
        %v3818 = vsel %vm1044, %v3815, %v3817
        %v3819 = vrot.slane %v3038, 2
        %v3820 = vsel %vm1044, %v3817, %v3819
        %v3821 = vrot.slane %v3039, 2
        %v3822 = vsel %vm1044, %v3819, %v3821
        %v3823 = vrot.slane %v3040, 2
        %v3824 = vsel %vm1044, %v3821, %v3823
        %v3825 = vrot.slane %v3041, 2
        %v3826 = vsel %vm1044, %v3823, %v3825
        %v3827 = vrot.slane %v3042, 2
        %v3828 = vsel %vm1044, %v3825, %v3827
        %v3829 = vrot.slane %v3043, 2
        %v3830 = vsel %vm1044, %v3827, %v3829
        %v3831 = vrot.slane %v3044, 2
        %v3832 = vsel %vm1044, %v3829, %v3831
        %v3833 = vrot.slane %v3045, 2
        %v3834 = vsel %vm1044, %v3831, %v3833
        %v3835 = vrot.slane %v3046, 2
        %v3836 = vsel %vm1044, %v3833, %v3835
        %v3837 = vrot.slane %v3047, 2
        %v3838 = vsel %vm1044, %v3835, %v3837
        %v3839 = vrot.slane %v3048, 2
        %v3840 = vsel %vm1044, %v3837, %v3839
        %v3841 = vrot.slane %v3049, 2
        %v3842 = vsel %vm1044, %v3839, %v3841
        %v3843 = vrot.slane %v3371, 2
        %v3844 = vsel %vm1044, %v3841, %v3843
        %v3878 = vunpack.c.l.b16 %v3793
        %v3879 = vunpack.c.l.b16 %v3794
        %v3880 = vunpack.c.l.b16 %v3795
        %v3881 = vunpack.c.l.b16 %v3796
        %v3882 = vunpack.c.l.b16 %v3797
        %v3883 = vunpack.c.l.b16 %v3798
        %v3884 = vunpack.c.l.b16 %v3799
        %v3885 = vunpack.c.l.b16 %v3800
        %v3886 = vunpack.c.l.b16 %v3801
        %v3887 = vunpack.c.l.b16 %v3802
        %v3888 = vunpack.c.l.b16 %v3803
        %v3889 = vunpack.c.l.b16 %v3804
        %v3890 = vunpack.c.l.b16 %v3805
        %v3891 = vunpack.c.l.b16 %v3806
        %v3892 = vunpack.c.l.b16 %v3807
        %v3893 = vunpack.c.l.b16 %v3808
        %v3894 = vpack.c.b16 %v3879, %v3878
        %v3895 = vpack.c.b16 %v3881, %v3880
        %v3896 = vpack.c.b16 %v3883, %v3882
        %v3897 = vpack.c.b16 %v3885, %v3884
        %v3898 = vpack.c.b16 %v3887, %v3886
        %v3899 = vpack.c.b16 %v3889, %v3888
        %v3900 = vpack.c.b16 %v3891, %v3890
        %v3901 = vpack.c.b16 %v3893, %v3892
        %3910 = vmatprep.subr.bf16.mxu0 0
        %3911 = vmatpush1.bf16.msra.mxu0 %v3901
        %3912 = vmatprep.subr.bf16.mxu0 0
        %3913 = vmatpush1.bf16.msra.mxu0 %v3900
        %3914 = vmatprep.subr.bf16.mxu0 0
        %3915 = vmatpush1.bf16.msra.mxu0 %v3899
        %3916 = vmatprep.subr.bf16.mxu0 0
        %3917 = vmatpush1.bf16.msra.mxu0 %v3898
        %3918 = vmatprep.subr.bf16.mxu0 0
        %3919 = vmatpush1.bf16.msra.mxu0 %v3897
        %3920 = vmatprep.subr.bf16.mxu0 0
        %3921 = vmatpush1.bf16.msra.mxu0 %v3896
        %3922 = vmatprep.subr.bf16.mxu0 0
        %3923 = vmatpush1.bf16.msra.mxu0 %v3895
        %3924 = vmatprep.subr.bf16.mxu0 0
        %3925 = vmatpush1.bf16.msra.mxu0 %v3894
        %3926 = vmatprep.subr.bf16.mxu0 0
        %3927 = vmatpush2.bf16.msra.mxu0 0
        %3928 = vmatprep.subr.bf16.mxu0 0
        %3929 = vmatpush2.bf16.msra.mxu0 0
        %3930 = vmatprep.subr.bf16.mxu0 0
        %3931 = vmatpush2.bf16.msra.mxu0 0
        %3932 = vmatprep.subr.bf16.mxu0 0
        %3933 = vmatpush2.bf16.msra.mxu0 0
        %3934 = vmatprep.subr.bf16.mxu0 0
        %3935 = vmatpush2.bf16.msra.mxu0 0
        %3936 = vmatprep.subr.bf16.mxu0 0
        %3937 = vmatpush2.bf16.msra.mxu0 0
        %3938 = vmatprep.subr.bf16.mxu0 0
        %3939 = vmatpush2.bf16.msra.mxu0 0
        %3940 = vmatprep.subr.bf16.mxu0 0
        %3941 = vmatpush2.bf16.msra.mxu0 0
        %3942 = vmatprep.mubr.bf16.mxu0 0
        %3943 = vmatmul.mubr.bf16.gmra.mxu0 %v3814
        %v3944 = vpop.f32.mrf.mxu0
        %v3945 = vadd.f32 0.0, %v3944
        %v3946 = vpop.f32.mrf.mxu0
        %v3947 = vpop.f32.mrf.mxu0
        %v3948 = vadd.f32 0.0, %v3947
        %v3949 = vpop.f32.mrf.mxu0
        %3950 = vmatprep.mubr.bf16.mxu0 0
        %3951 = vmatmul.mubr.bf16.gmra.mxu0 %v3816
        %v3952 = vpop.f32.mrf.mxu0
        %v3953 = vadd.f32 0.0, %v3952
        %v3954 = vpop.f32.mrf.mxu0
        %v3955 = vpop.f32.mrf.mxu0
        %v3956 = vadd.f32 0.0, %v3955
        %v3957 = vpop.f32.mrf.mxu0
        %3958 = vmatprep.mubr.bf16.mxu0 0
        %3959 = vmatmul.mubr.bf16.gmra.mxu0 %v3818
        %v3960 = vpop.f32.mrf.mxu0
        %v3961 = vadd.f32 0.0, %v3960
        %v3962 = vpop.f32.mrf.mxu0
        %v3963 = vpop.f32.mrf.mxu0
        %v3964 = vadd.f32 0.0, %v3963
        %v3965 = vpop.f32.mrf.mxu0
        %3966 = vmatprep.mubr.bf16.mxu0 0
        %3967 = vmatmul.mubr.bf16.gmra.mxu0 %v3820
        %v3968 = vpop.f32.mrf.mxu0
        %v3969 = vadd.f32 0.0, %v3968
        %v3970 = vpop.f32.mrf.mxu0
        %v3971 = vpop.f32.mrf.mxu0
        %v3972 = vadd.f32 0.0, %v3971
        %v3973 = vpop.f32.mrf.mxu0
        %3974 = vmatprep.mubr.bf16.mxu0 0
        %3975 = vmatmul.mubr.bf16.gmra.mxu0 %v3822
        %v3976 = vpop.f32.mrf.mxu0
        %v3977 = vadd.f32 0.0, %v3976
        %v3978 = vpop.f32.mrf.mxu0
        %v3979 = vpop.f32.mrf.mxu0
        %v3980 = vadd.f32 0.0, %v3979
        %v3981 = vpop.f32.mrf.mxu0
        %3982 = vmatprep.mubr.bf16.mxu0 0
        %3983 = vmatmul.mubr.bf16.gmra.mxu0 %v3824
        %v3984 = vpop.f32.mrf.mxu0
        %v3985 = vadd.f32 0.0, %v3984
        %v3986 = vpop.f32.mrf.mxu0
        %v3987 = vpop.f32.mrf.mxu0
        %v3988 = vadd.f32 0.0, %v3987
        %v3989 = vpop.f32.mrf.mxu0
        %3990 = vmatprep.mubr.bf16.mxu0 0
        %3991 = vmatmul.mubr.bf16.gmra.mxu0 %v3826
        %v3992 = vpop.f32.mrf.mxu0
        %v3993 = vadd.f32 0.0, %v3992
        %v3994 = vpop.f32.mrf.mxu0
        %v3995 = vpop.f32.mrf.mxu0
        %v3996 = vadd.f32 0.0, %v3995
        %v3997 = vpop.f32.mrf.mxu0
        %3998 = vmatprep.mubr.bf16.mxu0 0
        %3999 = vmatmul.mubr.bf16.gmra.mxu0 %v3828
        %v4000 = vpop.f32.mrf.mxu0
        %v4001 = vadd.f32 0.0, %v4000
        %v4002 = vpop.f32.mrf.mxu0
        %v4003 = vpop.f32.mrf.mxu0
        %v4004 = vadd.f32 0.0, %v4003
        %v4005 = vpop.f32.mrf.mxu0
        %4006 = vmatprep.mubr.bf16.mxu0 0
        %4007 = vmatmul.mubr.bf16.gmra.mxu0 %v3830
        %v4008 = vpop.f32.mrf.mxu0
        %v4009 = vadd.f32 0.0, %v4008
        %v4010 = vpop.f32.mrf.mxu0
        %v4011 = vpop.f32.mrf.mxu0
        %v4012 = vadd.f32 0.0, %v4011
        %v4013 = vpop.f32.mrf.mxu0
        %4014 = vmatprep.mubr.bf16.mxu0 0
        %4015 = vmatmul.mubr.bf16.gmra.mxu0 %v3832
        %v4016 = vpop.f32.mrf.mxu0
        %v4017 = vadd.f32 0.0, %v4016
        %v4018 = vpop.f32.mrf.mxu0
        %v4019 = vpop.f32.mrf.mxu0
        %v4020 = vadd.f32 0.0, %v4019
        %v4021 = vpop.f32.mrf.mxu0
        %4022 = vmatprep.mubr.bf16.mxu0 0
        %4023 = vmatmul.mubr.bf16.gmra.mxu0 %v3834
        %v4024 = vpop.f32.mrf.mxu0
        %v4025 = vadd.f32 0.0, %v4024
        %v4026 = vpop.f32.mrf.mxu0
        %v4027 = vpop.f32.mrf.mxu0
        %v4028 = vadd.f32 0.0, %v4027
        %v4029 = vpop.f32.mrf.mxu0
        %4030 = vmatprep.mubr.bf16.mxu0 0
        %4031 = vmatmul.mubr.bf16.gmra.mxu0 %v3836
        %v4032 = vpop.f32.mrf.mxu0
        %v4033 = vadd.f32 0.0, %v4032
        %v4034 = vpop.f32.mrf.mxu0
        %v4035 = vpop.f32.mrf.mxu0
        %v4036 = vadd.f32 0.0, %v4035
        %v4037 = vpop.f32.mrf.mxu0
        %4038 = vmatprep.mubr.bf16.mxu0 0
        %4039 = vmatmul.mubr.bf16.gmra.mxu0 %v3838
        %v4040 = vpop.f32.mrf.mxu0
        %v4041 = vadd.f32 0.0, %v4040
        %v4042 = vpop.f32.mrf.mxu0
        %v4043 = vpop.f32.mrf.mxu0
        %v4044 = vadd.f32 0.0, %v4043
        %v4045 = vpop.f32.mrf.mxu0
        %4046 = vmatprep.mubr.bf16.mxu0 0
        %4047 = vmatmul.mubr.bf16.gmra.mxu0 %v3840
        %v4048 = vpop.f32.mrf.mxu0
        %v4049 = vadd.f32 0.0, %v4048
        %v4050 = vpop.f32.mrf.mxu0
        %v4051 = vpop.f32.mrf.mxu0
        %v4052 = vadd.f32 0.0, %v4051
        %v4053 = vpop.f32.mrf.mxu0
        %4054 = vmatprep.mubr.bf16.mxu0 0
        %4055 = vmatmul.mubr.bf16.gmra.mxu0 %v3842
        %v4056 = vpop.f32.mrf.mxu0
        %v4057 = vadd.f32 0.0, %v4056
        %v4058 = vpop.f32.mrf.mxu0
        %v4059 = vpop.f32.mrf.mxu0
        %v4060 = vadd.f32 0.0, %v4059
        %v4061 = vpop.f32.mrf.mxu0
        %4062 = vmatprep.mubr.bf16.mxu0 0
        %4063 = vmatmul.mubr.bf16.gmra.mxu0 %v3844
        %v4064 = vpop.f32.mrf.mxu0
        %v4065 = vadd.f32 0.0, %v4064
        %v4066 = vpop.f32.mrf.mxu0
        %v4067 = vpop.f32.mrf.mxu0
        %v4068 = vadd.f32 0.0, %v4067
        %v4069 = vpop.f32.mrf.mxu0
        %4070 = vmatprep.mubr.bf16.mxu0 0
        %4071 = vmatmul.mubr.bf16.gmra.mxu0 %v3843
        %v4072 = vpop.f32.mrf.mxu0
        %v4073 = vadd.f32 0.0, %v4072
        %v4074 = vpop.f32.mrf.mxu0
        %v4075 = vpop.f32.mrf.mxu0
        %v4076 = vpop.f32.mrf.mxu0
        %4077 = vdwg.mxu0
        %v4078 = vadd.f32 %v3758, %v3945
        %v4079 = vadd.f32 %v3759, %v3948
        %v4080 = vadd.f32 %v3760, %v3953
        %v4081 = vadd.f32 %v3761, %v3956
        %v4082 = vadd.f32 %v3762, %v3961
        %v4083 = vadd.f32 %v3763, %v3964
        %v4084 = vadd.f32 %v3764, %v3969
        %v4085 = vadd.f32 %v3765, %v3972
        %v4086 = vadd.f32 %v3766, %v3977
        %v4087 = vadd.f32 %v3767, %v3980
        %v4088 = vadd.f32 %v3768, %v3985
        %v4089 = vadd.f32 %v3769, %v3988
        %v4090 = vadd.f32 %v3770, %v3993
        %v4091 = vadd.f32 %v3771, %v3996
        %v4092 = vadd.f32 %v3772, %v4001
        %v4093 = vadd.f32 %v3773, %v4004
        %v4094 = vadd.f32 %v3774, %v4009
        %v4095 = vadd.f32 %v3775, %v4012
        %v4096 = vadd.f32 %v3776, %v4017
        %v4097 = vadd.f32 %v3777, %v4020
        %v4098 = vadd.f32 %v3778, %v4025
        %v4099 = vadd.f32 %v3779, %v4028
        %v4100 = vadd.f32 %v3780, %v4033
        %v4101 = vadd.f32 %v3781, %v4036
        %v4102 = vadd.f32 %v3782, %v4041
        %v4103 = vadd.f32 %v3783, %v4044
        %v4104 = vadd.f32 %v3784, %v4049
        %v4105 = vadd.f32 %v3785, %v4052
        %v4106 = vadd.f32 %v3786, %v4057
        %v4107 = vadd.f32 %v3787, %v4060
        %v4108 = vadd.f32 %v3788, %v4065
        %v4109 = vadd.f32 %v3789, %v4068
        %v4110 = vadd.f32 %v3790, %v4073
        %v4111 = vld [vmem:[%s304] sm:$0x1]
        %v4113 = vlaneseq
        %v4114 = vshrl.u32 %v4113, 7
        %v4115 = vsub.s32 0, %v4114
        %v4116 = vrot.slane %v4111, %v4115
        %v4118 = vadd.f32 %v4078, %v4116
        %v4119 = vadd.f32 %v4079, %v4116
        %v4120 = vadd.f32 %v4080, %v4116
        %v4121 = vadd.f32 %v4081, %v4116
        %v4122 = vadd.f32 %v4082, %v4116
        %v4123 = vadd.f32 %v4083, %v4116
        %v4124 = vadd.f32 %v4084, %v4116
        %v4125 = vadd.f32 %v4085, %v4116
        %v4126 = vadd.f32 %v4086, %v4116
        %v4127 = vadd.f32 %v4087, %v4116
        %v4128 = vadd.f32 %v4088, %v4116
        %v4129 = vadd.f32 %v4089, %v4116
        %v4130 = vadd.f32 %v4090, %v4116
        %v4131 = vadd.f32 %v4091, %v4116
        %v4132 = vadd.f32 %v4092, %v4116
        %v4133 = vadd.f32 %v4093, %v4116
        %v4134 = vadd.f32 %v4094, %v4116
        %v4135 = vadd.f32 %v4095, %v4116
        %v4136 = vadd.f32 %v4096, %v4116
        %v4137 = vadd.f32 %v4097, %v4116
        %v4138 = vadd.f32 %v4098, %v4116
        %v4139 = vadd.f32 %v4099, %v4116
        %v4140 = vadd.f32 %v4100, %v4116
        %v4141 = vadd.f32 %v4101, %v4116
        %v4142 = vadd.f32 %v4102, %v4116
        %v4143 = vadd.f32 %v4103, %v4116
        %v4144 = vadd.f32 %v4104, %v4116
        %v4145 = vadd.f32 %v4105, %v4116
        %v4146 = vadd.f32 %v4106, %v4116
        %v4147 = vadd.f32 %v4107, %v4116
        %v4148 = vadd.f32 %v4108, %v4116
        %v4149 = vadd.f32 %v4109, %v4116
        %v4150 = vadd.f32 %v4110, %v4116
        %v4151 = vmax.f32 %v4118, 0.0
        %v4152 = vmax.f32 %v4119, 0.0
        %v4153 = vmax.f32 %v4120, 0.0
        %v4154 = vmax.f32 %v4121, 0.0
        %v4155 = vmax.f32 %v4122, 0.0
        %v4156 = vmax.f32 %v4123, 0.0
        %v4157 = vmax.f32 %v4124, 0.0
        %v4158 = vmax.f32 %v4125, 0.0
        %v4159 = vmax.f32 %v4126, 0.0
        %v4160 = vmax.f32 %v4127, 0.0
        %v4161 = vmax.f32 %v4128, 0.0
        %v4162 = vmax.f32 %v4129, 0.0
        %v4163 = vmax.f32 %v4130, 0.0
        %v4164 = vmax.f32 %v4131, 0.0
        %v4165 = vmax.f32 %v4132, 0.0
        %v4166 = vmax.f32 %v4133, 0.0
        %v4167 = vmax.f32 %v4134, 0.0
        %v4168 = vmax.f32 %v4135, 0.0
        %v4169 = vmax.f32 %v4136, 0.0
        %v4170 = vmax.f32 %v4137, 0.0
        %v4171 = vmax.f32 %v4138, 0.0
        %v4172 = vmax.f32 %v4139, 0.0
        %v4173 = vmax.f32 %v4140, 0.0
        %v4174 = vmax.f32 %v4141, 0.0
        %v4175 = vmax.f32 %v4142, 0.0
        %v4176 = vmax.f32 %v4143, 0.0
        %v4177 = vmax.f32 %v4144, 0.0
        %v4178 = vmax.f32 %v4145, 0.0
        %v4179 = vmax.f32 %v4146, 0.0
        %v4180 = vmax.f32 %v4147, 0.0
        %v4181 = vmax.f32 %v4148, 0.0
        %v4182 = vmax.f32 %v4149, 0.0
        %v4183 = vmax.f32 %v4150, 0.0
        %v4184 = vpack.c.bf16 %v4152, %v4151
        %v4185 = vpack.c.bf16 %v4154, %v4153
        %v4186 = vpack.c.bf16 %v4156, %v4155
        %v4187 = vpack.c.bf16 %v4158, %v4157
        %v4188 = vpack.c.bf16 %v4160, %v4159
        %v4189 = vpack.c.bf16 %v4162, %v4161
        %v4190 = vpack.c.bf16 %v4164, %v4163
        %v4191 = vpack.c.bf16 %v4166, %v4165
        %v4192 = vpack.c.bf16 %v4168, %v4167
        %v4193 = vpack.c.bf16 %v4170, %v4169
        %v4194 = vpack.c.bf16 %v4172, %v4171
        %v4195 = vpack.c.bf16 %v4174, %v4173
        %v4196 = vpack.c.bf16 %v4176, %v4175
        %v4197 = vpack.c.bf16 %v4178, %v4177
        %v4198 = vpack.c.bf16 %v4180, %v4179
        %v4199 = vpack.c.bf16 %v4182, %v4181
        %v4200 = vpack.c.bf16 %v4183, %v4183
        %v4234 = vunpack.c.l.b16 %v467
        %v4235 = vunpack.c.l.b16 %v468
        %v4236 = vunpack.c.l.b16 %v469
        %v4237 = vunpack.c.l.b16 %v470
        %v4238 = vunpack.c.l.b16 %v471
        %v4239 = vunpack.c.l.b16 %v472
        %v4240 = vunpack.c.l.b16 %v473
        %v4241 = vunpack.c.l.b16 %v474
        %v4242 = vunpack.c.l.b16 %v475
        %v4243 = vunpack.c.l.b16 %v476
        %v4244 = vunpack.c.l.b16 %v477
        %v4245 = vunpack.c.l.b16 %v478
        %v4246 = vunpack.c.l.b16 %v479
        %v4247 = vunpack.c.l.b16 %v480
        %v4248 = vunpack.c.l.b16 %v481
        %v4249 = vunpack.c.l.b16 %v482
        %v4250 = vunpack.c.l.b16 %v483
        %v4251 = vunpack.c.l.b16 %v484
        %v4252 = vunpack.c.l.b16 %v485
        %v4253 = vunpack.c.l.b16 %v486
        %v4254 = vunpack.c.l.b16 %v487
        %v4255 = vunpack.c.l.b16 %v488
        %v4256 = vunpack.c.l.b16 %v489
        %v4257 = vunpack.c.l.b16 %v490
        %v4258 = vunpack.c.l.b16 %v491
        %v4259 = vunpack.c.l.b16 %v492
        %v4260 = vunpack.c.l.b16 %v493
        %v4261 = vunpack.c.l.b16 %v494
        %v4262 = vunpack.c.l.b16 %v495
        %v4263 = vunpack.c.l.b16 %v496
        %v4264 = vunpack.c.l.b16 %v497
        %v4265 = vunpack.c.l.b16 %v498
        %v4266 = vunpack.c.l.b16 %v499
        %v4267 = vpack.c.b16 %v4235, %v4234
        %v4268 = vpack.c.b16 %v4237, %v4236
        %v4269 = vpack.c.b16 %v4239, %v4238
        %v4270 = vpack.c.b16 %v4241, %v4240
        %v4271 = vpack.c.b16 %v4243, %v4242
        %v4272 = vpack.c.b16 %v4245, %v4244
        %v4273 = vpack.c.b16 %v4247, %v4246
        %v4274 = vpack.c.b16 %v4249, %v4248
        %v4275 = vpack.c.b16 %v4251, %v4250
        %v4276 = vpack.c.b16 %v4253, %v4252
        %v4277 = vpack.c.b16 %v4255, %v4254
        %v4278 = vpack.c.b16 %v4257, %v4256
        %v4279 = vpack.c.b16 %v4259, %v4258
        %v4280 = vpack.c.b16 %v4261, %v4260
        %v4281 = vpack.c.b16 %v4263, %v4262
        %v4282 = vpack.c.b16 %v4265, %v4264
        %v4283 = vpack.c.b16 %v4266, %v4266
        %v4301 = vmul.bf16 %v4184, %v4267
        %v4302 = vmul.bf16 %v4185, %v4268
        %v4303 = vmul.bf16 %v4186, %v4269
        %v4304 = vmul.bf16 %v4187, %v4270
        %v4305 = vmul.bf16 %v4188, %v4271
        %v4306 = vmul.bf16 %v4189, %v4272
        %v4307 = vmul.bf16 %v4190, %v4273
        %v4308 = vmul.bf16 %v4191, %v4274
        %v4309 = vmul.bf16 %v4192, %v4275
        %v4310 = vmul.bf16 %v4193, %v4276
        %v4311 = vmul.bf16 %v4194, %v4277
        %v4312 = vmul.bf16 %v4195, %v4278
        %v4313 = vmul.bf16 %v4196, %v4279
        %v4314 = vmul.bf16 %v4197, %v4280
        %v4315 = vmul.bf16 %v4198, %v4281
        %v4316 = vmul.bf16 %v4199, %v4282
        %v4317 = vmul.bf16 %v4200, %v4283
        %v4335 = vunpack.c.l.b16 %v4301
        %v4336 = vunpack.c.h.b16 %v4301
        %v4337 = vunpack.c.l.b16 %v4302
        %v4338 = vunpack.c.h.b16 %v4302
        %v4339 = vunpack.c.l.b16 %v4303
        %v4340 = vunpack.c.h.b16 %v4303
        %v4341 = vunpack.c.l.b16 %v4304
        %v4342 = vunpack.c.h.b16 %v4304
        %v4343 = vunpack.c.l.b16 %v4305
        %v4344 = vunpack.c.h.b16 %v4305
        %v4345 = vunpack.c.l.b16 %v4306
        %v4346 = vunpack.c.h.b16 %v4306
        %v4347 = vunpack.c.l.b16 %v4307
        %v4348 = vunpack.c.h.b16 %v4307
        %v4349 = vunpack.c.l.b16 %v4308
        %v4350 = vunpack.c.h.b16 %v4308
        %v4351 = vunpack.c.l.b16 %v4309
        %v4352 = vunpack.c.h.b16 %v4309
        %v4353 = vunpack.c.l.b16 %v4310
        %v4354 = vunpack.c.h.b16 %v4310
        %v4355 = vunpack.c.l.b16 %v4311
        %v4356 = vunpack.c.h.b16 %v4311
        %v4357 = vunpack.c.l.b16 %v4312
        %v4358 = vunpack.c.h.b16 %v4312
        %v4359 = vunpack.c.l.b16 %v4313
        %v4360 = vunpack.c.h.b16 %v4313
        %v4361 = vunpack.c.l.b16 %v4314
        %v4362 = vunpack.c.h.b16 %v4314
        %v4363 = vunpack.c.l.b16 %v4315
        %v4364 = vunpack.c.h.b16 %v4315
        %v4365 = vunpack.c.l.b16 %v4316
        %v4366 = vunpack.c.h.b16 %v4316
        %v4367 = vunpack.c.l.b16 %v4317
        %v4368 = vpack.c.b16 %v4335, %v4335
        %v4369 = vpack.c.b16 %v4336, %v4336
        %v4370 = vpack.c.b16 %v4337, %v4337
        %v4371 = vpack.c.b16 %v4338, %v4338
        %v4372 = vpack.c.b16 %v4339, %v4339
        %v4373 = vpack.c.b16 %v4340, %v4340
        %v4374 = vpack.c.b16 %v4341, %v4341
        %v4375 = vpack.c.b16 %v4342, %v4342
        %v4376 = vpack.c.b16 %v4343, %v4343
        %v4377 = vpack.c.b16 %v4344, %v4344
        %v4378 = vpack.c.b16 %v4345, %v4345
        %v4379 = vpack.c.b16 %v4346, %v4346
        %v4380 = vpack.c.b16 %v4347, %v4347
        %v4381 = vpack.c.b16 %v4348, %v4348
        %v4382 = vpack.c.b16 %v4349, %v4349
        %v4383 = vpack.c.b16 %v4350, %v4350
        %v4384 = vpack.c.b16 %v4351, %v4351
        %v4385 = vpack.c.b16 %v4352, %v4352
        %v4386 = vpack.c.b16 %v4353, %v4353
        %v4387 = vpack.c.b16 %v4354, %v4354
        %v4388 = vpack.c.b16 %v4355, %v4355
        %v4389 = vpack.c.b16 %v4356, %v4356
        %v4390 = vpack.c.b16 %v4357, %v4357
        %v4391 = vpack.c.b16 %v4358, %v4358
        %v4392 = vpack.c.b16 %v4359, %v4359
        %v4393 = vpack.c.b16 %v4360, %v4360
        %v4394 = vpack.c.b16 %v4361, %v4361
        %v4395 = vpack.c.b16 %v4362, %v4362
        %v4396 = vpack.c.b16 %v4363, %v4363
        %v4397 = vpack.c.b16 %v4364, %v4364
        %v4398 = vpack.c.b16 %v4365, %v4365
        %v4399 = vpack.c.b16 %v4366, %v4366
        %v4400 = vpack.c.b16 %v4367, %v4367
        %4434 = vst [vmem:[#allocation2 + $0x8] sm:$0xf] %v4368
        %4435 = vst [vmem:[#allocation2 + $0xc] sm:$0xf] %v4369
        %4436 = vst [vmem:[#allocation2 + $0x10] sm:$0xf] %v4370
        %4437 = vst [vmem:[#allocation2 + $0x14] sm:$0xf] %v4371
        %4438 = vst [vmem:[#allocation2 + $0x18] sm:$0xf] %v4372
        %4439 = vst [vmem:[#allocation2 + $0x1c] sm:$0xf] %v4373
        %4440 = vst [vmem:[#allocation2 + $0x20] sm:$0xf] %v4374
        %4441 = vst [vmem:[#allocation2 + $0x24] sm:$0xf] %v4375
        %4442 = vst [vmem:[#allocation2 + $0x28] sm:$0xf] %v4376
        %4443 = vst [vmem:[#allocation2 + $0x2c] sm:$0xf] %v4377
        %4444 = vst [vmem:[#allocation2 + $0x30] sm:$0xf] %v4378
        %4445 = vst [vmem:[#allocation2 + $0x34] sm:$0xf] %v4379
        %4446 = vst [vmem:[#allocation2 + $0x38] sm:$0xf] %v4380
        %4447 = vst [vmem:[#allocation2 + $0x3c] sm:$0xf] %v4381
        %4448 = vst [vmem:[#allocation2 + $0x40] sm:$0xf] %v4382
        %4449 = vst [vmem:[#allocation2 + $0x44] sm:$0xf] %v4383
        %4450 = vst [vmem:[#allocation2 + $0x48] sm:$0xf] %v4384
        %4451 = vst [vmem:[#allocation2 + $0x4c] sm:$0xf] %v4385
        %4452 = vst [vmem:[#allocation2 + $0x50] sm:$0xf] %v4386
        %4453 = vst [vmem:[#allocation2 + $0x54] sm:$0xf] %v4387
        %4454 = vst [vmem:[#allocation2 + $0x58] sm:$0xf] %v4388
        %4455 = vst [vmem:[#allocation2 + $0x5c] sm:$0xf] %v4389
        %4456 = vst [vmem:[#allocation2 + $0x60] sm:$0xf] %v4390
        %4457 = vst [vmem:[#allocation2 + $0x64] sm:$0xf] %v4391
        %4458 = vst [vmem:[#allocation2 + $0x68] sm:$0xf] %v4392
        %4459 = vst [vmem:[#allocation2 + $0x6c] sm:$0xf] %v4393
        %4460 = vst [vmem:[#allocation2 + $0x70] sm:$0xf] %v4394
        %4461 = vst [vmem:[#allocation2 + $0x74] sm:$0xf] %v4395
        %4462 = vst [vmem:[#allocation2 + $0x78] sm:$0xf] %v4396
        %4463 = vst [vmem:[#allocation2 + $0x7c] sm:$0xf] %v4397
        %4464 = vst [vmem:[#allocation2 + $0x80] sm:$0xf] %v4398
        %4465 = vst [vmem:[#allocation2 + $0x84] sm:$0xf] %v4399
        %4466 = vst [vmem:[#allocation2 + $0x88] sm:$0xf] %v4400
        %p4467 = scmp.gt.s32.totalorder %s28, 0
        // Predicated region
        $region61: #{forward.2} parent=43 // pred_check
          %p4468 = pneg %p4467
        $region62: #{forward.2} parent=43 // pred_check_branch
          %4470 = sbr.rel (%p4468) target = $region64
        $region63: #{forward.2} parent=43 // pred_region
          %v4471 = vld [vmem:[#allocation2] sm:$0xc]
          %v4472 = vld [vmem:[#allocation2 + $0x4] sm:$0xf]
          %v4473 = vld [vmem:[#allocation2 + $0x8] sm:$0xf]
          %v4474 = vld [vmem:[#allocation2 + $0xc] sm:$0xf]
          %v4475 = vld [vmem:[#allocation2 + $0x10] sm:$0xf]
          %v4476 = vld [vmem:[#allocation2 + $0x14] sm:$0xf]
          %v4477 = vld [vmem:[#allocation2 + $0x18] sm:$0xf]
          %v4478 = vld [vmem:[#allocation2 + $0x1c] sm:$0xf]
          %v4479 = vld [vmem:[#allocation2 + $0x20] sm:$0xf]
          %v4480 = vld [vmem:[#allocation2 + $0x24] sm:$0xf]
          %v4481 = vld [vmem:[#allocation2 + $0x28] sm:$0xf]
          %v4482 = vld [vmem:[#allocation2 + $0x2c] sm:$0xf]
          %v4483 = vld [vmem:[#allocation2 + $0x30] sm:$0xf]
          %v4484 = vld [vmem:[#allocation2 + $0x34] sm:$0xf]
          %v4485 = vld [vmem:[#allocation2 + $0x38] sm:$0xf]
          %v4486 = vld [vmem:[#allocation2 + $0x3c] sm:$0xf]
          %v4487 = vld [vmem:[#allocation2 + $0x40] sm:$0xf]
          %v4488 = vld [vmem:[#allocation2 + $0x44] sm:$0xf]
          %v4489 = vld [vmem:[#allocation2 + $0x48] sm:$0xf]
          %v4490 = vld [vmem:[#allocation2 + $0x4c] sm:$0xf]
          %v4491 = vld [vmem:[#allocation2 + $0x50] sm:$0xf]
          %v4492 = vld [vmem:[#allocation2 + $0x54] sm:$0xf]
          %v4493 = vld [vmem:[#allocation2 + $0x58] sm:$0xf]
          %v4494 = vld [vmem:[#allocation2 + $0x5c] sm:$0xf]
          %v4495 = vld [vmem:[#allocation2 + $0x60] sm:$0xf]
          %v4496 = vld [vmem:[#allocation2 + $0x64] sm:$0xf]
          %v4497 = vld [vmem:[#allocation2 + $0x68] sm:$0xf]
          %v4498 = vld [vmem:[#allocation2 + $0x6c] sm:$0xf]
          %v4499 = vld [vmem:[#allocation2 + $0x70] sm:$0xf]
          %v4500 = vld [vmem:[#allocation2 + $0x74] sm:$0xf]
          %v4501 = vld [vmem:[#allocation2 + $0x78] sm:$0xf]
          %v4502 = vld [vmem:[#allocation2 + $0x7c] sm:$0xf]
          %v4503 = vld [vmem:[#allocation2 + $0x80] sm:$0xf]
          %v4504 = vld [vmem:[#allocation2 + $0x84] sm:$0x3]
          %s4505 = scalar_lea.vmem %s295, 576 [#allocation3]
          %v4506 = vld [vmem:[%s4505] sm:$0xf]
          %v4507 = vld [vmem:[%s4505 + $0x4] sm:$0xf]
          %v4508 = vld [vmem:[%s4505 + $0x8] sm:$0xf]
          %v4509 = vld [vmem:[%s4505 + $0xc] sm:$0xf]
          %v4510 = vld [vmem:[%s4505 + $0x10] sm:$0xf]
          %v4511 = vld [vmem:[%s4505 + $0x14] sm:$0xf]
          %v4512 = vld [vmem:[%s4505 + $0x18] sm:$0xf]
          %v4513 = vld [vmem:[%s4505 + $0x1c] sm:$0xf]
          %v4514 = vld [vmem:[%s4505 + $0x20] sm:$0xf]
          %v4515 = vld [vmem:[%s4505 + $0x24] sm:$0xf]
          %v4516 = vld [vmem:[%s4505 + $0x28] sm:$0xf]
          %v4517 = vld [vmem:[%s4505 + $0x2c] sm:$0xf]
          %v4518 = vld [vmem:[%s4505 + $0x30] sm:$0xf]
          %v4519 = vld [vmem:[%s4505 + $0x34] sm:$0xf]
          %v4520 = vld [vmem:[%s4505 + $0x38] sm:$0xf]
          %v4521 = vld [vmem:[%s4505 + $0x3c] sm:$0xf]
          %v4522 = vld [vmem:[#allocation2 + $0x84] sm:$0x7]
          %s4523 = scalar_lea.vmem %s295, 640 [#allocation3]
          %v4524 = vld [vmem:[%s4523] sm:$0xf]
          %v4525 = vld [vmem:[%s4523 + $0x4] sm:$0xf]
          %v4526 = vld [vmem:[%s4523 + $0x8] sm:$0xf]
          %v4527 = vld [vmem:[%s4523 + $0xc] sm:$0xf]
          %v4528 = vld [vmem:[%s4523 + $0x10] sm:$0xf]
          %v4529 = vld [vmem:[%s4523 + $0x14] sm:$0xf]
          %v4530 = vld [vmem:[%s4523 + $0x18] sm:$0xf]
          %v4531 = vld [vmem:[%s4523 + $0x1c] sm:$0xf]
          %v4532 = vld [vmem:[%s4523 + $0x20] sm:$0xf]
          %v4533 = vld [vmem:[%s4523 + $0x24] sm:$0xf]
          %v4534 = vld [vmem:[%s4523 + $0x28] sm:$0xf]
          %v4535 = vld [vmem:[%s4523 + $0x2c] sm:$0xf]
          %v4536 = vld [vmem:[%s4523 + $0x30] sm:$0xf]
          %v4537 = vld [vmem:[%s4523 + $0x34] sm:$0xf]
          %v4538 = vld [vmem:[%s4523 + $0x38] sm:$0xf]
          %v4539 = vld [vmem:[%s4523 + $0x3c] sm:$0xf]
          %v4574 = vunpack.c.l.b16 %v4471
          %v4575 = vunpack.c.l.b16 %v4472
          %v4576 = vunpack.c.l.b16 %v4473
          %v4577 = vunpack.c.l.b16 %v4474
          %v4578 = vunpack.c.l.b16 %v4475
          %v4579 = vunpack.c.l.b16 %v4476
          %v4580 = vunpack.c.l.b16 %v4477
          %v4581 = vunpack.c.l.b16 %v4478
          %v4582 = vunpack.c.l.b16 %v4479
          %v4583 = vunpack.c.l.b16 %v4480
          %v4584 = vunpack.c.l.b16 %v4481
          %v4585 = vunpack.c.l.b16 %v4482
          %v4586 = vunpack.c.l.b16 %v4483
          %v4587 = vunpack.c.l.b16 %v4484
          %v4588 = vunpack.c.l.b16 %v4485
          %v4589 = vunpack.c.l.b16 %v4486
          %v4590 = vunpack.c.l.b16 %v4487
          %v4591 = vunpack.c.l.b16 %v4488
          %v4592 = vunpack.c.l.b16 %v4489
          %v4593 = vunpack.c.l.b16 %v4490
          %v4594 = vunpack.c.l.b16 %v4491
          %v4595 = vunpack.c.l.b16 %v4492
          %v4596 = vunpack.c.l.b16 %v4493
          %v4597 = vunpack.c.l.b16 %v4494
          %v4598 = vunpack.c.l.b16 %v4495
          %v4599 = vunpack.c.l.b16 %v4496
          %v4600 = vunpack.c.l.b16 %v4497
          %v4601 = vunpack.c.l.b16 %v4498
          %v4602 = vunpack.c.l.b16 %v4499
          %v4603 = vunpack.c.l.b16 %v4500
          %v4604 = vunpack.c.l.b16 %v4501
          %v4605 = vunpack.c.l.b16 %v4502
          %v4606 = vunpack.c.l.b16 %v4503
          %v4607 = vunpack.c.l.b16 %v4522
          %v4608 = vpack.c.b16 %v4575, %v4574
          %v4609 = vpack.c.b16 %v4577, %v4576
          %v4610 = vpack.c.b16 %v4579, %v4578
          %v4611 = vpack.c.b16 %v4581, %v4580
          %v4612 = vpack.c.b16 %v4583, %v4582
          %v4613 = vpack.c.b16 %v4585, %v4584
          %v4614 = vpack.c.b16 %v4587, %v4586
          %v4615 = vpack.c.b16 %v4589, %v4588
          %v4616 = vpack.c.b16 %v4591, %v4590
          %v4617 = vpack.c.b16 %v4593, %v4592
          %v4618 = vpack.c.b16 %v4595, %v4594
          %v4619 = vpack.c.b16 %v4597, %v4596
          %v4620 = vpack.c.b16 %v4599, %v4598
          %v4621 = vpack.c.b16 %v4601, %v4600
          %v4622 = vpack.c.b16 %v4603, %v4602
          %v4623 = vpack.c.b16 %v4605, %v4604
          %v4624 = vpack.c.b16 %v4607, %v4606
          %v4626 = vshrl.u32 %v4608, 16
          %v4628 = vrot.slane %v4626, 2
          %v4629 = vshll.u32 %v4608, 16
          %v4631 = vrot.slane %v4629, 3
          %v4632 = vor.u32 %v4628, %v4631
          %v4634 = vshrl.u32 %v4609, 16
          %v4636 = vrot.slane %v4634, 2
          %v4637 = vshll.u32 %v4609, 16
          %v4639 = vrot.slane %v4637, 3
          %v4640 = vor.u32 %v4636, %v4639
          %v4641 = vsel %vm655, %v4632, %v4640
          %v4643 = vshrl.u32 %v4610, 16
          %v4645 = vrot.slane %v4643, 2
          %v4646 = vshll.u32 %v4610, 16
          %v4648 = vrot.slane %v4646, 3
          %v4649 = vor.u32 %v4645, %v4648
          %v4650 = vsel %vm655, %v4640, %v4649
          %v4652 = vshrl.u32 %v4611, 16
          %v4654 = vrot.slane %v4652, 2
          %v4655 = vshll.u32 %v4611, 16
          %v4657 = vrot.slane %v4655, 3
          %v4658 = vor.u32 %v4654, %v4657
          %v4659 = vsel %vm655, %v4649, %v4658
          %v4661 = vshrl.u32 %v4612, 16
          %v4663 = vrot.slane %v4661, 2
          %v4664 = vshll.u32 %v4612, 16
          %v4666 = vrot.slane %v4664, 3
          %v4667 = vor.u32 %v4663, %v4666
          %v4668 = vsel %vm655, %v4658, %v4667
          %v4670 = vshrl.u32 %v4613, 16
          %v4672 = vrot.slane %v4670, 2
          %v4673 = vshll.u32 %v4613, 16
          %v4675 = vrot.slane %v4673, 3
          %v4676 = vor.u32 %v4672, %v4675
          %v4677 = vsel %vm655, %v4667, %v4676
          %v4679 = vshrl.u32 %v4614, 16
          %v4681 = vrot.slane %v4679, 2
          %v4682 = vshll.u32 %v4614, 16
          %v4684 = vrot.slane %v4682, 3
          %v4685 = vor.u32 %v4681, %v4684
          %v4686 = vsel %vm655, %v4676, %v4685
          %v4688 = vshrl.u32 %v4615, 16
          %v4690 = vrot.slane %v4688, 2
          %v4691 = vshll.u32 %v4615, 16
          %v4693 = vrot.slane %v4691, 3
          %v4694 = vor.u32 %v4690, %v4693
          %v4695 = vsel %vm655, %v4685, %v4694
          %v4697 = vshrl.u32 %v4616, 16
          %v4699 = vrot.slane %v4697, 2
          %v4700 = vshll.u32 %v4616, 16
          %v4702 = vrot.slane %v4700, 3
          %v4703 = vor.u32 %v4699, %v4702
          %v4704 = vsel %vm655, %v4694, %v4703
          %v4706 = vshrl.u32 %v4617, 16
          %v4708 = vrot.slane %v4706, 2
          %v4709 = vshll.u32 %v4617, 16
          %v4711 = vrot.slane %v4709, 3
          %v4712 = vor.u32 %v4708, %v4711
          %v4713 = vsel %vm655, %v4703, %v4712
          %v4715 = vshrl.u32 %v4618, 16
          %v4717 = vrot.slane %v4715, 2
          %v4718 = vshll.u32 %v4618, 16
          %v4720 = vrot.slane %v4718, 3
          %v4721 = vor.u32 %v4717, %v4720
          %v4722 = vsel %vm655, %v4712, %v4721
          %v4724 = vshrl.u32 %v4619, 16
          %v4726 = vrot.slane %v4724, 2
          %v4727 = vshll.u32 %v4619, 16
          %v4729 = vrot.slane %v4727, 3
          %v4730 = vor.u32 %v4726, %v4729
          %v4731 = vsel %vm655, %v4721, %v4730
          %v4733 = vshrl.u32 %v4620, 16
          %v4735 = vrot.slane %v4733, 2
          %v4736 = vshll.u32 %v4620, 16
          %v4738 = vrot.slane %v4736, 3
          %v4739 = vor.u32 %v4735, %v4738
          %v4740 = vsel %vm655, %v4730, %v4739
          %v4742 = vshrl.u32 %v4621, 16
          %v4744 = vrot.slane %v4742, 2
          %v4745 = vshll.u32 %v4621, 16
          %v4747 = vrot.slane %v4745, 3
          %v4748 = vor.u32 %v4744, %v4747
          %v4749 = vsel %vm655, %v4739, %v4748
          %v4751 = vshrl.u32 %v4622, 16
          %v4753 = vrot.slane %v4751, 2
          %v4754 = vshll.u32 %v4622, 16
          %v4756 = vrot.slane %v4754, 3
          %v4757 = vor.u32 %v4753, %v4756
          %v4758 = vsel %vm655, %v4748, %v4757
          %v4760 = vshrl.u32 %v4623, 16
          %v4762 = vrot.slane %v4760, 2
          %v4763 = vshll.u32 %v4623, 16
          %v4765 = vrot.slane %v4763, 3
          %v4766 = vor.u32 %v4762, %v4765
          %v4767 = vsel %vm655, %v4757, %v4766
          %v4769 = vshrl.u32 %v4624, 16
          %v4771 = vrot.slane %v4769, 2
          %v4772 = vshll.u32 %v4624, 16
          %v4774 = vrot.slane %v4772, 3
          %v4775 = vor.u32 %v4771, %v4774
          %v4776 = vsel %vm655, %v4766, %v4775
          %v4810 = vunpack.c.l.b16 %v4524
          %v4811 = vunpack.c.l.b16 %v4525
          %v4812 = vunpack.c.l.b16 %v4526
          %v4813 = vunpack.c.l.b16 %v4527
          %v4814 = vunpack.c.l.b16 %v4528
          %v4815 = vunpack.c.l.b16 %v4529
          %v4816 = vunpack.c.l.b16 %v4530
          %v4817 = vunpack.c.l.b16 %v4531
          %v4818 = vunpack.c.l.b16 %v4532
          %v4819 = vunpack.c.l.b16 %v4533
          %v4820 = vunpack.c.l.b16 %v4534
          %v4821 = vunpack.c.l.b16 %v4535
          %v4822 = vunpack.c.l.b16 %v4536
          %v4823 = vunpack.c.l.b16 %v4537
          %v4824 = vunpack.c.l.b16 %v4538
          %v4825 = vunpack.c.l.b16 %v4539
          %v4826 = vpack.c.b16 %v4811, %v4810
          %v4827 = vpack.c.b16 %v4813, %v4812
          %v4828 = vpack.c.b16 %v4815, %v4814
          %v4829 = vpack.c.b16 %v4817, %v4816
          %v4830 = vpack.c.b16 %v4819, %v4818
          %v4831 = vpack.c.b16 %v4821, %v4820
          %v4832 = vpack.c.b16 %v4823, %v4822
          %v4833 = vpack.c.b16 %v4825, %v4824
          %4842 = vmatprep.subr.bf16.mxu0 0
          %4843 = vmatpush1.bf16.msra.mxu0 %v4833
          %4844 = vmatprep.subr.bf16.mxu0 0
          %4845 = vmatpush1.bf16.msra.mxu0 %v4832
          %4846 = vmatprep.subr.bf16.mxu0 0
          %4847 = vmatpush1.bf16.msra.mxu0 %v4831
          %4848 = vmatprep.subr.bf16.mxu0 0
          %4849 = vmatpush1.bf16.msra.mxu0 %v4830
          %4850 = vmatprep.subr.bf16.mxu0 0
          %4851 = vmatpush1.bf16.msra.mxu0 %v4829
          %4852 = vmatprep.subr.bf16.mxu0 0
          %4853 = vmatpush1.bf16.msra.mxu0 %v4828
          %4854 = vmatprep.subr.bf16.mxu0 0
          %4855 = vmatpush1.bf16.msra.mxu0 %v4827
          %4856 = vmatprep.subr.bf16.mxu0 0
          %4857 = vmatpush1.bf16.msra.mxu0 %v4826
          %4858 = vmatprep.subr.bf16.mxu0 0
          %4859 = vmatpush2.bf16.msra.mxu0 0
          %4860 = vmatprep.subr.bf16.mxu0 0
          %4861 = vmatpush2.bf16.msra.mxu0 0
          %4862 = vmatprep.subr.bf16.mxu0 0
          %4863 = vmatpush2.bf16.msra.mxu0 0
          %4864 = vmatprep.subr.bf16.mxu0 0
          %4865 = vmatpush2.bf16.msra.mxu0 0
          %4866 = vmatprep.subr.bf16.mxu0 0
          %4867 = vmatpush2.bf16.msra.mxu0 0
          %4868 = vmatprep.subr.bf16.mxu0 0
          %4869 = vmatpush2.bf16.msra.mxu0 0
          %4870 = vmatprep.subr.bf16.mxu0 0
          %4871 = vmatpush2.bf16.msra.mxu0 0
          %4872 = vmatprep.subr.bf16.mxu0 0
          %4873 = vmatpush2.bf16.msra.mxu0 0
          %4874 = vmatprep.mubr.bf16.mxu0 0
          %4875 = vmatmul.mubr.bf16.gmra.mxu0 %v4641
          %v4876 = vpop.f32.mrf.mxu0
          %v4877 = vadd.f32 0.0, %v4876
          %v4878 = vpop.f32.mrf.mxu0
          %v4879 = vpop.f32.mrf.mxu0
          %v4880 = vadd.f32 0.0, %v4879
          %v4881 = vpop.f32.mrf.mxu0
          %4882 = vmatprep.mubr.bf16.mxu0 0
          %4883 = vmatmul.mubr.bf16.gmra.mxu0 %v4650
          %v4884 = vpop.f32.mrf.mxu0
          %v4885 = vadd.f32 0.0, %v4884
          %v4886 = vpop.f32.mrf.mxu0
          %v4887 = vpop.f32.mrf.mxu0
          %v4888 = vadd.f32 0.0, %v4887
          %v4889 = vpop.f32.mrf.mxu0
          %4890 = vmatprep.mubr.bf16.mxu0 0
          %4891 = vmatmul.mubr.bf16.gmra.mxu0 %v4659
          %v4892 = vpop.f32.mrf.mxu0
          %v4893 = vadd.f32 0.0, %v4892
          %v4894 = vpop.f32.mrf.mxu0
          %v4895 = vpop.f32.mrf.mxu0
          %v4896 = vadd.f32 0.0, %v4895
          %v4897 = vpop.f32.mrf.mxu0
          %4898 = vmatprep.mubr.bf16.mxu0 0
          %4899 = vmatmul.mubr.bf16.gmra.mxu0 %v4668
          %v4900 = vpop.f32.mrf.mxu0
          %v4901 = vadd.f32 0.0, %v4900
          %v4902 = vpop.f32.mrf.mxu0
          %v4903 = vpop.f32.mrf.mxu0
          %v4904 = vadd.f32 0.0, %v4903
          %v4905 = vpop.f32.mrf.mxu0
          %4906 = vmatprep.mubr.bf16.mxu0 0
          %4907 = vmatmul.mubr.bf16.gmra.mxu0 %v4677
          %v4908 = vpop.f32.mrf.mxu0
          %v4909 = vadd.f32 0.0, %v4908
          %v4910 = vpop.f32.mrf.mxu0
          %v4911 = vpop.f32.mrf.mxu0
          %v4912 = vadd.f32 0.0, %v4911
          %v4913 = vpop.f32.mrf.mxu0
          %4914 = vmatprep.mubr.bf16.mxu0 0
          %4915 = vmatmul.mubr.bf16.gmra.mxu0 %v4686
          %v4916 = vpop.f32.mrf.mxu0
          %v4917 = vadd.f32 0.0, %v4916
          %v4918 = vpop.f32.mrf.mxu0
          %v4919 = vpop.f32.mrf.mxu0
          %v4920 = vadd.f32 0.0, %v4919
          %v4921 = vpop.f32.mrf.mxu0
          %4922 = vmatprep.mubr.bf16.mxu0 0
          %4923 = vmatmul.mubr.bf16.gmra.mxu0 %v4695
          %v4924 = vpop.f32.mrf.mxu0
          %v4925 = vadd.f32 0.0, %v4924
          %v4926 = vpop.f32.mrf.mxu0
          %v4927 = vpop.f32.mrf.mxu0
          %v4928 = vadd.f32 0.0, %v4927
          %v4929 = vpop.f32.mrf.mxu0
          %4930 = vmatprep.mubr.bf16.mxu0 0
          %4931 = vmatmul.mubr.bf16.gmra.mxu0 %v4704
          %v4932 = vpop.f32.mrf.mxu0
          %v4933 = vadd.f32 0.0, %v4932
          %v4934 = vpop.f32.mrf.mxu0
          %v4935 = vpop.f32.mrf.mxu0
          %v4936 = vadd.f32 0.0, %v4935
          %v4937 = vpop.f32.mrf.mxu0
          %4938 = vmatprep.mubr.bf16.mxu0 0
          %4939 = vmatmul.mubr.bf16.gmra.mxu0 %v4713
          %v4940 = vpop.f32.mrf.mxu0
          %v4941 = vadd.f32 0.0, %v4940
          %v4942 = vpop.f32.mrf.mxu0
          %v4943 = vpop.f32.mrf.mxu0
          %v4944 = vadd.f32 0.0, %v4943
          %v4945 = vpop.f32.mrf.mxu0
          %4946 = vmatprep.mubr.bf16.mxu0 0
          %4947 = vmatmul.mubr.bf16.gmra.mxu0 %v4722
          %v4948 = vpop.f32.mrf.mxu0
          %v4949 = vadd.f32 0.0, %v4948
          %v4950 = vpop.f32.mrf.mxu0
          %v4951 = vpop.f32.mrf.mxu0
          %v4952 = vadd.f32 0.0, %v4951
          %v4953 = vpop.f32.mrf.mxu0
          %4954 = vmatprep.mubr.bf16.mxu0 0
          %4955 = vmatmul.mubr.bf16.gmra.mxu0 %v4731
          %v4956 = vpop.f32.mrf.mxu0
          %v4957 = vadd.f32 0.0, %v4956
          %v4958 = vpop.f32.mrf.mxu0
          %v4959 = vpop.f32.mrf.mxu0
          %v4960 = vadd.f32 0.0, %v4959
          %v4961 = vpop.f32.mrf.mxu0
          %4962 = vmatprep.mubr.bf16.mxu0 0
          %4963 = vmatmul.mubr.bf16.gmra.mxu0 %v4740
          %v4964 = vpop.f32.mrf.mxu0
          %v4965 = vadd.f32 0.0, %v4964
          %v4966 = vpop.f32.mrf.mxu0
          %v4967 = vpop.f32.mrf.mxu0
          %v4968 = vadd.f32 0.0, %v4967
          %v4969 = vpop.f32.mrf.mxu0
          %4970 = vmatprep.mubr.bf16.mxu0 0
          %4971 = vmatmul.mubr.bf16.gmra.mxu0 %v4749
          %v4972 = vpop.f32.mrf.mxu0
          %v4973 = vadd.f32 0.0, %v4972
          %v4974 = vpop.f32.mrf.mxu0
          %v4975 = vpop.f32.mrf.mxu0
          %v4976 = vadd.f32 0.0, %v4975
          %v4977 = vpop.f32.mrf.mxu0
          %4978 = vmatprep.mubr.bf16.mxu0 0
          %4979 = vmatmul.mubr.bf16.gmra.mxu0 %v4758
          %v4980 = vpop.f32.mrf.mxu0
          %v4981 = vadd.f32 0.0, %v4980
          %v4982 = vpop.f32.mrf.mxu0
          %v4983 = vpop.f32.mrf.mxu0
          %v4984 = vadd.f32 0.0, %v4983
          %v4985 = vpop.f32.mrf.mxu0
          %4986 = vmatprep.mubr.bf16.mxu0 0
          %4987 = vmatmul.mubr.bf16.gmra.mxu0 %v4767
          %v4988 = vpop.f32.mrf.mxu0
          %v4989 = vadd.f32 0.0, %v4988
          %v4990 = vpop.f32.mrf.mxu0
          %v4991 = vpop.f32.mrf.mxu0
          %v4992 = vadd.f32 0.0, %v4991
          %v4993 = vpop.f32.mrf.mxu0
          %4994 = vmatprep.mubr.bf16.mxu0 0
          %4995 = vmatmul.mubr.bf16.gmra.mxu0 %v4776
          %v4996 = vpop.f32.mrf.mxu0
          %v4997 = vadd.f32 0.0, %v4996
          %v4998 = vpop.f32.mrf.mxu0
          %v4999 = vpop.f32.mrf.mxu0
          %v5000 = vadd.f32 0.0, %v4999
          %v5001 = vpop.f32.mrf.mxu0
          %5002 = vmatprep.mubr.bf16.mxu0 0
          %5003 = vmatmul.mubr.bf16.gmra.mxu0 %v4775
          %v5004 = vpop.f32.mrf.mxu0
          %v5005 = vadd.f32 0.0, %v5004
          %v5006 = vpop.f32.mrf.mxu0
          %v5007 = vpop.f32.mrf.mxu0
          %v5008 = vpop.f32.mrf.mxu0
          %5009 = vdwg.mxu0
          %v5011 = vunpack.c.l.b16 %v4504
          %v5012 = vpack.c.b16 %v5011, %v4606
          %v5013 = vrot.slane %v4608, 2
          %v5014 = vrot.slane %v4609, 2
          %v5015 = vsel %vm1044, %v5013, %v5014
          %v5016 = vrot.slane %v4610, 2
          %v5017 = vsel %vm1044, %v5014, %v5016
          %v5018 = vrot.slane %v4611, 2
          %v5019 = vsel %vm1044, %v5016, %v5018
          %v5020 = vrot.slane %v4612, 2
          %v5021 = vsel %vm1044, %v5018, %v5020
          %v5022 = vrot.slane %v4613, 2
          %v5023 = vsel %vm1044, %v5020, %v5022
          %v5024 = vrot.slane %v4614, 2
          %v5025 = vsel %vm1044, %v5022, %v5024
          %v5026 = vrot.slane %v4615, 2
          %v5027 = vsel %vm1044, %v5024, %v5026
          %v5028 = vrot.slane %v4616, 2
          %v5029 = vsel %vm1044, %v5026, %v5028
          %v5030 = vrot.slane %v4617, 2
          %v5031 = vsel %vm1044, %v5028, %v5030
          %v5032 = vrot.slane %v4618, 2
          %v5033 = vsel %vm1044, %v5030, %v5032
          %v5034 = vrot.slane %v4619, 2
          %v5035 = vsel %vm1044, %v5032, %v5034
          %v5036 = vrot.slane %v4620, 2
          %v5037 = vsel %vm1044, %v5034, %v5036
          %v5038 = vrot.slane %v4621, 2
          %v5039 = vsel %vm1044, %v5036, %v5038
          %v5040 = vrot.slane %v4622, 2
          %v5041 = vsel %vm1044, %v5038, %v5040
          %v5042 = vrot.slane %v4623, 2
          %v5043 = vsel %vm1044, %v5040, %v5042
          %v5044 = vrot.slane %v5012, 2
          %v5045 = vsel %vm1044, %v5042, %v5044
          %v5079 = vunpack.c.l.b16 %v4506
          %v5080 = vunpack.c.l.b16 %v4507
          %v5081 = vunpack.c.l.b16 %v4508
          %v5082 = vunpack.c.l.b16 %v4509
          %v5083 = vunpack.c.l.b16 %v4510
          %v5084 = vunpack.c.l.b16 %v4511
          %v5085 = vunpack.c.l.b16 %v4512
          %v5086 = vunpack.c.l.b16 %v4513
          %v5087 = vunpack.c.l.b16 %v4514
          %v5088 = vunpack.c.l.b16 %v4515
          %v5089 = vunpack.c.l.b16 %v4516
          %v5090 = vunpack.c.l.b16 %v4517
          %v5091 = vunpack.c.l.b16 %v4518
          %v5092 = vunpack.c.l.b16 %v4519
          %v5093 = vunpack.c.l.b16 %v4520
          %v5094 = vunpack.c.l.b16 %v4521
          %v5095 = vpack.c.b16 %v5080, %v5079
          %v5096 = vpack.c.b16 %v5082, %v5081
          %v5097 = vpack.c.b16 %v5084, %v5083
          %v5098 = vpack.c.b16 %v5086, %v5085
          %v5099 = vpack.c.b16 %v5088, %v5087
          %v5100 = vpack.c.b16 %v5090, %v5089
          %v5101 = vpack.c.b16 %v5092, %v5091
          %v5102 = vpack.c.b16 %v5094, %v5093
          %5111 = vmatprep.subr.bf16.mxu0 0
          %5112 = vmatpush1.bf16.msra.mxu0 %v5102
          %5113 = vmatprep.subr.bf16.mxu0 0
          %5114 = vmatpush1.bf16.msra.mxu0 %v5101
          %5115 = vmatprep.subr.bf16.mxu0 0
          %5116 = vmatpush1.bf16.msra.mxu0 %v5100
          %5117 = vmatprep.subr.bf16.mxu0 0
          %5118 = vmatpush1.bf16.msra.mxu0 %v5099
          %5119 = vmatprep.subr.bf16.mxu0 0
          %5120 = vmatpush1.bf16.msra.mxu0 %v5098
          %5121 = vmatprep.subr.bf16.mxu0 0
          %5122 = vmatpush1.bf16.msra.mxu0 %v5097
          %5123 = vmatprep.subr.bf16.mxu0 0
          %5124 = vmatpush1.bf16.msra.mxu0 %v5096
          %5125 = vmatprep.subr.bf16.mxu0 0
          %5126 = vmatpush1.bf16.msra.mxu0 %v5095
          %5127 = vmatprep.subr.bf16.mxu0 0
          %5128 = vmatpush2.bf16.msra.mxu0 0
          %5129 = vmatprep.subr.bf16.mxu0 0
          %5130 = vmatpush2.bf16.msra.mxu0 0
          %5131 = vmatprep.subr.bf16.mxu0 0
          %5132 = vmatpush2.bf16.msra.mxu0 0
          %5133 = vmatprep.subr.bf16.mxu0 0
          %5134 = vmatpush2.bf16.msra.mxu0 0
          %5135 = vmatprep.subr.bf16.mxu0 0
          %5136 = vmatpush2.bf16.msra.mxu0 0
          %5137 = vmatprep.subr.bf16.mxu0 0
          %5138 = vmatpush2.bf16.msra.mxu0 0
          %5139 = vmatprep.subr.bf16.mxu0 0
          %5140 = vmatpush2.bf16.msra.mxu0 0
          %5141 = vmatprep.subr.bf16.mxu0 0
          %5142 = vmatpush2.bf16.msra.mxu0 0
          %5143 = vmatprep.mubr.bf16.mxu0 0
          %5144 = vmatmul.mubr.bf16.gmra.mxu0 %v5015
          %v5145 = vpop.f32.mrf.mxu0
          %v5146 = vadd.f32 %v4877, %v5145
          %v5147 = vpop.f32.mrf.mxu0
          %v5148 = vpop.f32.mrf.mxu0
          %v5149 = vadd.f32 %v4880, %v5148
          %v5150 = vpop.f32.mrf.mxu0
          %5151 = vmatprep.mubr.bf16.mxu0 0
          %5152 = vmatmul.mubr.bf16.gmra.mxu0 %v5017
          %v5153 = vpop.f32.mrf.mxu0
          %v5154 = vadd.f32 %v4885, %v5153
          %v5155 = vpop.f32.mrf.mxu0
          %v5156 = vpop.f32.mrf.mxu0
          %v5157 = vadd.f32 %v4888, %v5156
          %v5158 = vpop.f32.mrf.mxu0
          %5159 = vmatprep.mubr.bf16.mxu0 0
          %5160 = vmatmul.mubr.bf16.gmra.mxu0 %v5019
          %v5161 = vpop.f32.mrf.mxu0
          %v5162 = vadd.f32 %v4893, %v5161
          %v5163 = vpop.f32.mrf.mxu0
          %v5164 = vpop.f32.mrf.mxu0
          %v5165 = vadd.f32 %v4896, %v5164
          %v5166 = vpop.f32.mrf.mxu0
          %5167 = vmatprep.mubr.bf16.mxu0 0
          %5168 = vmatmul.mubr.bf16.gmra.mxu0 %v5021
          %v5169 = vpop.f32.mrf.mxu0
          %v5170 = vadd.f32 %v4901, %v5169
          %v5171 = vpop.f32.mrf.mxu0
          %v5172 = vpop.f32.mrf.mxu0
          %v5173 = vadd.f32 %v4904, %v5172
          %v5174 = vpop.f32.mrf.mxu0
          %5175 = vmatprep.mubr.bf16.mxu0 0
          %5176 = vmatmul.mubr.bf16.gmra.mxu0 %v5023
          %v5177 = vpop.f32.mrf.mxu0
          %v5178 = vadd.f32 %v4909, %v5177
          %v5179 = vpop.f32.mrf.mxu0
          %v5180 = vpop.f32.mrf.mxu0
          %v5181 = vadd.f32 %v4912, %v5180
          %v5182 = vpop.f32.mrf.mxu0
          %5183 = vmatprep.mubr.bf16.mxu0 0
          %5184 = vmatmul.mubr.bf16.gmra.mxu0 %v5025
          %v5185 = vpop.f32.mrf.mxu0
          %v5186 = vadd.f32 %v4917, %v5185
          %v5187 = vpop.f32.mrf.mxu0
          %v5188 = vpop.f32.mrf.mxu0
          %v5189 = vadd.f32 %v4920, %v5188
          %v5190 = vpop.f32.mrf.mxu0
          %5191 = vmatprep.mubr.bf16.mxu0 0
          %5192 = vmatmul.mubr.bf16.gmra.mxu0 %v5027
          %v5193 = vpop.f32.mrf.mxu0
          %v5194 = vadd.f32 %v4925, %v5193
          %v5195 = vpop.f32.mrf.mxu0
          %v5196 = vpop.f32.mrf.mxu0
          %v5197 = vadd.f32 %v4928, %v5196
          %v5198 = vpop.f32.mrf.mxu0
          %5199 = vmatprep.mubr.bf16.mxu0 0
          %5200 = vmatmul.mubr.bf16.gmra.mxu0 %v5029
          %v5201 = vpop.f32.mrf.mxu0
          %v5202 = vadd.f32 %v4933, %v5201
          %v5203 = vpop.f32.mrf.mxu0
          %v5204 = vpop.f32.mrf.mxu0
          %v5205 = vadd.f32 %v4936, %v5204
          %v5206 = vpop.f32.mrf.mxu0
          %5207 = vmatprep.mubr.bf16.mxu0 0
          %5208 = vmatmul.mubr.bf16.gmra.mxu0 %v5031
          %v5209 = vpop.f32.mrf.mxu0
          %v5210 = vadd.f32 %v4941, %v5209
          %v5211 = vpop.f32.mrf.mxu0
          %v5212 = vpop.f32.mrf.mxu0
          %v5213 = vadd.f32 %v4944, %v5212
          %v5214 = vpop.f32.mrf.mxu0
          %5215 = vmatprep.mubr.bf16.mxu0 0
          %5216 = vmatmul.mubr.bf16.gmra.mxu0 %v5033
          %v5217 = vpop.f32.mrf.mxu0
          %v5218 = vadd.f32 %v4949, %v5217
          %v5219 = vpop.f32.mrf.mxu0
          %v5220 = vpop.f32.mrf.mxu0
          %v5221 = vadd.f32 %v4952, %v5220
          %v5222 = vpop.f32.mrf.mxu0
          %5223 = vmatprep.mubr.bf16.mxu0 0
          %5224 = vmatmul.mubr.bf16.gmra.mxu0 %v5035
          %v5225 = vpop.f32.mrf.mxu0
          %v5226 = vadd.f32 %v4957, %v5225
          %v5227 = vpop.f32.mrf.mxu0
          %v5228 = vpop.f32.mrf.mxu0
          %v5229 = vadd.f32 %v4960, %v5228
          %v5230 = vpop.f32.mrf.mxu0
          %5231 = vmatprep.mubr.bf16.mxu0 0
          %5232 = vmatmul.mubr.bf16.gmra.mxu0 %v5037
          %v5233 = vpop.f32.mrf.mxu0
          %v5234 = vadd.f32 %v4965, %v5233
          %v5235 = vpop.f32.mrf.mxu0
          %v5236 = vpop.f32.mrf.mxu0
          %v5237 = vadd.f32 %v4968, %v5236
          %v5238 = vpop.f32.mrf.mxu0
          %5239 = vmatprep.mubr.bf16.mxu0 0
          %5240 = vmatmul.mubr.bf16.gmra.mxu0 %v5039
          %v5241 = vpop.f32.mrf.mxu0
          %v5242 = vadd.f32 %v4973, %v5241
          %v5243 = vpop.f32.mrf.mxu0
          %v5244 = vpop.f32.mrf.mxu0
          %v5245 = vadd.f32 %v4976, %v5244
          %v5246 = vpop.f32.mrf.mxu0
          %5247 = vmatprep.mubr.bf16.mxu0 0
          %5248 = vmatmul.mubr.bf16.gmra.mxu0 %v5041
          %v5249 = vpop.f32.mrf.mxu0
          %v5250 = vadd.f32 %v4981, %v5249
          %v5251 = vpop.f32.mrf.mxu0
          %v5252 = vpop.f32.mrf.mxu0
          %v5253 = vadd.f32 %v4984, %v5252
          %v5254 = vpop.f32.mrf.mxu0
          %5255 = vmatprep.mubr.bf16.mxu0 0
          %5256 = vmatmul.mubr.bf16.gmra.mxu0 %v5043
          %v5257 = vpop.f32.mrf.mxu0
          %v5258 = vadd.f32 %v4989, %v5257
          %v5259 = vpop.f32.mrf.mxu0
          %v5260 = vpop.f32.mrf.mxu0
          %v5261 = vadd.f32 %v4992, %v5260
          %v5262 = vpop.f32.mrf.mxu0
          %5263 = vmatprep.mubr.bf16.mxu0 0
          %5264 = vmatmul.mubr.bf16.gmra.mxu0 %v5045
          %v5265 = vpop.f32.mrf.mxu0
          %v5266 = vadd.f32 %v4997, %v5265
          %v5267 = vpop.f32.mrf.mxu0
          %v5268 = vpop.f32.mrf.mxu0
          %v5269 = vadd.f32 %v5000, %v5268
          %v5270 = vpop.f32.mrf.mxu0
          %5271 = vmatprep.mubr.bf16.mxu0 0
          %5272 = vmatmul.mubr.bf16.gmra.mxu0 %v5044
          %v5273 = vpop.f32.mrf.mxu0
          %v5274 = vadd.f32 %v5005, %v5273
          %v5275 = vpop.f32.mrf.mxu0
          %v5276 = vpop.f32.mrf.mxu0
          %v5277 = vpop.f32.mrf.mxu0
          %5278 = vdwg.mxu0
          %v5279 = vld [vmem:[#allocation2] sm:$0x8]
          %s5280 = scalar_lea.vmem %s295, 704 [#allocation3]
          %v5281 = vld [vmem:[%s5280] sm:$0xf]
          %v5282 = vld [vmem:[%s5280 + $0x4] sm:$0xf]
          %v5283 = vld [vmem:[%s5280 + $0x8] sm:$0xf]
          %v5284 = vld [vmem:[%s5280 + $0xc] sm:$0xf]
          %v5285 = vld [vmem:[%s5280 + $0x10] sm:$0xf]
          %v5286 = vld [vmem:[%s5280 + $0x14] sm:$0xf]
          %v5287 = vld [vmem:[%s5280 + $0x18] sm:$0xf]
          %v5288 = vld [vmem:[%s5280 + $0x1c] sm:$0xf]
          %v5289 = vld [vmem:[%s5280 + $0x20] sm:$0xf]
          %v5290 = vld [vmem:[%s5280 + $0x24] sm:$0xf]
          %v5291 = vld [vmem:[%s5280 + $0x28] sm:$0xf]
          %v5292 = vld [vmem:[%s5280 + $0x2c] sm:$0xf]
          %v5293 = vld [vmem:[%s5280 + $0x30] sm:$0xf]
          %v5294 = vld [vmem:[%s5280 + $0x34] sm:$0xf]
          %v5295 = vld [vmem:[%s5280 + $0x38] sm:$0xf]
          %v5296 = vld [vmem:[%s5280 + $0x3c] sm:$0xf]
          %v5298 = vunpack.c.l.b16 %v5279
          %v5299 = vpack.c.b16 %v4575, %v5298
          %v5300 = vrot.slane %v5299, 3
          %v5301 = vrot.slane %v4609, 3
          %v5302 = vsel %vm1332, %v5300, %v5301
          %v5303 = vrot.slane %v4610, 3
          %v5304 = vsel %vm1332, %v5301, %v5303
          %v5305 = vrot.slane %v4611, 3
          %v5306 = vsel %vm1332, %v5303, %v5305
          %v5307 = vrot.slane %v4612, 3
          %v5308 = vsel %vm1332, %v5305, %v5307
          %v5309 = vrot.slane %v4613, 3
          %v5310 = vsel %vm1332, %v5307, %v5309
          %v5311 = vrot.slane %v4614, 3
          %v5312 = vsel %vm1332, %v5309, %v5311
          %v5313 = vrot.slane %v4615, 3
          %v5314 = vsel %vm1332, %v5311, %v5313
          %v5315 = vrot.slane %v4616, 3
          %v5316 = vsel %vm1332, %v5313, %v5315
          %v5317 = vrot.slane %v4617, 3
          %v5318 = vsel %vm1332, %v5315, %v5317
          %v5319 = vrot.slane %v4618, 3
          %v5320 = vsel %vm1332, %v5317, %v5319
          %v5321 = vrot.slane %v4619, 3
          %v5322 = vsel %vm1332, %v5319, %v5321
          %v5323 = vrot.slane %v4620, 3
          %v5324 = vsel %vm1332, %v5321, %v5323
          %v5325 = vrot.slane %v4621, 3
          %v5326 = vsel %vm1332, %v5323, %v5325
          %v5327 = vrot.slane %v4622, 3
          %v5328 = vsel %vm1332, %v5325, %v5327
          %v5329 = vrot.slane %v4623, 3
          %v5330 = vsel %vm1332, %v5327, %v5329
          %v5331 = vrot.slane %v4624, 3
          %v5332 = vsel %vm1332, %v5329, %v5331
          %v5366 = vunpack.c.l.b16 %v5281
          %v5367 = vunpack.c.l.b16 %v5282
          %v5368 = vunpack.c.l.b16 %v5283
          %v5369 = vunpack.c.l.b16 %v5284
          %v5370 = vunpack.c.l.b16 %v5285
          %v5371 = vunpack.c.l.b16 %v5286
          %v5372 = vunpack.c.l.b16 %v5287
          %v5373 = vunpack.c.l.b16 %v5288
          %v5374 = vunpack.c.l.b16 %v5289
          %v5375 = vunpack.c.l.b16 %v5290
          %v5376 = vunpack.c.l.b16 %v5291
          %v5377 = vunpack.c.l.b16 %v5292
          %v5378 = vunpack.c.l.b16 %v5293
          %v5379 = vunpack.c.l.b16 %v5294
          %v5380 = vunpack.c.l.b16 %v5295
          %v5381 = vunpack.c.l.b16 %v5296
          %v5382 = vpack.c.b16 %v5367, %v5366
          %v5383 = vpack.c.b16 %v5369, %v5368
          %v5384 = vpack.c.b16 %v5371, %v5370
          %v5385 = vpack.c.b16 %v5373, %v5372
          %v5386 = vpack.c.b16 %v5375, %v5374
          %v5387 = vpack.c.b16 %v5377, %v5376
          %v5388 = vpack.c.b16 %v5379, %v5378
          %v5389 = vpack.c.b16 %v5381, %v5380
          %5398 = vmatprep.subr.bf16.mxu0 0
          %5399 = vmatpush1.bf16.msra.mxu0 %v5389
          %5400 = vmatprep.subr.bf16.mxu0 0
          %5401 = vmatpush1.bf16.msra.mxu0 %v5388
          %5402 = vmatprep.subr.bf16.mxu0 0
          %5403 = vmatpush1.bf16.msra.mxu0 %v5387
          %5404 = vmatprep.subr.bf16.mxu0 0
          %5405 = vmatpush1.bf16.msra.mxu0 %v5386
          %5406 = vmatprep.subr.bf16.mxu0 0
          %5407 = vmatpush1.bf16.msra.mxu0 %v5385
          %5408 = vmatprep.subr.bf16.mxu0 0
          %5409 = vmatpush1.bf16.msra.mxu0 %v5384
          %5410 = vmatprep.subr.bf16.mxu0 0
          %5411 = vmatpush1.bf16.msra.mxu0 %v5383
          %5412 = vmatprep.subr.bf16.mxu0 0
          %5413 = vmatpush1.bf16.msra.mxu0 %v5382
          %5414 = vmatprep.subr.bf16.mxu0 0
          %5415 = vmatpush2.bf16.msra.mxu0 0
          %5416 = vmatprep.subr.bf16.mxu0 0
          %5417 = vmatpush2.bf16.msra.mxu0 0
          %5418 = vmatprep.subr.bf16.mxu0 0
          %5419 = vmatpush2.bf16.msra.mxu0 0
          %5420 = vmatprep.subr.bf16.mxu0 0
          %5421 = vmatpush2.bf16.msra.mxu0 0
          %5422 = vmatprep.subr.bf16.mxu0 0
          %5423 = vmatpush2.bf16.msra.mxu0 0
          %5424 = vmatprep.subr.bf16.mxu0 0
          %5425 = vmatpush2.bf16.msra.mxu0 0
          %5426 = vmatprep.subr.bf16.mxu0 0
          %5427 = vmatpush2.bf16.msra.mxu0 0
          %5428 = vmatprep.subr.bf16.mxu0 0
          %5429 = vmatpush2.bf16.msra.mxu0 0
          %5430 = vmatprep.mubr.bf16.mxu0 0
          %5431 = vmatmul.mubr.bf16.gmra.mxu0 %v5302
          %v5432 = vpop.f32.mrf.mxu0
          %v5433 = vadd.f32 0.0, %v5432
          %v5434 = vpop.f32.mrf.mxu0
          %v5435 = vpop.f32.mrf.mxu0
          %v5436 = vadd.f32 0.0, %v5435
          %v5437 = vpop.f32.mrf.mxu0
          %5438 = vmatprep.mubr.bf16.mxu0 0
          %5439 = vmatmul.mubr.bf16.gmra.mxu0 %v5304
          %v5440 = vpop.f32.mrf.mxu0
          %v5441 = vadd.f32 0.0, %v5440
          %v5442 = vpop.f32.mrf.mxu0
          %v5443 = vpop.f32.mrf.mxu0
          %v5444 = vadd.f32 0.0, %v5443
          %v5445 = vpop.f32.mrf.mxu0
          %5446 = vmatprep.mubr.bf16.mxu0 0
          %5447 = vmatmul.mubr.bf16.gmra.mxu0 %v5306
          %v5448 = vpop.f32.mrf.mxu0
          %v5449 = vadd.f32 0.0, %v5448
          %v5450 = vpop.f32.mrf.mxu0
          %v5451 = vpop.f32.mrf.mxu0
          %v5452 = vadd.f32 0.0, %v5451
          %v5453 = vpop.f32.mrf.mxu0
          %5454 = vmatprep.mubr.bf16.mxu0 0
          %5455 = vmatmul.mubr.bf16.gmra.mxu0 %v5308
          %v5456 = vpop.f32.mrf.mxu0
          %v5457 = vadd.f32 0.0, %v5456
          %v5458 = vpop.f32.mrf.mxu0
          %v5459 = vpop.f32.mrf.mxu0
          %v5460 = vadd.f32 0.0, %v5459
          %v5461 = vpop.f32.mrf.mxu0
          %5462 = vmatprep.mubr.bf16.mxu0 0
          %5463 = vmatmul.mubr.bf16.gmra.mxu0 %v5310
          %v5464 = vpop.f32.mrf.mxu0
          %v5465 = vadd.f32 0.0, %v5464
          %v5466 = vpop.f32.mrf.mxu0
          %v5467 = vpop.f32.mrf.mxu0
          %v5468 = vadd.f32 0.0, %v5467
          %v5469 = vpop.f32.mrf.mxu0
          %5470 = vmatprep.mubr.bf16.mxu0 0
          %5471 = vmatmul.mubr.bf16.gmra.mxu0 %v5312
          %v5472 = vpop.f32.mrf.mxu0
          %v5473 = vadd.f32 0.0, %v5472
          %v5474 = vpop.f32.mrf.mxu0
          %v5475 = vpop.f32.mrf.mxu0
          %v5476 = vadd.f32 0.0, %v5475
          %v5477 = vpop.f32.mrf.mxu0
          %5478 = vmatprep.mubr.bf16.mxu0 0
          %5479 = vmatmul.mubr.bf16.gmra.mxu0 %v5314
          %v5480 = vpop.f32.mrf.mxu0
          %v5481 = vadd.f32 0.0, %v5480
          %v5482 = vpop.f32.mrf.mxu0
          %v5483 = vpop.f32.mrf.mxu0
          %v5484 = vadd.f32 0.0, %v5483
          %v5485 = vpop.f32.mrf.mxu0
          %5486 = vmatprep.mubr.bf16.mxu0 0
          %5487 = vmatmul.mubr.bf16.gmra.mxu0 %v5316
          %v5488 = vpop.f32.mrf.mxu0
          %v5489 = vadd.f32 0.0, %v5488
          %v5490 = vpop.f32.mrf.mxu0
          %v5491 = vpop.f32.mrf.mxu0
          %v5492 = vadd.f32 0.0, %v5491
          %v5493 = vpop.f32.mrf.mxu0
          %5494 = vmatprep.mubr.bf16.mxu0 0
          %5495 = vmatmul.mubr.bf16.gmra.mxu0 %v5318
          %v5496 = vpop.f32.mrf.mxu0
          %v5497 = vadd.f32 0.0, %v5496
          %v5498 = vpop.f32.mrf.mxu0
          %v5499 = vpop.f32.mrf.mxu0
          %v5500 = vadd.f32 0.0, %v5499
          %v5501 = vpop.f32.mrf.mxu0
          %5502 = vmatprep.mubr.bf16.mxu0 0
          %5503 = vmatmul.mubr.bf16.gmra.mxu0 %v5320
          %v5504 = vpop.f32.mrf.mxu0
          %v5505 = vadd.f32 0.0, %v5504
          %v5506 = vpop.f32.mrf.mxu0
          %v5507 = vpop.f32.mrf.mxu0
          %v5508 = vadd.f32 0.0, %v5507
          %v5509 = vpop.f32.mrf.mxu0
          %5510 = vmatprep.mubr.bf16.mxu0 0
          %5511 = vmatmul.mubr.bf16.gmra.mxu0 %v5322
          %v5512 = vpop.f32.mrf.mxu0
          %v5513 = vadd.f32 0.0, %v5512
          %v5514 = vpop.f32.mrf.mxu0
          %v5515 = vpop.f32.mrf.mxu0
          %v5516 = vadd.f32 0.0, %v5515
          %v5517 = vpop.f32.mrf.mxu0
          %5518 = vmatprep.mubr.bf16.mxu0 0
          %5519 = vmatmul.mubr.bf16.gmra.mxu0 %v5324
          %v5520 = vpop.f32.mrf.mxu0
          %v5521 = vadd.f32 0.0, %v5520
          %v5522 = vpop.f32.mrf.mxu0
          %v5523 = vpop.f32.mrf.mxu0
          %v5524 = vadd.f32 0.0, %v5523
          %v5525 = vpop.f32.mrf.mxu0
          %5526 = vmatprep.mubr.bf16.mxu0 0
          %5527 = vmatmul.mubr.bf16.gmra.mxu0 %v5326
          %v5528 = vpop.f32.mrf.mxu0
          %v5529 = vadd.f32 0.0, %v5528
          %v5530 = vpop.f32.mrf.mxu0
          %v5531 = vpop.f32.mrf.mxu0
          %v5532 = vadd.f32 0.0, %v5531
          %v5533 = vpop.f32.mrf.mxu0
          %5534 = vmatprep.mubr.bf16.mxu0 0
          %5535 = vmatmul.mubr.bf16.gmra.mxu0 %v5328
          %v5536 = vpop.f32.mrf.mxu0
          %v5537 = vadd.f32 0.0, %v5536
          %v5538 = vpop.f32.mrf.mxu0
          %v5539 = vpop.f32.mrf.mxu0
          %v5540 = vadd.f32 0.0, %v5539
          %v5541 = vpop.f32.mrf.mxu0
          %5542 = vmatprep.mubr.bf16.mxu0 0
          %5543 = vmatmul.mubr.bf16.gmra.mxu0 %v5330
          %v5544 = vpop.f32.mrf.mxu0
          %v5545 = vadd.f32 0.0, %v5544
          %v5546 = vpop.f32.mrf.mxu0
          %v5547 = vpop.f32.mrf.mxu0
          %v5548 = vadd.f32 0.0, %v5547
          %v5549 = vpop.f32.mrf.mxu0
          %5550 = vmatprep.mubr.bf16.mxu0 0
          %5551 = vmatmul.mubr.bf16.gmra.mxu0 %v5332
          %v5552 = vpop.f32.mrf.mxu0
          %v5553 = vadd.f32 0.0, %v5552
          %v5554 = vpop.f32.mrf.mxu0
          %v5555 = vpop.f32.mrf.mxu0
          %v5556 = vadd.f32 0.0, %v5555
          %v5557 = vpop.f32.mrf.mxu0
          %5558 = vmatprep.mubr.bf16.mxu0 0
          %5559 = vmatmul.mubr.bf16.gmra.mxu0 %v5331
          %v5560 = vpop.f32.mrf.mxu0
          %v5561 = vadd.f32 0.0, %v5560
          %v5562 = vpop.f32.mrf.mxu0
          %v5563 = vpop.f32.mrf.mxu0
          %v5564 = vpop.f32.mrf.mxu0
          %5565 = vdwg.mxu0
          %v5566 = vadd.f32 %v5146, %v5433
          %v5567 = vadd.f32 %v5149, %v5436
          %v5568 = vadd.f32 %v5154, %v5441
          %v5569 = vadd.f32 %v5157, %v5444
          %v5570 = vadd.f32 %v5162, %v5449
          %v5571 = vadd.f32 %v5165, %v5452
          %v5572 = vadd.f32 %v5170, %v5457
          %v5573 = vadd.f32 %v5173, %v5460
          %v5574 = vadd.f32 %v5178, %v5465
          %v5575 = vadd.f32 %v5181, %v5468
          %v5576 = vadd.f32 %v5186, %v5473
          %v5577 = vadd.f32 %v5189, %v5476
          %v5578 = vadd.f32 %v5194, %v5481
          %v5579 = vadd.f32 %v5197, %v5484
          %v5580 = vadd.f32 %v5202, %v5489
          %v5581 = vadd.f32 %v5205, %v5492
          %v5582 = vadd.f32 %v5210, %v5497
          %v5583 = vadd.f32 %v5213, %v5500
          %v5584 = vadd.f32 %v5218, %v5505
          %v5585 = vadd.f32 %v5221, %v5508
          %v5586 = vadd.f32 %v5226, %v5513
          %v5587 = vadd.f32 %v5229, %v5516
          %v5588 = vadd.f32 %v5234, %v5521
          %v5589 = vadd.f32 %v5237, %v5524
          %v5590 = vadd.f32 %v5242, %v5529
          %v5591 = vadd.f32 %v5245, %v5532
          %v5592 = vadd.f32 %v5250, %v5537
          %v5593 = vadd.f32 %v5253, %v5540
          %v5594 = vadd.f32 %v5258, %v5545
          %v5595 = vadd.f32 %v5261, %v5548
          %v5596 = vadd.f32 %v5266, %v5553
          %v5597 = vadd.f32 %v5269, %v5556
          %v5598 = vadd.f32 %v5274, %v5561
          %v5599 = vld [vmem:[#allocation2 + $0x4] sm:$0x8]
          %v5600 = vld [vmem:[#allocation2 + $0x8] sm:$0xf]
          %v5601 = vld [vmem:[#allocation2 + $0xc] sm:$0xf]
          %v5602 = vld [vmem:[#allocation2 + $0x10] sm:$0xf]
          %v5603 = vld [vmem:[#allocation2 + $0x14] sm:$0xf]
          %v5604 = vld [vmem:[#allocation2 + $0x18] sm:$0xf]
          %v5605 = vld [vmem:[#allocation2 + $0x1c] sm:$0xf]
          %v5606 = vld [vmem:[#allocation2 + $0x20] sm:$0xf]
          %v5607 = vld [vmem:[#allocation2 + $0x24] sm:$0xf]
          %v5608 = vld [vmem:[#allocation2 + $0x28] sm:$0xf]
          %v5609 = vld [vmem:[#allocation2 + $0x2c] sm:$0xf]
          %v5610 = vld [vmem:[#allocation2 + $0x30] sm:$0xf]
          %v5611 = vld [vmem:[#allocation2 + $0x34] sm:$0xf]
          %v5612 = vld [vmem:[#allocation2 + $0x38] sm:$0xf]
          %v5613 = vld [vmem:[#allocation2 + $0x3c] sm:$0xf]
          %v5614 = vld [vmem:[#allocation2 + $0x40] sm:$0xf]
          %v5615 = vld [vmem:[#allocation2 + $0x44] sm:$0xf]
          %v5616 = vld [vmem:[#allocation2 + $0x48] sm:$0xf]
          %v5617 = vld [vmem:[#allocation2 + $0x4c] sm:$0xf]
          %v5618 = vld [vmem:[#allocation2 + $0x50] sm:$0xf]
          %v5619 = vld [vmem:[#allocation2 + $0x54] sm:$0xf]
          %v5620 = vld [vmem:[#allocation2 + $0x58] sm:$0xf]
          %v5621 = vld [vmem:[#allocation2 + $0x5c] sm:$0xf]
          %v5622 = vld [vmem:[#allocation2 + $0x60] sm:$0xf]
          %v5623 = vld [vmem:[#allocation2 + $0x64] sm:$0xf]
          %v5624 = vld [vmem:[#allocation2 + $0x68] sm:$0xf]
          %v5625 = vld [vmem:[#allocation2 + $0x6c] sm:$0xf]
          %v5626 = vld [vmem:[#allocation2 + $0x70] sm:$0xf]
          %v5627 = vld [vmem:[#allocation2 + $0x74] sm:$0xf]
          %v5628 = vld [vmem:[#allocation2 + $0x78] sm:$0xf]
          %v5629 = vld [vmem:[#allocation2 + $0x7c] sm:$0xf]
          %v5630 = vld [vmem:[#allocation2 + $0x80] sm:$0xf]
          %v5631 = vld [vmem:[#allocation2 + $0x84] sm:$0xf]
          %v5632 = vld [vmem:[#allocation2 + $0x88] sm:$0xf]
          %s5633 = scalar_lea.vmem %s295, 768 [#allocation3]
          %v5634 = vld [vmem:[%s5633] sm:$0xf]
          %v5635 = vld [vmem:[%s5633 + $0x4] sm:$0xf]
          %v5636 = vld [vmem:[%s5633 + $0x8] sm:$0xf]
          %v5637 = vld [vmem:[%s5633 + $0xc] sm:$0xf]
          %v5638 = vld [vmem:[%s5633 + $0x10] sm:$0xf]
          %v5639 = vld [vmem:[%s5633 + $0x14] sm:$0xf]
          %v5640 = vld [vmem:[%s5633 + $0x18] sm:$0xf]
          %v5641 = vld [vmem:[%s5633 + $0x1c] sm:$0xf]
          %v5642 = vld [vmem:[%s5633 + $0x20] sm:$0xf]
          %v5643 = vld [vmem:[%s5633 + $0x24] sm:$0xf]
          %v5644 = vld [vmem:[%s5633 + $0x28] sm:$0xf]
          %v5645 = vld [vmem:[%s5633 + $0x2c] sm:$0xf]
          %v5646 = vld [vmem:[%s5633 + $0x30] sm:$0xf]
          %v5647 = vld [vmem:[%s5633 + $0x34] sm:$0xf]
          %v5648 = vld [vmem:[%s5633 + $0x38] sm:$0xf]
          %v5649 = vld [vmem:[%s5633 + $0x3c] sm:$0xf]
          %v5684 = vunpack.c.l.b16 %v5599
          %v5685 = vunpack.c.l.b16 %v5600
          %v5686 = vunpack.c.l.b16 %v5601
          %v5687 = vunpack.c.l.b16 %v5602
          %v5688 = vunpack.c.l.b16 %v5603
          %v5689 = vunpack.c.l.b16 %v5604
          %v5690 = vunpack.c.l.b16 %v5605
          %v5691 = vunpack.c.l.b16 %v5606
          %v5692 = vunpack.c.l.b16 %v5607
          %v5693 = vunpack.c.l.b16 %v5608
          %v5694 = vunpack.c.l.b16 %v5609
          %v5695 = vunpack.c.l.b16 %v5610
          %v5696 = vunpack.c.l.b16 %v5611
          %v5697 = vunpack.c.l.b16 %v5612
          %v5698 = vunpack.c.l.b16 %v5613
          %v5699 = vunpack.c.l.b16 %v5614
          %v5700 = vunpack.c.l.b16 %v5615
          %v5701 = vunpack.c.l.b16 %v5616
          %v5702 = vunpack.c.l.b16 %v5617
          %v5703 = vunpack.c.l.b16 %v5618
          %v5704 = vunpack.c.l.b16 %v5619
          %v5705 = vunpack.c.l.b16 %v5620
          %v5706 = vunpack.c.l.b16 %v5621
          %v5707 = vunpack.c.l.b16 %v5622
          %v5708 = vunpack.c.l.b16 %v5623
          %v5709 = vunpack.c.l.b16 %v5624
          %v5710 = vunpack.c.l.b16 %v5625
          %v5711 = vunpack.c.l.b16 %v5626
          %v5712 = vunpack.c.l.b16 %v5627
          %v5713 = vunpack.c.l.b16 %v5628
          %v5714 = vunpack.c.l.b16 %v5629
          %v5715 = vunpack.c.l.b16 %v5630
          %v5716 = vunpack.c.l.b16 %v5631
          %v5717 = vunpack.c.l.b16 %v5632
          %v5718 = vpack.c.b16 %v5685, %v5684
          %v5719 = vpack.c.b16 %v5687, %v5686
          %v5720 = vpack.c.b16 %v5689, %v5688
          %v5721 = vpack.c.b16 %v5691, %v5690
          %v5722 = vpack.c.b16 %v5693, %v5692
          %v5723 = vpack.c.b16 %v5695, %v5694
          %v5724 = vpack.c.b16 %v5697, %v5696
          %v5725 = vpack.c.b16 %v5699, %v5698
          %v5726 = vpack.c.b16 %v5701, %v5700
          %v5727 = vpack.c.b16 %v5703, %v5702
          %v5728 = vpack.c.b16 %v5705, %v5704
          %v5729 = vpack.c.b16 %v5707, %v5706
          %v5730 = vpack.c.b16 %v5709, %v5708
          %v5731 = vpack.c.b16 %v5711, %v5710
          %v5732 = vpack.c.b16 %v5713, %v5712
          %v5733 = vpack.c.b16 %v5715, %v5714
          %v5734 = vpack.c.b16 %v5717, %v5716
          %v5736 = vshrl.u32 %v5718, 16
          %v5738 = vrot.slane %v5736, 3
          %v5739 = vshll.u32 %v5718, 16
          %v5741 = vrot.slane %v5739, 4
          %v5742 = vor.u32 %v5738, %v5741
          %v5744 = vshrl.u32 %v5719, 16
          %v5746 = vrot.slane %v5744, 3
          %v5747 = vshll.u32 %v5719, 16
          %v5749 = vrot.slane %v5747, 4
          %v5750 = vor.u32 %v5746, %v5749
          %v5751 = vsel %vm1673, %v5742, %v5750
          %v5753 = vshrl.u32 %v5720, 16
          %v5755 = vrot.slane %v5753, 3
          %v5756 = vshll.u32 %v5720, 16
          %v5758 = vrot.slane %v5756, 4
          %v5759 = vor.u32 %v5755, %v5758
          %v5760 = vsel %vm1673, %v5750, %v5759
          %v5762 = vshrl.u32 %v5721, 16
          %v5764 = vrot.slane %v5762, 3
          %v5765 = vshll.u32 %v5721, 16
          %v5767 = vrot.slane %v5765, 4
          %v5768 = vor.u32 %v5764, %v5767
          %v5769 = vsel %vm1673, %v5759, %v5768
          %v5771 = vshrl.u32 %v5722, 16
          %v5773 = vrot.slane %v5771, 3
          %v5774 = vshll.u32 %v5722, 16
          %v5776 = vrot.slane %v5774, 4
          %v5777 = vor.u32 %v5773, %v5776
          %v5778 = vsel %vm1673, %v5768, %v5777
          %v5780 = vshrl.u32 %v5723, 16
          %v5782 = vrot.slane %v5780, 3
          %v5783 = vshll.u32 %v5723, 16
          %v5785 = vrot.slane %v5783, 4
          %v5786 = vor.u32 %v5782, %v5785
          %v5787 = vsel %vm1673, %v5777, %v5786
          %v5789 = vshrl.u32 %v5724, 16
          %v5791 = vrot.slane %v5789, 3
          %v5792 = vshll.u32 %v5724, 16
          %v5794 = vrot.slane %v5792, 4
          %v5795 = vor.u32 %v5791, %v5794
          %v5796 = vsel %vm1673, %v5786, %v5795
          %v5798 = vshrl.u32 %v5725, 16
          %v5800 = vrot.slane %v5798, 3
          %v5801 = vshll.u32 %v5725, 16
          %v5803 = vrot.slane %v5801, 4
          %v5804 = vor.u32 %v5800, %v5803
          %v5805 = vsel %vm1673, %v5795, %v5804
          %v5807 = vshrl.u32 %v5726, 16
          %v5809 = vrot.slane %v5807, 3
          %v5810 = vshll.u32 %v5726, 16
          %v5812 = vrot.slane %v5810, 4
          %v5813 = vor.u32 %v5809, %v5812
          %v5814 = vsel %vm1673, %v5804, %v5813
          %v5816 = vshrl.u32 %v5727, 16
          %v5818 = vrot.slane %v5816, 3
          %v5819 = vshll.u32 %v5727, 16
          %v5821 = vrot.slane %v5819, 4
          %v5822 = vor.u32 %v5818, %v5821
          %v5823 = vsel %vm1673, %v5813, %v5822
          %v5825 = vshrl.u32 %v5728, 16
          %v5827 = vrot.slane %v5825, 3
          %v5828 = vshll.u32 %v5728, 16
          %v5830 = vrot.slane %v5828, 4
          %v5831 = vor.u32 %v5827, %v5830
          %v5832 = vsel %vm1673, %v5822, %v5831
          %v5834 = vshrl.u32 %v5729, 16
          %v5836 = vrot.slane %v5834, 3
          %v5837 = vshll.u32 %v5729, 16
          %v5839 = vrot.slane %v5837, 4
          %v5840 = vor.u32 %v5836, %v5839
          %v5841 = vsel %vm1673, %v5831, %v5840
          %v5843 = vshrl.u32 %v5730, 16
          %v5845 = vrot.slane %v5843, 3
          %v5846 = vshll.u32 %v5730, 16
          %v5848 = vrot.slane %v5846, 4
          %v5849 = vor.u32 %v5845, %v5848
          %v5850 = vsel %vm1673, %v5840, %v5849
          %v5852 = vshrl.u32 %v5731, 16
          %v5854 = vrot.slane %v5852, 3
          %v5855 = vshll.u32 %v5731, 16
          %v5857 = vrot.slane %v5855, 4
          %v5858 = vor.u32 %v5854, %v5857
          %v5859 = vsel %vm1673, %v5849, %v5858
          %v5861 = vshrl.u32 %v5732, 16
          %v5863 = vrot.slane %v5861, 3
          %v5864 = vshll.u32 %v5732, 16
          %v5866 = vrot.slane %v5864, 4
          %v5867 = vor.u32 %v5863, %v5866
          %v5868 = vsel %vm1673, %v5858, %v5867
          %v5870 = vshrl.u32 %v5733, 16
          %v5872 = vrot.slane %v5870, 3
          %v5873 = vshll.u32 %v5733, 16
          %v5875 = vrot.slane %v5873, 4
          %v5876 = vor.u32 %v5872, %v5875
          %v5877 = vsel %vm1673, %v5867, %v5876
          %v5879 = vshrl.u32 %v5734, 16
          %v5881 = vrot.slane %v5879, 3
          %v5882 = vshll.u32 %v5734, 16
          %v5884 = vrot.slane %v5882, 4
          %v5885 = vor.u32 %v5881, %v5884
          %v5886 = vsel %vm1673, %v5876, %v5885
          %v5920 = vunpack.c.l.b16 %v5634
          %v5921 = vunpack.c.l.b16 %v5635
          %v5922 = vunpack.c.l.b16 %v5636
          %v5923 = vunpack.c.l.b16 %v5637
          %v5924 = vunpack.c.l.b16 %v5638
          %v5925 = vunpack.c.l.b16 %v5639
          %v5926 = vunpack.c.l.b16 %v5640
          %v5927 = vunpack.c.l.b16 %v5641
          %v5928 = vunpack.c.l.b16 %v5642
          %v5929 = vunpack.c.l.b16 %v5643
          %v5930 = vunpack.c.l.b16 %v5644
          %v5931 = vunpack.c.l.b16 %v5645
          %v5932 = vunpack.c.l.b16 %v5646
          %v5933 = vunpack.c.l.b16 %v5647
          %v5934 = vunpack.c.l.b16 %v5648
          %v5935 = vunpack.c.l.b16 %v5649
          %v5936 = vpack.c.b16 %v5921, %v5920
          %v5937 = vpack.c.b16 %v5923, %v5922
          %v5938 = vpack.c.b16 %v5925, %v5924
          %v5939 = vpack.c.b16 %v5927, %v5926
          %v5940 = vpack.c.b16 %v5929, %v5928
          %v5941 = vpack.c.b16 %v5931, %v5930
          %v5942 = vpack.c.b16 %v5933, %v5932
          %v5943 = vpack.c.b16 %v5935, %v5934
          %5952 = vmatprep.subr.bf16.mxu0 0
          %5953 = vmatpush1.bf16.msra.mxu0 %v5943
          %5954 = vmatprep.subr.bf16.mxu0 0
          %5955 = vmatpush1.bf16.msra.mxu0 %v5942
          %5956 = vmatprep.subr.bf16.mxu0 0
          %5957 = vmatpush1.bf16.msra.mxu0 %v5941
          %5958 = vmatprep.subr.bf16.mxu0 0
          %5959 = vmatpush1.bf16.msra.mxu0 %v5940
          %5960 = vmatprep.subr.bf16.mxu0 0
          %5961 = vmatpush1.bf16.msra.mxu0 %v5939
          %5962 = vmatprep.subr.bf16.mxu0 0
          %5963 = vmatpush1.bf16.msra.mxu0 %v5938
          %5964 = vmatprep.subr.bf16.mxu0 0
          %5965 = vmatpush1.bf16.msra.mxu0 %v5937
          %5966 = vmatprep.subr.bf16.mxu0 0
          %5967 = vmatpush1.bf16.msra.mxu0 %v5936
          %5968 = vmatprep.subr.bf16.mxu0 0
          %5969 = vmatpush2.bf16.msra.mxu0 0
          %5970 = vmatprep.subr.bf16.mxu0 0
          %5971 = vmatpush2.bf16.msra.mxu0 0
          %5972 = vmatprep.subr.bf16.mxu0 0
          %5973 = vmatpush2.bf16.msra.mxu0 0
          %5974 = vmatprep.subr.bf16.mxu0 0
          %5975 = vmatpush2.bf16.msra.mxu0 0
          %5976 = vmatprep.subr.bf16.mxu0 0
          %5977 = vmatpush2.bf16.msra.mxu0 0
          %5978 = vmatprep.subr.bf16.mxu0 0
          %5979 = vmatpush2.bf16.msra.mxu0 0
          %5980 = vmatprep.subr.bf16.mxu0 0
          %5981 = vmatpush2.bf16.msra.mxu0 0
          %5982 = vmatprep.subr.bf16.mxu0 0
          %5983 = vmatpush2.bf16.msra.mxu0 0
          %5984 = vmatprep.mubr.bf16.mxu0 0
          %5985 = vmatmul.mubr.bf16.gmra.mxu0 %v5751
          %v5986 = vpop.f32.mrf.mxu0
          %v5987 = vadd.f32 0.0, %v5986
          %v5988 = vpop.f32.mrf.mxu0
          %v5989 = vpop.f32.mrf.mxu0
          %v5990 = vadd.f32 0.0, %v5989
          %v5991 = vpop.f32.mrf.mxu0
          %5992 = vmatprep.mubr.bf16.mxu0 0
          %5993 = vmatmul.mubr.bf16.gmra.mxu0 %v5760
          %v5994 = vpop.f32.mrf.mxu0
          %v5995 = vadd.f32 0.0, %v5994
          %v5996 = vpop.f32.mrf.mxu0
          %v5997 = vpop.f32.mrf.mxu0
          %v5998 = vadd.f32 0.0, %v5997
          %v5999 = vpop.f32.mrf.mxu0
          %6000 = vmatprep.mubr.bf16.mxu0 0
          %6001 = vmatmul.mubr.bf16.gmra.mxu0 %v5769
          %v6002 = vpop.f32.mrf.mxu0
          %v6003 = vadd.f32 0.0, %v6002
          %v6004 = vpop.f32.mrf.mxu0
          %v6005 = vpop.f32.mrf.mxu0
          %v6006 = vadd.f32 0.0, %v6005
          %v6007 = vpop.f32.mrf.mxu0
          %6008 = vmatprep.mubr.bf16.mxu0 0
          %6009 = vmatmul.mubr.bf16.gmra.mxu0 %v5778
          %v6010 = vpop.f32.mrf.mxu0
          %v6011 = vadd.f32 0.0, %v6010
          %v6012 = vpop.f32.mrf.mxu0
          %v6013 = vpop.f32.mrf.mxu0
          %v6014 = vadd.f32 0.0, %v6013
          %v6015 = vpop.f32.mrf.mxu0
          %6016 = vmatprep.mubr.bf16.mxu0 0
          %6017 = vmatmul.mubr.bf16.gmra.mxu0 %v5787
          %v6018 = vpop.f32.mrf.mxu0
          %v6019 = vadd.f32 0.0, %v6018
          %v6020 = vpop.f32.mrf.mxu0
          %v6021 = vpop.f32.mrf.mxu0
          %v6022 = vadd.f32 0.0, %v6021
          %v6023 = vpop.f32.mrf.mxu0
          %6024 = vmatprep.mubr.bf16.mxu0 0
          %6025 = vmatmul.mubr.bf16.gmra.mxu0 %v5796
          %v6026 = vpop.f32.mrf.mxu0
          %v6027 = vadd.f32 0.0, %v6026
          %v6028 = vpop.f32.mrf.mxu0
          %v6029 = vpop.f32.mrf.mxu0
          %v6030 = vadd.f32 0.0, %v6029
          %v6031 = vpop.f32.mrf.mxu0
          %6032 = vmatprep.mubr.bf16.mxu0 0
          %6033 = vmatmul.mubr.bf16.gmra.mxu0 %v5805
          %v6034 = vpop.f32.mrf.mxu0
          %v6035 = vadd.f32 0.0, %v6034
          %v6036 = vpop.f32.mrf.mxu0
          %v6037 = vpop.f32.mrf.mxu0
          %v6038 = vadd.f32 0.0, %v6037
          %v6039 = vpop.f32.mrf.mxu0
          %6040 = vmatprep.mubr.bf16.mxu0 0
          %6041 = vmatmul.mubr.bf16.gmra.mxu0 %v5814
          %v6042 = vpop.f32.mrf.mxu0
          %v6043 = vadd.f32 0.0, %v6042
          %v6044 = vpop.f32.mrf.mxu0
          %v6045 = vpop.f32.mrf.mxu0
          %v6046 = vadd.f32 0.0, %v6045
          %v6047 = vpop.f32.mrf.mxu0
          %6048 = vmatprep.mubr.bf16.mxu0 0
          %6049 = vmatmul.mubr.bf16.gmra.mxu0 %v5823
          %v6050 = vpop.f32.mrf.mxu0
          %v6051 = vadd.f32 0.0, %v6050
          %v6052 = vpop.f32.mrf.mxu0
          %v6053 = vpop.f32.mrf.mxu0
          %v6054 = vadd.f32 0.0, %v6053
          %v6055 = vpop.f32.mrf.mxu0
          %6056 = vmatprep.mubr.bf16.mxu0 0
          %6057 = vmatmul.mubr.bf16.gmra.mxu0 %v5832
          %v6058 = vpop.f32.mrf.mxu0
          %v6059 = vadd.f32 0.0, %v6058
          %v6060 = vpop.f32.mrf.mxu0
          %v6061 = vpop.f32.mrf.mxu0
          %v6062 = vadd.f32 0.0, %v6061
          %v6063 = vpop.f32.mrf.mxu0
          %6064 = vmatprep.mubr.bf16.mxu0 0
          %6065 = vmatmul.mubr.bf16.gmra.mxu0 %v5841
          %v6066 = vpop.f32.mrf.mxu0
          %v6067 = vadd.f32 0.0, %v6066
          %v6068 = vpop.f32.mrf.mxu0
          %v6069 = vpop.f32.mrf.mxu0
          %v6070 = vadd.f32 0.0, %v6069
          %v6071 = vpop.f32.mrf.mxu0
          %6072 = vmatprep.mubr.bf16.mxu0 0
          %6073 = vmatmul.mubr.bf16.gmra.mxu0 %v5850
          %v6074 = vpop.f32.mrf.mxu0
          %v6075 = vadd.f32 0.0, %v6074
          %v6076 = vpop.f32.mrf.mxu0
          %v6077 = vpop.f32.mrf.mxu0
          %v6078 = vadd.f32 0.0, %v6077
          %v6079 = vpop.f32.mrf.mxu0
          %6080 = vmatprep.mubr.bf16.mxu0 0
          %6081 = vmatmul.mubr.bf16.gmra.mxu0 %v5859
          %v6082 = vpop.f32.mrf.mxu0
          %v6083 = vadd.f32 0.0, %v6082
          %v6084 = vpop.f32.mrf.mxu0
          %v6085 = vpop.f32.mrf.mxu0
          %v6086 = vadd.f32 0.0, %v6085
          %v6087 = vpop.f32.mrf.mxu0
          %6088 = vmatprep.mubr.bf16.mxu0 0
          %6089 = vmatmul.mubr.bf16.gmra.mxu0 %v5868
          %v6090 = vpop.f32.mrf.mxu0
          %v6091 = vadd.f32 0.0, %v6090
          %v6092 = vpop.f32.mrf.mxu0
          %v6093 = vpop.f32.mrf.mxu0
          %v6094 = vadd.f32 0.0, %v6093
          %v6095 = vpop.f32.mrf.mxu0
          %6096 = vmatprep.mubr.bf16.mxu0 0
          %6097 = vmatmul.mubr.bf16.gmra.mxu0 %v5877
          %v6098 = vpop.f32.mrf.mxu0
          %v6099 = vadd.f32 0.0, %v6098
          %v6100 = vpop.f32.mrf.mxu0
          %v6101 = vpop.f32.mrf.mxu0
          %v6102 = vadd.f32 0.0, %v6101
          %v6103 = vpop.f32.mrf.mxu0
          %6104 = vmatprep.mubr.bf16.mxu0 0
          %6105 = vmatmul.mubr.bf16.gmra.mxu0 %v5886
          %v6106 = vpop.f32.mrf.mxu0
          %v6107 = vadd.f32 0.0, %v6106
          %v6108 = vpop.f32.mrf.mxu0
          %v6109 = vpop.f32.mrf.mxu0
          %v6110 = vadd.f32 0.0, %v6109
          %v6111 = vpop.f32.mrf.mxu0
          %6112 = vmatprep.mubr.bf16.mxu0 0
          %6113 = vmatmul.mubr.bf16.gmra.mxu0 %v5885
          %v6114 = vpop.f32.mrf.mxu0
          %v6115 = vadd.f32 0.0, %v6114
          %v6116 = vpop.f32.mrf.mxu0
          %v6117 = vpop.f32.mrf.mxu0
          %v6118 = vpop.f32.mrf.mxu0
          %6119 = vdwg.mxu0
          %v6120 = vadd.f32 %v5566, %v5987
          %v6121 = vadd.f32 %v5567, %v5990
          %v6122 = vadd.f32 %v5568, %v5995
          %v6123 = vadd.f32 %v5569, %v5998
          %v6124 = vadd.f32 %v5570, %v6003
          %v6125 = vadd.f32 %v5571, %v6006
          %v6126 = vadd.f32 %v5572, %v6011
          %v6127 = vadd.f32 %v5573, %v6014
          %v6128 = vadd.f32 %v5574, %v6019
          %v6129 = vadd.f32 %v5575, %v6022
          %v6130 = vadd.f32 %v5576, %v6027
          %v6131 = vadd.f32 %v5577, %v6030
          %v6132 = vadd.f32 %v5578, %v6035
          %v6133 = vadd.f32 %v5579, %v6038
          %v6134 = vadd.f32 %v5580, %v6043
          %v6135 = vadd.f32 %v5581, %v6046
          %v6136 = vadd.f32 %v5582, %v6051
          %v6137 = vadd.f32 %v5583, %v6054
          %v6138 = vadd.f32 %v5584, %v6059
          %v6139 = vadd.f32 %v5585, %v6062
          %v6140 = vadd.f32 %v5586, %v6067
          %v6141 = vadd.f32 %v5587, %v6070
          %v6142 = vadd.f32 %v5588, %v6075
          %v6143 = vadd.f32 %v5589, %v6078
          %v6144 = vadd.f32 %v5590, %v6083
          %v6145 = vadd.f32 %v5591, %v6086
          %v6146 = vadd.f32 %v5592, %v6091
          %v6147 = vadd.f32 %v5593, %v6094
          %v6148 = vadd.f32 %v5594, %v6099
          %v6149 = vadd.f32 %v5595, %v6102
          %v6150 = vadd.f32 %v5596, %v6107
          %v6151 = vadd.f32 %v5597, %v6110
          %v6152 = vadd.f32 %v5598, %v6115
          %s6153 = scalar_lea.vmem %s295, 832 [#allocation3]
          %v6154 = vld [vmem:[%s6153] sm:$0xf]
          %v6155 = vld [vmem:[%s6153 + $0x4] sm:$0xf]
          %v6156 = vld [vmem:[%s6153 + $0x8] sm:$0xf]
          %v6157 = vld [vmem:[%s6153 + $0xc] sm:$0xf]
          %v6158 = vld [vmem:[%s6153 + $0x10] sm:$0xf]
          %v6159 = vld [vmem:[%s6153 + $0x14] sm:$0xf]
          %v6160 = vld [vmem:[%s6153 + $0x18] sm:$0xf]
          %v6161 = vld [vmem:[%s6153 + $0x1c] sm:$0xf]
          %v6162 = vld [vmem:[%s6153 + $0x20] sm:$0xf]
          %v6163 = vld [vmem:[%s6153 + $0x24] sm:$0xf]
          %v6164 = vld [vmem:[%s6153 + $0x28] sm:$0xf]
          %v6165 = vld [vmem:[%s6153 + $0x2c] sm:$0xf]
          %v6166 = vld [vmem:[%s6153 + $0x30] sm:$0xf]
          %v6167 = vld [vmem:[%s6153 + $0x34] sm:$0xf]
          %v6168 = vld [vmem:[%s6153 + $0x38] sm:$0xf]
          %v6169 = vld [vmem:[%s6153 + $0x3c] sm:$0xf]
          %v6186 = vunpack.c.l.b16 %v6154
          %v6187 = vunpack.c.l.b16 %v6155
          %v6188 = vunpack.c.l.b16 %v6156
          %v6189 = vunpack.c.l.b16 %v6157
          %v6190 = vunpack.c.l.b16 %v6158
          %v6191 = vunpack.c.l.b16 %v6159
          %v6192 = vunpack.c.l.b16 %v6160
          %v6193 = vunpack.c.l.b16 %v6161
          %v6194 = vunpack.c.l.b16 %v6162
          %v6195 = vunpack.c.l.b16 %v6163
          %v6196 = vunpack.c.l.b16 %v6164
          %v6197 = vunpack.c.l.b16 %v6165
          %v6198 = vunpack.c.l.b16 %v6166
          %v6199 = vunpack.c.l.b16 %v6167
          %v6200 = vunpack.c.l.b16 %v6168
          %v6201 = vunpack.c.l.b16 %v6169
          %v6202 = vpack.c.b16 %v6187, %v6186
          %v6203 = vpack.c.b16 %v6189, %v6188
          %v6204 = vpack.c.b16 %v6191, %v6190
          %v6205 = vpack.c.b16 %v6193, %v6192
          %v6206 = vpack.c.b16 %v6195, %v6194
          %v6207 = vpack.c.b16 %v6197, %v6196
          %v6208 = vpack.c.b16 %v6199, %v6198
          %v6209 = vpack.c.b16 %v6201, %v6200
          %6218 = vmatprep.subr.bf16.mxu0 0
          %6219 = vmatpush1.bf16.msra.mxu0 %v6209
          %6220 = vmatprep.subr.bf16.mxu0 0
          %6221 = vmatpush1.bf16.msra.mxu0 %v6208
          %6222 = vmatprep.subr.bf16.mxu0 0
          %6223 = vmatpush1.bf16.msra.mxu0 %v6207
          %6224 = vmatprep.subr.bf16.mxu0 0
          %6225 = vmatpush1.bf16.msra.mxu0 %v6206
          %6226 = vmatprep.subr.bf16.mxu0 0
          %6227 = vmatpush1.bf16.msra.mxu0 %v6205
          %6228 = vmatprep.subr.bf16.mxu0 0
          %6229 = vmatpush1.bf16.msra.mxu0 %v6204
          %6230 = vmatprep.subr.bf16.mxu0 0
          %6231 = vmatpush1.bf16.msra.mxu0 %v6203
          %6232 = vmatprep.subr.bf16.mxu0 0
          %6233 = vmatpush1.bf16.msra.mxu0 %v6202
          %6234 = vmatprep.subr.bf16.mxu0 0
          %6235 = vmatpush2.bf16.msra.mxu0 0
          %6236 = vmatprep.subr.bf16.mxu0 0
          %6237 = vmatpush2.bf16.msra.mxu0 0
          %6238 = vmatprep.subr.bf16.mxu0 0
          %6239 = vmatpush2.bf16.msra.mxu0 0
          %6240 = vmatprep.subr.bf16.mxu0 0
          %6241 = vmatpush2.bf16.msra.mxu0 0
          %6242 = vmatprep.subr.bf16.mxu0 0
          %6243 = vmatpush2.bf16.msra.mxu0 0
          %6244 = vmatprep.subr.bf16.mxu0 0
          %6245 = vmatpush2.bf16.msra.mxu0 0
          %6246 = vmatprep.subr.bf16.mxu0 0
          %6247 = vmatpush2.bf16.msra.mxu0 0
          %6248 = vmatprep.subr.bf16.mxu0 0
          %6249 = vmatpush2.bf16.msra.mxu0 0
          %6250 = vmatprep.mubr.bf16.mxu0 0
          %6251 = vmatmul.mubr.bf16.gmra.mxu0 %v4301
          %v6252 = vpop.f32.mrf.mxu0
          %v6253 = vadd.f32 0.0, %v6252
          %v6254 = vpop.f32.mrf.mxu0
          %v6255 = vpop.f32.mrf.mxu0
          %v6256 = vadd.f32 0.0, %v6255
          %v6257 = vpop.f32.mrf.mxu0
          %6258 = vmatprep.mubr.bf16.mxu0 0
          %6259 = vmatmul.mubr.bf16.gmra.mxu0 %v4302
          %v6260 = vpop.f32.mrf.mxu0
          %v6261 = vadd.f32 0.0, %v6260
          %v6262 = vpop.f32.mrf.mxu0
          %v6263 = vpop.f32.mrf.mxu0
          %v6264 = vadd.f32 0.0, %v6263
          %v6265 = vpop.f32.mrf.mxu0
          %6266 = vmatprep.mubr.bf16.mxu0 0
          %6267 = vmatmul.mubr.bf16.gmra.mxu0 %v4303
          %v6268 = vpop.f32.mrf.mxu0
          %v6269 = vadd.f32 0.0, %v6268
          %v6270 = vpop.f32.mrf.mxu0
          %v6271 = vpop.f32.mrf.mxu0
          %v6272 = vadd.f32 0.0, %v6271
          %v6273 = vpop.f32.mrf.mxu0
          %6274 = vmatprep.mubr.bf16.mxu0 0
          %6275 = vmatmul.mubr.bf16.gmra.mxu0 %v4304
          %v6276 = vpop.f32.mrf.mxu0
          %v6277 = vadd.f32 0.0, %v6276
          %v6278 = vpop.f32.mrf.mxu0
          %v6279 = vpop.f32.mrf.mxu0
          %v6280 = vadd.f32 0.0, %v6279
          %v6281 = vpop.f32.mrf.mxu0
          %6282 = vmatprep.mubr.bf16.mxu0 0
          %6283 = vmatmul.mubr.bf16.gmra.mxu0 %v4305
          %v6284 = vpop.f32.mrf.mxu0
          %v6285 = vadd.f32 0.0, %v6284
          %v6286 = vpop.f32.mrf.mxu0
          %v6287 = vpop.f32.mrf.mxu0
          %v6288 = vadd.f32 0.0, %v6287
          %v6289 = vpop.f32.mrf.mxu0
          %6290 = vmatprep.mubr.bf16.mxu0 0
          %6291 = vmatmul.mubr.bf16.gmra.mxu0 %v4306
          %v6292 = vpop.f32.mrf.mxu0
          %v6293 = vadd.f32 0.0, %v6292
          %v6294 = vpop.f32.mrf.mxu0
          %v6295 = vpop.f32.mrf.mxu0
          %v6296 = vadd.f32 0.0, %v6295
          %v6297 = vpop.f32.mrf.mxu0
          %6298 = vmatprep.mubr.bf16.mxu0 0
          %6299 = vmatmul.mubr.bf16.gmra.mxu0 %v4307
          %v6300 = vpop.f32.mrf.mxu0
          %v6301 = vadd.f32 0.0, %v6300
          %v6302 = vpop.f32.mrf.mxu0
          %v6303 = vpop.f32.mrf.mxu0
          %v6304 = vadd.f32 0.0, %v6303
          %v6305 = vpop.f32.mrf.mxu0
          %6306 = vmatprep.mubr.bf16.mxu0 0
          %6307 = vmatmul.mubr.bf16.gmra.mxu0 %v4308
          %v6308 = vpop.f32.mrf.mxu0
          %v6309 = vadd.f32 0.0, %v6308
          %v6310 = vpop.f32.mrf.mxu0
          %v6311 = vpop.f32.mrf.mxu0
          %v6312 = vadd.f32 0.0, %v6311
          %v6313 = vpop.f32.mrf.mxu0
          %6314 = vmatprep.mubr.bf16.mxu0 0
          %6315 = vmatmul.mubr.bf16.gmra.mxu0 %v4309
          %v6316 = vpop.f32.mrf.mxu0
          %v6317 = vadd.f32 0.0, %v6316
          %v6318 = vpop.f32.mrf.mxu0
          %v6319 = vpop.f32.mrf.mxu0
          %v6320 = vadd.f32 0.0, %v6319
          %v6321 = vpop.f32.mrf.mxu0
          %6322 = vmatprep.mubr.bf16.mxu0 0
          %6323 = vmatmul.mubr.bf16.gmra.mxu0 %v4310
          %v6324 = vpop.f32.mrf.mxu0
          %v6325 = vadd.f32 0.0, %v6324
          %v6326 = vpop.f32.mrf.mxu0
          %v6327 = vpop.f32.mrf.mxu0
          %v6328 = vadd.f32 0.0, %v6327
          %v6329 = vpop.f32.mrf.mxu0
          %6330 = vmatprep.mubr.bf16.mxu0 0
          %6331 = vmatmul.mubr.bf16.gmra.mxu0 %v4311
          %v6332 = vpop.f32.mrf.mxu0
          %v6333 = vadd.f32 0.0, %v6332
          %v6334 = vpop.f32.mrf.mxu0
          %v6335 = vpop.f32.mrf.mxu0
          %v6336 = vadd.f32 0.0, %v6335
          %v6337 = vpop.f32.mrf.mxu0
          %6338 = vmatprep.mubr.bf16.mxu0 0
          %6339 = vmatmul.mubr.bf16.gmra.mxu0 %v4312
          %v6340 = vpop.f32.mrf.mxu0
          %v6341 = vadd.f32 0.0, %v6340
          %v6342 = vpop.f32.mrf.mxu0
          %v6343 = vpop.f32.mrf.mxu0
          %v6344 = vadd.f32 0.0, %v6343
          %v6345 = vpop.f32.mrf.mxu0
          %6346 = vmatprep.mubr.bf16.mxu0 0
          %6347 = vmatmul.mubr.bf16.gmra.mxu0 %v4313
          %v6348 = vpop.f32.mrf.mxu0
          %v6349 = vadd.f32 0.0, %v6348
          %v6350 = vpop.f32.mrf.mxu0
          %v6351 = vpop.f32.mrf.mxu0
          %v6352 = vadd.f32 0.0, %v6351
          %v6353 = vpop.f32.mrf.mxu0
          %6354 = vmatprep.mubr.bf16.mxu0 0
          %6355 = vmatmul.mubr.bf16.gmra.mxu0 %v4314
          %v6356 = vpop.f32.mrf.mxu0
          %v6357 = vadd.f32 0.0, %v6356
          %v6358 = vpop.f32.mrf.mxu0
          %v6359 = vpop.f32.mrf.mxu0
          %v6360 = vadd.f32 0.0, %v6359
          %v6361 = vpop.f32.mrf.mxu0
          %6362 = vmatprep.mubr.bf16.mxu0 0
          %6363 = vmatmul.mubr.bf16.gmra.mxu0 %v4315
          %v6364 = vpop.f32.mrf.mxu0
          %v6365 = vadd.f32 0.0, %v6364
          %v6366 = vpop.f32.mrf.mxu0
          %v6367 = vpop.f32.mrf.mxu0
          %v6368 = vadd.f32 0.0, %v6367
          %v6369 = vpop.f32.mrf.mxu0
          %6370 = vmatprep.mubr.bf16.mxu0 0
          %6371 = vmatmul.mubr.bf16.gmra.mxu0 %v4316
          %v6372 = vpop.f32.mrf.mxu0
          %v6373 = vadd.f32 0.0, %v6372
          %v6374 = vpop.f32.mrf.mxu0
          %v6375 = vpop.f32.mrf.mxu0
          %v6376 = vadd.f32 0.0, %v6375
          %v6377 = vpop.f32.mrf.mxu0
          %6378 = vmatprep.mubr.bf16.mxu0 0
          %6379 = vmatmul.mubr.bf16.gmra.mxu0 %v4317
          %v6380 = vpop.f32.mrf.mxu0
          %v6381 = vadd.f32 0.0, %v6380
          %v6382 = vpop.f32.mrf.mxu0
          %v6383 = vpop.f32.mrf.mxu0
          %v6384 = vpop.f32.mrf.mxu0
          %6385 = vdwg.mxu0
          %v6386 = vadd.f32 %v6120, %v6253
          %v6387 = vadd.f32 %v6121, %v6256
          %v6388 = vadd.f32 %v6122, %v6261
          %v6389 = vadd.f32 %v6123, %v6264
          %v6390 = vadd.f32 %v6124, %v6269
          %v6391 = vadd.f32 %v6125, %v6272
          %v6392 = vadd.f32 %v6126, %v6277
          %v6393 = vadd.f32 %v6127, %v6280
          %v6394 = vadd.f32 %v6128, %v6285
          %v6395 = vadd.f32 %v6129, %v6288
          %v6396 = vadd.f32 %v6130, %v6293
          %v6397 = vadd.f32 %v6131, %v6296
          %v6398 = vadd.f32 %v6132, %v6301
          %v6399 = vadd.f32 %v6133, %v6304
          %v6400 = vadd.f32 %v6134, %v6309
          %v6401 = vadd.f32 %v6135, %v6312
          %v6402 = vadd.f32 %v6136, %v6317
          %v6403 = vadd.f32 %v6137, %v6320
          %v6404 = vadd.f32 %v6138, %v6325
          %v6405 = vadd.f32 %v6139, %v6328
          %v6406 = vadd.f32 %v6140, %v6333
          %v6407 = vadd.f32 %v6141, %v6336
          %v6408 = vadd.f32 %v6142, %v6341
          %v6409 = vadd.f32 %v6143, %v6344
          %v6410 = vadd.f32 %v6144, %v6349
          %v6411 = vadd.f32 %v6145, %v6352
          %v6412 = vadd.f32 %v6146, %v6357
          %v6413 = vadd.f32 %v6147, %v6360
          %v6414 = vadd.f32 %v6148, %v6365
          %v6415 = vadd.f32 %v6149, %v6368
          %v6416 = vadd.f32 %v6150, %v6373
          %v6417 = vadd.f32 %v6151, %v6376
          %v6418 = vadd.f32 %v6152, %v6381
          %v6419 = vld [vmem:[#allocation2 + $0x8] sm:$0xf]
          %v6420 = vld [vmem:[#allocation2 + $0xc] sm:$0xf]
          %v6421 = vld [vmem:[#allocation2 + $0x10] sm:$0xf]
          %v6422 = vld [vmem:[#allocation2 + $0x14] sm:$0xf]
          %v6423 = vld [vmem:[#allocation2 + $0x18] sm:$0xf]
          %v6424 = vld [vmem:[#allocation2 + $0x1c] sm:$0xf]
          %v6425 = vld [vmem:[#allocation2 + $0x20] sm:$0xf]
          %v6426 = vld [vmem:[#allocation2 + $0x24] sm:$0xf]
          %v6427 = vld [vmem:[#allocation2 + $0x28] sm:$0xf]
          %v6428 = vld [vmem:[#allocation2 + $0x2c] sm:$0xf]
          %v6429 = vld [vmem:[#allocation2 + $0x30] sm:$0xf]
          %v6430 = vld [vmem:[#allocation2 + $0x34] sm:$0xf]
          %v6431 = vld [vmem:[#allocation2 + $0x38] sm:$0xf]
          %v6432 = vld [vmem:[#allocation2 + $0x3c] sm:$0xf]
          %v6433 = vld [vmem:[#allocation2 + $0x40] sm:$0xf]
          %v6434 = vld [vmem:[#allocation2 + $0x44] sm:$0xf]
          %v6435 = vld [vmem:[#allocation2 + $0x48] sm:$0xf]
          %v6436 = vld [vmem:[#allocation2 + $0x4c] sm:$0xf]
          %v6437 = vld [vmem:[#allocation2 + $0x50] sm:$0xf]
          %v6438 = vld [vmem:[#allocation2 + $0x54] sm:$0xf]
          %v6439 = vld [vmem:[#allocation2 + $0x58] sm:$0xf]
          %v6440 = vld [vmem:[#allocation2 + $0x5c] sm:$0xf]
          %v6441 = vld [vmem:[#allocation2 + $0x60] sm:$0xf]
          %v6442 = vld [vmem:[#allocation2 + $0x64] sm:$0xf]
          %v6443 = vld [vmem:[#allocation2 + $0x68] sm:$0xf]
          %v6444 = vld [vmem:[#allocation2 + $0x6c] sm:$0xf]
          %v6445 = vld [vmem:[#allocation2 + $0x70] sm:$0xf]
          %v6446 = vld [vmem:[#allocation2 + $0x74] sm:$0xf]
          %v6447 = vld [vmem:[#allocation2 + $0x78] sm:$0xf]
          %v6448 = vld [vmem:[#allocation2 + $0x7c] sm:$0xf]
          %v6449 = vld [vmem:[#allocation2 + $0x80] sm:$0xf]
          %v6450 = vld [vmem:[#allocation2 + $0x84] sm:$0xf]
          %v6451 = vld [vmem:[#allocation2 + $0x88] sm:$0xf]
          %v6452 = vld [vmem:[#allocation2 + $0x8c] sm:$0x1]
          %s6453 = scalar_lea.vmem %s295, 896 [#allocation3]
          %v6454 = vld [vmem:[%s6453] sm:$0xf]
          %v6455 = vld [vmem:[%s6453 + $0x4] sm:$0xf]
          %v6456 = vld [vmem:[%s6453 + $0x8] sm:$0xf]
          %v6457 = vld [vmem:[%s6453 + $0xc] sm:$0xf]
          %v6458 = vld [vmem:[%s6453 + $0x10] sm:$0xf]
          %v6459 = vld [vmem:[%s6453 + $0x14] sm:$0xf]
          %v6460 = vld [vmem:[%s6453 + $0x18] sm:$0xf]
          %v6461 = vld [vmem:[%s6453 + $0x1c] sm:$0xf]
          %v6462 = vld [vmem:[%s6453 + $0x20] sm:$0xf]
          %v6463 = vld [vmem:[%s6453 + $0x24] sm:$0xf]
          %v6464 = vld [vmem:[%s6453 + $0x28] sm:$0xf]
          %v6465 = vld [vmem:[%s6453 + $0x2c] sm:$0xf]
          %v6466 = vld [vmem:[%s6453 + $0x30] sm:$0xf]
          %v6467 = vld [vmem:[%s6453 + $0x34] sm:$0xf]
          %v6468 = vld [vmem:[%s6453 + $0x38] sm:$0xf]
          %v6469 = vld [vmem:[%s6453 + $0x3c] sm:$0xf]
          %v6504 = vunpack.c.l.b16 %v6419
          %v6505 = vunpack.c.l.b16 %v6420
          %v6506 = vunpack.c.l.b16 %v6421
          %v6507 = vunpack.c.l.b16 %v6422
          %v6508 = vunpack.c.l.b16 %v6423
          %v6509 = vunpack.c.l.b16 %v6424
          %v6510 = vunpack.c.l.b16 %v6425
          %v6511 = vunpack.c.l.b16 %v6426
          %v6512 = vunpack.c.l.b16 %v6427
          %v6513 = vunpack.c.l.b16 %v6428
          %v6514 = vunpack.c.l.b16 %v6429
          %v6515 = vunpack.c.l.b16 %v6430
          %v6516 = vunpack.c.l.b16 %v6431
          %v6517 = vunpack.c.l.b16 %v6432
          %v6518 = vunpack.c.l.b16 %v6433
          %v6519 = vunpack.c.l.b16 %v6434
          %v6520 = vunpack.c.l.b16 %v6435
          %v6521 = vunpack.c.l.b16 %v6436
          %v6522 = vunpack.c.l.b16 %v6437
          %v6523 = vunpack.c.l.b16 %v6438
          %v6524 = vunpack.c.l.b16 %v6439
          %v6525 = vunpack.c.l.b16 %v6440
          %v6526 = vunpack.c.l.b16 %v6441
          %v6527 = vunpack.c.l.b16 %v6442
          %v6528 = vunpack.c.l.b16 %v6443
          %v6529 = vunpack.c.l.b16 %v6444
          %v6530 = vunpack.c.l.b16 %v6445
          %v6531 = vunpack.c.l.b16 %v6446
          %v6532 = vunpack.c.l.b16 %v6447
          %v6533 = vunpack.c.l.b16 %v6448
          %v6534 = vunpack.c.l.b16 %v6449
          %v6535 = vunpack.c.l.b16 %v6450
          %v6536 = vunpack.c.l.b16 %v6451
          %v6537 = vunpack.c.l.b16 %v6452
          %v6538 = vpack.c.b16 %v6505, %v6504
          %v6539 = vpack.c.b16 %v6507, %v6506
          %v6540 = vpack.c.b16 %v6509, %v6508
          %v6541 = vpack.c.b16 %v6511, %v6510
          %v6542 = vpack.c.b16 %v6513, %v6512
          %v6543 = vpack.c.b16 %v6515, %v6514
          %v6544 = vpack.c.b16 %v6517, %v6516
          %v6545 = vpack.c.b16 %v6519, %v6518
          %v6546 = vpack.c.b16 %v6521, %v6520
          %v6547 = vpack.c.b16 %v6523, %v6522
          %v6548 = vpack.c.b16 %v6525, %v6524
          %v6549 = vpack.c.b16 %v6527, %v6526
          %v6550 = vpack.c.b16 %v6529, %v6528
          %v6551 = vpack.c.b16 %v6531, %v6530
          %v6552 = vpack.c.b16 %v6533, %v6532
          %v6553 = vpack.c.b16 %v6535, %v6534
          %v6554 = vpack.c.b16 %v6537, %v6536
          %v6556 = vshrl.u32 %v6538, 16
          %v6558 = vshll.u32 %v6538, 16
          %v6560 = vrot.slane %v6558, 1
          %v6561 = vor.u32 %v6556, %v6560
          %v6563 = vshll.u32 %v6539, 16
          %v6565 = vrot.slane %v6563, 1
          %v6566 = vsel %vm2513, %v6561, %v6565
          %v6567 = vshrl.u32 %v6539, 16
          %v6569 = vor.u32 %v6567, %v6565
          %v6571 = vshll.u32 %v6540, 16
          %v6573 = vrot.slane %v6571, 1
          %v6574 = vsel %vm2513, %v6569, %v6573
          %v6575 = vshrl.u32 %v6540, 16
          %v6577 = vor.u32 %v6575, %v6573
          %v6579 = vshll.u32 %v6541, 16
          %v6581 = vrot.slane %v6579, 1
          %v6582 = vsel %vm2513, %v6577, %v6581
          %v6583 = vshrl.u32 %v6541, 16
          %v6585 = vor.u32 %v6583, %v6581
          %v6587 = vshll.u32 %v6542, 16
          %v6589 = vrot.slane %v6587, 1
          %v6590 = vsel %vm2513, %v6585, %v6589
          %v6591 = vshrl.u32 %v6542, 16
          %v6593 = vor.u32 %v6591, %v6589
          %v6595 = vshll.u32 %v6543, 16
          %v6597 = vrot.slane %v6595, 1
          %v6598 = vsel %vm2513, %v6593, %v6597
          %v6599 = vshrl.u32 %v6543, 16
          %v6601 = vor.u32 %v6599, %v6597
          %v6603 = vshll.u32 %v6544, 16
          %v6605 = vrot.slane %v6603, 1
          %v6606 = vsel %vm2513, %v6601, %v6605
          %v6607 = vshrl.u32 %v6544, 16
          %v6609 = vor.u32 %v6607, %v6605
          %v6611 = vshll.u32 %v6545, 16
          %v6613 = vrot.slane %v6611, 1
          %v6614 = vsel %vm2513, %v6609, %v6613
          %v6615 = vshrl.u32 %v6545, 16
          %v6617 = vor.u32 %v6615, %v6613
          %v6619 = vshll.u32 %v6546, 16
          %v6621 = vrot.slane %v6619, 1
          %v6622 = vsel %vm2513, %v6617, %v6621
          %v6623 = vshrl.u32 %v6546, 16
          %v6625 = vor.u32 %v6623, %v6621
          %v6627 = vshll.u32 %v6547, 16
          %v6629 = vrot.slane %v6627, 1
          %v6630 = vsel %vm2513, %v6625, %v6629
          %v6631 = vshrl.u32 %v6547, 16
          %v6633 = vor.u32 %v6631, %v6629
          %v6635 = vshll.u32 %v6548, 16
          %v6637 = vrot.slane %v6635, 1
          %v6638 = vsel %vm2513, %v6633, %v6637
          %v6639 = vshrl.u32 %v6548, 16
          %v6641 = vor.u32 %v6639, %v6637
          %v6643 = vshll.u32 %v6549, 16
          %v6645 = vrot.slane %v6643, 1
          %v6646 = vsel %vm2513, %v6641, %v6645
          %v6647 = vshrl.u32 %v6549, 16
          %v6649 = vor.u32 %v6647, %v6645
          %v6651 = vshll.u32 %v6550, 16
          %v6653 = vrot.slane %v6651, 1
          %v6654 = vsel %vm2513, %v6649, %v6653
          %v6655 = vshrl.u32 %v6550, 16
          %v6657 = vor.u32 %v6655, %v6653
          %v6659 = vshll.u32 %v6551, 16
          %v6661 = vrot.slane %v6659, 1
          %v6662 = vsel %vm2513, %v6657, %v6661
          %v6663 = vshrl.u32 %v6551, 16
          %v6665 = vor.u32 %v6663, %v6661
          %v6667 = vshll.u32 %v6552, 16
          %v6669 = vrot.slane %v6667, 1
          %v6670 = vsel %vm2513, %v6665, %v6669
          %v6671 = vshrl.u32 %v6552, 16
          %v6673 = vor.u32 %v6671, %v6669
          %v6675 = vshll.u32 %v6553, 16
          %v6677 = vrot.slane %v6675, 1
          %v6678 = vsel %vm2513, %v6673, %v6677
          %v6679 = vshrl.u32 %v6553, 16
          %v6681 = vor.u32 %v6679, %v6677
          %v6683 = vshll.u32 %v6554, 16
          %v6685 = vrot.slane %v6683, 1
          %v6686 = vsel %vm2513, %v6681, %v6685
          %v6687 = vshrl.u32 %v6554, 16
          %v6689 = vor.u32 %v6687, %v6685
          %v6723 = vunpack.c.l.b16 %v6454
          %v6724 = vunpack.c.l.b16 %v6455
          %v6725 = vunpack.c.l.b16 %v6456
          %v6726 = vunpack.c.l.b16 %v6457
          %v6727 = vunpack.c.l.b16 %v6458
          %v6728 = vunpack.c.l.b16 %v6459
          %v6729 = vunpack.c.l.b16 %v6460
          %v6730 = vunpack.c.l.b16 %v6461
          %v6731 = vunpack.c.l.b16 %v6462
          %v6732 = vunpack.c.l.b16 %v6463
          %v6733 = vunpack.c.l.b16 %v6464
          %v6734 = vunpack.c.l.b16 %v6465
          %v6735 = vunpack.c.l.b16 %v6466
          %v6736 = vunpack.c.l.b16 %v6467
          %v6737 = vunpack.c.l.b16 %v6468
          %v6738 = vunpack.c.l.b16 %v6469
          %v6739 = vpack.c.b16 %v6724, %v6723
          %v6740 = vpack.c.b16 %v6726, %v6725
          %v6741 = vpack.c.b16 %v6728, %v6727
          %v6742 = vpack.c.b16 %v6730, %v6729
          %v6743 = vpack.c.b16 %v6732, %v6731
          %v6744 = vpack.c.b16 %v6734, %v6733
          %v6745 = vpack.c.b16 %v6736, %v6735
          %v6746 = vpack.c.b16 %v6738, %v6737
          %6755 = vmatprep.subr.bf16.mxu0 0
          %6756 = vmatpush1.bf16.msra.mxu0 %v6746
          %6757 = vmatprep.subr.bf16.mxu0 0
          %6758 = vmatpush1.bf16.msra.mxu0 %v6745
          %6759 = vmatprep.subr.bf16.mxu0 0
          %6760 = vmatpush1.bf16.msra.mxu0 %v6744
          %6761 = vmatprep.subr.bf16.mxu0 0
          %6762 = vmatpush1.bf16.msra.mxu0 %v6743
          %6763 = vmatprep.subr.bf16.mxu0 0
          %6764 = vmatpush1.bf16.msra.mxu0 %v6742
          %6765 = vmatprep.subr.bf16.mxu0 0
          %6766 = vmatpush1.bf16.msra.mxu0 %v6741
          %6767 = vmatprep.subr.bf16.mxu0 0
          %6768 = vmatpush1.bf16.msra.mxu0 %v6740
          %6769 = vmatprep.subr.bf16.mxu0 0
          %6770 = vmatpush1.bf16.msra.mxu0 %v6739
          %6771 = vmatprep.subr.bf16.mxu0 0
          %6772 = vmatpush2.bf16.msra.mxu0 0
          %6773 = vmatprep.subr.bf16.mxu0 0
          %6774 = vmatpush2.bf16.msra.mxu0 0
          %6775 = vmatprep.subr.bf16.mxu0 0
          %6776 = vmatpush2.bf16.msra.mxu0 0
          %6777 = vmatprep.subr.bf16.mxu0 0
          %6778 = vmatpush2.bf16.msra.mxu0 0
          %6779 = vmatprep.subr.bf16.mxu0 0
          %6780 = vmatpush2.bf16.msra.mxu0 0
          %6781 = vmatprep.subr.bf16.mxu0 0
          %6782 = vmatpush2.bf16.msra.mxu0 0
          %6783 = vmatprep.subr.bf16.mxu0 0
          %6784 = vmatpush2.bf16.msra.mxu0 0
          %6785 = vmatprep.subr.bf16.mxu0 0
          %6786 = vmatpush2.bf16.msra.mxu0 0
          %6787 = vmatprep.mubr.bf16.mxu0 0
          %6788 = vmatmul.mubr.bf16.gmra.mxu0 %v6566
          %v6789 = vpop.f32.mrf.mxu0
          %v6790 = vadd.f32 0.0, %v6789
          %v6791 = vpop.f32.mrf.mxu0
          %v6792 = vpop.f32.mrf.mxu0
          %v6793 = vadd.f32 0.0, %v6792
          %v6794 = vpop.f32.mrf.mxu0
          %6795 = vmatprep.mubr.bf16.mxu0 0
          %6796 = vmatmul.mubr.bf16.gmra.mxu0 %v6574
          %v6797 = vpop.f32.mrf.mxu0
          %v6798 = vadd.f32 0.0, %v6797
          %v6799 = vpop.f32.mrf.mxu0
          %v6800 = vpop.f32.mrf.mxu0
          %v6801 = vadd.f32 0.0, %v6800
          %v6802 = vpop.f32.mrf.mxu0
          %6803 = vmatprep.mubr.bf16.mxu0 0
          %6804 = vmatmul.mubr.bf16.gmra.mxu0 %v6582
          %v6805 = vpop.f32.mrf.mxu0
          %v6806 = vadd.f32 0.0, %v6805
          %v6807 = vpop.f32.mrf.mxu0
          %v6808 = vpop.f32.mrf.mxu0
          %v6809 = vadd.f32 0.0, %v6808
          %v6810 = vpop.f32.mrf.mxu0
          %6811 = vmatprep.mubr.bf16.mxu0 0
          %6812 = vmatmul.mubr.bf16.gmra.mxu0 %v6590
          %v6813 = vpop.f32.mrf.mxu0
          %v6814 = vadd.f32 0.0, %v6813
          %v6815 = vpop.f32.mrf.mxu0
          %v6816 = vpop.f32.mrf.mxu0
          %v6817 = vadd.f32 0.0, %v6816
          %v6818 = vpop.f32.mrf.mxu0
          %6819 = vmatprep.mubr.bf16.mxu0 0
          %6820 = vmatmul.mubr.bf16.gmra.mxu0 %v6598
          %v6821 = vpop.f32.mrf.mxu0
          %v6822 = vadd.f32 0.0, %v6821
          %v6823 = vpop.f32.mrf.mxu0
          %v6824 = vpop.f32.mrf.mxu0
          %v6825 = vadd.f32 0.0, %v6824
          %v6826 = vpop.f32.mrf.mxu0
          %6827 = vmatprep.mubr.bf16.mxu0 0
          %6828 = vmatmul.mubr.bf16.gmra.mxu0 %v6606
          %v6829 = vpop.f32.mrf.mxu0
          %v6830 = vadd.f32 0.0, %v6829
          %v6831 = vpop.f32.mrf.mxu0
          %v6832 = vpop.f32.mrf.mxu0
          %v6833 = vadd.f32 0.0, %v6832
          %v6834 = vpop.f32.mrf.mxu0
          %6835 = vmatprep.mubr.bf16.mxu0 0
          %6836 = vmatmul.mubr.bf16.gmra.mxu0 %v6614
          %v6837 = vpop.f32.mrf.mxu0
          %v6838 = vadd.f32 0.0, %v6837
          %v6839 = vpop.f32.mrf.mxu0
          %v6840 = vpop.f32.mrf.mxu0
          %v6841 = vadd.f32 0.0, %v6840
          %v6842 = vpop.f32.mrf.mxu0
          %6843 = vmatprep.mubr.bf16.mxu0 0
          %6844 = vmatmul.mubr.bf16.gmra.mxu0 %v6622
          %v6845 = vpop.f32.mrf.mxu0
          %v6846 = vadd.f32 0.0, %v6845
          %v6847 = vpop.f32.mrf.mxu0
          %v6848 = vpop.f32.mrf.mxu0
          %v6849 = vadd.f32 0.0, %v6848
          %v6850 = vpop.f32.mrf.mxu0
          %6851 = vmatprep.mubr.bf16.mxu0 0
          %6852 = vmatmul.mubr.bf16.gmra.mxu0 %v6630
          %v6853 = vpop.f32.mrf.mxu0
          %v6854 = vadd.f32 0.0, %v6853
          %v6855 = vpop.f32.mrf.mxu0
          %v6856 = vpop.f32.mrf.mxu0
          %v6857 = vadd.f32 0.0, %v6856
          %v6858 = vpop.f32.mrf.mxu0
          %6859 = vmatprep.mubr.bf16.mxu0 0
          %6860 = vmatmul.mubr.bf16.gmra.mxu0 %v6638
          %v6861 = vpop.f32.mrf.mxu0
          %v6862 = vadd.f32 0.0, %v6861
          %v6863 = vpop.f32.mrf.mxu0
          %v6864 = vpop.f32.mrf.mxu0
          %v6865 = vadd.f32 0.0, %v6864
          %v6866 = vpop.f32.mrf.mxu0
          %6867 = vmatprep.mubr.bf16.mxu0 0
          %6868 = vmatmul.mubr.bf16.gmra.mxu0 %v6646
          %v6869 = vpop.f32.mrf.mxu0
          %v6870 = vadd.f32 0.0, %v6869
          %v6871 = vpop.f32.mrf.mxu0
          %v6872 = vpop.f32.mrf.mxu0
          %v6873 = vadd.f32 0.0, %v6872
          %v6874 = vpop.f32.mrf.mxu0
          %6875 = vmatprep.mubr.bf16.mxu0 0
          %6876 = vmatmul.mubr.bf16.gmra.mxu0 %v6654
          %v6877 = vpop.f32.mrf.mxu0
          %v6878 = vadd.f32 0.0, %v6877
          %v6879 = vpop.f32.mrf.mxu0
          %v6880 = vpop.f32.mrf.mxu0
          %v6881 = vadd.f32 0.0, %v6880
          %v6882 = vpop.f32.mrf.mxu0
          %6883 = vmatprep.mubr.bf16.mxu0 0
          %6884 = vmatmul.mubr.bf16.gmra.mxu0 %v6662
          %v6885 = vpop.f32.mrf.mxu0
          %v6886 = vadd.f32 0.0, %v6885
          %v6887 = vpop.f32.mrf.mxu0
          %v6888 = vpop.f32.mrf.mxu0
          %v6889 = vadd.f32 0.0, %v6888
          %v6890 = vpop.f32.mrf.mxu0
          %6891 = vmatprep.mubr.bf16.mxu0 0
          %6892 = vmatmul.mubr.bf16.gmra.mxu0 %v6670
          %v6893 = vpop.f32.mrf.mxu0
          %v6894 = vadd.f32 0.0, %v6893
          %v6895 = vpop.f32.mrf.mxu0
          %v6896 = vpop.f32.mrf.mxu0
          %v6897 = vadd.f32 0.0, %v6896
          %v6898 = vpop.f32.mrf.mxu0
          %6899 = vmatprep.mubr.bf16.mxu0 0
          %6900 = vmatmul.mubr.bf16.gmra.mxu0 %v6678
          %v6901 = vpop.f32.mrf.mxu0
          %v6902 = vadd.f32 0.0, %v6901
          %v6903 = vpop.f32.mrf.mxu0
          %v6904 = vpop.f32.mrf.mxu0
          %v6905 = vadd.f32 0.0, %v6904
          %v6906 = vpop.f32.mrf.mxu0
          %6907 = vmatprep.mubr.bf16.mxu0 0
          %6908 = vmatmul.mubr.bf16.gmra.mxu0 %v6686
          %v6909 = vpop.f32.mrf.mxu0
          %v6910 = vadd.f32 0.0, %v6909
          %v6911 = vpop.f32.mrf.mxu0
          %v6912 = vpop.f32.mrf.mxu0
          %v6913 = vadd.f32 0.0, %v6912
          %v6914 = vpop.f32.mrf.mxu0
          %6915 = vmatprep.mubr.bf16.mxu0 0
          %6916 = vmatmul.mubr.bf16.gmra.mxu0 %v6689
          %v6917 = vpop.f32.mrf.mxu0
          %v6918 = vadd.f32 0.0, %v6917
          %v6919 = vpop.f32.mrf.mxu0
          %v6920 = vpop.f32.mrf.mxu0
          %v6921 = vpop.f32.mrf.mxu0
          %6922 = vdwg.mxu0
          %v6923 = vadd.f32 %v6386, %v6790
          %v6924 = vadd.f32 %v6387, %v6793
          %v6925 = vadd.f32 %v6388, %v6798
          %v6926 = vadd.f32 %v6389, %v6801
          %v6927 = vadd.f32 %v6390, %v6806
          %v6928 = vadd.f32 %v6391, %v6809
          %v6929 = vadd.f32 %v6392, %v6814
          %v6930 = vadd.f32 %v6393, %v6817
          %v6931 = vadd.f32 %v6394, %v6822
          %v6932 = vadd.f32 %v6395, %v6825
          %v6933 = vadd.f32 %v6396, %v6830
          %v6934 = vadd.f32 %v6397, %v6833
          %v6935 = vadd.f32 %v6398, %v6838
          %v6936 = vadd.f32 %v6399, %v6841
          %v6937 = vadd.f32 %v6400, %v6846
          %v6938 = vadd.f32 %v6401, %v6849
          %v6939 = vadd.f32 %v6402, %v6854
          %v6940 = vadd.f32 %v6403, %v6857
          %v6941 = vadd.f32 %v6404, %v6862
          %v6942 = vadd.f32 %v6405, %v6865
          %v6943 = vadd.f32 %v6406, %v6870
          %v6944 = vadd.f32 %v6407, %v6873
          %v6945 = vadd.f32 %v6408, %v6878
          %v6946 = vadd.f32 %v6409, %v6881
          %v6947 = vadd.f32 %v6410, %v6886
          %v6948 = vadd.f32 %v6411, %v6889
          %v6949 = vadd.f32 %v6412, %v6894
          %v6950 = vadd.f32 %v6413, %v6897
          %v6951 = vadd.f32 %v6414, %v6902
          %v6952 = vadd.f32 %v6415, %v6905
          %v6953 = vadd.f32 %v6416, %v6910
          %v6954 = vadd.f32 %v6417, %v6913
          %v6955 = vadd.f32 %v6418, %v6918
          %v6956 = vld [vmem:[#allocation2 + $0xc] sm:$0xe]
          %v6957 = vld [vmem:[#allocation2 + $0x10] sm:$0xf]
          %v6958 = vld [vmem:[#allocation2 + $0x14] sm:$0xf]
          %v6959 = vld [vmem:[#allocation2 + $0x18] sm:$0xf]
          %v6960 = vld [vmem:[#allocation2 + $0x1c] sm:$0xf]
          %v6961 = vld [vmem:[#allocation2 + $0x20] sm:$0xf]
          %v6962 = vld [vmem:[#allocation2 + $0x24] sm:$0xf]
          %v6963 = vld [vmem:[#allocation2 + $0x28] sm:$0xf]
          %v6964 = vld [vmem:[#allocation2 + $0x2c] sm:$0xf]
          %v6965 = vld [vmem:[#allocation2 + $0x30] sm:$0xf]
          %v6966 = vld [vmem:[#allocation2 + $0x34] sm:$0xf]
          %v6967 = vld [vmem:[#allocation2 + $0x38] sm:$0xf]
          %v6968 = vld [vmem:[#allocation2 + $0x3c] sm:$0xf]
          %v6969 = vld [vmem:[#allocation2 + $0x40] sm:$0xf]
          %v6970 = vld [vmem:[#allocation2 + $0x44] sm:$0xf]
          %v6971 = vld [vmem:[#allocation2 + $0x48] sm:$0xf]
          %v6972 = vld [vmem:[#allocation2 + $0x4c] sm:$0xf]
          %v6973 = vld [vmem:[#allocation2 + $0x50] sm:$0xf]
          %v6974 = vld [vmem:[#allocation2 + $0x54] sm:$0xf]
          %v6975 = vld [vmem:[#allocation2 + $0x58] sm:$0xf]
          %v6976 = vld [vmem:[#allocation2 + $0x5c] sm:$0xf]
          %v6977 = vld [vmem:[#allocation2 + $0x60] sm:$0xf]
          %v6978 = vld [vmem:[#allocation2 + $0x64] sm:$0xf]
          %v6979 = vld [vmem:[#allocation2 + $0x68] sm:$0xf]
          %v6980 = vld [vmem:[#allocation2 + $0x6c] sm:$0xf]
          %v6981 = vld [vmem:[#allocation2 + $0x70] sm:$0xf]
          %v6982 = vld [vmem:[#allocation2 + $0x74] sm:$0xf]
          %v6983 = vld [vmem:[#allocation2 + $0x78] sm:$0xf]
          %v6984 = vld [vmem:[#allocation2 + $0x7c] sm:$0xf]
          %v6985 = vld [vmem:[#allocation2 + $0x80] sm:$0xf]
          %v6986 = vld [vmem:[#allocation2 + $0x84] sm:$0xf]
          %v6987 = vld [vmem:[#allocation2 + $0x88] sm:$0xf]
          %v6988 = vld [vmem:[#allocation2 + $0x8c] sm:$0xf]
          %v6989 = vld [vmem:[#allocation2 + $0x90] sm:$0x1]
          %s6990 = scalar_lea.vmem %s295, 960 [#allocation3]
          %v6991 = vld [vmem:[%s6990] sm:$0xf]
          %v6992 = vld [vmem:[%s6990 + $0x4] sm:$0xf]
          %v6993 = vld [vmem:[%s6990 + $0x8] sm:$0xf]
          %v6994 = vld [vmem:[%s6990 + $0xc] sm:$0xf]
          %v6995 = vld [vmem:[%s6990 + $0x10] sm:$0xf]
          %v6996 = vld [vmem:[%s6990 + $0x14] sm:$0xf]
          %v6997 = vld [vmem:[%s6990 + $0x18] sm:$0xf]
          %v6998 = vld [vmem:[%s6990 + $0x1c] sm:$0xf]
          %v6999 = vld [vmem:[%s6990 + $0x20] sm:$0xf]
          %v7000 = vld [vmem:[%s6990 + $0x24] sm:$0xf]
          %v7001 = vld [vmem:[%s6990 + $0x28] sm:$0xf]
          %v7002 = vld [vmem:[%s6990 + $0x2c] sm:$0xf]
          %v7003 = vld [vmem:[%s6990 + $0x30] sm:$0xf]
          %v7004 = vld [vmem:[%s6990 + $0x34] sm:$0xf]
          %v7005 = vld [vmem:[%s6990 + $0x38] sm:$0xf]
          %v7006 = vld [vmem:[%s6990 + $0x3c] sm:$0xf]
          %v7041 = vunpack.c.l.b16 %v6956
          %v7042 = vunpack.c.l.b16 %v6957
          %v7043 = vunpack.c.l.b16 %v6958
          %v7044 = vunpack.c.l.b16 %v6959
          %v7045 = vunpack.c.l.b16 %v6960
          %v7046 = vunpack.c.l.b16 %v6961
          %v7047 = vunpack.c.l.b16 %v6962
          %v7048 = vunpack.c.l.b16 %v6963
          %v7049 = vunpack.c.l.b16 %v6964
          %v7050 = vunpack.c.l.b16 %v6965
          %v7051 = vunpack.c.l.b16 %v6966
          %v7052 = vunpack.c.l.b16 %v6967
          %v7053 = vunpack.c.l.b16 %v6968
          %v7054 = vunpack.c.l.b16 %v6969
          %v7055 = vunpack.c.l.b16 %v6970
          %v7056 = vunpack.c.l.b16 %v6971
          %v7057 = vunpack.c.l.b16 %v6972
          %v7058 = vunpack.c.l.b16 %v6973
          %v7059 = vunpack.c.l.b16 %v6974
          %v7060 = vunpack.c.l.b16 %v6975
          %v7061 = vunpack.c.l.b16 %v6976
          %v7062 = vunpack.c.l.b16 %v6977
          %v7063 = vunpack.c.l.b16 %v6978
          %v7064 = vunpack.c.l.b16 %v6979
          %v7065 = vunpack.c.l.b16 %v6980
          %v7066 = vunpack.c.l.b16 %v6981
          %v7067 = vunpack.c.l.b16 %v6982
          %v7068 = vunpack.c.l.b16 %v6983
          %v7069 = vunpack.c.l.b16 %v6984
          %v7070 = vunpack.c.l.b16 %v6985
          %v7071 = vunpack.c.l.b16 %v6986
          %v7072 = vunpack.c.l.b16 %v6987
          %v7073 = vunpack.c.l.b16 %v6988
          %v7074 = vunpack.c.l.b16 %v6989
          %v7075 = vpack.c.b16 %v7042, %v7041
          %v7076 = vpack.c.b16 %v7044, %v7043
          %v7077 = vpack.c.b16 %v7046, %v7045
          %v7078 = vpack.c.b16 %v7048, %v7047
          %v7079 = vpack.c.b16 %v7050, %v7049
          %v7080 = vpack.c.b16 %v7052, %v7051
          %v7081 = vpack.c.b16 %v7054, %v7053
          %v7082 = vpack.c.b16 %v7056, %v7055
          %v7083 = vpack.c.b16 %v7058, %v7057
          %v7084 = vpack.c.b16 %v7060, %v7059
          %v7085 = vpack.c.b16 %v7062, %v7061
          %v7086 = vpack.c.b16 %v7064, %v7063
          %v7087 = vpack.c.b16 %v7066, %v7065
          %v7088 = vpack.c.b16 %v7068, %v7067
          %v7089 = vpack.c.b16 %v7070, %v7069
          %v7090 = vpack.c.b16 %v7072, %v7071
          %v7091 = vpack.c.b16 %v7074, %v7073
          %v7092 = vrot.slane %v7075, 1
          %v7093 = vrot.slane %v7076, 1
          %v7094 = vsel %vm3051, %v7092, %v7093
          %v7095 = vrot.slane %v7077, 1
          %v7096 = vsel %vm3051, %v7093, %v7095
          %v7097 = vrot.slane %v7078, 1
          %v7098 = vsel %vm3051, %v7095, %v7097
          %v7099 = vrot.slane %v7079, 1
          %v7100 = vsel %vm3051, %v7097, %v7099
          %v7101 = vrot.slane %v7080, 1
          %v7102 = vsel %vm3051, %v7099, %v7101
          %v7103 = vrot.slane %v7081, 1
          %v7104 = vsel %vm3051, %v7101, %v7103
          %v7105 = vrot.slane %v7082, 1
          %v7106 = vsel %vm3051, %v7103, %v7105
          %v7107 = vrot.slane %v7083, 1
          %v7108 = vsel %vm3051, %v7105, %v7107
          %v7109 = vrot.slane %v7084, 1
          %v7110 = vsel %vm3051, %v7107, %v7109
          %v7111 = vrot.slane %v7085, 1
          %v7112 = vsel %vm3051, %v7109, %v7111
          %v7113 = vrot.slane %v7086, 1
          %v7114 = vsel %vm3051, %v7111, %v7113
          %v7115 = vrot.slane %v7087, 1
          %v7116 = vsel %vm3051, %v7113, %v7115
          %v7117 = vrot.slane %v7088, 1
          %v7118 = vsel %vm3051, %v7115, %v7117
          %v7119 = vrot.slane %v7089, 1
          %v7120 = vsel %vm3051, %v7117, %v7119
          %v7121 = vrot.slane %v7090, 1
          %v7122 = vsel %vm3051, %v7119, %v7121
          %v7123 = vrot.slane %v7091, 1
          %v7124 = vsel %vm3051, %v7121, %v7123
          %v7158 = vunpack.c.l.b16 %v6991
          %v7159 = vunpack.c.l.b16 %v6992
          %v7160 = vunpack.c.l.b16 %v6993
          %v7161 = vunpack.c.l.b16 %v6994
          %v7162 = vunpack.c.l.b16 %v6995
          %v7163 = vunpack.c.l.b16 %v6996
          %v7164 = vunpack.c.l.b16 %v6997
          %v7165 = vunpack.c.l.b16 %v6998
          %v7166 = vunpack.c.l.b16 %v6999
          %v7167 = vunpack.c.l.b16 %v7000
          %v7168 = vunpack.c.l.b16 %v7001
          %v7169 = vunpack.c.l.b16 %v7002
          %v7170 = vunpack.c.l.b16 %v7003
          %v7171 = vunpack.c.l.b16 %v7004
          %v7172 = vunpack.c.l.b16 %v7005
          %v7173 = vunpack.c.l.b16 %v7006
          %v7174 = vpack.c.b16 %v7159, %v7158
          %v7175 = vpack.c.b16 %v7161, %v7160
          %v7176 = vpack.c.b16 %v7163, %v7162
          %v7177 = vpack.c.b16 %v7165, %v7164
          %v7178 = vpack.c.b16 %v7167, %v7166
          %v7179 = vpack.c.b16 %v7169, %v7168
          %v7180 = vpack.c.b16 %v7171, %v7170
          %v7181 = vpack.c.b16 %v7173, %v7172
          %7190 = vmatprep.subr.bf16.mxu0 0
          %7191 = vmatpush1.bf16.msra.mxu0 %v7181
          %7192 = vmatprep.subr.bf16.mxu0 0
          %7193 = vmatpush1.bf16.msra.mxu0 %v7180
          %7194 = vmatprep.subr.bf16.mxu0 0
          %7195 = vmatpush1.bf16.msra.mxu0 %v7179
          %7196 = vmatprep.subr.bf16.mxu0 0
          %7197 = vmatpush1.bf16.msra.mxu0 %v7178
          %7198 = vmatprep.subr.bf16.mxu0 0
          %7199 = vmatpush1.bf16.msra.mxu0 %v7177
          %7200 = vmatprep.subr.bf16.mxu0 0
          %7201 = vmatpush1.bf16.msra.mxu0 %v7176
          %7202 = vmatprep.subr.bf16.mxu0 0
          %7203 = vmatpush1.bf16.msra.mxu0 %v7175
          %7204 = vmatprep.subr.bf16.mxu0 0
          %7205 = vmatpush1.bf16.msra.mxu0 %v7174
          %7206 = vmatprep.subr.bf16.mxu0 0
          %7207 = vmatpush2.bf16.msra.mxu0 0
          %7208 = vmatprep.subr.bf16.mxu0 0
          %7209 = vmatpush2.bf16.msra.mxu0 0
          %7210 = vmatprep.subr.bf16.mxu0 0
          %7211 = vmatpush2.bf16.msra.mxu0 0
          %7212 = vmatprep.subr.bf16.mxu0 0
          %7213 = vmatpush2.bf16.msra.mxu0 0
          %7214 = vmatprep.subr.bf16.mxu0 0
          %7215 = vmatpush2.bf16.msra.mxu0 0
          %7216 = vmatprep.subr.bf16.mxu0 0
          %7217 = vmatpush2.bf16.msra.mxu0 0
          %7218 = vmatprep.subr.bf16.mxu0 0
          %7219 = vmatpush2.bf16.msra.mxu0 0
          %7220 = vmatprep.subr.bf16.mxu0 0
          %7221 = vmatpush2.bf16.msra.mxu0 0
          %7222 = vmatprep.mubr.bf16.mxu0 0
          %7223 = vmatmul.mubr.bf16.gmra.mxu0 %v7094
          %v7224 = vpop.f32.mrf.mxu0
          %v7225 = vadd.f32 0.0, %v7224
          %v7226 = vpop.f32.mrf.mxu0
          %v7227 = vpop.f32.mrf.mxu0
          %v7228 = vadd.f32 0.0, %v7227
          %v7229 = vpop.f32.mrf.mxu0
          %7230 = vmatprep.mubr.bf16.mxu0 0
          %7231 = vmatmul.mubr.bf16.gmra.mxu0 %v7096
          %v7232 = vpop.f32.mrf.mxu0
          %v7233 = vadd.f32 0.0, %v7232
          %v7234 = vpop.f32.mrf.mxu0
          %v7235 = vpop.f32.mrf.mxu0
          %v7236 = vadd.f32 0.0, %v7235
          %v7237 = vpop.f32.mrf.mxu0
          %7238 = vmatprep.mubr.bf16.mxu0 0
          %7239 = vmatmul.mubr.bf16.gmra.mxu0 %v7098
          %v7240 = vpop.f32.mrf.mxu0
          %v7241 = vadd.f32 0.0, %v7240
          %v7242 = vpop.f32.mrf.mxu0
          %v7243 = vpop.f32.mrf.mxu0
          %v7244 = vadd.f32 0.0, %v7243
          %v7245 = vpop.f32.mrf.mxu0
          %7246 = vmatprep.mubr.bf16.mxu0 0
          %7247 = vmatmul.mubr.bf16.gmra.mxu0 %v7100
          %v7248 = vpop.f32.mrf.mxu0
          %v7249 = vadd.f32 0.0, %v7248
          %v7250 = vpop.f32.mrf.mxu0
          %v7251 = vpop.f32.mrf.mxu0
          %v7252 = vadd.f32 0.0, %v7251
          %v7253 = vpop.f32.mrf.mxu0
          %7254 = vmatprep.mubr.bf16.mxu0 0
          %7255 = vmatmul.mubr.bf16.gmra.mxu0 %v7102
          %v7256 = vpop.f32.mrf.mxu0
          %v7257 = vadd.f32 0.0, %v7256
          %v7258 = vpop.f32.mrf.mxu0
          %v7259 = vpop.f32.mrf.mxu0
          %v7260 = vadd.f32 0.0, %v7259
          %v7261 = vpop.f32.mrf.mxu0
          %7262 = vmatprep.mubr.bf16.mxu0 0
          %7263 = vmatmul.mubr.bf16.gmra.mxu0 %v7104
          %v7264 = vpop.f32.mrf.mxu0
          %v7265 = vadd.f32 0.0, %v7264
          %v7266 = vpop.f32.mrf.mxu0
          %v7267 = vpop.f32.mrf.mxu0
          %v7268 = vadd.f32 0.0, %v7267
          %v7269 = vpop.f32.mrf.mxu0
          %7270 = vmatprep.mubr.bf16.mxu0 0
          %7271 = vmatmul.mubr.bf16.gmra.mxu0 %v7106
          %v7272 = vpop.f32.mrf.mxu0
          %v7273 = vadd.f32 0.0, %v7272
          %v7274 = vpop.f32.mrf.mxu0
          %v7275 = vpop.f32.mrf.mxu0
          %v7276 = vadd.f32 0.0, %v7275
          %v7277 = vpop.f32.mrf.mxu0
          %7278 = vmatprep.mubr.bf16.mxu0 0
          %7279 = vmatmul.mubr.bf16.gmra.mxu0 %v7108
          %v7280 = vpop.f32.mrf.mxu0
          %v7281 = vadd.f32 0.0, %v7280
          %v7282 = vpop.f32.mrf.mxu0
          %v7283 = vpop.f32.mrf.mxu0
          %v7284 = vadd.f32 0.0, %v7283
          %v7285 = vpop.f32.mrf.mxu0
          %7286 = vmatprep.mubr.bf16.mxu0 0
          %7287 = vmatmul.mubr.bf16.gmra.mxu0 %v7110
          %v7288 = vpop.f32.mrf.mxu0
          %v7289 = vadd.f32 0.0, %v7288
          %v7290 = vpop.f32.mrf.mxu0
          %v7291 = vpop.f32.mrf.mxu0
          %v7292 = vadd.f32 0.0, %v7291
          %v7293 = vpop.f32.mrf.mxu0
          %7294 = vmatprep.mubr.bf16.mxu0 0
          %7295 = vmatmul.mubr.bf16.gmra.mxu0 %v7112
          %v7296 = vpop.f32.mrf.mxu0
          %v7297 = vadd.f32 0.0, %v7296
          %v7298 = vpop.f32.mrf.mxu0
          %v7299 = vpop.f32.mrf.mxu0
          %v7300 = vadd.f32 0.0, %v7299
          %v7301 = vpop.f32.mrf.mxu0
          %7302 = vmatprep.mubr.bf16.mxu0 0
          %7303 = vmatmul.mubr.bf16.gmra.mxu0 %v7114
          %v7304 = vpop.f32.mrf.mxu0
          %v7305 = vadd.f32 0.0, %v7304
          %v7306 = vpop.f32.mrf.mxu0
          %v7307 = vpop.f32.mrf.mxu0
          %v7308 = vadd.f32 0.0, %v7307
          %v7309 = vpop.f32.mrf.mxu0
          %7310 = vmatprep.mubr.bf16.mxu0 0
          %7311 = vmatmul.mubr.bf16.gmra.mxu0 %v7116
          %v7312 = vpop.f32.mrf.mxu0
          %v7313 = vadd.f32 0.0, %v7312
          %v7314 = vpop.f32.mrf.mxu0
          %v7315 = vpop.f32.mrf.mxu0
          %v7316 = vadd.f32 0.0, %v7315
          %v7317 = vpop.f32.mrf.mxu0
          %7318 = vmatprep.mubr.bf16.mxu0 0
          %7319 = vmatmul.mubr.bf16.gmra.mxu0 %v7118
          %v7320 = vpop.f32.mrf.mxu0
          %v7321 = vadd.f32 0.0, %v7320
          %v7322 = vpop.f32.mrf.mxu0
          %v7323 = vpop.f32.mrf.mxu0
          %v7324 = vadd.f32 0.0, %v7323
          %v7325 = vpop.f32.mrf.mxu0
          %7326 = vmatprep.mubr.bf16.mxu0 0
          %7327 = vmatmul.mubr.bf16.gmra.mxu0 %v7120
          %v7328 = vpop.f32.mrf.mxu0
          %v7329 = vadd.f32 0.0, %v7328
          %v7330 = vpop.f32.mrf.mxu0
          %v7331 = vpop.f32.mrf.mxu0
          %v7332 = vadd.f32 0.0, %v7331
          %v7333 = vpop.f32.mrf.mxu0
          %7334 = vmatprep.mubr.bf16.mxu0 0
          %7335 = vmatmul.mubr.bf16.gmra.mxu0 %v7122
          %v7336 = vpop.f32.mrf.mxu0
          %v7337 = vadd.f32 0.0, %v7336
          %v7338 = vpop.f32.mrf.mxu0
          %v7339 = vpop.f32.mrf.mxu0
          %v7340 = vadd.f32 0.0, %v7339
          %v7341 = vpop.f32.mrf.mxu0
          %7342 = vmatprep.mubr.bf16.mxu0 0
          %7343 = vmatmul.mubr.bf16.gmra.mxu0 %v7124
          %v7344 = vpop.f32.mrf.mxu0
          %v7345 = vadd.f32 0.0, %v7344
          %v7346 = vpop.f32.mrf.mxu0
          %v7347 = vpop.f32.mrf.mxu0
          %v7348 = vadd.f32 0.0, %v7347
          %v7349 = vpop.f32.mrf.mxu0
          %7350 = vmatprep.mubr.bf16.mxu0 0
          %7351 = vmatmul.mubr.bf16.gmra.mxu0 %v7123
          %v7352 = vpop.f32.mrf.mxu0
          %v7353 = vadd.f32 0.0, %v7352
          %v7354 = vpop.f32.mrf.mxu0
          %v7355 = vpop.f32.mrf.mxu0
          %v7356 = vpop.f32.mrf.mxu0
          %7357 = vdwg.mxu0
          %v7358 = vadd.f32 %v6923, %v7225
          %v7359 = vadd.f32 %v6924, %v7228
          %v7360 = vadd.f32 %v6925, %v7233
          %v7361 = vadd.f32 %v6926, %v7236
          %v7362 = vadd.f32 %v6927, %v7241
          %v7363 = vadd.f32 %v6928, %v7244
          %v7364 = vadd.f32 %v6929, %v7249
          %v7365 = vadd.f32 %v6930, %v7252
          %v7366 = vadd.f32 %v6931, %v7257
          %v7367 = vadd.f32 %v6932, %v7260
          %v7368 = vadd.f32 %v6933, %v7265
          %v7369 = vadd.f32 %v6934, %v7268
          %v7370 = vadd.f32 %v6935, %v7273
          %v7371 = vadd.f32 %v6936, %v7276
          %v7372 = vadd.f32 %v6937, %v7281
          %v7373 = vadd.f32 %v6938, %v7284
          %v7374 = vadd.f32 %v6939, %v7289
          %v7375 = vadd.f32 %v6940, %v7292
          %v7376 = vadd.f32 %v6941, %v7297
          %v7377 = vadd.f32 %v6942, %v7300
          %v7378 = vadd.f32 %v6943, %v7305
          %v7379 = vadd.f32 %v6944, %v7308
          %v7380 = vadd.f32 %v6945, %v7313
          %v7381 = vadd.f32 %v6946, %v7316
          %v7382 = vadd.f32 %v6947, %v7321
          %v7383 = vadd.f32 %v6948, %v7324
          %v7384 = vadd.f32 %v6949, %v7329
          %v7385 = vadd.f32 %v6950, %v7332
          %v7386 = vadd.f32 %v6951, %v7337
          %v7387 = vadd.f32 %v6952, %v7340
          %v7388 = vadd.f32 %v6953, %v7345
          %v7389 = vadd.f32 %v6954, %v7348
          %v7390 = vadd.f32 %v6955, %v7353
          %v7391 = vld [vmem:[#allocation2 + $0x90] sm:$0x3]
          %s7392 = scalar_lea.vmem %s295, 1024 [#allocation3]
          %v7393 = vld [vmem:[%s7392] sm:$0xf]
          %v7394 = vld [vmem:[%s7392 + $0x4] sm:$0xf]
          %v7395 = vld [vmem:[%s7392 + $0x8] sm:$0xf]
          %v7396 = vld [vmem:[%s7392 + $0xc] sm:$0xf]
          %v7397 = vld [vmem:[%s7392 + $0x10] sm:$0xf]
          %v7398 = vld [vmem:[%s7392 + $0x14] sm:$0xf]
          %v7399 = vld [vmem:[%s7392 + $0x18] sm:$0xf]
          %v7400 = vld [vmem:[%s7392 + $0x1c] sm:$0xf]
          %v7401 = vld [vmem:[%s7392 + $0x20] sm:$0xf]
          %v7402 = vld [vmem:[%s7392 + $0x24] sm:$0xf]
          %v7403 = vld [vmem:[%s7392 + $0x28] sm:$0xf]
          %v7404 = vld [vmem:[%s7392 + $0x2c] sm:$0xf]
          %v7405 = vld [vmem:[%s7392 + $0x30] sm:$0xf]
          %v7406 = vld [vmem:[%s7392 + $0x34] sm:$0xf]
          %v7407 = vld [vmem:[%s7392 + $0x38] sm:$0xf]
          %v7408 = vld [vmem:[%s7392 + $0x3c] sm:$0xf]
          %v7410 = vunpack.c.l.b16 %v7391
          %v7411 = vpack.c.b16 %v7410, %v7073
          %v7413 = vshrl.u32 %v7075, 16
          %v7415 = vrot.slane %v7413, 1
          %v7416 = vshll.u32 %v7075, 16
          %v7418 = vrot.slane %v7416, 2
          %v7419 = vor.u32 %v7415, %v7418
          %v7421 = vshrl.u32 %v7076, 16
          %v7423 = vrot.slane %v7421, 1
          %v7424 = vshll.u32 %v7076, 16
          %v7426 = vrot.slane %v7424, 2
          %v7427 = vor.u32 %v7423, %v7426
          %v7428 = vsel %vm3372, %v7419, %v7427
          %v7430 = vshrl.u32 %v7077, 16
          %v7432 = vrot.slane %v7430, 1
          %v7433 = vshll.u32 %v7077, 16
          %v7435 = vrot.slane %v7433, 2
          %v7436 = vor.u32 %v7432, %v7435
          %v7437 = vsel %vm3372, %v7427, %v7436
          %v7439 = vshrl.u32 %v7078, 16
          %v7441 = vrot.slane %v7439, 1
          %v7442 = vshll.u32 %v7078, 16
          %v7444 = vrot.slane %v7442, 2
          %v7445 = vor.u32 %v7441, %v7444
          %v7446 = vsel %vm3372, %v7436, %v7445
          %v7448 = vshrl.u32 %v7079, 16
          %v7450 = vrot.slane %v7448, 1
          %v7451 = vshll.u32 %v7079, 16
          %v7453 = vrot.slane %v7451, 2
          %v7454 = vor.u32 %v7450, %v7453
          %v7455 = vsel %vm3372, %v7445, %v7454
          %v7457 = vshrl.u32 %v7080, 16
          %v7459 = vrot.slane %v7457, 1
          %v7460 = vshll.u32 %v7080, 16
          %v7462 = vrot.slane %v7460, 2
          %v7463 = vor.u32 %v7459, %v7462
          %v7464 = vsel %vm3372, %v7454, %v7463
          %v7466 = vshrl.u32 %v7081, 16
          %v7468 = vrot.slane %v7466, 1
          %v7469 = vshll.u32 %v7081, 16
          %v7471 = vrot.slane %v7469, 2
          %v7472 = vor.u32 %v7468, %v7471
          %v7473 = vsel %vm3372, %v7463, %v7472
          %v7475 = vshrl.u32 %v7082, 16
          %v7477 = vrot.slane %v7475, 1
          %v7478 = vshll.u32 %v7082, 16
          %v7480 = vrot.slane %v7478, 2
          %v7481 = vor.u32 %v7477, %v7480
          %v7482 = vsel %vm3372, %v7472, %v7481
          %v7484 = vshrl.u32 %v7083, 16
          %v7486 = vrot.slane %v7484, 1
          %v7487 = vshll.u32 %v7083, 16
          %v7489 = vrot.slane %v7487, 2
          %v7490 = vor.u32 %v7486, %v7489
          %v7491 = vsel %vm3372, %v7481, %v7490
          %v7493 = vshrl.u32 %v7084, 16
          %v7495 = vrot.slane %v7493, 1
          %v7496 = vshll.u32 %v7084, 16
          %v7498 = vrot.slane %v7496, 2
          %v7499 = vor.u32 %v7495, %v7498
          %v7500 = vsel %vm3372, %v7490, %v7499
          %v7502 = vshrl.u32 %v7085, 16
          %v7504 = vrot.slane %v7502, 1
          %v7505 = vshll.u32 %v7085, 16
          %v7507 = vrot.slane %v7505, 2
          %v7508 = vor.u32 %v7504, %v7507
          %v7509 = vsel %vm3372, %v7499, %v7508
          %v7511 = vshrl.u32 %v7086, 16
          %v7513 = vrot.slane %v7511, 1
          %v7514 = vshll.u32 %v7086, 16
          %v7516 = vrot.slane %v7514, 2
          %v7517 = vor.u32 %v7513, %v7516
          %v7518 = vsel %vm3372, %v7508, %v7517
          %v7520 = vshrl.u32 %v7087, 16
          %v7522 = vrot.slane %v7520, 1
          %v7523 = vshll.u32 %v7087, 16
          %v7525 = vrot.slane %v7523, 2
          %v7526 = vor.u32 %v7522, %v7525
          %v7527 = vsel %vm3372, %v7517, %v7526
          %v7529 = vshrl.u32 %v7088, 16
          %v7531 = vrot.slane %v7529, 1
          %v7532 = vshll.u32 %v7088, 16
          %v7534 = vrot.slane %v7532, 2
          %v7535 = vor.u32 %v7531, %v7534
          %v7536 = vsel %vm3372, %v7526, %v7535
          %v7538 = vshrl.u32 %v7089, 16
          %v7540 = vrot.slane %v7538, 1
          %v7541 = vshll.u32 %v7089, 16
          %v7543 = vrot.slane %v7541, 2
          %v7544 = vor.u32 %v7540, %v7543
          %v7545 = vsel %vm3372, %v7535, %v7544
          %v7547 = vshrl.u32 %v7090, 16
          %v7549 = vrot.slane %v7547, 1
          %v7550 = vshll.u32 %v7090, 16
          %v7552 = vrot.slane %v7550, 2
          %v7553 = vor.u32 %v7549, %v7552
          %v7554 = vsel %vm3372, %v7544, %v7553
          %v7556 = vshrl.u32 %v7411, 16
          %v7558 = vrot.slane %v7556, 1
          %v7559 = vshll.u32 %v7411, 16
          %v7561 = vrot.slane %v7559, 2
          %v7562 = vor.u32 %v7558, %v7561
          %v7563 = vsel %vm3372, %v7553, %v7562
          %v7597 = vunpack.c.l.b16 %v7393
          %v7598 = vunpack.c.l.b16 %v7394
          %v7599 = vunpack.c.l.b16 %v7395
          %v7600 = vunpack.c.l.b16 %v7396
          %v7601 = vunpack.c.l.b16 %v7397
          %v7602 = vunpack.c.l.b16 %v7398
          %v7603 = vunpack.c.l.b16 %v7399
          %v7604 = vunpack.c.l.b16 %v7400
          %v7605 = vunpack.c.l.b16 %v7401
          %v7606 = vunpack.c.l.b16 %v7402
          %v7607 = vunpack.c.l.b16 %v7403
          %v7608 = vunpack.c.l.b16 %v7404
          %v7609 = vunpack.c.l.b16 %v7405
          %v7610 = vunpack.c.l.b16 %v7406
          %v7611 = vunpack.c.l.b16 %v7407
          %v7612 = vunpack.c.l.b16 %v7408
          %v7613 = vpack.c.b16 %v7598, %v7597
          %v7614 = vpack.c.b16 %v7600, %v7599
          %v7615 = vpack.c.b16 %v7602, %v7601
          %v7616 = vpack.c.b16 %v7604, %v7603
          %v7617 = vpack.c.b16 %v7606, %v7605
          %v7618 = vpack.c.b16 %v7608, %v7607
          %v7619 = vpack.c.b16 %v7610, %v7609
          %v7620 = vpack.c.b16 %v7612, %v7611
          %7629 = vmatprep.subr.bf16.mxu0 0
          %7630 = vmatpush1.bf16.msra.mxu0 %v7620
          %7631 = vmatprep.subr.bf16.mxu0 0
          %7632 = vmatpush1.bf16.msra.mxu0 %v7619
          %7633 = vmatprep.subr.bf16.mxu0 0
          %7634 = vmatpush1.bf16.msra.mxu0 %v7618
          %7635 = vmatprep.subr.bf16.mxu0 0
          %7636 = vmatpush1.bf16.msra.mxu0 %v7617
          %7637 = vmatprep.subr.bf16.mxu0 0
          %7638 = vmatpush1.bf16.msra.mxu0 %v7616
          %7639 = vmatprep.subr.bf16.mxu0 0
          %7640 = vmatpush1.bf16.msra.mxu0 %v7615
          %7641 = vmatprep.subr.bf16.mxu0 0
          %7642 = vmatpush1.bf16.msra.mxu0 %v7614
          %7643 = vmatprep.subr.bf16.mxu0 0
          %7644 = vmatpush1.bf16.msra.mxu0 %v7613
          %7645 = vmatprep.subr.bf16.mxu0 0
          %7646 = vmatpush2.bf16.msra.mxu0 0
          %7647 = vmatprep.subr.bf16.mxu0 0
          %7648 = vmatpush2.bf16.msra.mxu0 0
          %7649 = vmatprep.subr.bf16.mxu0 0
          %7650 = vmatpush2.bf16.msra.mxu0 0
          %7651 = vmatprep.subr.bf16.mxu0 0
          %7652 = vmatpush2.bf16.msra.mxu0 0
          %7653 = vmatprep.subr.bf16.mxu0 0
          %7654 = vmatpush2.bf16.msra.mxu0 0
          %7655 = vmatprep.subr.bf16.mxu0 0
          %7656 = vmatpush2.bf16.msra.mxu0 0
          %7657 = vmatprep.subr.bf16.mxu0 0
          %7658 = vmatpush2.bf16.msra.mxu0 0
          %7659 = vmatprep.subr.bf16.mxu0 0
          %7660 = vmatpush2.bf16.msra.mxu0 0
          %7661 = vmatprep.mubr.bf16.mxu0 0
          %7662 = vmatmul.mubr.bf16.gmra.mxu0 %v7428
          %v7663 = vpop.f32.mrf.mxu0
          %v7664 = vadd.f32 0.0, %v7663
          %v7665 = vpop.f32.mrf.mxu0
          %v7666 = vpop.f32.mrf.mxu0
          %v7667 = vadd.f32 0.0, %v7666
          %v7668 = vpop.f32.mrf.mxu0
          %7669 = vmatprep.mubr.bf16.mxu0 0
          %7670 = vmatmul.mubr.bf16.gmra.mxu0 %v7437
          %v7671 = vpop.f32.mrf.mxu0
          %v7672 = vadd.f32 0.0, %v7671
          %v7673 = vpop.f32.mrf.mxu0
          %v7674 = vpop.f32.mrf.mxu0
          %v7675 = vadd.f32 0.0, %v7674
          %v7676 = vpop.f32.mrf.mxu0
          %7677 = vmatprep.mubr.bf16.mxu0 0
          %7678 = vmatmul.mubr.bf16.gmra.mxu0 %v7446
          %v7679 = vpop.f32.mrf.mxu0
          %v7680 = vadd.f32 0.0, %v7679
          %v7681 = vpop.f32.mrf.mxu0
          %v7682 = vpop.f32.mrf.mxu0
          %v7683 = vadd.f32 0.0, %v7682
          %v7684 = vpop.f32.mrf.mxu0
          %7685 = vmatprep.mubr.bf16.mxu0 0
          %7686 = vmatmul.mubr.bf16.gmra.mxu0 %v7455
          %v7687 = vpop.f32.mrf.mxu0
          %v7688 = vadd.f32 0.0, %v7687
          %v7689 = vpop.f32.mrf.mxu0
          %v7690 = vpop.f32.mrf.mxu0
          %v7691 = vadd.f32 0.0, %v7690
          %v7692 = vpop.f32.mrf.mxu0
          %7693 = vmatprep.mubr.bf16.mxu0 0
          %7694 = vmatmul.mubr.bf16.gmra.mxu0 %v7464
          %v7695 = vpop.f32.mrf.mxu0
          %v7696 = vadd.f32 0.0, %v7695
          %v7697 = vpop.f32.mrf.mxu0
          %v7698 = vpop.f32.mrf.mxu0
          %v7699 = vadd.f32 0.0, %v7698
          %v7700 = vpop.f32.mrf.mxu0
          %7701 = vmatprep.mubr.bf16.mxu0 0
          %7702 = vmatmul.mubr.bf16.gmra.mxu0 %v7473
          %v7703 = vpop.f32.mrf.mxu0
          %v7704 = vadd.f32 0.0, %v7703
          %v7705 = vpop.f32.mrf.mxu0
          %v7706 = vpop.f32.mrf.mxu0
          %v7707 = vadd.f32 0.0, %v7706
          %v7708 = vpop.f32.mrf.mxu0
          %7709 = vmatprep.mubr.bf16.mxu0 0
          %7710 = vmatmul.mubr.bf16.gmra.mxu0 %v7482
          %v7711 = vpop.f32.mrf.mxu0
          %v7712 = vadd.f32 0.0, %v7711
          %v7713 = vpop.f32.mrf.mxu0
          %v7714 = vpop.f32.mrf.mxu0
          %v7715 = vadd.f32 0.0, %v7714
          %v7716 = vpop.f32.mrf.mxu0
          %7717 = vmatprep.mubr.bf16.mxu0 0
          %7718 = vmatmul.mubr.bf16.gmra.mxu0 %v7491
          %v7719 = vpop.f32.mrf.mxu0
          %v7720 = vadd.f32 0.0, %v7719
          %v7721 = vpop.f32.mrf.mxu0
          %v7722 = vpop.f32.mrf.mxu0
          %v7723 = vadd.f32 0.0, %v7722
          %v7724 = vpop.f32.mrf.mxu0
          %7725 = vmatprep.mubr.bf16.mxu0 0
          %7726 = vmatmul.mubr.bf16.gmra.mxu0 %v7500
          %v7727 = vpop.f32.mrf.mxu0
          %v7728 = vadd.f32 0.0, %v7727
          %v7729 = vpop.f32.mrf.mxu0
          %v7730 = vpop.f32.mrf.mxu0
          %v7731 = vadd.f32 0.0, %v7730
          %v7732 = vpop.f32.mrf.mxu0
          %7733 = vmatprep.mubr.bf16.mxu0 0
          %7734 = vmatmul.mubr.bf16.gmra.mxu0 %v7509
          %v7735 = vpop.f32.mrf.mxu0
          %v7736 = vadd.f32 0.0, %v7735
          %v7737 = vpop.f32.mrf.mxu0
          %v7738 = vpop.f32.mrf.mxu0
          %v7739 = vadd.f32 0.0, %v7738
          %v7740 = vpop.f32.mrf.mxu0
          %7741 = vmatprep.mubr.bf16.mxu0 0
          %7742 = vmatmul.mubr.bf16.gmra.mxu0 %v7518
          %v7743 = vpop.f32.mrf.mxu0
          %v7744 = vadd.f32 0.0, %v7743
          %v7745 = vpop.f32.mrf.mxu0
          %v7746 = vpop.f32.mrf.mxu0
          %v7747 = vadd.f32 0.0, %v7746
          %v7748 = vpop.f32.mrf.mxu0
          %7749 = vmatprep.mubr.bf16.mxu0 0
          %7750 = vmatmul.mubr.bf16.gmra.mxu0 %v7527
          %v7751 = vpop.f32.mrf.mxu0
          %v7752 = vadd.f32 0.0, %v7751
          %v7753 = vpop.f32.mrf.mxu0
          %v7754 = vpop.f32.mrf.mxu0
          %v7755 = vadd.f32 0.0, %v7754
          %v7756 = vpop.f32.mrf.mxu0
          %7757 = vmatprep.mubr.bf16.mxu0 0
          %7758 = vmatmul.mubr.bf16.gmra.mxu0 %v7536
          %v7759 = vpop.f32.mrf.mxu0
          %v7760 = vadd.f32 0.0, %v7759
          %v7761 = vpop.f32.mrf.mxu0
          %v7762 = vpop.f32.mrf.mxu0
          %v7763 = vadd.f32 0.0, %v7762
          %v7764 = vpop.f32.mrf.mxu0
          %7765 = vmatprep.mubr.bf16.mxu0 0
          %7766 = vmatmul.mubr.bf16.gmra.mxu0 %v7545
          %v7767 = vpop.f32.mrf.mxu0
          %v7768 = vadd.f32 0.0, %v7767
          %v7769 = vpop.f32.mrf.mxu0
          %v7770 = vpop.f32.mrf.mxu0
          %v7771 = vadd.f32 0.0, %v7770
          %v7772 = vpop.f32.mrf.mxu0
          %7773 = vmatprep.mubr.bf16.mxu0 0
          %7774 = vmatmul.mubr.bf16.gmra.mxu0 %v7554
          %v7775 = vpop.f32.mrf.mxu0
          %v7776 = vadd.f32 0.0, %v7775
          %v7777 = vpop.f32.mrf.mxu0
          %v7778 = vpop.f32.mrf.mxu0
          %v7779 = vadd.f32 0.0, %v7778
          %v7780 = vpop.f32.mrf.mxu0
          %7781 = vmatprep.mubr.bf16.mxu0 0
          %7782 = vmatmul.mubr.bf16.gmra.mxu0 %v7563
          %v7783 = vpop.f32.mrf.mxu0
          %v7784 = vadd.f32 0.0, %v7783
          %v7785 = vpop.f32.mrf.mxu0
          %v7786 = vpop.f32.mrf.mxu0
          %v7787 = vadd.f32 0.0, %v7786
          %v7788 = vpop.f32.mrf.mxu0
          %7789 = vmatprep.mubr.bf16.mxu0 0
          %7790 = vmatmul.mubr.bf16.gmra.mxu0 %v7562
          %v7791 = vpop.f32.mrf.mxu0
          %v7792 = vadd.f32 0.0, %v7791
          %v7793 = vpop.f32.mrf.mxu0
          %v7794 = vpop.f32.mrf.mxu0
          %v7795 = vpop.f32.mrf.mxu0
          %7796 = vdwg.mxu0
          %v7797 = vadd.f32 %v7358, %v7664
          %v7798 = vadd.f32 %v7359, %v7667
          %v7799 = vadd.f32 %v7360, %v7672
          %v7800 = vadd.f32 %v7361, %v7675
          %v7801 = vadd.f32 %v7362, %v7680
          %v7802 = vadd.f32 %v7363, %v7683
          %v7803 = vadd.f32 %v7364, %v7688
          %v7804 = vadd.f32 %v7365, %v7691
          %v7805 = vadd.f32 %v7366, %v7696
          %v7806 = vadd.f32 %v7367, %v7699
          %v7807 = vadd.f32 %v7368, %v7704
          %v7808 = vadd.f32 %v7369, %v7707
          %v7809 = vadd.f32 %v7370, %v7712
          %v7810 = vadd.f32 %v7371, %v7715
          %v7811 = vadd.f32 %v7372, %v7720
          %v7812 = vadd.f32 %v7373, %v7723
          %v7813 = vadd.f32 %v7374, %v7728
          %v7814 = vadd.f32 %v7375, %v7731
          %v7815 = vadd.f32 %v7376, %v7736
          %v7816 = vadd.f32 %v7377, %v7739
          %v7817 = vadd.f32 %v7378, %v7744
          %v7818 = vadd.f32 %v7379, %v7747
          %v7819 = vadd.f32 %v7380, %v7752
          %v7820 = vadd.f32 %v7381, %v7755
          %v7821 = vadd.f32 %v7382, %v7760
          %v7822 = vadd.f32 %v7383, %v7763
          %v7823 = vadd.f32 %v7384, %v7768
          %v7824 = vadd.f32 %v7385, %v7771
          %v7825 = vadd.f32 %v7386, %v7776
          %v7826 = vadd.f32 %v7387, %v7779
          %v7827 = vadd.f32 %v7388, %v7784
          %v7828 = vadd.f32 %v7389, %v7787
          %v7829 = vadd.f32 %v7390, %v7792
          %v7830 = vld [vmem:[#allocation2 + $0xc] sm:$0xc]
          %s7831 = scalar_lea.vmem %s295, 1088 [#allocation3]
          %v7832 = vld [vmem:[%s7831] sm:$0xf]
          %v7833 = vld [vmem:[%s7831 + $0x4] sm:$0xf]
          %v7834 = vld [vmem:[%s7831 + $0x8] sm:$0xf]
          %v7835 = vld [vmem:[%s7831 + $0xc] sm:$0xf]
          %v7836 = vld [vmem:[%s7831 + $0x10] sm:$0xf]
          %v7837 = vld [vmem:[%s7831 + $0x14] sm:$0xf]
          %v7838 = vld [vmem:[%s7831 + $0x18] sm:$0xf]
          %v7839 = vld [vmem:[%s7831 + $0x1c] sm:$0xf]
          %v7840 = vld [vmem:[%s7831 + $0x20] sm:$0xf]
          %v7841 = vld [vmem:[%s7831 + $0x24] sm:$0xf]
          %v7842 = vld [vmem:[%s7831 + $0x28] sm:$0xf]
          %v7843 = vld [vmem:[%s7831 + $0x2c] sm:$0xf]
          %v7844 = vld [vmem:[%s7831 + $0x30] sm:$0xf]
          %v7845 = vld [vmem:[%s7831 + $0x34] sm:$0xf]
          %v7846 = vld [vmem:[%s7831 + $0x38] sm:$0xf]
          %v7847 = vld [vmem:[%s7831 + $0x3c] sm:$0xf]
          %v7849 = vunpack.c.l.b16 %v7830
          %v7850 = vpack.c.b16 %v7042, %v7849
          %v7851 = vrot.slane %v7850, 2
          %v7852 = vrot.slane %v7076, 2
          %v7853 = vsel %vm1044, %v7851, %v7852
          %v7854 = vrot.slane %v7077, 2
          %v7855 = vsel %vm1044, %v7852, %v7854
          %v7856 = vrot.slane %v7078, 2
          %v7857 = vsel %vm1044, %v7854, %v7856
          %v7858 = vrot.slane %v7079, 2
          %v7859 = vsel %vm1044, %v7856, %v7858
          %v7860 = vrot.slane %v7080, 2
          %v7861 = vsel %vm1044, %v7858, %v7860
          %v7862 = vrot.slane %v7081, 2
          %v7863 = vsel %vm1044, %v7860, %v7862
          %v7864 = vrot.slane %v7082, 2
          %v7865 = vsel %vm1044, %v7862, %v7864
          %v7866 = vrot.slane %v7083, 2
          %v7867 = vsel %vm1044, %v7864, %v7866
          %v7868 = vrot.slane %v7084, 2
          %v7869 = vsel %vm1044, %v7866, %v7868
          %v7870 = vrot.slane %v7085, 2
          %v7871 = vsel %vm1044, %v7868, %v7870
          %v7872 = vrot.slane %v7086, 2
          %v7873 = vsel %vm1044, %v7870, %v7872
          %v7874 = vrot.slane %v7087, 2
          %v7875 = vsel %vm1044, %v7872, %v7874
          %v7876 = vrot.slane %v7088, 2
          %v7877 = vsel %vm1044, %v7874, %v7876
          %v7878 = vrot.slane %v7089, 2
          %v7879 = vsel %vm1044, %v7876, %v7878
          %v7880 = vrot.slane %v7090, 2
          %v7881 = vsel %vm1044, %v7878, %v7880
          %v7882 = vrot.slane %v7411, 2
          %v7883 = vsel %vm1044, %v7880, %v7882
          %v7917 = vunpack.c.l.b16 %v7832
          %v7918 = vunpack.c.l.b16 %v7833
          %v7919 = vunpack.c.l.b16 %v7834
          %v7920 = vunpack.c.l.b16 %v7835
          %v7921 = vunpack.c.l.b16 %v7836
          %v7922 = vunpack.c.l.b16 %v7837
          %v7923 = vunpack.c.l.b16 %v7838
          %v7924 = vunpack.c.l.b16 %v7839
          %v7925 = vunpack.c.l.b16 %v7840
          %v7926 = vunpack.c.l.b16 %v7841
          %v7927 = vunpack.c.l.b16 %v7842
          %v7928 = vunpack.c.l.b16 %v7843
          %v7929 = vunpack.c.l.b16 %v7844
          %v7930 = vunpack.c.l.b16 %v7845
          %v7931 = vunpack.c.l.b16 %v7846
          %v7932 = vunpack.c.l.b16 %v7847
          %v7933 = vpack.c.b16 %v7918, %v7917
          %v7934 = vpack.c.b16 %v7920, %v7919
          %v7935 = vpack.c.b16 %v7922, %v7921
          %v7936 = vpack.c.b16 %v7924, %v7923
          %v7937 = vpack.c.b16 %v7926, %v7925
          %v7938 = vpack.c.b16 %v7928, %v7927
          %v7939 = vpack.c.b16 %v7930, %v7929
          %v7940 = vpack.c.b16 %v7932, %v7931
          %7949 = vmatprep.subr.bf16.mxu0 0
          %7950 = vmatpush1.bf16.msra.mxu0 %v7940
          %7951 = vmatprep.subr.bf16.mxu0 0
          %7952 = vmatpush1.bf16.msra.mxu0 %v7939
          %7953 = vmatprep.subr.bf16.mxu0 0
          %7954 = vmatpush1.bf16.msra.mxu0 %v7938
          %7955 = vmatprep.subr.bf16.mxu0 0
          %7956 = vmatpush1.bf16.msra.mxu0 %v7937
          %7957 = vmatprep.subr.bf16.mxu0 0
          %7958 = vmatpush1.bf16.msra.mxu0 %v7936
          %7959 = vmatprep.subr.bf16.mxu0 0
          %7960 = vmatpush1.bf16.msra.mxu0 %v7935
          %7961 = vmatprep.subr.bf16.mxu0 0
          %7962 = vmatpush1.bf16.msra.mxu0 %v7934
          %7963 = vmatprep.subr.bf16.mxu0 0
          %7964 = vmatpush1.bf16.msra.mxu0 %v7933
          %7965 = vmatprep.subr.bf16.mxu0 0
          %7966 = vmatpush2.bf16.msra.mxu0 0
          %7967 = vmatprep.subr.bf16.mxu0 0
          %7968 = vmatpush2.bf16.msra.mxu0 0
          %7969 = vmatprep.subr.bf16.mxu0 0
          %7970 = vmatpush2.bf16.msra.mxu0 0
          %7971 = vmatprep.subr.bf16.mxu0 0
          %7972 = vmatpush2.bf16.msra.mxu0 0
          %7973 = vmatprep.subr.bf16.mxu0 0
          %7974 = vmatpush2.bf16.msra.mxu0 0
          %7975 = vmatprep.subr.bf16.mxu0 0
          %7976 = vmatpush2.bf16.msra.mxu0 0
          %7977 = vmatprep.subr.bf16.mxu0 0
          %7978 = vmatpush2.bf16.msra.mxu0 0
          %7979 = vmatprep.subr.bf16.mxu0 0
          %7980 = vmatpush2.bf16.msra.mxu0 0
          %7981 = vmatprep.mubr.bf16.mxu0 0
          %7982 = vmatmul.mubr.bf16.gmra.mxu0 %v7853
          %v7983 = vpop.f32.mrf.mxu0
          %v7984 = vadd.f32 0.0, %v7983
          %v7985 = vpop.f32.mrf.mxu0
          %v7986 = vpop.f32.mrf.mxu0
          %v7987 = vadd.f32 0.0, %v7986
          %v7988 = vpop.f32.mrf.mxu0
          %7989 = vmatprep.mubr.bf16.mxu0 0
          %7990 = vmatmul.mubr.bf16.gmra.mxu0 %v7855
          %v7991 = vpop.f32.mrf.mxu0
          %v7992 = vadd.f32 0.0, %v7991
          %v7993 = vpop.f32.mrf.mxu0
          %v7994 = vpop.f32.mrf.mxu0
          %v7995 = vadd.f32 0.0, %v7994
          %v7996 = vpop.f32.mrf.mxu0
          %7997 = vmatprep.mubr.bf16.mxu0 0
          %7998 = vmatmul.mubr.bf16.gmra.mxu0 %v7857
          %v7999 = vpop.f32.mrf.mxu0
          %v8000 = vadd.f32 0.0, %v7999
          %v8001 = vpop.f32.mrf.mxu0
          %v8002 = vpop.f32.mrf.mxu0
          %v8003 = vadd.f32 0.0, %v8002
          %v8004 = vpop.f32.mrf.mxu0
          %8005 = vmatprep.mubr.bf16.mxu0 0
          %8006 = vmatmul.mubr.bf16.gmra.mxu0 %v7859
          %v8007 = vpop.f32.mrf.mxu0
          %v8008 = vadd.f32 0.0, %v8007
          %v8009 = vpop.f32.mrf.mxu0
          %v8010 = vpop.f32.mrf.mxu0
          %v8011 = vadd.f32 0.0, %v8010
          %v8012 = vpop.f32.mrf.mxu0
          %8013 = vmatprep.mubr.bf16.mxu0 0
          %8014 = vmatmul.mubr.bf16.gmra.mxu0 %v7861
          %v8015 = vpop.f32.mrf.mxu0
          %v8016 = vadd.f32 0.0, %v8015
          %v8017 = vpop.f32.mrf.mxu0
          %v8018 = vpop.f32.mrf.mxu0
          %v8019 = vadd.f32 0.0, %v8018
          %v8020 = vpop.f32.mrf.mxu0
          %8021 = vmatprep.mubr.bf16.mxu0 0
          %8022 = vmatmul.mubr.bf16.gmra.mxu0 %v7863
          %v8023 = vpop.f32.mrf.mxu0
          %v8024 = vadd.f32 0.0, %v8023
          %v8025 = vpop.f32.mrf.mxu0
          %v8026 = vpop.f32.mrf.mxu0
          %v8027 = vadd.f32 0.0, %v8026
          %v8028 = vpop.f32.mrf.mxu0
          %8029 = vmatprep.mubr.bf16.mxu0 0
          %8030 = vmatmul.mubr.bf16.gmra.mxu0 %v7865
          %v8031 = vpop.f32.mrf.mxu0
          %v8032 = vadd.f32 0.0, %v8031
          %v8033 = vpop.f32.mrf.mxu0
          %v8034 = vpop.f32.mrf.mxu0
          %v8035 = vadd.f32 0.0, %v8034
          %v8036 = vpop.f32.mrf.mxu0
          %8037 = vmatprep.mubr.bf16.mxu0 0
          %8038 = vmatmul.mubr.bf16.gmra.mxu0 %v7867
          %v8039 = vpop.f32.mrf.mxu0
          %v8040 = vadd.f32 0.0, %v8039
          %v8041 = vpop.f32.mrf.mxu0
          %v8042 = vpop.f32.mrf.mxu0
          %v8043 = vadd.f32 0.0, %v8042
          %v8044 = vpop.f32.mrf.mxu0
          %8045 = vmatprep.mubr.bf16.mxu0 0
          %8046 = vmatmul.mubr.bf16.gmra.mxu0 %v7869
          %v8047 = vpop.f32.mrf.mxu0
          %v8048 = vadd.f32 0.0, %v8047
          %v8049 = vpop.f32.mrf.mxu0
          %v8050 = vpop.f32.mrf.mxu0
          %v8051 = vadd.f32 0.0, %v8050
          %v8052 = vpop.f32.mrf.mxu0
          %8053 = vmatprep.mubr.bf16.mxu0 0
          %8054 = vmatmul.mubr.bf16.gmra.mxu0 %v7871
          %v8055 = vpop.f32.mrf.mxu0
          %v8056 = vadd.f32 0.0, %v8055
          %v8057 = vpop.f32.mrf.mxu0
          %v8058 = vpop.f32.mrf.mxu0
          %v8059 = vadd.f32 0.0, %v8058
          %v8060 = vpop.f32.mrf.mxu0
          %8061 = vmatprep.mubr.bf16.mxu0 0
          %8062 = vmatmul.mubr.bf16.gmra.mxu0 %v7873
          %v8063 = vpop.f32.mrf.mxu0
          %v8064 = vadd.f32 0.0, %v8063
          %v8065 = vpop.f32.mrf.mxu0
          %v8066 = vpop.f32.mrf.mxu0
          %v8067 = vadd.f32 0.0, %v8066
          %v8068 = vpop.f32.mrf.mxu0
          %8069 = vmatprep.mubr.bf16.mxu0 0
          %8070 = vmatmul.mubr.bf16.gmra.mxu0 %v7875
          %v8071 = vpop.f32.mrf.mxu0
          %v8072 = vadd.f32 0.0, %v8071
          %v8073 = vpop.f32.mrf.mxu0
          %v8074 = vpop.f32.mrf.mxu0
          %v8075 = vadd.f32 0.0, %v8074
          %v8076 = vpop.f32.mrf.mxu0
          %8077 = vmatprep.mubr.bf16.mxu0 0
          %8078 = vmatmul.mubr.bf16.gmra.mxu0 %v7877
          %v8079 = vpop.f32.mrf.mxu0
          %v8080 = vadd.f32 0.0, %v8079
          %v8081 = vpop.f32.mrf.mxu0
          %v8082 = vpop.f32.mrf.mxu0
          %v8083 = vadd.f32 0.0, %v8082
          %v8084 = vpop.f32.mrf.mxu0
          %8085 = vmatprep.mubr.bf16.mxu0 0
          %8086 = vmatmul.mubr.bf16.gmra.mxu0 %v7879
          %v8087 = vpop.f32.mrf.mxu0
          %v8088 = vadd.f32 0.0, %v8087
          %v8089 = vpop.f32.mrf.mxu0
          %v8090 = vpop.f32.mrf.mxu0
          %v8091 = vadd.f32 0.0, %v8090
          %v8092 = vpop.f32.mrf.mxu0
          %8093 = vmatprep.mubr.bf16.mxu0 0
          %8094 = vmatmul.mubr.bf16.gmra.mxu0 %v7881
          %v8095 = vpop.f32.mrf.mxu0
          %v8096 = vadd.f32 0.0, %v8095
          %v8097 = vpop.f32.mrf.mxu0
          %v8098 = vpop.f32.mrf.mxu0
          %v8099 = vadd.f32 0.0, %v8098
          %v8100 = vpop.f32.mrf.mxu0
          %8101 = vmatprep.mubr.bf16.mxu0 0
          %8102 = vmatmul.mubr.bf16.gmra.mxu0 %v7883
          %v8103 = vpop.f32.mrf.mxu0
          %v8104 = vadd.f32 0.0, %v8103
          %v8105 = vpop.f32.mrf.mxu0
          %v8106 = vpop.f32.mrf.mxu0
          %v8107 = vadd.f32 0.0, %v8106
          %v8108 = vpop.f32.mrf.mxu0
          %8109 = vmatprep.mubr.bf16.mxu0 0
          %8110 = vmatmul.mubr.bf16.gmra.mxu0 %v7882
          %v8111 = vpop.f32.mrf.mxu0
          %v8112 = vadd.f32 0.0, %v8111
          %v8113 = vpop.f32.mrf.mxu0
          %v8114 = vpop.f32.mrf.mxu0
          %v8115 = vpop.f32.mrf.mxu0
          %8116 = vdwg.mxu0
          %v8117 = vadd.f32 %v7797, %v7984
          %v8118 = vadd.f32 %v7798, %v7987
          %v8119 = vadd.f32 %v7799, %v7992
          %v8120 = vadd.f32 %v7800, %v7995
          %v8121 = vadd.f32 %v7801, %v8000
          %v8122 = vadd.f32 %v7802, %v8003
          %v8123 = vadd.f32 %v7803, %v8008
          %v8124 = vadd.f32 %v7804, %v8011
          %v8125 = vadd.f32 %v7805, %v8016
          %v8126 = vadd.f32 %v7806, %v8019
          %v8127 = vadd.f32 %v7807, %v8024
          %v8128 = vadd.f32 %v7808, %v8027
          %v8129 = vadd.f32 %v7809, %v8032
          %v8130 = vadd.f32 %v7810, %v8035
          %v8131 = vadd.f32 %v7811, %v8040
          %v8132 = vadd.f32 %v7812, %v8043
          %v8133 = vadd.f32 %v7813, %v8048
          %v8134 = vadd.f32 %v7814, %v8051
          %v8135 = vadd.f32 %v7815, %v8056
          %v8136 = vadd.f32 %v7816, %v8059
          %v8137 = vadd.f32 %v7817, %v8064
          %v8138 = vadd.f32 %v7818, %v8067
          %v8139 = vadd.f32 %v7819, %v8072
          %v8140 = vadd.f32 %v7820, %v8075
          %v8141 = vadd.f32 %v7821, %v8080
          %v8142 = vadd.f32 %v7822, %v8083
          %v8143 = vadd.f32 %v7823, %v8088
          %v8144 = vadd.f32 %v7824, %v8091
          %v8145 = vadd.f32 %v7825, %v8096
          %v8146 = vadd.f32 %v7826, %v8099
          %v8147 = vadd.f32 %v7827, %v8104
          %v8148 = vadd.f32 %v7828, %v8107
          %v8149 = vadd.f32 %v7829, %v8112
          %s8150 = scalar_lea.vmem %s304, 1 [#allocation5]
          %v8151 = vld [vmem:[%s8150] sm:$0x1]
          %v8153 = vlaneseq
          %v8154 = vshrl.u32 %v8153, 7
          %v8155 = vsub.s32 0, %v8154
          %v8156 = vrot.slane %v8151, %v8155
          %v8158 = vadd.f32 %v8117, %v8156
          %v8159 = vadd.f32 %v8118, %v8156
          %v8160 = vadd.f32 %v8119, %v8156
          %v8161 = vadd.f32 %v8120, %v8156
          %v8162 = vadd.f32 %v8121, %v8156
          %v8163 = vadd.f32 %v8122, %v8156
          %v8164 = vadd.f32 %v8123, %v8156
          %v8165 = vadd.f32 %v8124, %v8156
          %v8166 = vadd.f32 %v8125, %v8156
          %v8167 = vadd.f32 %v8126, %v8156
          %v8168 = vadd.f32 %v8127, %v8156
          %v8169 = vadd.f32 %v8128, %v8156
          %v8170 = vadd.f32 %v8129, %v8156
          %v8171 = vadd.f32 %v8130, %v8156
          %v8172 = vadd.f32 %v8131, %v8156
          %v8173 = vadd.f32 %v8132, %v8156
          %v8174 = vadd.f32 %v8133, %v8156
          %v8175 = vadd.f32 %v8134, %v8156
          %v8176 = vadd.f32 %v8135, %v8156
          %v8177 = vadd.f32 %v8136, %v8156
          %v8178 = vadd.f32 %v8137, %v8156
          %v8179 = vadd.f32 %v8138, %v8156
          %v8180 = vadd.f32 %v8139, %v8156
          %v8181 = vadd.f32 %v8140, %v8156
          %v8182 = vadd.f32 %v8141, %v8156
          %v8183 = vadd.f32 %v8142, %v8156
          %v8184 = vadd.f32 %v8143, %v8156
          %v8185 = vadd.f32 %v8144, %v8156
          %v8186 = vadd.f32 %v8145, %v8156
          %v8187 = vadd.f32 %v8146, %v8156
          %v8188 = vadd.f32 %v8147, %v8156
          %v8189 = vadd.f32 %v8148, %v8156
          %v8190 = vadd.f32 %v8149, %v8156
          %v8191 = vunpack.c.l.bf16 %v500
          %v8192 = vunpack.c.l.bf16 %v501
          %v8193 = vunpack.c.l.bf16 %v502
          %v8194 = vunpack.c.l.bf16 %v503
          %v8195 = vunpack.c.l.bf16 %v504
          %v8196 = vunpack.c.l.bf16 %v505
          %v8197 = vunpack.c.l.bf16 %v506
          %v8198 = vunpack.c.l.bf16 %v507
          %v8199 = vunpack.c.l.bf16 %v508
          %v8200 = vunpack.c.l.bf16 %v509
          %v8201 = vunpack.c.l.bf16 %v510
          %v8202 = vunpack.c.l.bf16 %v511
          %v8203 = vunpack.c.l.bf16 %v512
          %v8204 = vunpack.c.l.bf16 %v513
          %v8205 = vunpack.c.l.bf16 %v514
          %v8206 = vunpack.c.l.bf16 %v515
          %v8207 = vunpack.c.l.bf16 %v516
          %v8208 = vunpack.c.l.bf16 %v517
          %v8209 = vunpack.c.l.bf16 %v518
          %v8210 = vunpack.c.l.bf16 %v519
          %v8211 = vunpack.c.l.bf16 %v520
          %v8212 = vunpack.c.l.bf16 %v521
          %v8213 = vunpack.c.l.bf16 %v522
          %v8214 = vunpack.c.l.bf16 %v523
          %v8215 = vunpack.c.l.bf16 %v524
          %v8216 = vunpack.c.l.bf16 %v525
          %v8217 = vunpack.c.l.bf16 %v526
          %v8218 = vunpack.c.l.bf16 %v527
          %v8219 = vunpack.c.l.bf16 %v528
          %v8220 = vunpack.c.l.bf16 %v529
          %v8221 = vunpack.c.l.bf16 %v530
          %v8222 = vunpack.c.l.bf16 %v531
          %v8223 = vunpack.c.l.bf16 %v532
          %v8224 = vadd.f32 %v8158, %v8191
          %v8225 = vadd.f32 %v8159, %v8192
          %v8226 = vadd.f32 %v8160, %v8193
          %v8227 = vadd.f32 %v8161, %v8194
          %v8228 = vadd.f32 %v8162, %v8195
          %v8229 = vadd.f32 %v8163, %v8196
          %v8230 = vadd.f32 %v8164, %v8197
          %v8231 = vadd.f32 %v8165, %v8198
          %v8232 = vadd.f32 %v8166, %v8199
          %v8233 = vadd.f32 %v8167, %v8200
          %v8234 = vadd.f32 %v8168, %v8201
          %v8235 = vadd.f32 %v8169, %v8202
          %v8236 = vadd.f32 %v8170, %v8203
          %v8237 = vadd.f32 %v8171, %v8204
          %v8238 = vadd.f32 %v8172, %v8205
          %v8239 = vadd.f32 %v8173, %v8206
          %v8240 = vadd.f32 %v8174, %v8207
          %v8241 = vadd.f32 %v8175, %v8208
          %v8242 = vadd.f32 %v8176, %v8209
          %v8243 = vadd.f32 %v8177, %v8210
          %v8244 = vadd.f32 %v8178, %v8211
          %v8245 = vadd.f32 %v8179, %v8212
          %v8246 = vadd.f32 %v8180, %v8213
          %v8247 = vadd.f32 %v8181, %v8214
          %v8248 = vadd.f32 %v8182, %v8215
          %v8249 = vadd.f32 %v8183, %v8216
          %v8250 = vadd.f32 %v8184, %v8217
          %v8251 = vadd.f32 %v8185, %v8218
          %v8252 = vadd.f32 %v8186, %v8219
          %v8253 = vadd.f32 %v8187, %v8220
          %v8254 = vadd.f32 %v8188, %v8221
          %v8255 = vadd.f32 %v8189, %v8222
          %v8256 = vadd.f32 %v8190, %v8223
          %v8257 = vmax.f32 %v8224, 0.0
          %v8258 = vmax.f32 %v8225, 0.0
          %v8259 = vmax.f32 %v8226, 0.0
          %v8260 = vmax.f32 %v8227, 0.0
          %v8261 = vmax.f32 %v8228, 0.0
          %v8262 = vmax.f32 %v8229, 0.0
          %v8263 = vmax.f32 %v8230, 0.0
          %v8264 = vmax.f32 %v8231, 0.0
          %v8265 = vmax.f32 %v8232, 0.0
          %v8266 = vmax.f32 %v8233, 0.0
          %v8267 = vmax.f32 %v8234, 0.0
          %v8268 = vmax.f32 %v8235, 0.0
          %v8269 = vmax.f32 %v8236, 0.0
          %v8270 = vmax.f32 %v8237, 0.0
          %v8271 = vmax.f32 %v8238, 0.0
          %v8272 = vmax.f32 %v8239, 0.0
          %v8273 = vmax.f32 %v8240, 0.0
          %v8274 = vmax.f32 %v8241, 0.0
          %v8275 = vmax.f32 %v8242, 0.0
          %v8276 = vmax.f32 %v8243, 0.0
          %v8277 = vmax.f32 %v8244, 0.0
          %v8278 = vmax.f32 %v8245, 0.0
          %v8279 = vmax.f32 %v8246, 0.0
          %v8280 = vmax.f32 %v8247, 0.0
          %v8281 = vmax.f32 %v8248, 0.0
          %v8282 = vmax.f32 %v8249, 0.0
          %v8283 = vmax.f32 %v8250, 0.0
          %v8284 = vmax.f32 %v8251, 0.0
          %v8285 = vmax.f32 %v8252, 0.0
          %v8286 = vmax.f32 %v8253, 0.0
          %v8287 = vmax.f32 %v8254, 0.0
          %v8288 = vmax.f32 %v8255, 0.0
          %v8289 = vmax.f32 %v8256, 0.0
          %v8290 = vpack.c.bf16 %v8258, %v8257
          %v8291 = vpack.c.bf16 %v8260, %v8259
          %v8292 = vpack.c.bf16 %v8262, %v8261
          %v8293 = vpack.c.bf16 %v8264, %v8263
          %v8294 = vpack.c.bf16 %v8266, %v8265
          %v8295 = vpack.c.bf16 %v8268, %v8267
          %v8296 = vpack.c.bf16 %v8270, %v8269
          %v8297 = vpack.c.bf16 %v8272, %v8271
          %v8298 = vpack.c.bf16 %v8274, %v8273
          %v8299 = vpack.c.bf16 %v8276, %v8275
          %v8300 = vpack.c.bf16 %v8278, %v8277
          %v8301 = vpack.c.bf16 %v8280, %v8279
          %v8302 = vpack.c.bf16 %v8282, %v8281
          %v8303 = vpack.c.bf16 %v8284, %v8283
          %v8304 = vpack.c.bf16 %v8286, %v8285
          %v8305 = vpack.c.bf16 %v8288, %v8287
          %v8306 = vpack.c.bf16 %v8289, %v8289
          %v8307 = vmul.bf16 %v8290, %v4267
          %v8308 = vmul.bf16 %v8291, %v4268
          %v8309 = vmul.bf16 %v8292, %v4269
          %v8310 = vmul.bf16 %v8293, %v4270
          %v8311 = vmul.bf16 %v8294, %v4271
          %v8312 = vmul.bf16 %v8295, %v4272
          %v8313 = vmul.bf16 %v8296, %v4273
          %v8314 = vmul.bf16 %v8297, %v4274
          %v8315 = vmul.bf16 %v8298, %v4275
          %v8316 = vmul.bf16 %v8299, %v4276
          %v8317 = vmul.bf16 %v8300, %v4277
          %v8318 = vmul.bf16 %v8301, %v4278
          %v8319 = vmul.bf16 %v8302, %v4279
          %v8320 = vmul.bf16 %v8303, %v4280
          %v8321 = vmul.bf16 %v8304, %v4281
          %v8322 = vmul.bf16 %v8305, %v4282
          %v8323 = vmul.bf16 %v8306, %v4283
          %v8341 = vunpack.c.l.b16 %v8307
          %v8342 = vunpack.c.h.b16 %v8307
          %v8343 = vunpack.c.l.b16 %v8308
          %v8344 = vunpack.c.h.b16 %v8308
          %v8345 = vunpack.c.l.b16 %v8309
          %v8346 = vunpack.c.h.b16 %v8309
          %v8347 = vunpack.c.l.b16 %v8310
          %v8348 = vunpack.c.h.b16 %v8310
          %v8349 = vunpack.c.l.b16 %v8311
          %v8350 = vunpack.c.h.b16 %v8311
          %v8351 = vunpack.c.l.b16 %v8312
          %v8352 = vunpack.c.h.b16 %v8312
          %v8353 = vunpack.c.l.b16 %v8313
          %v8354 = vunpack.c.h.b16 %v8313
          %v8355 = vunpack.c.l.b16 %v8314
          %v8356 = vunpack.c.h.b16 %v8314
          %v8357 = vunpack.c.l.b16 %v8315
          %v8358 = vunpack.c.h.b16 %v8315
          %v8359 = vunpack.c.l.b16 %v8316
          %v8360 = vunpack.c.h.b16 %v8316
          %v8361 = vunpack.c.l.b16 %v8317
          %v8362 = vunpack.c.h.b16 %v8317
          %v8363 = vunpack.c.l.b16 %v8318
          %v8364 = vunpack.c.h.b16 %v8318
          %v8365 = vunpack.c.l.b16 %v8319
          %v8366 = vunpack.c.h.b16 %v8319
          %v8367 = vunpack.c.l.b16 %v8320
          %v8368 = vunpack.c.h.b16 %v8320
          %v8369 = vunpack.c.l.b16 %v8321
          %v8370 = vunpack.c.h.b16 %v8321
          %v8371 = vunpack.c.l.b16 %v8322
          %v8372 = vunpack.c.h.b16 %v8322
          %v8373 = vunpack.c.l.b16 %v8323
          %v8374 = vpack.c.b16 %v8341, %v8341
          %v8375 = vpack.c.b16 %v8342, %v8342
          %v8376 = vpack.c.b16 %v8343, %v8343
          %v8377 = vpack.c.b16 %v8344, %v8344
          %v8378 = vpack.c.b16 %v8345, %v8345
          %v8379 = vpack.c.b16 %v8346, %v8346
          %v8380 = vpack.c.b16 %v8347, %v8347
          %v8381 = vpack.c.b16 %v8348, %v8348
          %v8382 = vpack.c.b16 %v8349, %v8349
          %v8383 = vpack.c.b16 %v8350, %v8350
          %v8384 = vpack.c.b16 %v8351, %v8351
          %v8385 = vpack.c.b16 %v8352, %v8352
          %v8386 = vpack.c.b16 %v8353, %v8353
          %v8387 = vpack.c.b16 %v8354, %v8354
          %v8388 = vpack.c.b16 %v8355, %v8355
          %v8389 = vpack.c.b16 %v8356, %v8356
          %v8390 = vpack.c.b16 %v8357, %v8357
          %v8391 = vpack.c.b16 %v8358, %v8358
          %v8392 = vpack.c.b16 %v8359, %v8359
          %v8393 = vpack.c.b16 %v8360, %v8360
          %v8394 = vpack.c.b16 %v8361, %v8361
          %v8395 = vpack.c.b16 %v8362, %v8362
          %v8396 = vpack.c.b16 %v8363, %v8363
          %v8397 = vpack.c.b16 %v8364, %v8364
          %v8398 = vpack.c.b16 %v8365, %v8365
          %v8399 = vpack.c.b16 %v8366, %v8366
          %v8400 = vpack.c.b16 %v8367, %v8367
          %v8401 = vpack.c.b16 %v8368, %v8368
          %v8402 = vpack.c.b16 %v8369, %v8369
          %v8403 = vpack.c.b16 %v8370, %v8370
          %v8404 = vpack.c.b16 %v8371, %v8371
          %v8405 = vpack.c.b16 %v8372, %v8372
          %v8406 = vpack.c.b16 %v8373, %v8373
          %8440 = vst [vmem:[#allocation2 + $0x8] sm:$0xf] %v8374
          %8441 = vst [vmem:[#allocation2 + $0xc] sm:$0xf] %v8375
          %8442 = vst [vmem:[#allocation2 + $0x10] sm:$0xf] %v8376
          %8443 = vst [vmem:[#allocation2 + $0x14] sm:$0xf] %v8377
          %8444 = vst [vmem:[#allocation2 + $0x18] sm:$0xf] %v8378
          %8445 = vst [vmem:[#allocation2 + $0x1c] sm:$0xf] %v8379
          %8446 = vst [vmem:[#allocation2 + $0x20] sm:$0xf] %v8380
          %8447 = vst [vmem:[#allocation2 + $0x24] sm:$0xf] %v8381
          %8448 = vst [vmem:[#allocation2 + $0x28] sm:$0xf] %v8382
          %8449 = vst [vmem:[#allocation2 + $0x2c] sm:$0xf] %v8383
          %8450 = vst [vmem:[#allocation2 + $0x30] sm:$0xf] %v8384
          %8451 = vst [vmem:[#allocation2 + $0x34] sm:$0xf] %v8385
          %8452 = vst [vmem:[#allocation2 + $0x38] sm:$0xf] %v8386
          %8453 = vst [vmem:[#allocation2 + $0x3c] sm:$0xf] %v8387
          %8454 = vst [vmem:[#allocation2 + $0x40] sm:$0xf] %v8388
          %8455 = vst [vmem:[#allocation2 + $0x44] sm:$0xf] %v8389
          %8456 = vst [vmem:[#allocation2 + $0x48] sm:$0xf] %v8390
          %8457 = vst [vmem:[#allocation2 + $0x4c] sm:$0xf] %v8391
          %8458 = vst [vmem:[#allocation2 + $0x50] sm:$0xf] %v8392
          %8459 = vst [vmem:[#allocation2 + $0x54] sm:$0xf] %v8393
          %8460 = vst [vmem:[#allocation2 + $0x58] sm:$0xf] %v8394
          %8461 = vst [vmem:[#allocation2 + $0x5c] sm:$0xf] %v8395
          %8462 = vst [vmem:[#allocation2 + $0x60] sm:$0xf] %v8396
          %8463 = vst [vmem:[#allocation2 + $0x64] sm:$0xf] %v8397
          %8464 = vst [vmem:[#allocation2 + $0x68] sm:$0xf] %v8398
          %8465 = vst [vmem:[#allocation2 + $0x6c] sm:$0xf] %v8399
          %8466 = vst [vmem:[#allocation2 + $0x70] sm:$0xf] %v8400
          %8467 = vst [vmem:[#allocation2 + $0x74] sm:$0xf] %v8401
          %8468 = vst [vmem:[#allocation2 + $0x78] sm:$0xf] %v8402
          %8469 = vst [vmem:[#allocation2 + $0x7c] sm:$0xf] %v8403
          %8470 = vst [vmem:[#allocation2 + $0x80] sm:$0xf] %v8404
          %8471 = vst [vmem:[#allocation2 + $0x84] sm:$0xf] %v8405
          %8472 = vst [vmem:[#allocation2 + $0x88] sm:$0xf] %v8406
          %p8473 = scmp.eq.s32.totalorder %s28, 7
          // Predicated region
          $region65: #{forward.2} parent=63 // pred_check
            %p8474 = pneg %p8473
          $region66: #{forward.2} parent=63 // pred_check_branch
            %8476 = sbr.rel (%p8474) target = $region68
          $region67: #{forward.2} parent=63 // pred_region
            %v8477 = vld [vmem:[%s4] sm:$0xf]
            %v8478 = vld [vmem:[%s4 + $0x4] sm:$0xf]
            %v8479 = vld [vmem:[%s4 + $0x8] sm:$0xf]
            %v8480 = vld [vmem:[%s4 + $0xc] sm:$0xf]
            %v8481 = vld [vmem:[%s4 + $0x10] sm:$0xf]
            %v8482 = vld [vmem:[%s4 + $0x14] sm:$0xf]
            %v8483 = vld [vmem:[%s4 + $0x18] sm:$0xf]
            %v8484 = vld [vmem:[%s4 + $0x1c] sm:$0xf]
            %v8485 = vld [vmem:[%s4 + $0x20] sm:$0xf]
            %v8486 = vld [vmem:[%s4 + $0x24] sm:$0xf]
            %v8487 = vld [vmem:[%s4 + $0x28] sm:$0xf]
            %v8488 = vld [vmem:[%s4 + $0x2c] sm:$0xf]
            %v8489 = vld [vmem:[%s4 + $0x30] sm:$0xf]
            %v8490 = vld [vmem:[%s4 + $0x34] sm:$0xf]
            %v8491 = vld [vmem:[%s4 + $0x38] sm:$0xf]
            %v8492 = vld [vmem:[%s4 + $0x3c] sm:$0xf]
            %v8493 = vld [vmem:[#allocation7] sm:$0x1]
            %v8495 = vlaneseq
            %v8496 = vshrl.u32 %v8495, 7
            %v8497 = vsub.s32 0, %v8496
            %v8498 = vrot.slane %v8493, %v8497
            %v8516 = vunpack.c.l.b16 %v8477
            %v8517 = vunpack.c.l.b16 %v8478
            %v8518 = vunpack.c.l.b16 %v8479
            %v8519 = vunpack.c.l.b16 %v8480
            %v8520 = vunpack.c.l.b16 %v8481
            %v8521 = vunpack.c.l.b16 %v8482
            %v8522 = vunpack.c.l.b16 %v8483
            %v8523 = vunpack.c.l.b16 %v8484
            %v8524 = vunpack.c.l.b16 %v8485
            %v8525 = vunpack.c.l.b16 %v8486
            %v8526 = vunpack.c.l.b16 %v8487
            %v8527 = vunpack.c.l.b16 %v8488
            %v8528 = vunpack.c.l.b16 %v8489
            %v8529 = vunpack.c.l.b16 %v8490
            %v8530 = vunpack.c.l.b16 %v8491
            %v8531 = vunpack.c.l.b16 %v8492
            %v8532 = vpack.c.b16 %v8517, %v8516
            %v8533 = vpack.c.b16 %v8519, %v8518
            %v8534 = vpack.c.b16 %v8521, %v8520
            %v8535 = vpack.c.b16 %v8523, %v8522
            %v8536 = vpack.c.b16 %v8525, %v8524
            %v8537 = vpack.c.b16 %v8527, %v8526
            %v8538 = vpack.c.b16 %v8529, %v8528
            %v8539 = vpack.c.b16 %v8531, %v8530
            %8548 = vmatprep.subr.bf16.mxu0 0
            %8549 = vmatpush1.bf16.msra.mxu0 %v8539
            %8550 = vmatprep.subr.bf16.mxu0 0
            %8551 = vmatpush1.bf16.msra.mxu0 %v8538
            %8552 = vmatprep.subr.bf16.mxu0 0
            %8553 = vmatpush1.bf16.msra.mxu0 %v8537
            %8554 = vmatprep.subr.bf16.mxu0 0
            %8555 = vmatpush1.bf16.msra.mxu0 %v8536
            %8556 = vmatprep.subr.bf16.mxu0 0
            %8557 = vmatpush1.bf16.msra.mxu0 %v8535
            %8558 = vmatprep.subr.bf16.mxu0 0
            %8559 = vmatpush1.bf16.msra.mxu0 %v8534
            %8560 = vmatprep.subr.bf16.mxu0 0
            %8561 = vmatpush1.bf16.msra.mxu0 %v8533
            %8562 = vmatprep.subr.bf16.mxu0 0
            %8563 = vmatpush1.bf16.msra.mxu0 %v8532
            %8564 = vmatprep.subr.bf16.mxu0 0
            %8565 = vmatpush2.bf16.msra.mxu0 0
            %8566 = vmatprep.subr.bf16.mxu0 0
            %8567 = vmatpush2.bf16.msra.mxu0 0
            %8568 = vmatprep.subr.bf16.mxu0 0
            %8569 = vmatpush2.bf16.msra.mxu0 0
            %8570 = vmatprep.subr.bf16.mxu0 0
            %8571 = vmatpush2.bf16.msra.mxu0 0
            %8572 = vmatprep.subr.bf16.mxu0 0
            %8573 = vmatpush2.bf16.msra.mxu0 0
            %8574 = vmatprep.subr.bf16.mxu0 0
            %8575 = vmatpush2.bf16.msra.mxu0 0
            %8576 = vmatprep.subr.bf16.mxu0 0
            %8577 = vmatpush2.bf16.msra.mxu0 0
            %8578 = vmatprep.subr.bf16.mxu0 0
            %8579 = vmatpush2.bf16.msra.mxu0 0
            %8580 = vmatprep.mubr.bf16.mxu0 0
            %8581 = vmatmul.mubr.bf16.gmra.mxu0 %v8307
            %v8582 = vpop.f32.mrf.mxu0
            %v8583 = vadd.f32 %v8498, %v8582
            %v8584 = vpop.f32.mrf.mxu0
            %v8585 = vpop.f32.mrf.mxu0
            %v8586 = vadd.f32 %v8498, %v8585
            %v8587 = vpop.f32.mrf.mxu0
            %8588 = vmatprep.mubr.bf16.mxu0 0
            %8589 = vmatmul.mubr.bf16.gmra.mxu0 %v8308
            %v8590 = vpop.f32.mrf.mxu0
            %v8591 = vadd.f32 %v8498, %v8590
            %v8592 = vpop.f32.mrf.mxu0
            %v8593 = vpop.f32.mrf.mxu0
            %v8594 = vadd.f32 %v8498, %v8593
            %v8595 = vpop.f32.mrf.mxu0
            %8596 = vmatprep.mubr.bf16.mxu0 0
            %8597 = vmatmul.mubr.bf16.gmra.mxu0 %v8309
            %v8598 = vpop.f32.mrf.mxu0
            %v8599 = vadd.f32 %v8498, %v8598
            %v8600 = vpop.f32.mrf.mxu0
            %v8601 = vpop.f32.mrf.mxu0
            %v8602 = vadd.f32 %v8498, %v8601
            %v8603 = vpop.f32.mrf.mxu0
            %8604 = vmatprep.mubr.bf16.mxu0 0
            %8605 = vmatmul.mubr.bf16.gmra.mxu0 %v8310
            %v8606 = vpop.f32.mrf.mxu0
            %v8607 = vadd.f32 %v8498, %v8606
            %v8608 = vpop.f32.mrf.mxu0
            %v8609 = vpop.f32.mrf.mxu0
            %v8610 = vadd.f32 %v8498, %v8609
            %v8611 = vpop.f32.mrf.mxu0
            %8612 = vmatprep.mubr.bf16.mxu0 0
            %8613 = vmatmul.mubr.bf16.gmra.mxu0 %v8311
            %v8614 = vpop.f32.mrf.mxu0
            %v8615 = vadd.f32 %v8498, %v8614
            %v8616 = vpop.f32.mrf.mxu0
            %v8617 = vpop.f32.mrf.mxu0
            %v8618 = vadd.f32 %v8498, %v8617
            %v8619 = vpop.f32.mrf.mxu0
            %8620 = vmatprep.mubr.bf16.mxu0 0
            %8621 = vmatmul.mubr.bf16.gmra.mxu0 %v8312
            %v8622 = vpop.f32.mrf.mxu0
            %v8623 = vadd.f32 %v8498, %v8622
            %v8624 = vpop.f32.mrf.mxu0
            %v8625 = vpop.f32.mrf.mxu0
            %v8626 = vadd.f32 %v8498, %v8625
            %v8627 = vpop.f32.mrf.mxu0
            %8628 = vmatprep.mubr.bf16.mxu0 0
            %8629 = vmatmul.mubr.bf16.gmra.mxu0 %v8313
            %v8630 = vpop.f32.mrf.mxu0
            %v8631 = vadd.f32 %v8498, %v8630
            %v8632 = vpop.f32.mrf.mxu0
            %v8633 = vpop.f32.mrf.mxu0
            %v8634 = vadd.f32 %v8498, %v8633
            %v8635 = vpop.f32.mrf.mxu0
            %8636 = vmatprep.mubr.bf16.mxu0 0
            %8637 = vmatmul.mubr.bf16.gmra.mxu0 %v8314
            %v8638 = vpop.f32.mrf.mxu0
            %v8639 = vadd.f32 %v8498, %v8638
            %v8640 = vpop.f32.mrf.mxu0
            %v8641 = vpop.f32.mrf.mxu0
            %v8642 = vadd.f32 %v8498, %v8641
            %v8643 = vpop.f32.mrf.mxu0
            %8644 = vmatprep.mubr.bf16.mxu0 0
            %8645 = vmatmul.mubr.bf16.gmra.mxu0 %v8315
            %v8646 = vpop.f32.mrf.mxu0
            %v8647 = vadd.f32 %v8498, %v8646
            %v8648 = vpop.f32.mrf.mxu0
            %v8649 = vpop.f32.mrf.mxu0
            %v8650 = vadd.f32 %v8498, %v8649
            %v8651 = vpop.f32.mrf.mxu0
            %8652 = vmatprep.mubr.bf16.mxu0 0
            %8653 = vmatmul.mubr.bf16.gmra.mxu0 %v8316
            %v8654 = vpop.f32.mrf.mxu0
            %v8655 = vadd.f32 %v8498, %v8654
            %v8656 = vpop.f32.mrf.mxu0
            %v8657 = vpop.f32.mrf.mxu0
            %v8658 = vadd.f32 %v8498, %v8657
            %v8659 = vpop.f32.mrf.mxu0
            %8660 = vmatprep.mubr.bf16.mxu0 0
            %8661 = vmatmul.mubr.bf16.gmra.mxu0 %v8317
            %v8662 = vpop.f32.mrf.mxu0
            %v8663 = vadd.f32 %v8498, %v8662
            %v8664 = vpop.f32.mrf.mxu0
            %v8665 = vpop.f32.mrf.mxu0
            %v8666 = vadd.f32 %v8498, %v8665
            %v8667 = vpop.f32.mrf.mxu0
            %8668 = vmatprep.mubr.bf16.mxu0 0
            %8669 = vmatmul.mubr.bf16.gmra.mxu0 %v8318
            %v8670 = vpop.f32.mrf.mxu0
            %v8671 = vadd.f32 %v8498, %v8670
            %v8672 = vpop.f32.mrf.mxu0
            %v8673 = vpop.f32.mrf.mxu0
            %v8674 = vadd.f32 %v8498, %v8673
            %v8675 = vpop.f32.mrf.mxu0
            %8676 = vmatprep.mubr.bf16.mxu0 0
            %8677 = vmatmul.mubr.bf16.gmra.mxu0 %v8319
            %v8678 = vpop.f32.mrf.mxu0
            %v8679 = vadd.f32 %v8498, %v8678
            %v8680 = vpop.f32.mrf.mxu0
            %v8681 = vpop.f32.mrf.mxu0
            %v8682 = vadd.f32 %v8498, %v8681
            %v8683 = vpop.f32.mrf.mxu0
            %8684 = vmatprep.mubr.bf16.mxu0 0
            %8685 = vmatmul.mubr.bf16.gmra.mxu0 %v8320
            %v8686 = vpop.f32.mrf.mxu0
            %v8687 = vadd.f32 %v8498, %v8686
            %v8688 = vpop.f32.mrf.mxu0
            %v8689 = vpop.f32.mrf.mxu0
            %v8690 = vadd.f32 %v8498, %v8689
            %v8691 = vpop.f32.mrf.mxu0
            %8692 = vmatprep.mubr.bf16.mxu0 0
            %8693 = vmatmul.mubr.bf16.gmra.mxu0 %v8321
            %v8694 = vpop.f32.mrf.mxu0
            %v8695 = vadd.f32 %v8498, %v8694
            %v8696 = vpop.f32.mrf.mxu0
            %v8697 = vpop.f32.mrf.mxu0
            %v8698 = vadd.f32 %v8498, %v8697
            %v8699 = vpop.f32.mrf.mxu0
            %8700 = vmatprep.mubr.bf16.mxu0 0
            %8701 = vmatmul.mubr.bf16.gmra.mxu0 %v8322
            %v8702 = vpop.f32.mrf.mxu0
            %v8703 = vadd.f32 %v8498, %v8702
            %v8704 = vpop.f32.mrf.mxu0
            %v8705 = vpop.f32.mrf.mxu0
            %v8706 = vadd.f32 %v8498, %v8705
            %v8707 = vpop.f32.mrf.mxu0
            %8708 = vmatprep.mubr.bf16.mxu0 0
            %8709 = vmatmul.mubr.bf16.gmra.mxu0 %v8323
            %v8710 = vpop.f32.mrf.mxu0
            %v8711 = vadd.f32 %v8498, %v8710
            %v8712 = vpop.f32.mrf.mxu0
            %v8713 = vpop.f32.mrf.mxu0
            %v8714 = vpop.f32.mrf.mxu0
            %8715 = vdwg.mxu0
            %v8716 = vmax.f32 %v8583, 0.0
            %v8717 = vmax.f32 %v8586, 0.0
            %v8718 = vmax.f32 %v8591, 0.0
            %v8719 = vmax.f32 %v8594, 0.0
            %v8720 = vmax.f32 %v8599, 0.0
            %v8721 = vmax.f32 %v8602, 0.0
            %v8722 = vmax.f32 %v8607, 0.0
            %v8723 = vmax.f32 %v8610, 0.0
            %v8724 = vmax.f32 %v8615, 0.0
            %v8725 = vmax.f32 %v8618, 0.0
            %v8726 = vmax.f32 %v8623, 0.0
            %v8727 = vmax.f32 %v8626, 0.0
            %v8728 = vmax.f32 %v8631, 0.0
            %v8729 = vmax.f32 %v8634, 0.0
            %v8730 = vmax.f32 %v8639, 0.0
            %v8731 = vmax.f32 %v8642, 0.0
            %v8732 = vmax.f32 %v8647, 0.0
            %v8733 = vmax.f32 %v8650, 0.0
            %v8734 = vmax.f32 %v8655, 0.0
            %v8735 = vmax.f32 %v8658, 0.0
            %v8736 = vmax.f32 %v8663, 0.0
            %v8737 = vmax.f32 %v8666, 0.0
            %v8738 = vmax.f32 %v8671, 0.0
            %v8739 = vmax.f32 %v8674, 0.0
            %v8740 = vmax.f32 %v8679, 0.0
            %v8741 = vmax.f32 %v8682, 0.0
            %v8742 = vmax.f32 %v8687, 0.0
            %v8743 = vmax.f32 %v8690, 0.0
            %v8744 = vmax.f32 %v8695, 0.0
            %v8745 = vmax.f32 %v8698, 0.0
            %v8746 = vmax.f32 %v8703, 0.0
            %v8747 = vmax.f32 %v8706, 0.0
            %v8748 = vmax.f32 %v8711, 0.0
            %vm8749 = vcmask 64512
            %8750 = vst.msk [vmem:[%s357] sm:$0xff] %vm8749, %v8716
            %8751 = vst.msk [vmem:[%s357 + $0x8] sm:$0xff] %vm8749, %v8717
            %8752 = vst.msk [vmem:[%s357 + $0x10] sm:$0xff] %vm8749, %v8718
            %8753 = vst.msk [vmem:[%s357 + $0x18] sm:$0xff] %vm8749, %v8719
            %8754 = vst.msk [vmem:[%s357 + $0x20] sm:$0xff] %vm8749, %v8720
            %8755 = vst.msk [vmem:[%s357 + $0x28] sm:$0xff] %vm8749, %v8721
            %8756 = vst.msk [vmem:[%s357 + $0x30] sm:$0xff] %vm8749, %v8722
            %8757 = vst.msk [vmem:[%s357 + $0x38] sm:$0xff] %vm8749, %v8723
            %8758 = vst.msk [vmem:[%s357 + $0x40] sm:$0xff] %vm8749, %v8724
            %8759 = vst.msk [vmem:[%s357 + $0x48] sm:$0xff] %vm8749, %v8725
            %8760 = vst.msk [vmem:[%s357 + $0x50] sm:$0xff] %vm8749, %v8726
            %8761 = vst.msk [vmem:[%s357 + $0x58] sm:$0xff] %vm8749, %v8727
            %8762 = vst.msk [vmem:[%s357 + $0x60] sm:$0xff] %vm8749, %v8728
            %8763 = vst.msk [vmem:[%s357 + $0x68] sm:$0xff] %vm8749, %v8729
            %8764 = vst.msk [vmem:[%s357 + $0x70] sm:$0xff] %vm8749, %v8730
            %8765 = vst.msk [vmem:[%s357 + $0x78] sm:$0xff] %vm8749, %v8731
            %8766 = vst.msk [vmem:[%s357 + $0x80] sm:$0xff] %vm8749, %v8732
            %8767 = vst.msk [vmem:[%s357 + $0x88] sm:$0xff] %vm8749, %v8733
            %8768 = vst.msk [vmem:[%s357 + $0x90] sm:$0xff] %vm8749, %v8734
            %8769 = vst.msk [vmem:[%s357 + $0x98] sm:$0xff] %vm8749, %v8735
            %8770 = vst.msk [vmem:[%s357 + $0xa0] sm:$0xff] %vm8749, %v8736
            %8771 = vst.msk [vmem:[%s357 + $0xa8] sm:$0xff] %vm8749, %v8737
            %8772 = vst.msk [vmem:[%s357 + $0xb0] sm:$0xff] %vm8749, %v8738
            %8773 = vst.msk [vmem:[%s357 + $0xb8] sm:$0xff] %vm8749, %v8739
            %8774 = vst.msk [vmem:[%s357 + $0xc0] sm:$0xff] %vm8749, %v8740
            %8775 = vst.msk [vmem:[%s357 + $0xc8] sm:$0xff] %vm8749, %v8741
            %8776 = vst.msk [vmem:[%s357 + $0xd0] sm:$0xff] %vm8749, %v8742
            %8777 = vst.msk [vmem:[%s357 + $0xd8] sm:$0xff] %vm8749, %v8743
            %8778 = vst.msk [vmem:[%s357 + $0xe0] sm:$0xff] %vm8749, %v8744
            %8779 = vst.msk [vmem:[%s357 + $0xe8] sm:$0xff] %vm8749, %v8745
            %8780 = vst.msk [vmem:[%s357 + $0xf0] sm:$0xff] %vm8749, %v8746
            %8781 = vst.msk [vmem:[%s357 + $0xf8] sm:$0xff] %vm8749, %v8747
            %8782 = vst.msk [vmem:[%s357 + $0x100] sm:$0xff] %vm8749, %v8748
          $region68: #{forward.2} parent=63 // pred_fallthru
            _
        $region64: #{forward.2} parent=43 // pred_fallthru
          _
        %s8783 = smul.u32 33, %s27
        %p8784 = scmp.lt.s32.totalorder %s8783, 32
        %s8785 = scalar_select %p8784, %s8783, 32
        %s8786 = smul.addr %s8785, 8
        %s8787 = scalar_lea.vmem %s6, %s8786
        // Predicated region
        $region69: #{forward.2} parent=43 // pred_check
          %p8788 = pneg %p194
        $region70: #{forward.2} parent=43 // pred_check_branch
          %8790 = sbr.rel (%p8788) target = $region72
        $region71: #{forward.2} parent=43 // pred_region
          %s8791 = smul.u32 33, %s27
        $region72: #{forward.2} parent=43 // pred_fallthru
          _
        // Predicated region
        $region73: #{forward.2} parent=43 // pred_check
          %p8792 = pneg %p194
        $region74: #{forward.2} parent=43 // pred_check_branch
          %8794 = sbr.rel (%p8792) target = $region76
        $region75: #{forward.2} parent=43 // pred_region
          %s8795 = smul.u32 33, %s27
          %p8796 = scmp.lt.s32.totalorder %s8795, 32
          %s8797 = scalar_select %p8796, %s8795, 32
          %s8798 = smul.addr %s8797, 8
          %s8799 = scalar_lea.vmem %s6, %s8798
        $region76: #{forward.2} parent=43 // pred_fallthru
          _
      $region44: #{forward.2} parent=5 // pred_fallthru
        _
      %p8800 = scmp.le.s32.totalorder 2, %s18
      // Predicated region
      $region77: #{forward.2} parent=5 // pred_check
        %p8801 = pneg %p8800
      $region78: #{forward.2} parent=5 // pred_check_branch
        %8803 = sbr.rel (%p8801) target = $region80
      $region79: #{forward.2} parent=5 // pred_region
        %s8804 = ssub.s32 %s18, 2
      $region80: #{forward.2} parent=5 // pred_fallthru
        _
    $region6: #{forward.2} parent=1 // loop_footer
      %s22 = sadd.s32 1, %s18
    $region7: #{forward.2} parent=1 // loop_footer_branch
      %17 = sbr.rel target = $region3
    $region8: #{forward.2} parent=1 // loop_exit
      _
    %8805 = vsyncpa [#allocation4], 1
    %s8806 = scalar_lea.sflag [#allocation4], 1
    %8807 = vsyncpa %s8806, 1
    %8808 = vsyncpa [#allocation6], 1
    %s8809 = scalar_lea.sflag [#allocation6], 1
    %8810 = vsyncpa %s8809, 1

</llo_original>
